<compile_context>
chip_gen: v6e
topology: v6e:2x2x1
jax: 0.10.0
libtpu: 0.0.40
codegen_flags: <defaults>
</compile_context>

<pallas_src>
import functools
import math

import numpy as np
import jax
import jax.numpy as jnp
from jax import lax
from jax.experimental import pallas as pl
from jax.experimental.pallas import tpu as pltpu


# ----------------------------- in-kernel helpers -----------------------------

def _norm_rows(x, a, b, d, eps):
    """Tutorial Norm: unbiased std (d-1), eps added to std (not variance)."""
    mean = jnp.mean(x, axis=-1, keepdims=True)
    var = jnp.sum((x - mean) ** 2, axis=-1, keepdims=True) * (1.0 / (d - 1))
    inv = pl.reciprocal(jnp.sqrt(var) + eps, approx=False)
    return a * ((x - mean) * inv) + b


def _proj(x, w_bf16, b):
    """(M, din) f32 @ (din, dout) bf16 -> f32 (+bias). MXU runs bf16, acc f32."""
    return jnp.dot(x.astype(jnp.bfloat16), w_bf16,
                   preferred_element_type=jnp.float32) + b


def _mha(q3, k3, v3, maskf, heads, dk):
    """q3:(B,Sq,D) k3,v3:(B,Sk,D) maskf:(B,Sq,Sk) f32. Batched over B per head."""
    scale = 1.0 / math.sqrt(dk)
    outs = []
    for h in range(heads):                       # tiny static loop (lane slices)
        lo = h * dk
        qh = q3[:, :, lo:lo + dk]
        kh = k3[:, :, lo:lo + dk]
        vh = v3[:, :, lo:lo + dk]
        s = jnp.einsum('bqd,bkd->bqk', qh, kh,
                       preferred_element_type=jnp.float32) * scale
        s = jnp.where(maskf == 0.0, jnp.float32(-1e9), s)     # masked_fill
        s = s - jnp.max(s, axis=-1, keepdims=True)            # stable softmax
        p = jnp.exp(s)
        p = p * pl.reciprocal(jnp.sum(p, axis=-1, keepdims=True), approx=True)
        outs.append(jnp.einsum('bqk,bkd->bqd', p, vh,
                               preferred_element_type=jnp.float32))
    return jnp.concatenate(outs, axis=-1)        # (B, Sq, D)


# --------------------------- fully-fused decoder kernel -----------------------

def _decoder_fused_kernel(
        ids_ref, e_ref, trg_mask_ref, src_mask_ref, embed_ref, pe_ref,
        ln1_a_ref, ln1_b_ref, wqkv1_ref, bqkv1_ref, wo1_ref, bo1_ref,
        ln2_a_ref, ln2_b_ref, wq2_ref, bq2_ref, wkv2_ref, bkv2_ref,
        wo2_ref, bo2_ref,
        ln3_a_ref, ln3_b_ref, w1_ref, b1_ref, w2_ref, b2_ref,
        fn_a_ref, fn_b_ref,
        o_ref, *, B, St, Ss, D, heads, n_layers, vocab, eps):
    dk = D // heads
    M = B * St

    # ---- Embedder (one-hot MXU gather) + *sqrt(D) + PositionalEncoder ----
    ids = ids_ref[...]                                            # (M, 1) int32
    onehot = (ids == lax.broadcasted_iota(jnp.int32, (M, vocab), 1)
              ).astype(jnp.float32)                               # (M, vocab)
    x = jnp.dot(onehot, embed_ref[...],
                preferred_element_type=jnp.float32) * math.sqrt(D)
    pe = pe_ref[...]                                              # (St, D)
    x = x + jnp.concatenate([pe] * B, axis=0)                     # (M, D)

    e_flat = e_ref[...].astype(jnp.float32).reshape(B * Ss, D)    # (B*Ss, D)
    tmask = trg_mask_ref[...]                                     # (B, St, St)
    smask = src_mask_ref[...]                                     # (B, St, Ss)

    for l in range(n_layers):                                     # static unroll
        # ---- self-attention sub-layer (pre-norm, residual) ----
        x2 = _norm_rows(x, ln1_a_ref[l], ln1_b_ref[l], D, eps)
        qkv = _proj(x2, wqkv1_ref[l], bqkv1_ref[l])               # (M, 3D)
        q3 = qkv[:, 0:D].reshape(B, St, D)
        k3 = qkv[:, D:2 * D].reshape(B, St, D)
        v3 = qkv[:, 2 * D:3 * D].reshape(B, St, D)
        att = _mha(q3, k3, v3, tmask, heads, dk).reshape(M, D)
        x = x + _proj(att, wo1_ref[l], bo1_ref[l])

        # ---- cross-attention sub-layer ----
        x2 = _norm_rows(x, ln2_a_ref[l], ln2_b_ref[l], D, eps)
        q3 = _proj(x2, wq2_ref[l], bq2_ref[l]).reshape(B, St, D)
        kv = _proj(e_flat, wkv2_ref[l], bkv2_ref[l])              # (B*Ss, 2D)
        kv3 = kv.reshape(B, Ss, 2 * D)
        att = _mha(q3, kv3[:, :, 0:D], kv3[:, :, D:2 * D],
                   smask, heads, dk).reshape(M, D)
        x = x + _proj(att, wo2_ref[l], bo2_ref[l])

        # ---- feed-forward sub-layer (hidden never leaves VMEM) ----
        x2 = _norm_rows(x, ln3_a_ref[l], ln3_b_ref[l], D, eps)
        hid = jnp.maximum(_proj(x2, w1_ref[l], b1_ref[l]), 0.0)   # (M, d_ff)
        x = x + _proj(hid, w2_ref[l], b2_ref[l])

    # ---- final Norm ----
    out = _norm_rows(x, fn_a_ref[...], fn_b_ref[...], D, eps)
    o_ref[...] = out.reshape(B, St, D).astype(o_ref.dtype)


# ----------------------------- wrapper (one launch) ---------------------------

def decoder_forward(trg, e_outputs, src_mask, trg_mask, params, *, heads,
                    eps=1e-6):
    B, St = trg.shape
    _, Ss, D = e_outputs.shape
    vocab = params["embed"].shape[0]
    n_layers = params["wqkv1"].shape[0]

    ids = trg.reshape(B * St, 1).astype(jnp.int32)
    pe = params["pe"][:St]
    trg_m = jnp.broadcast_to(trg_mask, (B, St, St)).astype(jnp.float32)
    src_m = jnp.broadcast_to(src_mask, (B, St, Ss)).astype(jnp.float32)

    kern = functools.partial(
        _decoder_fused_kernel, B=B, St=St, Ss=Ss, D=D, heads=heads,
        n_layers=n_layers, vocab=vocab, eps=eps)

    return pl.pallas_call(
        kern,
        out_shape=jax.ShapeDtypeStruct((B, St, D), jnp.float32),
        compiler_params=pltpu.CompilerParams(
            vmem_limit_bytes=8 * 1024 * 1024),
    )(ids, e_outputs, trg_m, src_m, params["embed"], pe,
      params["ln1_a"], params["ln1_b"], params["wqkv1"], params["bqkv1"],
      params["wo1"], params["bo1"],
      params["ln2_a"], params["ln2_b"], params["wq2"], params["bq2"],
      params["wkv2"], params["bkv2"], params["wo2"], params["bo2"],
      params["ln3_a"], params["ln3_b"], params["w1"], params["b1"],
      params["w2"], params["b2"],
      params["norm_a"], params["norm_b"])


# -------------------------------- param init ----------------------------------

def positional_encoding_table(max_len, d_model):
    pe = np.zeros((max_len, d_model), np.float32)
    for pos in range(max_len):
        for i in range(0, d_model, 2):
            pe[pos, i] = math.sin(pos / (10000 ** ((2 * i) / d_model)))
            pe[pos, i + 1] = math.cos(pos / (10000 ** ((2 * (i + 1)) / d_model)))
    return jnp.asarray(pe)


def init_decoder_params(key, vocab_size, d_model, N, d_ff, max_len=200):
    keys = jax.random.split(key, 1 + N)

    def linear(k, din, dout, scale=0.05):
        w = jax.random.normal(k, (din, dout), jnp.float32) * scale
        b = jnp.zeros((1, dout), jnp.float32)
        return w.astype(jnp.bfloat16), b          # bf16 weight, f32 bias

    per_layer = []
    for li in range(N):
        lk = jax.random.split(keys[1 + li], 7)
        # q/k/v fused into one (D, 3D) weight; cross-attn k/v fused into (D, 2D).
        wqkv1, bqkv1 = linear(lk[0], d_model, 3 * d_model)
        wo1, bo1 = linear(lk[1], d_model, d_model)
        wq2, bq2 = linear(lk[2], d_model, d_model)
        wkv2, bkv2 = linear(lk[3], d_model, 2 * d_model)
        wo2, bo2 = linear(lk[4], d_model, d_model)
        w1, b1 = linear(lk[5], d_model, d_ff)
        w2, b2 = linear(lk[6], d_ff, d_model)
        per_layer.append(dict(
            ln1_a=jnp.ones((1, d_model), jnp.float32),
            ln1_b=jnp.zeros((1, d_model), jnp.float32),
            ln2_a=jnp.ones((1, d_model), jnp.float32),
            ln2_b=jnp.zeros((1, d_model), jnp.float32),
            ln3_a=jnp.ones((1, d_model), jnp.float32),
            ln3_b=jnp.zeros((1, d_model), jnp.float32),
            wqkv1=wqkv1, bqkv1=bqkv1, wo1=wo1, bo1=bo1,
            wq2=wq2, bq2=bq2, wkv2=wkv2, bkv2=bkv2, wo2=wo2, bo2=bo2,
            w1=w1, b1=b1, w2=w2, b2=b2))

    stacked = {name: jnp.stack([layer[name] for layer in per_layer], axis=0)
               for name in per_layer[0]}

    params = dict(
        embed=jax.random.normal(keys[0], (vocab_size, d_model),
                                jnp.float32) * 0.1,
        pe=positional_encoding_table(max_len, d_model),
        norm_a=jnp.ones((1, d_model), jnp.float32),
        norm_b=jnp.zeros((1, d_model), jnp.float32),
        **stacked)
    return params


# ---------------------------------- main ---------------------------------------

if __name__ == "__main__":
    vocab_size, d_model, N, heads = 40, 32, 2, 4
    d_ff = 2048          # FeedForward default hidden size in the tutorial
    B, St, Ss = 2, 8, 8

    key = jax.random.PRNGKey(0)
    kp, kt, ke = jax.random.split(key, 3)

    params = init_decoder_params(kp, vocab_size, d_model, N, d_ff)

    trg = jax.random.randint(kt, (B, St), 0, vocab_size, dtype=jnp.int32)
    e_outputs = jax.random.normal(ke, (B, Ss, d_model), jnp.float32)
    src_mask = jnp.ones((B, 1, Ss), jnp.int32)
    trg_mask = jnp.asarray(np.tril(np.ones((St, St), np.int32))[None, :, :]
                           .repeat(B, axis=0))

    fwd = jax.jit(functools.partial(decoder_forward, heads=heads))
    out = jax.block_until_ready(fwd(trg, e_outputs, src_mask, trg_mask, params))

    assert out.shape == (B, St, d_model) and bool(jnp.all(jnp.isfinite(out)))
    print("KERNEL_OK")
</pallas_src>

<mosaic_0001>
module attributes {stable_mosaic.version = 11 : i64} {
  func.func @_decoder_fused_kernel(%arg0: memref<16x1xi32, #tpu.memory_space<vmem>>, %arg1: memref<2x8x32xf32, #tpu.memory_space<vmem>>, %arg2: memref<2x8x8xf32, #tpu.memory_space<vmem>>, %arg3: memref<2x8x8xf32, #tpu.memory_space<vmem>>, %arg4: memref<40x32xf32, #tpu.memory_space<vmem>>, %arg5: memref<8x32xf32, #tpu.memory_space<vmem>>, %arg6: memref<2x1x32xf32, #tpu.memory_space<vmem>>, %arg7: memref<2x1x32xf32, #tpu.memory_space<vmem>>, %arg8: memref<2x32x96xbf16, #tpu.memory_space<vmem>>, %arg9: memref<2x1x96xf32, #tpu.memory_space<vmem>>, %arg10: memref<2x32x32xbf16, #tpu.memory_space<vmem>>, %arg11: memref<2x1x32xf32, #tpu.memory_space<vmem>>, %arg12: memref<2x1x32xf32, #tpu.memory_space<vmem>>, %arg13: memref<2x1x32xf32, #tpu.memory_space<vmem>>, %arg14: memref<2x32x32xbf16, #tpu.memory_space<vmem>>, %arg15: memref<2x1x32xf32, #tpu.memory_space<vmem>>, %arg16: memref<2x32x64xbf16, #tpu.memory_space<vmem>>, %arg17: memref<2x1x64xf32, #tpu.memory_space<vmem>>, %arg18: memref<2x32x32xbf16, #tpu.memory_space<vmem>>, %arg19: memref<2x1x32xf32, #tpu.memory_space<vmem>>, %arg20: memref<2x1x32xf32, #tpu.memory_space<vmem>>, %arg21: memref<2x1x32xf32, #tpu.memory_space<vmem>>, %arg22: memref<2x32x2048xbf16, #tpu.memory_space<vmem>>, %arg23: memref<2x1x2048xf32, #tpu.memory_space<vmem>>, %arg24: memref<2x2048x32xbf16, #tpu.memory_space<vmem>>, %arg25: memref<2x1x32xf32, #tpu.memory_space<vmem>>, %arg26: memref<1x32xf32, #tpu.memory_space<vmem>>, %arg27: memref<1x32xf32, #tpu.memory_space<vmem>>, %arg28: memref<2x8x32xf32, #tpu.memory_space<vmem>>) attributes {dimension_semantics = [], scalar_prefetch = 0 : i64, scratch_operands = 0 : i64, tpu.core_type = #tpu.core_type<tc>} {
    %c0 = arith.constant 0 : index
    %c0_0 = arith.constant 0 : index
    %0 = vector.load %arg0[%c0, %c0_0] : memref<16x1xi32, #tpu.memory_space<vmem>>, vector<16x1xi32>
    %1 = tpu.iota {dimensions = array<i32: 1>} : vector<16x40xi32>
    %2 = vector.broadcast %0 : vector<16x1xi32> to vector<16x40xi32>
    %3 = arith.cmpi eq, %2, %1 : vector<16x40xi32>
    %4 = arith.extui %3 : vector<16x40xi1> to vector<16x40xi32>
    %5 = arith.sitofp %4 : vector<16x40xi32> to vector<16x40xf32>
    %c0_1 = arith.constant 0 : index
    %c0_2 = arith.constant 0 : index
    %6 = vector.load %arg4[%c0_1, %c0_2] : memref<40x32xf32, #tpu.memory_space<vmem>>, vector<40x32xf32>
    %cst = arith.constant dense<0.000000e+00> : vector<16x32xf32>
    %7 = tpu.matmul %5, %6, %cst {dimension_numbers = #tpu.dot_dimension_numbers<[1], [0], [0], [1], [0, 0, 1, 1], [], []>} : vector<16x40xf32>, vector<40x32xf32>, vector<16x32xf32> -> vector<16x32xf32>
    %cst_3 = arith.constant 5.65685415 : f32
    %8 = vector.broadcast %cst_3 : f32 to vector<16x32xf32>
    %9 = arith.mulf %7, %8 : vector<16x32xf32>
    %c0_4 = arith.constant 0 : index
    %c0_5 = arith.constant 0 : index
    %10 = vector.load %arg5[%c0_4, %c0_5] : memref<8x32xf32, #tpu.memory_space<vmem>>, vector<8x32xf32>
    %11 = tpu.concatenate %10, %10 in 0 : vector<8x32xf32>, vector<8x32xf32> -> vector<16x32xf32>
    %12 = arith.addf %9, %11 : vector<16x32xf32>
    %c0_6 = arith.constant 0 : index
    %c0_7 = arith.constant 0 : index
    %c0_8 = arith.constant 0 : index
    %13 = vector.load %arg1[%c0_6, %c0_7, %c0_8] : memref<2x8x32xf32, #tpu.memory_space<vmem>>, vector<2x8x32xf32>
    %14 = vector.shape_cast %13 : vector<2x8x32xf32> to vector<16x32xf32>
    %c0_9 = arith.constant 0 : index
    %c0_10 = arith.constant 0 : index
    %c0_11 = arith.constant 0 : index
    %15 = vector.load %arg2[%c0_9, %c0_10, %c0_11] : memref<2x8x8xf32, #tpu.memory_space<vmem>>, vector<2x8x8xf32>
    %c0_12 = arith.constant 0 : index
    %c0_13 = arith.constant 0 : index
    %c0_14 = arith.constant 0 : index
    %16 = vector.load %arg3[%c0_12, %c0_13, %c0_14] : memref<2x8x8xf32, #tpu.memory_space<vmem>>, vector<2x8x8xf32>
    %c0_15 = arith.constant 0 : index
    %c0_16 = arith.constant 0 : index
    %c0_17 = arith.constant 0 : index
    %17 = vector.load %arg6[%c0_15, %c0_16, %c0_17] : memref<2x1x32xf32, #tpu.memory_space<vmem>>, vector<1x1x32xf32>
    %18 = vector.shape_cast %17 : vector<1x1x32xf32> to vector<1x32xf32>
    %c0_18 = arith.constant 0 : index
    %c0_19 = arith.constant 0 : index
    %c0_20 = arith.constant 0 : index
    %19 = vector.load %arg7[%c0_18, %c0_19, %c0_20] : memref<2x1x32xf32, #tpu.memory_space<vmem>>, vector<1x1x32xf32>
    %20 = vector.shape_cast %19 : vector<1x1x32xf32> to vector<1x32xf32>
    %cst_21 = arith.constant dense<0.000000e+00> : vector<16xf32>
    %21 = vector.multi_reduction <add>, %12, %cst_21 [1] : vector<16x32xf32> to vector<16xf32>
    %22 = vector.shape_cast %21 : vector<16xf32> to vector<16x1xf32>
    %cst_22 = arith.constant 3.200000e+01 : f32
    %23 = vector.broadcast %cst_22 : f32 to vector<16x1xf32>
    %24 = arith.divf %22, %23 : vector<16x1xf32>
    %25 = vector.broadcast %24 : vector<16x1xf32> to vector<16x32xf32>
    %26 = arith.subf %12, %25 : vector<16x32xf32>
    %27 = arith.mulf %26, %26 : vector<16x32xf32>
    %cst_23 = arith.constant dense<0.000000e+00> : vector<16xf32>
    %28 = vector.multi_reduction <add>, %27, %cst_23 [1] : vector<16x32xf32> to vector<16xf32>
    %29 = vector.shape_cast %28 : vector<16xf32> to vector<16x1xf32>
    %cst_24 = arith.constant 0.0322580636 : f32
    %30 = vector.broadcast %cst_24 : f32 to vector<16x1xf32>
    %31 = arith.mulf %29, %30 : vector<16x1xf32>
    %32 = math.sqrt %31 : vector<16x1xf32>
    %cst_25 = arith.constant 9.99999997E-7 : f32
    %33 = vector.broadcast %cst_25 : f32 to vector<16x1xf32>
    %34 = arith.addf %32, %33 : vector<16x1xf32>
    %35 = tpu.reciprocal %34 : vector<16x1xf32> -> vector<16x1xf32>
    %36 = vector.broadcast %24 : vector<16x1xf32> to vector<16x32xf32>
    %37 = arith.subf %12, %36 : vector<16x32xf32>
    %38 = vector.broadcast %35 : vector<16x1xf32> to vector<16x32xf32>
    %39 = arith.mulf %37, %38 : vector<16x32xf32>
    %40 = vector.broadcast %18 : vector<1x32xf32> to vector<16x32xf32>
    %41 = arith.mulf %40, %39 : vector<16x32xf32>
    %42 = vector.broadcast %20 : vector<1x32xf32> to vector<16x32xf32>
    %43 = arith.addf %41, %42 : vector<16x32xf32>
    %c0_26 = arith.constant 0 : index
    %c0_27 = arith.constant 0 : index
    %c0_28 = arith.constant 0 : index
    %44 = vector.load %arg8[%c0_26, %c0_27, %c0_28] : memref<2x32x96xbf16, #tpu.memory_space<vmem>>, vector<1x32x96xbf16>
    %45 = vector.shape_cast %44 : vector<1x32x96xbf16> to vector<32x96xbf16>
    %c0_29 = arith.constant 0 : index
    %c0_30 = arith.constant 0 : index
    %c0_31 = arith.constant 0 : index
    %46 = vector.load %arg9[%c0_29, %c0_30, %c0_31] : memref<2x1x96xf32, #tpu.memory_space<vmem>>, vector<1x1x96xf32>
    %47 = vector.shape_cast %46 : vector<1x1x96xf32> to vector<1x96xf32>
    %48 = arith.truncf %43 : vector<16x32xf32> to vector<16x32xbf16>
    %cst_32 = arith.constant dense<0.000000e+00> : vector<16x96xf32>
    %49 = tpu.matmul %48, %45, %cst_32 {dimension_numbers = #tpu.dot_dimension_numbers<[1], [0], [0], [1], [0, 0, 1, 1], [], []>} : vector<16x32xbf16>, vector<32x96xbf16>, vector<16x96xf32> -> vector<16x96xf32>
    %50 = vector.broadcast %47 : vector<1x96xf32> to vector<16x96xf32>
    %51 = arith.addf %49, %50 : vector<16x96xf32>
    %52 = vector.extract_strided_slice %51 {offsets = [0, 0], sizes = [16, 32], strides = [1, 1]} : vector<16x96xf32> to vector<16x32xf32>
    %53 = vector.shape_cast %52 : vector<16x32xf32> to vector<2x8x32xf32>
    %54 = vector.extract_strided_slice %51 {offsets = [0, 32], sizes = [16, 32], strides = [1, 1]} : vector<16x96xf32> to vector<16x32xf32>
    %55 = vector.shape_cast %54 : vector<16x32xf32> to vector<2x8x32xf32>
    %56 = vector.extract_strided_slice %51 {offsets = [0, 64], sizes = [16, 32], strides = [1, 1]} : vector<16x96xf32> to vector<16x32xf32>
    %57 = vector.shape_cast %56 : vector<16x32xf32> to vector<2x8x32xf32>
    %58 = vector.extract_strided_slice %53 {offsets = [0, 0, 0], sizes = [2, 8, 8], strides = [1, 1, 1]} : vector<2x8x32xf32> to vector<2x8x8xf32>
    %59 = vector.extract_strided_slice %55 {offsets = [0, 0, 0], sizes = [2, 8, 8], strides = [1, 1, 1]} : vector<2x8x32xf32> to vector<2x8x8xf32>
    %60 = vector.extract_strided_slice %57 {offsets = [0, 0, 0], sizes = [2, 8, 8], strides = [1, 1, 1]} : vector<2x8x32xf32> to vector<2x8x8xf32>
    "tpu.trace_start"() <{level = 10 : i32, message = "bqd,bkd->bqk"}> : () -> ()
    %cst_33 = arith.constant dense<0.000000e+00> : vector<2x8x8xf32>
    %61 = tpu.matmul %58, %59, %cst_33 {dimension_numbers = #tpu.dot_dimension_numbers<[2], [2], [1], [1], [0, 0, 0, 1, 1, 1], [0], [0]>} : vector<2x8x8xf32>, vector<2x8x8xf32>, vector<2x8x8xf32> -> vector<2x8x8xf32>
    "tpu.trace_stop"() : () -> ()
    %cst_34 = arith.constant 0.353553385 : f32
    %62 = vector.broadcast %cst_34 : f32 to vector<2x8x8xf32>
    %63 = arith.mulf %61, %62 : vector<2x8x8xf32>
    %cst_35 = arith.constant 0.000000e+00 : f32
    %64 = vector.broadcast %cst_35 : f32 to vector<2x8x8xf32>
    %65 = arith.cmpf oeq, %15, %64 : vector<2x8x8xf32>
    %cst_36 = arith.constant -1.000000e+09 : f32
    %66 = vector.broadcast %cst_36 : f32 to vector<2x8x8xf32>
    %67 = arith.select %65, %66, %63 : vector<2x8x8xi1>, vector<2x8x8xf32>
    %cst_37 = arith.constant dense<0xFF800000> : vector<2x8xf32>
    %68 = vector.multi_reduction <maximumf>, %67, %cst_37 [2] : vector<2x8x8xf32> to vector<2x8xf32>
    %69 = vector.shape_cast %68 : vector<2x8xf32> to vector<2x8x1xf32>
    %70 = vector.broadcast %69 : vector<2x8x1xf32> to vector<2x8x8xf32>
    %71 = arith.subf %67, %70 : vector<2x8x8xf32>
    %72 = math.exp %71 : vector<2x8x8xf32>
    %cst_38 = arith.constant dense<0.000000e+00> : vector<2x8xf32>
    %73 = vector.multi_reduction <add>, %72, %cst_38 [2] : vector<2x8x8xf32> to vector<2x8xf32>
    %74 = vector.shape_cast %73 : vector<2x8xf32> to vector<2x8x1xf32>
    %75 = tpu.reciprocal %74 {approx = true} : vector<2x8x1xf32> -> vector<2x8x1xf32>
    %76 = vector.broadcast %75 : vector<2x8x1xf32> to vector<2x8x8xf32>
    %77 = arith.mulf %72, %76 : vector<2x8x8xf32>
    "tpu.trace_start"() <{level = 10 : i32, message = "bqk,bkd->bqd"}> : () -> ()
    %cst_39 = arith.constant dense<0.000000e+00> : vector<2x8x8xf32>
    %78 = tpu.matmul %77, %60, %cst_39 {dimension_numbers = #tpu.dot_dimension_numbers<[2], [1], [1], [2], [0, 0, 0, 1, 1, 2], [0], [0]>} : vector<2x8x8xf32>, vector<2x8x8xf32>, vector<2x8x8xf32> -> vector<2x8x8xf32>
    "tpu.trace_stop"() : () -> ()
    %79 = vector.extract_strided_slice %53 {offsets = [0, 0, 8], sizes = [2, 8, 8], strides = [1, 1, 1]} : vector<2x8x32xf32> to vector<2x8x8xf32>
    %80 = vector.extract_strided_slice %55 {offsets = [0, 0, 8], sizes = [2, 8, 8], strides = [1, 1, 1]} : vector<2x8x32xf32> to vector<2x8x8xf32>
    %81 = vector.extract_strided_slice %57 {offsets = [0, 0, 8], sizes = [2, 8, 8], strides = [1, 1, 1]} : vector<2x8x32xf32> to vector<2x8x8xf32>
    "tpu.trace_start"() <{level = 10 : i32, message = "bqd,bkd->bqk"}> : () -> ()
    %cst_40 = arith.constant dense<0.000000e+00> : vector<2x8x8xf32>
    %82 = tpu.matmul %79, %80, %cst_40 {dimension_numbers = #tpu.dot_dimension_numbers<[2], [2], [1], [1], [0, 0, 0, 1, 1, 1], [0], [0]>} : vector<2x8x8xf32>, vector<2x8x8xf32>, vector<2x8x8xf32> -> vector<2x8x8xf32>
    "tpu.trace_stop"() : () -> ()
    %cst_41 = arith.constant 0.353553385 : f32
    %83 = vector.broadcast %cst_41 : f32 to vector<2x8x8xf32>
    %84 = arith.mulf %82, %83 : vector<2x8x8xf32>
    %cst_42 = arith.constant 0.000000e+00 : f32
    %85 = vector.broadcast %cst_42 : f32 to vector<2x8x8xf32>
    %86 = arith.cmpf oeq, %15, %85 : vector<2x8x8xf32>
    %cst_43 = arith.constant -1.000000e+09 : f32
    %87 = vector.broadcast %cst_43 : f32 to vector<2x8x8xf32>
    %88 = arith.select %86, %87, %84 : vector<2x8x8xi1>, vector<2x8x8xf32>
    %cst_44 = arith.constant dense<0xFF800000> : vector<2x8xf32>
    %89 = vector.multi_reduction <maximumf>, %88, %cst_44 [2] : vector<2x8x8xf32> to vector<2x8xf32>
    %90 = vector.shape_cast %89 : vector<2x8xf32> to vector<2x8x1xf32>
    %91 = vector.broadcast %90 : vector<2x8x1xf32> to vector<2x8x8xf32>
    %92 = arith.subf %88, %91 : vector<2x8x8xf32>
    %93 = math.exp %92 : vector<2x8x8xf32>
    %cst_45 = arith.constant dense<0.000000e+00> : vector<2x8xf32>
    %94 = vector.multi_reduction <add>, %93, %cst_45 [2] : vector<2x8x8xf32> to vector<2x8xf32>
    %95 = vector.shape_cast %94 : vector<2x8xf32> to vector<2x8x1xf32>
    %96 = tpu.reciprocal %95 {approx = true} : vector<2x8x1xf32> -> vector<2x8x1xf32>
    %97 = vector.broadcast %96 : vector<2x8x1xf32> to vector<2x8x8xf32>
    %98 = arith.mulf %93, %97 : vector<2x8x8xf32>
    "tpu.trace_start"() <{level = 10 : i32, message = "bqk,bkd->bqd"}> : () -> ()
    %cst_46 = arith.constant dense<0.000000e+00> : vector<2x8x8xf32>
    %99 = tpu.matmul %98, %81, %cst_46 {dimension_numbers = #tpu.dot_dimension_numbers<[2], [1], [1], [2], [0, 0, 0, 1, 1, 2], [0], [0]>} : vector<2x8x8xf32>, vector<2x8x8xf32>, vector<2x8x8xf32> -> vector<2x8x8xf32>
    "tpu.trace_stop"() : () -> ()
    %100 = vector.extract_strided_slice %53 {offsets = [0, 0, 16], sizes = [2, 8, 8], strides = [1, 1, 1]} : vector<2x8x32xf32> to vector<2x8x8xf32>
    %101 = vector.extract_strided_slice %55 {offsets = [0, 0, 16], sizes = [2, 8, 8], strides = [1, 1, 1]} : vector<2x8x32xf32> to vector<2x8x8xf32>
    %102 = vector.extract_strided_slice %57 {offsets = [0, 0, 16], sizes = [2, 8, 8], strides = [1, 1, 1]} : vector<2x8x32xf32> to vector<2x8x8xf32>
    "tpu.trace_start"() <{level = 10 : i32, message = "bqd,bkd->bqk"}> : () -> ()
    %cst_47 = arith.constant dense<0.000000e+00> : vector<2x8x8xf32>
    %103 = tpu.matmul %100, %101, %cst_47 {dimension_numbers = #tpu.dot_dimension_numbers<[2], [2], [1], [1], [0, 0, 0, 1, 1, 1], [0], [0]>} : vector<2x8x8xf32>, vector<2x8x8xf32>, vector<2x8x8xf32> -> vector<2x8x8xf32>
    "tpu.trace_stop"() : () -> ()
    %cst_48 = arith.constant 0.353553385 : f32
    %104 = vector.broadcast %cst_48 : f32 to vector<2x8x8xf32>
    %105 = arith.mulf %103, %104 : vector<2x8x8xf32>
    %cst_49 = arith.constant 0.000000e+00 : f32
    %106 = vector.broadcast %cst_49 : f32 to vector<2x8x8xf32>
    %107 = arith.cmpf oeq, %15, %106 : vector<2x8x8xf32>
    %cst_50 = arith.constant -1.000000e+09 : f32
    %108 = vector.broadcast %cst_50 : f32 to vector<2x8x8xf32>
    %109 = arith.select %107, %108, %105 : vector<2x8x8xi1>, vector<2x8x8xf32>
    %cst_51 = arith.constant dense<0xFF800000> : vector<2x8xf32>
    %110 = vector.multi_reduction <maximumf>, %109, %cst_51 [2] : vector<2x8x8xf32> to vector<2x8xf32>
    %111 = vector.shape_cast %110 : vector<2x8xf32> to vector<2x8x1xf32>
    %112 = vector.broadcast %111 : vector<2x8x1xf32> to vector<2x8x8xf32>
    %113 = arith.subf %109, %112 : vector<2x8x8xf32>
    %114 = math.exp %113 : vector<2x8x8xf32>
    %cst_52 = arith.constant dense<0.000000e+00> : vector<2x8xf32>
    %115 = vector.multi_reduction <add>, %114, %cst_52 [2] : vector<2x8x8xf32> to vector<2x8xf32>
    %116 = vector.shape_cast %115 : vector<2x8xf32> to vector<2x8x1xf32>
    %117 = tpu.reciprocal %116 {approx = true} : vector<2x8x1xf32> -> vector<2x8x1xf32>
    %118 = vector.broadcast %117 : vector<2x8x1xf32> to vector<2x8x8xf32>
    %119 = arith.mulf %114, %118 : vector<2x8x8xf32>
    "tpu.trace_start"() <{level = 10 : i32, message = "bqk,bkd->bqd"}> : () -> ()
    %cst_53 = arith.constant dense<0.000000e+00> : vector<2x8x8xf32>
    %120 = tpu.matmul %119, %102, %cst_53 {dimension_numbers = #tpu.dot_dimension_numbers<[2], [1], [1], [2], [0, 0, 0, 1, 1, 2], [0], [0]>} : vector<2x8x8xf32>, vector<2x8x8xf32>, vector<2x8x8xf32> -> vector<2x8x8xf32>
    "tpu.trace_stop"() : () -> ()
    %121 = vector.extract_strided_slice %53 {offsets = [0, 0, 24], sizes = [2, 8, 8], strides = [1, 1, 1]} : vector<2x8x32xf32> to vector<2x8x8xf32>
    %122 = vector.extract_strided_slice %55 {offsets = [0, 0, 24], sizes = [2, 8, 8], strides = [1, 1, 1]} : vector<2x8x32xf32> to vector<2x8x8xf32>
    %123 = vector.extract_strided_slice %57 {offsets = [0, 0, 24], sizes = [2, 8, 8], strides = [1, 1, 1]} : vector<2x8x32xf32> to vector<2x8x8xf32>
    "tpu.trace_start"() <{level = 10 : i32, message = "bqd,bkd->bqk"}> : () -> ()
    %cst_54 = arith.constant dense<0.000000e+00> : vector<2x8x8xf32>
    %124 = tpu.matmul %121, %122, %cst_54 {dimension_numbers = #tpu.dot_dimension_numbers<[2], [2], [1], [1], [0, 0, 0, 1, 1, 1], [0], [0]>} : vector<2x8x8xf32>, vector<2x8x8xf32>, vector<2x8x8xf32> -> vector<2x8x8xf32>
    "tpu.trace_stop"() : () -> ()
    %cst_55 = arith.constant 0.353553385 : f32
    %125 = vector.broadcast %cst_55 : f32 to vector<2x8x8xf32>
    %126 = arith.mulf %124, %125 : vector<2x8x8xf32>
    %cst_56 = arith.constant 0.000000e+00 : f32
    %127 = vector.broadcast %cst_56 : f32 to vector<2x8x8xf32>
    %128 = arith.cmpf oeq, %15, %127 : vector<2x8x8xf32>
    %cst_57 = arith.constant -1.000000e+09 : f32
    %129 = vector.broadcast %cst_57 : f32 to vector<2x8x8xf32>
    %130 = arith.select %128, %129, %126 : vector<2x8x8xi1>, vector<2x8x8xf32>
    %cst_58 = arith.constant dense<0xFF800000> : vector<2x8xf32>
    %131 = vector.multi_reduction <maximumf>, %130, %cst_58 [2] : vector<2x8x8xf32> to vector<2x8xf32>
    %132 = vector.shape_cast %131 : vector<2x8xf32> to vector<2x8x1xf32>
    %133 = vector.broadcast %132 : vector<2x8x1xf32> to vector<2x8x8xf32>
    %134 = arith.subf %130, %133 : vector<2x8x8xf32>
    %135 = math.exp %134 : vector<2x8x8xf32>
    %cst_59 = arith.constant dense<0.000000e+00> : vector<2x8xf32>
    %136 = vector.multi_reduction <add>, %135, %cst_59 [2] : vector<2x8x8xf32> to vector<2x8xf32>
    %137 = vector.shape_cast %136 : vector<2x8xf32> to vector<2x8x1xf32>
    %138 = tpu.reciprocal %137 {approx = true} : vector<2x8x1xf32> -> vector<2x8x1xf32>
    %139 = vector.broadcast %138 : vector<2x8x1xf32> to vector<2x8x8xf32>
    %140 = arith.mulf %135, %139 : vector<2x8x8xf32>
    "tpu.trace_start"() <{level = 10 : i32, message = "bqk,bkd->bqd"}> : () -> ()
    %cst_60 = arith.constant dense<0.000000e+00> : vector<2x8x8xf32>
    %141 = tpu.matmul %140, %123, %cst_60 {dimension_numbers = #tpu.dot_dimension_numbers<[2], [1], [1], [2], [0, 0, 0, 1, 1, 2], [0], [0]>} : vector<2x8x8xf32>, vector<2x8x8xf32>, vector<2x8x8xf32> -> vector<2x8x8xf32>
    "tpu.trace_stop"() : () -> ()
    %142 = tpu.concatenate %78, %99, %120, %141 in 2 : vector<2x8x8xf32>, vector<2x8x8xf32>, vector<2x8x8xf32>, vector<2x8x8xf32> -> vector<2x8x32xf32>
    %143 = vector.shape_cast %142 : vector<2x8x32xf32> to vector<16x32xf32>
    %c0_61 = arith.constant 0 : index
    %c0_62 = arith.constant 0 : index
    %c0_63 = arith.constant 0 : index
    %144 = vector.load %arg10[%c0_61, %c0_62, %c0_63] : memref<2x32x32xbf16, #tpu.memory_space<vmem>>, vector<1x32x32xbf16>
    %145 = vector.shape_cast %144 : vector<1x32x32xbf16> to vector<32x32xbf16>
    %c0_64 = arith.constant 0 : index
    %c0_65 = arith.constant 0 : index
    %c0_66 = arith.constant 0 : index
    %146 = vector.load %arg11[%c0_64, %c0_65, %c0_66] : memref<2x1x32xf32, #tpu.memory_space<vmem>>, vector<1x1x32xf32>
    %147 = vector.shape_cast %146 : vector<1x1x32xf32> to vector<1x32xf32>
    %148 = arith.truncf %143 : vector<16x32xf32> to vector<16x32xbf16>
    %cst_67 = arith.constant dense<0.000000e+00> : vector<16x32xf32>
    %149 = tpu.matmul %148, %145, %cst_67 {dimension_numbers = #tpu.dot_dimension_numbers<[1], [0], [0], [1], [0, 0, 1, 1], [], []>} : vector<16x32xbf16>, vector<32x32xbf16>, vector<16x32xf32> -> vector<16x32xf32>
    %150 = vector.broadcast %147 : vector<1x32xf32> to vector<16x32xf32>
    %151 = arith.addf %149, %150 : vector<16x32xf32>
    %152 = arith.addf %12, %151 : vector<16x32xf32>
    %c0_68 = arith.constant 0 : index
    %c0_69 = arith.constant 0 : index
    %c0_70 = arith.constant 0 : index
    %153 = vector.load %arg12[%c0_68, %c0_69, %c0_70] : memref<2x1x32xf32, #tpu.memory_space<vmem>>, vector<1x1x32xf32>
    %154 = vector.shape_cast %153 : vector<1x1x32xf32> to vector<1x32xf32>
    %c0_71 = arith.constant 0 : index
    %c0_72 = arith.constant 0 : index
    %c0_73 = arith.constant 0 : index
    %155 = vector.load %arg13[%c0_71, %c0_72, %c0_73] : memref<2x1x32xf32, #tpu.memory_space<vmem>>, vector<1x1x32xf32>
    %156 = vector.shape_cast %155 : vector<1x1x32xf32> to vector<1x32xf32>
    %cst_74 = arith.constant dense<0.000000e+00> : vector<16xf32>
    %157 = vector.multi_reduction <add>, %152, %cst_74 [1] : vector<16x32xf32> to vector<16xf32>
    %158 = vector.shape_cast %157 : vector<16xf32> to vector<16x1xf32>
    %cst_75 = arith.constant 3.200000e+01 : f32
    %159 = vector.broadcast %cst_75 : f32 to vector<16x1xf32>
    %160 = arith.divf %158, %159 : vector<16x1xf32>
    %161 = vector.broadcast %160 : vector<16x1xf32> to vector<16x32xf32>
    %162 = arith.subf %152, %161 : vector<16x32xf32>
    %163 = arith.mulf %162, %162 : vector<16x32xf32>
    %cst_76 = arith.constant dense<0.000000e+00> : vector<16xf32>
    %164 = vector.multi_reduction <add>, %163, %cst_76 [1] : vector<16x32xf32> to vector<16xf32>
    %165 = vector.shape_cast %164 : vector<16xf32> to vector<16x1xf32>
    %cst_77 = arith.constant 0.0322580636 : f32
    %166 = vector.broadcast %cst_77 : f32 to vector<16x1xf32>
    %167 = arith.mulf %165, %166 : vector<16x1xf32>
    %168 = math.sqrt %167 : vector<16x1xf32>
    %cst_78 = arith.constant 9.99999997E-7 : f32
    %169 = vector.broadcast %cst_78 : f32 to vector<16x1xf32>
    %170 = arith.addf %168, %169 : vector<16x1xf32>
    %171 = tpu.reciprocal %170 : vector<16x1xf32> -> vector<16x1xf32>
    %172 = vector.broadcast %160 : vector<16x1xf32> to vector<16x32xf32>
    %173 = arith.subf %152, %172 : vector<16x32xf32>
    %174 = vector.broadcast %171 : vector<16x1xf32> to vector<16x32xf32>
    %175 = arith.mulf %173, %174 : vector<16x32xf32>
    %176 = vector.broadcast %154 : vector<1x32xf32> to vector<16x32xf32>
    %177 = arith.mulf %176, %175 : vector<16x32xf32>
    %178 = vector.broadcast %156 : vector<1x32xf32> to vector<16x32xf32>
    %179 = arith.addf %177, %178 : vector<16x32xf32>
    %c0_79 = arith.constant 0 : index
    %c0_80 = arith.constant 0 : index
    %c0_81 = arith.constant 0 : index
    %180 = vector.load %arg14[%c0_79, %c0_80, %c0_81] : memref<2x32x32xbf16, #tpu.memory_space<vmem>>, vector<1x32x32xbf16>
    %181 = vector.shape_cast %180 : vector<1x32x32xbf16> to vector<32x32xbf16>
    %c0_82 = arith.constant 0 : index
    %c0_83 = arith.constant 0 : index
    %c0_84 = arith.constant 0 : index
    %182 = vector.load %arg15[%c0_82, %c0_83, %c0_84] : memref<2x1x32xf32, #tpu.memory_space<vmem>>, vector<1x1x32xf32>
    %183 = vector.shape_cast %182 : vector<1x1x32xf32> to vector<1x32xf32>
    %184 = arith.truncf %179 : vector<16x32xf32> to vector<16x32xbf16>
    %cst_85 = arith.constant dense<0.000000e+00> : vector<16x32xf32>
    %185 = tpu.matmul %184, %181, %cst_85 {dimension_numbers = #tpu.dot_dimension_numbers<[1], [0], [0], [1], [0, 0, 1, 1], [], []>} : vector<16x32xbf16>, vector<32x32xbf16>, vector<16x32xf32> -> vector<16x32xf32>
    %186 = vector.broadcast %183 : vector<1x32xf32> to vector<16x32xf32>
    %187 = arith.addf %185, %186 : vector<16x32xf32>
    %188 = vector.shape_cast %187 : vector<16x32xf32> to vector<2x8x32xf32>
    %c0_86 = arith.constant 0 : index
    %c0_87 = arith.constant 0 : index
    %c0_88 = arith.constant 0 : index
    %189 = vector.load %arg16[%c0_86, %c0_87, %c0_88] : memref<2x32x64xbf16, #tpu.memory_space<vmem>>, vector<1x32x64xbf16>
    %190 = vector.shape_cast %189 : vector<1x32x64xbf16> to vector<32x64xbf16>
    %c0_89 = arith.constant 0 : index
    %c0_90 = arith.constant 0 : index
    %c0_91 = arith.constant 0 : index
    %191 = vector.load %arg17[%c0_89, %c0_90, %c0_91] : memref<2x1x64xf32, #tpu.memory_space<vmem>>, vector<1x1x64xf32>
    %192 = vector.shape_cast %191 : vector<1x1x64xf32> to vector<1x64xf32>
    %193 = arith.truncf %14 : vector<16x32xf32> to vector<16x32xbf16>
    %cst_92 = arith.constant dense<0.000000e+00> : vector<16x64xf32>
    %194 = tpu.matmul %193, %190, %cst_92 {dimension_numbers = #tpu.dot_dimension_numbers<[1], [0], [0], [1], [0, 0, 1, 1], [], []>} : vector<16x32xbf16>, vector<32x64xbf16>, vector<16x64xf32> -> vector<16x64xf32>
    %195 = vector.broadcast %192 : vector<1x64xf32> to vector<16x64xf32>
    %196 = arith.addf %194, %195 : vector<16x64xf32>
    %197 = vector.shape_cast %196 : vector<16x64xf32> to vector<2x8x64xf32>
    %198 = vector.extract_strided_slice %197 {offsets = [0, 0, 0], sizes = [2, 8, 32], strides = [1, 1, 1]} : vector<2x8x64xf32> to vector<2x8x32xf32>
    %199 = vector.extract_strided_slice %197 {offsets = [0, 0, 32], sizes = [2, 8, 32], strides = [1, 1, 1]} : vector<2x8x64xf32> to vector<2x8x32xf32>
    %200 = vector.extract_strided_slice %188 {offsets = [0, 0, 0], sizes = [2, 8, 8], strides = [1, 1, 1]} : vector<2x8x32xf32> to vector<2x8x8xf32>
    %201 = vector.extract_strided_slice %198 {offsets = [0, 0, 0], sizes = [2, 8, 8], strides = [1, 1, 1]} : vector<2x8x32xf32> to vector<2x8x8xf32>
    %202 = vector.extract_strided_slice %199 {offsets = [0, 0, 0], sizes = [2, 8, 8], strides = [1, 1, 1]} : vector<2x8x32xf32> to vector<2x8x8xf32>
    "tpu.trace_start"() <{level = 10 : i32, message = "bqd,bkd->bqk"}> : () -> ()
    %cst_93 = arith.constant dense<0.000000e+00> : vector<2x8x8xf32>
    %203 = tpu.matmul %200, %201, %cst_93 {dimension_numbers = #tpu.dot_dimension_numbers<[2], [2], [1], [1], [0, 0, 0, 1, 1, 1], [0], [0]>} : vector<2x8x8xf32>, vector<2x8x8xf32>, vector<2x8x8xf32> -> vector<2x8x8xf32>
    "tpu.trace_stop"() : () -> ()
    %cst_94 = arith.constant 0.353553385 : f32
    %204 = vector.broadcast %cst_94 : f32 to vector<2x8x8xf32>
    %205 = arith.mulf %203, %204 : vector<2x8x8xf32>
    %cst_95 = arith.constant 0.000000e+00 : f32
    %206 = vector.broadcast %cst_95 : f32 to vector<2x8x8xf32>
    %207 = arith.cmpf oeq, %16, %206 : vector<2x8x8xf32>
    %cst_96 = arith.constant -1.000000e+09 : f32
    %208 = vector.broadcast %cst_96 : f32 to vector<2x8x8xf32>
    %209 = arith.select %207, %208, %205 : vector<2x8x8xi1>, vector<2x8x8xf32>
    %cst_97 = arith.constant dense<0xFF800000> : vector<2x8xf32>
    %210 = vector.multi_reduction <maximumf>, %209, %cst_97 [2] : vector<2x8x8xf32> to vector<2x8xf32>
    %211 = vector.shape_cast %210 : vector<2x8xf32> to vector<2x8x1xf32>
    %212 = vector.broadcast %211 : vector<2x8x1xf32> to vector<2x8x8xf32>
    %213 = arith.subf %209, %212 : vector<2x8x8xf32>
    %214 = math.exp %213 : vector<2x8x8xf32>
    %cst_98 = arith.constant dense<0.000000e+00> : vector<2x8xf32>
    %215 = vector.multi_reduction <add>, %214, %cst_98 [2] : vector<2x8x8xf32> to vector<2x8xf32>
    %216 = vector.shape_cast %215 : vector<2x8xf32> to vector<2x8x1xf32>
    %217 = tpu.reciprocal %216 {approx = true} : vector<2x8x1xf32> -> vector<2x8x1xf32>
    %218 = vector.broadcast %217 : vector<2x8x1xf32> to vector<2x8x8xf32>
    %219 = arith.mulf %214, %218 : vector<2x8x8xf32>
    "tpu.trace_start"() <{level = 10 : i32, message = "bqk,bkd->bqd"}> : () -> ()
    %cst_99 = arith.constant dense<0.000000e+00> : vector<2x8x8xf32>
    %220 = tpu.matmul %219, %202, %cst_99 {dimension_numbers = #tpu.dot_dimension_numbers<[2], [1], [1], [2], [0, 0, 0, 1, 1, 2], [0], [0]>} : vector<2x8x8xf32>, vector<2x8x8xf32>, vector<2x8x8xf32> -> vector<2x8x8xf32>
    "tpu.trace_stop"() : () -> ()
    %221 = vector.extract_strided_slice %188 {offsets = [0, 0, 8], sizes = [2, 8, 8], strides = [1, 1, 1]} : vector<2x8x32xf32> to vector<2x8x8xf32>
    %222 = vector.extract_strided_slice %198 {offsets = [0, 0, 8], sizes = [2, 8, 8], strides = [1, 1, 1]} : vector<2x8x32xf32> to vector<2x8x8xf32>
    %223 = vector.extract_strided_slice %199 {offsets = [0, 0, 8], sizes = [2, 8, 8], strides = [1, 1, 1]} : vector<2x8x32xf32> to vector<2x8x8xf32>
    "tpu.trace_start"() <{level = 10 : i32, message = "bqd,bkd->bqk"}> : () -> ()
    %cst_100 = arith.constant dense<0.000000e+00> : vector<2x8x8xf32>
    %224 = tpu.matmul %221, %222, %cst_100 {dimension_numbers = #tpu.dot_dimension_numbers<[2], [2], [1], [1], [0, 0, 0, 1, 1, 1], [0], [0]>} : vector<2x8x8xf32>, vector<2x8x8xf32>, vector<2x8x8xf32> -> vector<2x8x8xf32>
    "tpu.trace_stop"() : () -> ()
    %cst_101 = arith.constant 0.353553385 : f32
    %225 = vector.broadcast %cst_101 : f32 to vector<2x8x8xf32>
    %226 = arith.mulf %224, %225 : vector<2x8x8xf32>
    %cst_102 = arith.constant 0.000000e+00 : f32
    %227 = vector.broadcast %cst_102 : f32 to vector<2x8x8xf32>
    %228 = arith.cmpf oeq, %16, %227 : vector<2x8x8xf32>
    %cst_103 = arith.constant -1.000000e+09 : f32
    %229 = vector.broadcast %cst_103 : f32 to vector<2x8x8xf32>
    %230 = arith.select %228, %229, %226 : vector<2x8x8xi1>, vector<2x8x8xf32>
    %cst_104 = arith.constant dense<0xFF800000> : vector<2x8xf32>
    %231 = vector.multi_reduction <maximumf>, %230, %cst_104 [2] : vector<2x8x8xf32> to vector<2x8xf32>
    %232 = vector.shape_cast %231 : vector<2x8xf32> to vector<2x8x1xf32>
    %233 = vector.broadcast %232 : vector<2x8x1xf32> to vector<2x8x8xf32>
    %234 = arith.subf %230, %233 : vector<2x8x8xf32>
    %235 = math.exp %234 : vector<2x8x8xf32>
    %cst_105 = arith.constant dense<0.000000e+00> : vector<2x8xf32>
    %236 = vector.multi_reduction <add>, %235, %cst_105 [2] : vector<2x8x8xf32> to vector<2x8xf32>
    %237 = vector.shape_cast %236 : vector<2x8xf32> to vector<2x8x1xf32>
    %238 = tpu.reciprocal %237 {approx = true} : vector<2x8x1xf32> -> vector<2x8x1xf32>
    %239 = vector.broadcast %238 : vector<2x8x1xf32> to vector<2x8x8xf32>
    %240 = arith.mulf %235, %239 : vector<2x8x8xf32>
    "tpu.trace_start"() <{level = 10 : i32, message = "bqk,bkd->bqd"}> : () -> ()
    %cst_106 = arith.constant dense<0.000000e+00> : vector<2x8x8xf32>
    %241 = tpu.matmul %240, %223, %cst_106 {dimension_numbers = #tpu.dot_dimension_numbers<[2], [1], [1], [2], [0, 0, 0, 1, 1, 2], [0], [0]>} : vector<2x8x8xf32>, vector<2x8x8xf32>, vector<2x8x8xf32> -> vector<2x8x8xf32>
    "tpu.trace_stop"() : () -> ()
    %242 = vector.extract_strided_slice %188 {offsets = [0, 0, 16], sizes = [2, 8, 8], strides = [1, 1, 1]} : vector<2x8x32xf32> to vector<2x8x8xf32>
    %243 = vector.extract_strided_slice %198 {offsets = [0, 0, 16], sizes = [2, 8, 8], strides = [1, 1, 1]} : vector<2x8x32xf32> to vector<2x8x8xf32>
    %244 = vector.extract_strided_slice %199 {offsets = [0, 0, 16], sizes = [2, 8, 8], strides = [1, 1, 1]} : vector<2x8x32xf32> to vector<2x8x8xf32>
    "tpu.trace_start"() <{level = 10 : i32, message = "bqd,bkd->bqk"}> : () -> ()
    %cst_107 = arith.constant dense<0.000000e+00> : vector<2x8x8xf32>
    %245 = tpu.matmul %242, %243, %cst_107 {dimension_numbers = #tpu.dot_dimension_numbers<[2], [2], [1], [1], [0, 0, 0, 1, 1, 1], [0], [0]>} : vector<2x8x8xf32>, vector<2x8x8xf32>, vector<2x8x8xf32> -> vector<2x8x8xf32>
    "tpu.trace_stop"() : () -> ()
    %cst_108 = arith.constant 0.353553385 : f32
    %246 = vector.broadcast %cst_108 : f32 to vector<2x8x8xf32>
    %247 = arith.mulf %245, %246 : vector<2x8x8xf32>
    %cst_109 = arith.constant 0.000000e+00 : f32
    %248 = vector.broadcast %cst_109 : f32 to vector<2x8x8xf32>
    %249 = arith.cmpf oeq, %16, %248 : vector<2x8x8xf32>
    %cst_110 = arith.constant -1.000000e+09 : f32
    %250 = vector.broadcast %cst_110 : f32 to vector<2x8x8xf32>
    %251 = arith.select %249, %250, %247 : vector<2x8x8xi1>, vector<2x8x8xf32>
    %cst_111 = arith.constant dense<0xFF800000> : vector<2x8xf32>
    %252 = vector.multi_reduction <maximumf>, %251, %cst_111 [2] : vector<2x8x8xf32> to vector<2x8xf32>
    %253 = vector.shape_cast %252 : vector<2x8xf32> to vector<2x8x1xf32>
    %254 = vector.broadcast %253 : vector<2x8x1xf32> to vector<2x8x8xf32>
    %255 = arith.subf %251, %254 : vector<2x8x8xf32>
    %256 = math.exp %255 : vector<2x8x8xf32>
    %cst_112 = arith.constant dense<0.000000e+00> : vector<2x8xf32>
    %257 = vector.multi_reduction <add>, %256, %cst_112 [2] : vector<2x8x8xf32> to vector<2x8xf32>
    %258 = vector.shape_cast %257 : vector<2x8xf32> to vector<2x8x1xf32>
    %259 = tpu.reciprocal %258 {approx = true} : vector<2x8x1xf32> -> vector<2x8x1xf32>
    %260 = vector.broadcast %259 : vector<2x8x1xf32> to vector<2x8x8xf32>
    %261 = arith.mulf %256, %260 : vector<2x8x8xf32>
    "tpu.trace_start"() <{level = 10 : i32, message = "bqk,bkd->bqd"}> : () -> ()
    %cst_113 = arith.constant dense<0.000000e+00> : vector<2x8x8xf32>
    %262 = tpu.matmul %261, %244, %cst_113 {dimension_numbers = #tpu.dot_dimension_numbers<[2], [1], [1], [2], [0, 0, 0, 1, 1, 2], [0], [0]>} : vector<2x8x8xf32>, vector<2x8x8xf32>, vector<2x8x8xf32> -> vector<2x8x8xf32>
    "tpu.trace_stop"() : () -> ()
    %263 = vector.extract_strided_slice %188 {offsets = [0, 0, 24], sizes = [2, 8, 8], strides = [1, 1, 1]} : vector<2x8x32xf32> to vector<2x8x8xf32>
    %264 = vector.extract_strided_slice %198 {offsets = [0, 0, 24], sizes = [2, 8, 8], strides = [1, 1, 1]} : vector<2x8x32xf32> to vector<2x8x8xf32>
    %265 = vector.extract_strided_slice %199 {offsets = [0, 0, 24], sizes = [2, 8, 8], strides = [1, 1, 1]} : vector<2x8x32xf32> to vector<2x8x8xf32>
    "tpu.trace_start"() <{level = 10 : i32, message = "bqd,bkd->bqk"}> : () -> ()
    %cst_114 = arith.constant dense<0.000000e+00> : vector<2x8x8xf32>
    %266 = tpu.matmul %263, %264, %cst_114 {dimension_numbers = #tpu.dot_dimension_numbers<[2], [2], [1], [1], [0, 0, 0, 1, 1, 1], [0], [0]>} : vector<2x8x8xf32>, vector<2x8x8xf32>, vector<2x8x8xf32> -> vector<2x8x8xf32>
    "tpu.trace_stop"() : () -> ()
    %cst_115 = arith.constant 0.353553385 : f32
    %267 = vector.broadcast %cst_115 : f32 to vector<2x8x8xf32>
    %268 = arith.mulf %266, %267 : vector<2x8x8xf32>
    %cst_116 = arith.constant 0.000000e+00 : f32
    %269 = vector.broadcast %cst_116 : f32 to vector<2x8x8xf32>
    %270 = arith.cmpf oeq, %16, %269 : vector<2x8x8xf32>
    %cst_117 = arith.constant -1.000000e+09 : f32
    %271 = vector.broadcast %cst_117 : f32 to vector<2x8x8xf32>
    %272 = arith.select %270, %271, %268 : vector<2x8x8xi1>, vector<2x8x8xf32>
    %cst_118 = arith.constant dense<0xFF800000> : vector<2x8xf32>
    %273 = vector.multi_reduction <maximumf>, %272, %cst_118 [2] : vector<2x8x8xf32> to vector<2x8xf32>
    %274 = vector.shape_cast %273 : vector<2x8xf32> to vector<2x8x1xf32>
    %275 = vector.broadcast %274 : vector<2x8x1xf32> to vector<2x8x8xf32>
    %276 = arith.subf %272, %275 : vector<2x8x8xf32>
    %277 = math.exp %276 : vector<2x8x8xf32>
    %cst_119 = arith.constant dense<0.000000e+00> : vector<2x8xf32>
    %278 = vector.multi_reduction <add>, %277, %cst_119 [2] : vector<2x8x8xf32> to vector<2x8xf32>
    %279 = vector.shape_cast %278 : vector<2x8xf32> to vector<2x8x1xf32>
    %280 = tpu.reciprocal %279 {approx = true} : vector<2x8x1xf32> -> vector<2x8x1xf32>
    %281 = vector.broadcast %280 : vector<2x8x1xf32> to vector<2x8x8xf32>
    %282 = arith.mulf %277, %281 : vector<2x8x8xf32>
    "tpu.trace_start"() <{level = 10 : i32, message = "bqk,bkd->bqd"}> : () -> ()
    %cst_120 = arith.constant dense<0.000000e+00> : vector<2x8x8xf32>
    %283 = tpu.matmul %282, %265, %cst_120 {dimension_numbers = #tpu.dot_dimension_numbers<[2], [1], [1], [2], [0, 0, 0, 1, 1, 2], [0], [0]>} : vector<2x8x8xf32>, vector<2x8x8xf32>, vector<2x8x8xf32> -> vector<2x8x8xf32>
    "tpu.trace_stop"() : () -> ()
    %284 = tpu.concatenate %220, %241, %262, %283 in 2 : vector<2x8x8xf32>, vector<2x8x8xf32>, vector<2x8x8xf32>, vector<2x8x8xf32> -> vector<2x8x32xf32>
    %285 = vector.shape_cast %284 : vector<2x8x32xf32> to vector<16x32xf32>
    %c0_121 = arith.constant 0 : index
    %c0_122 = arith.constant 0 : index
    %c0_123 = arith.constant 0 : index
    %286 = vector.load %arg18[%c0_121, %c0_122, %c0_123] : memref<2x32x32xbf16, #tpu.memory_space<vmem>>, vector<1x32x32xbf16>
    %287 = vector.shape_cast %286 : vector<1x32x32xbf16> to vector<32x32xbf16>
    %c0_124 = arith.constant 0 : index
    %c0_125 = arith.constant 0 : index
    %c0_126 = arith.constant 0 : index
    %288 = vector.load %arg19[%c0_124, %c0_125, %c0_126] : memref<2x1x32xf32, #tpu.memory_space<vmem>>, vector<1x1x32xf32>
    %289 = vector.shape_cast %288 : vector<1x1x32xf32> to vector<1x32xf32>
    %290 = arith.truncf %285 : vector<16x32xf32> to vector<16x32xbf16>
    %cst_127 = arith.constant dense<0.000000e+00> : vector<16x32xf32>
    %291 = tpu.matmul %290, %287, %cst_127 {dimension_numbers = #tpu.dot_dimension_numbers<[1], [0], [0], [1], [0, 0, 1, 1], [], []>} : vector<16x32xbf16>, vector<32x32xbf16>, vector<16x32xf32> -> vector<16x32xf32>
    %292 = vector.broadcast %289 : vector<1x32xf32> to vector<16x32xf32>
    %293 = arith.addf %291, %292 : vector<16x32xf32>
    %294 = arith.addf %152, %293 : vector<16x32xf32>
    %c0_128 = arith.constant 0 : index
    %c0_129 = arith.constant 0 : index
    %c0_130 = arith.constant 0 : index
    %295 = vector.load %arg20[%c0_128, %c0_129, %c0_130] : memref<2x1x32xf32, #tpu.memory_space<vmem>>, vector<1x1x32xf32>
    %296 = vector.shape_cast %295 : vector<1x1x32xf32> to vector<1x32xf32>
    %c0_131 = arith.constant 0 : index
    %c0_132 = arith.constant 0 : index
    %c0_133 = arith.constant 0 : index
    %297 = vector.load %arg21[%c0_131, %c0_132, %c0_133] : memref<2x1x32xf32, #tpu.memory_space<vmem>>, vector<1x1x32xf32>
    %298 = vector.shape_cast %297 : vector<1x1x32xf32> to vector<1x32xf32>
    %cst_134 = arith.constant dense<0.000000e+00> : vector<16xf32>
    %299 = vector.multi_reduction <add>, %294, %cst_134 [1] : vector<16x32xf32> to vector<16xf32>
    %300 = vector.shape_cast %299 : vector<16xf32> to vector<16x1xf32>
    %cst_135 = arith.constant 3.200000e+01 : f32
    %301 = vector.broadcast %cst_135 : f32 to vector<16x1xf32>
    %302 = arith.divf %300, %301 : vector<16x1xf32>
    %303 = vector.broadcast %302 : vector<16x1xf32> to vector<16x32xf32>
    %304 = arith.subf %294, %303 : vector<16x32xf32>
    %305 = arith.mulf %304, %304 : vector<16x32xf32>
    %cst_136 = arith.constant dense<0.000000e+00> : vector<16xf32>
    %306 = vector.multi_reduction <add>, %305, %cst_136 [1] : vector<16x32xf32> to vector<16xf32>
    %307 = vector.shape_cast %306 : vector<16xf32> to vector<16x1xf32>
    %cst_137 = arith.constant 0.0322580636 : f32
    %308 = vector.broadcast %cst_137 : f32 to vector<16x1xf32>
    %309 = arith.mulf %307, %308 : vector<16x1xf32>
    %310 = math.sqrt %309 : vector<16x1xf32>
    %cst_138 = arith.constant 9.99999997E-7 : f32
    %311 = vector.broadcast %cst_138 : f32 to vector<16x1xf32>
    %312 = arith.addf %310, %311 : vector<16x1xf32>
    %313 = tpu.reciprocal %312 : vector<16x1xf32> -> vector<16x1xf32>
    %314 = vector.broadcast %302 : vector<16x1xf32> to vector<16x32xf32>
    %315 = arith.subf %294, %314 : vector<16x32xf32>
    %316 = vector.broadcast %313 : vector<16x1xf32> to vector<16x32xf32>
    %317 = arith.mulf %315, %316 : vector<16x32xf32>
    %318 = vector.broadcast %296 : vector<1x32xf32> to vector<16x32xf32>
    %319 = arith.mulf %318, %317 : vector<16x32xf32>
    %320 = vector.broadcast %298 : vector<1x32xf32> to vector<16x32xf32>
    %321 = arith.addf %319, %320 : vector<16x32xf32>
    %c0_139 = arith.constant 0 : index
    %c0_140 = arith.constant 0 : index
    %c0_141 = arith.constant 0 : index
    %322 = vector.load %arg22[%c0_139, %c0_140, %c0_141] : memref<2x32x2048xbf16, #tpu.memory_space<vmem>>, vector<1x32x2048xbf16>
    %323 = vector.shape_cast %322 : vector<1x32x2048xbf16> to vector<32x2048xbf16>
    %c0_142 = arith.constant 0 : index
    %c0_143 = arith.constant 0 : index
    %c0_144 = arith.constant 0 : index
    %324 = vector.load %arg23[%c0_142, %c0_143, %c0_144] : memref<2x1x2048xf32, #tpu.memory_space<vmem>>, vector<1x1x2048xf32>
    %325 = vector.shape_cast %324 : vector<1x1x2048xf32> to vector<1x2048xf32>
    %326 = arith.truncf %321 : vector<16x32xf32> to vector<16x32xbf16>
    %cst_145 = arith.constant dense<0.000000e+00> : vector<16x2048xf32>
    %327 = tpu.matmul %326, %323, %cst_145 {dimension_numbers = #tpu.dot_dimension_numbers<[1], [0], [0], [1], [0, 0, 1, 1], [], []>} : vector<16x32xbf16>, vector<32x2048xbf16>, vector<16x2048xf32> -> vector<16x2048xf32>
    %328 = vector.broadcast %325 : vector<1x2048xf32> to vector<16x2048xf32>
    %329 = arith.addf %327, %328 : vector<16x2048xf32>
    %cst_146 = arith.constant 0.000000e+00 : f32
    %330 = vector.broadcast %cst_146 : f32 to vector<16x2048xf32>
    %331 = arith.maximumf %329, %330 : vector<16x2048xf32>
    %c0_147 = arith.constant 0 : index
    %c0_148 = arith.constant 0 : index
    %c0_149 = arith.constant 0 : index
    %332 = vector.load %arg24[%c0_147, %c0_148, %c0_149] : memref<2x2048x32xbf16, #tpu.memory_space<vmem>>, vector<1x2048x32xbf16>
    %333 = vector.shape_cast %332 : vector<1x2048x32xbf16> to vector<2048x32xbf16>
    %c0_150 = arith.constant 0 : index
    %c0_151 = arith.constant 0 : index
    %c0_152 = arith.constant 0 : index
    %334 = vector.load %arg25[%c0_150, %c0_151, %c0_152] : memref<2x1x32xf32, #tpu.memory_space<vmem>>, vector<1x1x32xf32>
    %335 = vector.shape_cast %334 : vector<1x1x32xf32> to vector<1x32xf32>
    %336 = arith.truncf %331 : vector<16x2048xf32> to vector<16x2048xbf16>
    %cst_153 = arith.constant dense<0.000000e+00> : vector<16x32xf32>
    %337 = tpu.matmul %336, %333, %cst_153 {dimension_numbers = #tpu.dot_dimension_numbers<[1], [0], [0], [1], [0, 0, 1, 1], [], []>} : vector<16x2048xbf16>, vector<2048x32xbf16>, vector<16x32xf32> -> vector<16x32xf32>
    %338 = vector.broadcast %335 : vector<1x32xf32> to vector<16x32xf32>
    %339 = arith.addf %337, %338 : vector<16x32xf32>
    %340 = arith.addf %294, %339 : vector<16x32xf32>
    %c1 = arith.constant 1 : index
    %c0_154 = arith.constant 0 : index
    %c0_155 = arith.constant 0 : index
    %341 = vector.load %arg6[%c1, %c0_154, %c0_155] : memref<2x1x32xf32, #tpu.memory_space<vmem>>, vector<1x1x32xf32>
    %342 = vector.shape_cast %341 : vector<1x1x32xf32> to vector<1x32xf32>
    %c1_156 = arith.constant 1 : index
    %c0_157 = arith.constant 0 : index
    %c0_158 = arith.constant 0 : index
    %343 = vector.load %arg7[%c1_156, %c0_157, %c0_158] : memref<2x1x32xf32, #tpu.memory_space<vmem>>, vector<1x1x32xf32>
    %344 = vector.shape_cast %343 : vector<1x1x32xf32> to vector<1x32xf32>
    %cst_159 = arith.constant dense<0.000000e+00> : vector<16xf32>
    %345 = vector.multi_reduction <add>, %340, %cst_159 [1] : vector<16x32xf32> to vector<16xf32>
    %346 = vector.shape_cast %345 : vector<16xf32> to vector<16x1xf32>
    %cst_160 = arith.constant 3.200000e+01 : f32
    %347 = vector.broadcast %cst_160 : f32 to vector<16x1xf32>
    %348 = arith.divf %346, %347 : vector<16x1xf32>
    %349 = vector.broadcast %348 : vector<16x1xf32> to vector<16x32xf32>
    %350 = arith.subf %340, %349 : vector<16x32xf32>
    %351 = arith.mulf %350, %350 : vector<16x32xf32>
    %cst_161 = arith.constant dense<0.000000e+00> : vector<16xf32>
    %352 = vector.multi_reduction <add>, %351, %cst_161 [1] : vector<16x32xf32> to vector<16xf32>
    %353 = vector.shape_cast %352 : vector<16xf32> to vector<16x1xf32>
    %cst_162 = arith.constant 0.0322580636 : f32
    %354 = vector.broadcast %cst_162 : f32 to vector<16x1xf32>
    %355 = arith.mulf %353, %354 : vector<16x1xf32>
    %356 = math.sqrt %355 : vector<16x1xf32>
    %cst_163 = arith.constant 9.99999997E-7 : f32
    %357 = vector.broadcast %cst_163 : f32 to vector<16x1xf32>
    %358 = arith.addf %356, %357 : vector<16x1xf32>
    %359 = tpu.reciprocal %358 : vector<16x1xf32> -> vector<16x1xf32>
    %360 = vector.broadcast %348 : vector<16x1xf32> to vector<16x32xf32>
    %361 = arith.subf %340, %360 : vector<16x32xf32>
    %362 = vector.broadcast %359 : vector<16x1xf32> to vector<16x32xf32>
    %363 = arith.mulf %361, %362 : vector<16x32xf32>
    %364 = vector.broadcast %342 : vector<1x32xf32> to vector<16x32xf32>
    %365 = arith.mulf %364, %363 : vector<16x32xf32>
    %366 = vector.broadcast %344 : vector<1x32xf32> to vector<16x32xf32>
    %367 = arith.addf %365, %366 : vector<16x32xf32>
    %c1_164 = arith.constant 1 : index
    %c0_165 = arith.constant 0 : index
    %c0_166 = arith.constant 0 : index
    %368 = vector.load %arg8[%c1_164, %c0_165, %c0_166] : memref<2x32x96xbf16, #tpu.memory_space<vmem>>, vector<1x32x96xbf16>
    %369 = vector.shape_cast %368 : vector<1x32x96xbf16> to vector<32x96xbf16>
    %c1_167 = arith.constant 1 : index
    %c0_168 = arith.constant 0 : index
    %c0_169 = arith.constant 0 : index
    %370 = vector.load %arg9[%c1_167, %c0_168, %c0_169] : memref<2x1x96xf32, #tpu.memory_space<vmem>>, vector<1x1x96xf32>
    %371 = vector.shape_cast %370 : vector<1x1x96xf32> to vector<1x96xf32>
    %372 = arith.truncf %367 : vector<16x32xf32> to vector<16x32xbf16>
    %cst_170 = arith.constant dense<0.000000e+00> : vector<16x96xf32>
    %373 = tpu.matmul %372, %369, %cst_170 {dimension_numbers = #tpu.dot_dimension_numbers<[1], [0], [0], [1], [0, 0, 1, 1], [], []>} : vector<16x32xbf16>, vector<32x96xbf16>, vector<16x96xf32> -> vector<16x96xf32>
    %374 = vector.broadcast %371 : vector<1x96xf32> to vector<16x96xf32>
    %375 = arith.addf %373, %374 : vector<16x96xf32>
    %376 = vector.extract_strided_slice %375 {offsets = [0, 0], sizes = [16, 32], strides = [1, 1]} : vector<16x96xf32> to vector<16x32xf32>
    %377 = vector.shape_cast %376 : vector<16x32xf32> to vector<2x8x32xf32>
    %378 = vector.extract_strided_slice %375 {offsets = [0, 32], sizes = [16, 32], strides = [1, 1]} : vector<16x96xf32> to vector<16x32xf32>
    %379 = vector.shape_cast %378 : vector<16x32xf32> to vector<2x8x32xf32>
    %380 = vector.extract_strided_slice %375 {offsets = [0, 64], sizes = [16, 32], strides = [1, 1]} : vector<16x96xf32> to vector<16x32xf32>
    %381 = vector.shape_cast %380 : vector<16x32xf32> to vector<2x8x32xf32>
    %382 = vector.extract_strided_slice %377 {offsets = [0, 0, 0], sizes = [2, 8, 8], strides = [1, 1, 1]} : vector<2x8x32xf32> to vector<2x8x8xf32>
    %383 = vector.extract_strided_slice %379 {offsets = [0, 0, 0], sizes = [2, 8, 8], strides = [1, 1, 1]} : vector<2x8x32xf32> to vector<2x8x8xf32>
    %384 = vector.extract_strided_slice %381 {offsets = [0, 0, 0], sizes = [2, 8, 8], strides = [1, 1, 1]} : vector<2x8x32xf32> to vector<2x8x8xf32>
    "tpu.trace_start"() <{level = 10 : i32, message = "bqd,bkd->bqk"}> : () -> ()
    %cst_171 = arith.constant dense<0.000000e+00> : vector<2x8x8xf32>
    %385 = tpu.matmul %382, %383, %cst_171 {dimension_numbers = #tpu.dot_dimension_numbers<[2], [2], [1], [1], [0, 0, 0, 1, 1, 1], [0], [0]>} : vector<2x8x8xf32>, vector<2x8x8xf32>, vector<2x8x8xf32> -> vector<2x8x8xf32>
    "tpu.trace_stop"() : () -> ()
    %cst_172 = arith.constant 0.353553385 : f32
    %386 = vector.broadcast %cst_172 : f32 to vector<2x8x8xf32>
    %387 = arith.mulf %385, %386 : vector<2x8x8xf32>
    %cst_173 = arith.constant 0.000000e+00 : f32
    %388 = vector.broadcast %cst_173 : f32 to vector<2x8x8xf32>
    %389 = arith.cmpf oeq, %15, %388 : vector<2x8x8xf32>
    %cst_174 = arith.constant -1.000000e+09 : f32
    %390 = vector.broadcast %cst_174 : f32 to vector<2x8x8xf32>
    %391 = arith.select %389, %390, %387 : vector<2x8x8xi1>, vector<2x8x8xf32>
    %cst_175 = arith.constant dense<0xFF800000> : vector<2x8xf32>
    %392 = vector.multi_reduction <maximumf>, %391, %cst_175 [2] : vector<2x8x8xf32> to vector<2x8xf32>
    %393 = vector.shape_cast %392 : vector<2x8xf32> to vector<2x8x1xf32>
    %394 = vector.broadcast %393 : vector<2x8x1xf32> to vector<2x8x8xf32>
    %395 = arith.subf %391, %394 : vector<2x8x8xf32>
    %396 = math.exp %395 : vector<2x8x8xf32>
    %cst_176 = arith.constant dense<0.000000e+00> : vector<2x8xf32>
    %397 = vector.multi_reduction <add>, %396, %cst_176 [2] : vector<2x8x8xf32> to vector<2x8xf32>
    %398 = vector.shape_cast %397 : vector<2x8xf32> to vector<2x8x1xf32>
    %399 = tpu.reciprocal %398 {approx = true} : vector<2x8x1xf32> -> vector<2x8x1xf32>
    %400 = vector.broadcast %399 : vector<2x8x1xf32> to vector<2x8x8xf32>
    %401 = arith.mulf %396, %400 : vector<2x8x8xf32>
    "tpu.trace_start"() <{level = 10 : i32, message = "bqk,bkd->bqd"}> : () -> ()
    %cst_177 = arith.constant dense<0.000000e+00> : vector<2x8x8xf32>
    %402 = tpu.matmul %401, %384, %cst_177 {dimension_numbers = #tpu.dot_dimension_numbers<[2], [1], [1], [2], [0, 0, 0, 1, 1, 2], [0], [0]>} : vector<2x8x8xf32>, vector<2x8x8xf32>, vector<2x8x8xf32> -> vector<2x8x8xf32>
    "tpu.trace_stop"() : () -> ()
    %403 = vector.extract_strided_slice %377 {offsets = [0, 0, 8], sizes = [2, 8, 8], strides = [1, 1, 1]} : vector<2x8x32xf32> to vector<2x8x8xf32>
    %404 = vector.extract_strided_slice %379 {offsets = [0, 0, 8], sizes = [2, 8, 8], strides = [1, 1, 1]} : vector<2x8x32xf32> to vector<2x8x8xf32>
    %405 = vector.extract_strided_slice %381 {offsets = [0, 0, 8], sizes = [2, 8, 8], strides = [1, 1, 1]} : vector<2x8x32xf32> to vector<2x8x8xf32>
    "tpu.trace_start"() <{level = 10 : i32, message = "bqd,bkd->bqk"}> : () -> ()
    %cst_178 = arith.constant dense<0.000000e+00> : vector<2x8x8xf32>
    %406 = tpu.matmul %403, %404, %cst_178 {dimension_numbers = #tpu.dot_dimension_numbers<[2], [2], [1], [1], [0, 0, 0, 1, 1, 1], [0], [0]>} : vector<2x8x8xf32>, vector<2x8x8xf32>, vector<2x8x8xf32> -> vector<2x8x8xf32>
    "tpu.trace_stop"() : () -> ()
    %cst_179 = arith.constant 0.353553385 : f32
    %407 = vector.broadcast %cst_179 : f32 to vector<2x8x8xf32>
    %408 = arith.mulf %406, %407 : vector<2x8x8xf32>
    %cst_180 = arith.constant 0.000000e+00 : f32
    %409 = vector.broadcast %cst_180 : f32 to vector<2x8x8xf32>
    %410 = arith.cmpf oeq, %15, %409 : vector<2x8x8xf32>
    %cst_181 = arith.constant -1.000000e+09 : f32
    %411 = vector.broadcast %cst_181 : f32 to vector<2x8x8xf32>
    %412 = arith.select %410, %411, %408 : vector<2x8x8xi1>, vector<2x8x8xf32>
    %cst_182 = arith.constant dense<0xFF800000> : vector<2x8xf32>
    %413 = vector.multi_reduction <maximumf>, %412, %cst_182 [2] : vector<2x8x8xf32> to vector<2x8xf32>
    %414 = vector.shape_cast %413 : vector<2x8xf32> to vector<2x8x1xf32>
    %415 = vector.broadcast %414 : vector<2x8x1xf32> to vector<2x8x8xf32>
    %416 = arith.subf %412, %415 : vector<2x8x8xf32>
    %417 = math.exp %416 : vector<2x8x8xf32>
    %cst_183 = arith.constant dense<0.000000e+00> : vector<2x8xf32>
    %418 = vector.multi_reduction <add>, %417, %cst_183 [2] : vector<2x8x8xf32> to vector<2x8xf32>
    %419 = vector.shape_cast %418 : vector<2x8xf32> to vector<2x8x1xf32>
    %420 = tpu.reciprocal %419 {approx = true} : vector<2x8x1xf32> -> vector<2x8x1xf32>
    %421 = vector.broadcast %420 : vector<2x8x1xf32> to vector<2x8x8xf32>
    %422 = arith.mulf %417, %421 : vector<2x8x8xf32>
    "tpu.trace_start"() <{level = 10 : i32, message = "bqk,bkd->bqd"}> : () -> ()
    %cst_184 = arith.constant dense<0.000000e+00> : vector<2x8x8xf32>
    %423 = tpu.matmul %422, %405, %cst_184 {dimension_numbers = #tpu.dot_dimension_numbers<[2], [1], [1], [2], [0, 0, 0, 1, 1, 2], [0], [0]>} : vector<2x8x8xf32>, vector<2x8x8xf32>, vector<2x8x8xf32> -> vector<2x8x8xf32>
    "tpu.trace_stop"() : () -> ()
    %424 = vector.extract_strided_slice %377 {offsets = [0, 0, 16], sizes = [2, 8, 8], strides = [1, 1, 1]} : vector<2x8x32xf32> to vector<2x8x8xf32>
    %425 = vector.extract_strided_slice %379 {offsets = [0, 0, 16], sizes = [2, 8, 8], strides = [1, 1, 1]} : vector<2x8x32xf32> to vector<2x8x8xf32>
    %426 = vector.extract_strided_slice %381 {offsets = [0, 0, 16], sizes = [2, 8, 8], strides = [1, 1, 1]} : vector<2x8x32xf32> to vector<2x8x8xf32>
    "tpu.trace_start"() <{level = 10 : i32, message = "bqd,bkd->bqk"}> : () -> ()
    %cst_185 = arith.constant dense<0.000000e+00> : vector<2x8x8xf32>
    %427 = tpu.matmul %424, %425, %cst_185 {dimension_numbers = #tpu.dot_dimension_numbers<[2], [2], [1], [1], [0, 0, 0, 1, 1, 1], [0], [0]>} : vector<2x8x8xf32>, vector<2x8x8xf32>, vector<2x8x8xf32> -> vector<2x8x8xf32>
    "tpu.trace_stop"() : () -> ()
    %cst_186 = arith.constant 0.353553385 : f32
    %428 = vector.broadcast %cst_186 : f32 to vector<2x8x8xf32>
    %429 = arith.mulf %427, %428 : vector<2x8x8xf32>
    %cst_187 = arith.constant 0.000000e+00 : f32
    %430 = vector.broadcast %cst_187 : f32 to vector<2x8x8xf32>
    %431 = arith.cmpf oeq, %15, %430 : vector<2x8x8xf32>
    %cst_188 = arith.constant -1.000000e+09 : f32
    %432 = vector.broadcast %cst_188 : f32 to vector<2x8x8xf32>
    %433 = arith.select %431, %432, %429 : vector<2x8x8xi1>, vector<2x8x8xf32>
    %cst_189 = arith.constant dense<0xFF800000> : vector<2x8xf32>
    %434 = vector.multi_reduction <maximumf>, %433, %cst_189 [2] : vector<2x8x8xf32> to vector<2x8xf32>
    %435 = vector.shape_cast %434 : vector<2x8xf32> to vector<2x8x1xf32>
    %436 = vector.broadcast %435 : vector<2x8x1xf32> to vector<2x8x8xf32>
    %437 = arith.subf %433, %436 : vector<2x8x8xf32>
    %438 = math.exp %437 : vector<2x8x8xf32>
    %cst_190 = arith.constant dense<0.000000e+00> : vector<2x8xf32>
    %439 = vector.multi_reduction <add>, %438, %cst_190 [2] : vector<2x8x8xf32> to vector<2x8xf32>
    %440 = vector.shape_cast %439 : vector<2x8xf32> to vector<2x8x1xf32>
    %441 = tpu.reciprocal %440 {approx = true} : vector<2x8x1xf32> -> vector<2x8x1xf32>
    %442 = vector.broadcast %441 : vector<2x8x1xf32> to vector<2x8x8xf32>
    %443 = arith.mulf %438, %442 : vector<2x8x8xf32>
    "tpu.trace_start"() <{level = 10 : i32, message = "bqk,bkd->bqd"}> : () -> ()
    %cst_191 = arith.constant dense<0.000000e+00> : vector<2x8x8xf32>
    %444 = tpu.matmul %443, %426, %cst_191 {dimension_numbers = #tpu.dot_dimension_numbers<[2], [1], [1], [2], [0, 0, 0, 1, 1, 2], [0], [0]>} : vector<2x8x8xf32>, vector<2x8x8xf32>, vector<2x8x8xf32> -> vector<2x8x8xf32>
    "tpu.trace_stop"() : () -> ()
    %445 = vector.extract_strided_slice %377 {offsets = [0, 0, 24], sizes = [2, 8, 8], strides = [1, 1, 1]} : vector<2x8x32xf32> to vector<2x8x8xf32>
    %446 = vector.extract_strided_slice %379 {offsets = [0, 0, 24], sizes = [2, 8, 8], strides = [1, 1, 1]} : vector<2x8x32xf32> to vector<2x8x8xf32>
    %447 = vector.extract_strided_slice %381 {offsets = [0, 0, 24], sizes = [2, 8, 8], strides = [1, 1, 1]} : vector<2x8x32xf32> to vector<2x8x8xf32>
    "tpu.trace_start"() <{level = 10 : i32, message = "bqd,bkd->bqk"}> : () -> ()
    %cst_192 = arith.constant dense<0.000000e+00> : vector<2x8x8xf32>
    %448 = tpu.matmul %445, %446, %cst_192 {dimension_numbers = #tpu.dot_dimension_numbers<[2], [2], [1], [1], [0, 0, 0, 1, 1, 1], [0], [0]>} : vector<2x8x8xf32>, vector<2x8x8xf32>, vector<2x8x8xf32> -> vector<2x8x8xf32>
    "tpu.trace_stop"() : () -> ()
    %cst_193 = arith.constant 0.353553385 : f32
    %449 = vector.broadcast %cst_193 : f32 to vector<2x8x8xf32>
    %450 = arith.mulf %448, %449 : vector<2x8x8xf32>
    %cst_194 = arith.constant 0.000000e+00 : f32
    %451 = vector.broadcast %cst_194 : f32 to vector<2x8x8xf32>
    %452 = arith.cmpf oeq, %15, %451 : vector<2x8x8xf32>
    %cst_195 = arith.constant -1.000000e+09 : f32
    %453 = vector.broadcast %cst_195 : f32 to vector<2x8x8xf32>
    %454 = arith.select %452, %453, %450 : vector<2x8x8xi1>, vector<2x8x8xf32>
    %cst_196 = arith.constant dense<0xFF800000> : vector<2x8xf32>
    %455 = vector.multi_reduction <maximumf>, %454, %cst_196 [2] : vector<2x8x8xf32> to vector<2x8xf32>
    %456 = vector.shape_cast %455 : vector<2x8xf32> to vector<2x8x1xf32>
    %457 = vector.broadcast %456 : vector<2x8x1xf32> to vector<2x8x8xf32>
    %458 = arith.subf %454, %457 : vector<2x8x8xf32>
    %459 = math.exp %458 : vector<2x8x8xf32>
    %cst_197 = arith.constant dense<0.000000e+00> : vector<2x8xf32>
    %460 = vector.multi_reduction <add>, %459, %cst_197 [2] : vector<2x8x8xf32> to vector<2x8xf32>
    %461 = vector.shape_cast %460 : vector<2x8xf32> to vector<2x8x1xf32>
    %462 = tpu.reciprocal %461 {approx = true} : vector<2x8x1xf32> -> vector<2x8x1xf32>
    %463 = vector.broadcast %462 : vector<2x8x1xf32> to vector<2x8x8xf32>
    %464 = arith.mulf %459, %463 : vector<2x8x8xf32>
    "tpu.trace_start"() <{level = 10 : i32, message = "bqk,bkd->bqd"}> : () -> ()
    %cst_198 = arith.constant dense<0.000000e+00> : vector<2x8x8xf32>
    %465 = tpu.matmul %464, %447, %cst_198 {dimension_numbers = #tpu.dot_dimension_numbers<[2], [1], [1], [2], [0, 0, 0, 1, 1, 2], [0], [0]>} : vector<2x8x8xf32>, vector<2x8x8xf32>, vector<2x8x8xf32> -> vector<2x8x8xf32>
    "tpu.trace_stop"() : () -> ()
    %466 = tpu.concatenate %402, %423, %444, %465 in 2 : vector<2x8x8xf32>, vector<2x8x8xf32>, vector<2x8x8xf32>, vector<2x8x8xf32> -> vector<2x8x32xf32>
    %467 = vector.shape_cast %466 : vector<2x8x32xf32> to vector<16x32xf32>
    %c1_199 = arith.constant 1 : index
    %c0_200 = arith.constant 0 : index
    %c0_201 = arith.constant 0 : index
    %468 = vector.load %arg10[%c1_199, %c0_200, %c0_201] : memref<2x32x32xbf16, #tpu.memory_space<vmem>>, vector<1x32x32xbf16>
    %469 = vector.shape_cast %468 : vector<1x32x32xbf16> to vector<32x32xbf16>
    %c1_202 = arith.constant 1 : index
    %c0_203 = arith.constant 0 : index
    %c0_204 = arith.constant 0 : index
    %470 = vector.load %arg11[%c1_202, %c0_203, %c0_204] : memref<2x1x32xf32, #tpu.memory_space<vmem>>, vector<1x1x32xf32>
    %471 = vector.shape_cast %470 : vector<1x1x32xf32> to vector<1x32xf32>
    %472 = arith.truncf %467 : vector<16x32xf32> to vector<16x32xbf16>
    %cst_205 = arith.constant dense<0.000000e+00> : vector<16x32xf32>
    %473 = tpu.matmul %472, %469, %cst_205 {dimension_numbers = #tpu.dot_dimension_numbers<[1], [0], [0], [1], [0, 0, 1, 1], [], []>} : vector<16x32xbf16>, vector<32x32xbf16>, vector<16x32xf32> -> vector<16x32xf32>
    %474 = vector.broadcast %471 : vector<1x32xf32> to vector<16x32xf32>
    %475 = arith.addf %473, %474 : vector<16x32xf32>
    %476 = arith.addf %340, %475 : vector<16x32xf32>
    %c1_206 = arith.constant 1 : index
    %c0_207 = arith.constant 0 : index
    %c0_208 = arith.constant 0 : index
    %477 = vector.load %arg12[%c1_206, %c0_207, %c0_208] : memref<2x1x32xf32, #tpu.memory_space<vmem>>, vector<1x1x32xf32>
    %478 = vector.shape_cast %477 : vector<1x1x32xf32> to vector<1x32xf32>
    %c1_209 = arith.constant 1 : index
    %c0_210 = arith.constant 0 : index
    %c0_211 = arith.constant 0 : index
    %479 = vector.load %arg13[%c1_209, %c0_210, %c0_211] : memref<2x1x32xf32, #tpu.memory_space<vmem>>, vector<1x1x32xf32>
    %480 = vector.shape_cast %479 : vector<1x1x32xf32> to vector<1x32xf32>
    %cst_212 = arith.constant dense<0.000000e+00> : vector<16xf32>
    %481 = vector.multi_reduction <add>, %476, %cst_212 [1] : vector<16x32xf32> to vector<16xf32>
    %482 = vector.shape_cast %481 : vector<16xf32> to vector<16x1xf32>
    %cst_213 = arith.constant 3.200000e+01 : f32
    %483 = vector.broadcast %cst_213 : f32 to vector<16x1xf32>
    %484 = arith.divf %482, %483 : vector<16x1xf32>
    %485 = vector.broadcast %484 : vector<16x1xf32> to vector<16x32xf32>
    %486 = arith.subf %476, %485 : vector<16x32xf32>
    %487 = arith.mulf %486, %486 : vector<16x32xf32>
    %cst_214 = arith.constant dense<0.000000e+00> : vector<16xf32>
    %488 = vector.multi_reduction <add>, %487, %cst_214 [1] : vector<16x32xf32> to vector<16xf32>
    %489 = vector.shape_cast %488 : vector<16xf32> to vector<16x1xf32>
    %cst_215 = arith.constant 0.0322580636 : f32
    %490 = vector.broadcast %cst_215 : f32 to vector<16x1xf32>
    %491 = arith.mulf %489, %490 : vector<16x1xf32>
    %492 = math.sqrt %491 : vector<16x1xf32>
    %cst_216 = arith.constant 9.99999997E-7 : f32
    %493 = vector.broadcast %cst_216 : f32 to vector<16x1xf32>
    %494 = arith.addf %492, %493 : vector<16x1xf32>
    %495 = tpu.reciprocal %494 : vector<16x1xf32> -> vector<16x1xf32>
    %496 = vector.broadcast %484 : vector<16x1xf32> to vector<16x32xf32>
    %497 = arith.subf %476, %496 : vector<16x32xf32>
    %498 = vector.broadcast %495 : vector<16x1xf32> to vector<16x32xf32>
    %499 = arith.mulf %497, %498 : vector<16x32xf32>
    %500 = vector.broadcast %478 : vector<1x32xf32> to vector<16x32xf32>
    %501 = arith.mulf %500, %499 : vector<16x32xf32>
    %502 = vector.broadcast %480 : vector<1x32xf32> to vector<16x32xf32>
    %503 = arith.addf %501, %502 : vector<16x32xf32>
    %c1_217 = arith.constant 1 : index
    %c0_218 = arith.constant 0 : index
    %c0_219 = arith.constant 0 : index
    %504 = vector.load %arg14[%c1_217, %c0_218, %c0_219] : memref<2x32x32xbf16, #tpu.memory_space<vmem>>, vector<1x32x32xbf16>
    %505 = vector.shape_cast %504 : vector<1x32x32xbf16> to vector<32x32xbf16>
    %c1_220 = arith.constant 1 : index
    %c0_221 = arith.constant 0 : index
    %c0_222 = arith.constant 0 : index
    %506 = vector.load %arg15[%c1_220, %c0_221, %c0_222] : memref<2x1x32xf32, #tpu.memory_space<vmem>>, vector<1x1x32xf32>
    %507 = vector.shape_cast %506 : vector<1x1x32xf32> to vector<1x32xf32>
    %508 = arith.truncf %503 : vector<16x32xf32> to vector<16x32xbf16>
    %cst_223 = arith.constant dense<0.000000e+00> : vector<16x32xf32>
    %509 = tpu.matmul %508, %505, %cst_223 {dimension_numbers = #tpu.dot_dimension_numbers<[1], [0], [0], [1], [0, 0, 1, 1], [], []>} : vector<16x32xbf16>, vector<32x32xbf16>, vector<16x32xf32> -> vector<16x32xf32>
    %510 = vector.broadcast %507 : vector<1x32xf32> to vector<16x32xf32>
    %511 = arith.addf %509, %510 : vector<16x32xf32>
    %512 = vector.shape_cast %511 : vector<16x32xf32> to vector<2x8x32xf32>
    %c1_224 = arith.constant 1 : index
    %c0_225 = arith.constant 0 : index
    %c0_226 = arith.constant 0 : index
    %513 = vector.load %arg16[%c1_224, %c0_225, %c0_226] : memref<2x32x64xbf16, #tpu.memory_space<vmem>>, vector<1x32x64xbf16>
    %514 = vector.shape_cast %513 : vector<1x32x64xbf16> to vector<32x64xbf16>
    %c1_227 = arith.constant 1 : index
    %c0_228 = arith.constant 0 : index
    %c0_229 = arith.constant 0 : index
    %515 = vector.load %arg17[%c1_227, %c0_228, %c0_229] : memref<2x1x64xf32, #tpu.memory_space<vmem>>, vector<1x1x64xf32>
    %516 = vector.shape_cast %515 : vector<1x1x64xf32> to vector<1x64xf32>
    %517 = arith.truncf %14 : vector<16x32xf32> to vector<16x32xbf16>
    %cst_230 = arith.constant dense<0.000000e+00> : vector<16x64xf32>
    %518 = tpu.matmul %517, %514, %cst_230 {dimension_numbers = #tpu.dot_dimension_numbers<[1], [0], [0], [1], [0, 0, 1, 1], [], []>} : vector<16x32xbf16>, vector<32x64xbf16>, vector<16x64xf32> -> vector<16x64xf32>
    %519 = vector.broadcast %516 : vector<1x64xf32> to vector<16x64xf32>
    %520 = arith.addf %518, %519 : vector<16x64xf32>
    %521 = vector.shape_cast %520 : vector<16x64xf32> to vector<2x8x64xf32>
    %522 = vector.extract_strided_slice %521 {offsets = [0, 0, 0], sizes = [2, 8, 32], strides = [1, 1, 1]} : vector<2x8x64xf32> to vector<2x8x32xf32>
    %523 = vector.extract_strided_slice %521 {offsets = [0, 0, 32], sizes = [2, 8, 32], strides = [1, 1, 1]} : vector<2x8x64xf32> to vector<2x8x32xf32>
    %524 = vector.extract_strided_slice %512 {offsets = [0, 0, 0], sizes = [2, 8, 8], strides = [1, 1, 1]} : vector<2x8x32xf32> to vector<2x8x8xf32>
    %525 = vector.extract_strided_slice %522 {offsets = [0, 0, 0], sizes = [2, 8, 8], strides = [1, 1, 1]} : vector<2x8x32xf32> to vector<2x8x8xf32>
    %526 = vector.extract_strided_slice %523 {offsets = [0, 0, 0], sizes = [2, 8, 8], strides = [1, 1, 1]} : vector<2x8x32xf32> to vector<2x8x8xf32>
    "tpu.trace_start"() <{level = 10 : i32, message = "bqd,bkd->bqk"}> : () -> ()
    %cst_231 = arith.constant dense<0.000000e+00> : vector<2x8x8xf32>
    %527 = tpu.matmul %524, %525, %cst_231 {dimension_numbers = #tpu.dot_dimension_numbers<[2], [2], [1], [1], [0, 0, 0, 1, 1, 1], [0], [0]>} : vector<2x8x8xf32>, vector<2x8x8xf32>, vector<2x8x8xf32> -> vector<2x8x8xf32>
    "tpu.trace_stop"() : () -> ()
    %cst_232 = arith.constant 0.353553385 : f32
    %528 = vector.broadcast %cst_232 : f32 to vector<2x8x8xf32>
    %529 = arith.mulf %527, %528 : vector<2x8x8xf32>
    %cst_233 = arith.constant 0.000000e+00 : f32
    %530 = vector.broadcast %cst_233 : f32 to vector<2x8x8xf32>
    %531 = arith.cmpf oeq, %16, %530 : vector<2x8x8xf32>
    %cst_234 = arith.constant -1.000000e+09 : f32
    %532 = vector.broadcast %cst_234 : f32 to vector<2x8x8xf32>
    %533 = arith.select %531, %532, %529 : vector<2x8x8xi1>, vector<2x8x8xf32>
    %cst_235 = arith.constant dense<0xFF800000> : vector<2x8xf32>
    %534 = vector.multi_reduction <maximumf>, %533, %cst_235 [2] : vector<2x8x8xf32> to vector<2x8xf32>
    %535 = vector.shape_cast %534 : vector<2x8xf32> to vector<2x8x1xf32>
    %536 = vector.broadcast %535 : vector<2x8x1xf32> to vector<2x8x8xf32>
    %537 = arith.subf %533, %536 : vector<2x8x8xf32>
    %538 = math.exp %537 : vector<2x8x8xf32>
    %cst_236 = arith.constant dense<0.000000e+00> : vector<2x8xf32>
    %539 = vector.multi_reduction <add>, %538, %cst_236 [2] : vector<2x8x8xf32> to vector<2x8xf32>
    %540 = vector.shape_cast %539 : vector<2x8xf32> to vector<2x8x1xf32>
    %541 = tpu.reciprocal %540 {approx = true} : vector<2x8x1xf32> -> vector<2x8x1xf32>
    %542 = vector.broadcast %541 : vector<2x8x1xf32> to vector<2x8x8xf32>
    %543 = arith.mulf %538, %542 : vector<2x8x8xf32>
    "tpu.trace_start"() <{level = 10 : i32, message = "bqk,bkd->bqd"}> : () -> ()
    %cst_237 = arith.constant dense<0.000000e+00> : vector<2x8x8xf32>
    %544 = tpu.matmul %543, %526, %cst_237 {dimension_numbers = #tpu.dot_dimension_numbers<[2], [1], [1], [2], [0, 0, 0, 1, 1, 2], [0], [0]>} : vector<2x8x8xf32>, vector<2x8x8xf32>, vector<2x8x8xf32> -> vector<2x8x8xf32>
    "tpu.trace_stop"() : () -> ()
    %545 = vector.extract_strided_slice %512 {offsets = [0, 0, 8], sizes = [2, 8, 8], strides = [1, 1, 1]} : vector<2x8x32xf32> to vector<2x8x8xf32>
    %546 = vector.extract_strided_slice %522 {offsets = [0, 0, 8], sizes = [2, 8, 8], strides = [1, 1, 1]} : vector<2x8x32xf32> to vector<2x8x8xf32>
    %547 = vector.extract_strided_slice %523 {offsets = [0, 0, 8], sizes = [2, 8, 8], strides = [1, 1, 1]} : vector<2x8x32xf32> to vector<2x8x8xf32>
    "tpu.trace_start"() <{level = 10 : i32, message = "bqd,bkd->bqk"}> : () -> ()
    %cst_238 = arith.constant dense<0.000000e+00> : vector<2x8x8xf32>
    %548 = tpu.matmul %545, %546, %cst_238 {dimension_numbers = #tpu.dot_dimension_numbers<[2], [2], [1], [1], [0, 0, 0, 1, 1, 1], [0], [0]>} : vector<2x8x8xf32>, vector<2x8x8xf32>, vector<2x8x8xf32> -> vector<2x8x8xf32>
    "tpu.trace_stop"() : () -> ()
    %cst_239 = arith.constant 0.353553385 : f32
    %549 = vector.broadcast %cst_239 : f32 to vector<2x8x8xf32>
    %550 = arith.mulf %548, %549 : vector<2x8x8xf32>
    %cst_240 = arith.constant 0.000000e+00 : f32
    %551 = vector.broadcast %cst_240 : f32 to vector<2x8x8xf32>
    %552 = arith.cmpf oeq, %16, %551 : vector<2x8x8xf32>
    %cst_241 = arith.constant -1.000000e+09 : f32
    %553 = vector.broadcast %cst_241 : f32 to vector<2x8x8xf32>
    %554 = arith.select %552, %553, %550 : vector<2x8x8xi1>, vector<2x8x8xf32>
    %cst_242 = arith.constant dense<0xFF800000> : vector<2x8xf32>
    %555 = vector.multi_reduction <maximumf>, %554, %cst_242 [2] : vector<2x8x8xf32> to vector<2x8xf32>
    %556 = vector.shape_cast %555 : vector<2x8xf32> to vector<2x8x1xf32>
    %557 = vector.broadcast %556 : vector<2x8x1xf32> to vector<2x8x8xf32>
    %558 = arith.subf %554, %557 : vector<2x8x8xf32>
    %559 = math.exp %558 : vector<2x8x8xf32>
    %cst_243 = arith.constant dense<0.000000e+00> : vector<2x8xf32>
    %560 = vector.multi_reduction <add>, %559, %cst_243 [2] : vector<2x8x8xf32> to vector<2x8xf32>
    %561 = vector.shape_cast %560 : vector<2x8xf32> to vector<2x8x1xf32>
    %562 = tpu.reciprocal %561 {approx = true} : vector<2x8x1xf32> -> vector<2x8x1xf32>
    %563 = vector.broadcast %562 : vector<2x8x1xf32> to vector<2x8x8xf32>
    %564 = arith.mulf %559, %563 : vector<2x8x8xf32>
    "tpu.trace_start"() <{level = 10 : i32, message = "bqk,bkd->bqd"}> : () -> ()
    %cst_244 = arith.constant dense<0.000000e+00> : vector<2x8x8xf32>
    %565 = tpu.matmul %564, %547, %cst_244 {dimension_numbers = #tpu.dot_dimension_numbers<[2], [1], [1], [2], [0, 0, 0, 1, 1, 2], [0], [0]>} : vector<2x8x8xf32>, vector<2x8x8xf32>, vector<2x8x8xf32> -> vector<2x8x8xf32>
    "tpu.trace_stop"() : () -> ()
    %566 = vector.extract_strided_slice %512 {offsets = [0, 0, 16], sizes = [2, 8, 8], strides = [1, 1, 1]} : vector<2x8x32xf32> to vector<2x8x8xf32>
    %567 = vector.extract_strided_slice %522 {offsets = [0, 0, 16], sizes = [2, 8, 8], strides = [1, 1, 1]} : vector<2x8x32xf32> to vector<2x8x8xf32>
    %568 = vector.extract_strided_slice %523 {offsets = [0, 0, 16], sizes = [2, 8, 8], strides = [1, 1, 1]} : vector<2x8x32xf32> to vector<2x8x8xf32>
    "tpu.trace_start"() <{level = 10 : i32, message = "bqd,bkd->bqk"}> : () -> ()
    %cst_245 = arith.constant dense<0.000000e+00> : vector<2x8x8xf32>
    %569 = tpu.matmul %566, %567, %cst_245 {dimension_numbers = #tpu.dot_dimension_numbers<[2], [2], [1], [1], [0, 0, 0, 1, 1, 1], [0], [0]>} : vector<2x8x8xf32>, vector<2x8x8xf32>, vector<2x8x8xf32> -> vector<2x8x8xf32>
    "tpu.trace_stop"() : () -> ()
    %cst_246 = arith.constant 0.353553385 : f32
    %570 = vector.broadcast %cst_246 : f32 to vector<2x8x8xf32>
    %571 = arith.mulf %569, %570 : vector<2x8x8xf32>
    %cst_247 = arith.constant 0.000000e+00 : f32
    %572 = vector.broadcast %cst_247 : f32 to vector<2x8x8xf32>
    %573 = arith.cmpf oeq, %16, %572 : vector<2x8x8xf32>
    %cst_248 = arith.constant -1.000000e+09 : f32
    %574 = vector.broadcast %cst_248 : f32 to vector<2x8x8xf32>
    %575 = arith.select %573, %574, %571 : vector<2x8x8xi1>, vector<2x8x8xf32>
    %cst_249 = arith.constant dense<0xFF800000> : vector<2x8xf32>
    %576 = vector.multi_reduction <maximumf>, %575, %cst_249 [2] : vector<2x8x8xf32> to vector<2x8xf32>
    %577 = vector.shape_cast %576 : vector<2x8xf32> to vector<2x8x1xf32>
    %578 = vector.broadcast %577 : vector<2x8x1xf32> to vector<2x8x8xf32>
    %579 = arith.subf %575, %578 : vector<2x8x8xf32>
    %580 = math.exp %579 : vector<2x8x8xf32>
    %cst_250 = arith.constant dense<0.000000e+00> : vector<2x8xf32>
    %581 = vector.multi_reduction <add>, %580, %cst_250 [2] : vector<2x8x8xf32> to vector<2x8xf32>
    %582 = vector.shape_cast %581 : vector<2x8xf32> to vector<2x8x1xf32>
    %583 = tpu.reciprocal %582 {approx = true} : vector<2x8x1xf32> -> vector<2x8x1xf32>
    %584 = vector.broadcast %583 : vector<2x8x1xf32> to vector<2x8x8xf32>
    %585 = arith.mulf %580, %584 : vector<2x8x8xf32>
    "tpu.trace_start"() <{level = 10 : i32, message = "bqk,bkd->bqd"}> : () -> ()
    %cst_251 = arith.constant dense<0.000000e+00> : vector<2x8x8xf32>
    %586 = tpu.matmul %585, %568, %cst_251 {dimension_numbers = #tpu.dot_dimension_numbers<[2], [1], [1], [2], [0, 0, 0, 1, 1, 2], [0], [0]>} : vector<2x8x8xf32>, vector<2x8x8xf32>, vector<2x8x8xf32> -> vector<2x8x8xf32>
    "tpu.trace_stop"() : () -> ()
    %587 = vector.extract_strided_slice %512 {offsets = [0, 0, 24], sizes = [2, 8, 8], strides = [1, 1, 1]} : vector<2x8x32xf32> to vector<2x8x8xf32>
    %588 = vector.extract_strided_slice %522 {offsets = [0, 0, 24], sizes = [2, 8, 8], strides = [1, 1, 1]} : vector<2x8x32xf32> to vector<2x8x8xf32>
    %589 = vector.extract_strided_slice %523 {offsets = [0, 0, 24], sizes = [2, 8, 8], strides = [1, 1, 1]} : vector<2x8x32xf32> to vector<2x8x8xf32>
    "tpu.trace_start"() <{level = 10 : i32, message = "bqd,bkd->bqk"}> : () -> ()
    %cst_252 = arith.constant dense<0.000000e+00> : vector<2x8x8xf32>
    %590 = tpu.matmul %587, %588, %cst_252 {dimension_numbers = #tpu.dot_dimension_numbers<[2], [2], [1], [1], [0, 0, 0, 1, 1, 1], [0], [0]>} : vector<2x8x8xf32>, vector<2x8x8xf32>, vector<2x8x8xf32> -> vector<2x8x8xf32>
    "tpu.trace_stop"() : () -> ()
    %cst_253 = arith.constant 0.353553385 : f32
    %591 = vector.broadcast %cst_253 : f32 to vector<2x8x8xf32>
    %592 = arith.mulf %590, %591 : vector<2x8x8xf32>
    %cst_254 = arith.constant 0.000000e+00 : f32
    %593 = vector.broadcast %cst_254 : f32 to vector<2x8x8xf32>
    %594 = arith.cmpf oeq, %16, %593 : vector<2x8x8xf32>
    %cst_255 = arith.constant -1.000000e+09 : f32
    %595 = vector.broadcast %cst_255 : f32 to vector<2x8x8xf32>
    %596 = arith.select %594, %595, %592 : vector<2x8x8xi1>, vector<2x8x8xf32>
    %cst_256 = arith.constant dense<0xFF800000> : vector<2x8xf32>
    %597 = vector.multi_reduction <maximumf>, %596, %cst_256 [2] : vector<2x8x8xf32> to vector<2x8xf32>
    %598 = vector.shape_cast %597 : vector<2x8xf32> to vector<2x8x1xf32>
    %599 = vector.broadcast %598 : vector<2x8x1xf32> to vector<2x8x8xf32>
    %600 = arith.subf %596, %599 : vector<2x8x8xf32>
    %601 = math.exp %600 : vector<2x8x8xf32>
    %cst_257 = arith.constant dense<0.000000e+00> : vector<2x8xf32>
    %602 = vector.multi_reduction <add>, %601, %cst_257 [2] : vector<2x8x8xf32> to vector<2x8xf32>
    %603 = vector.shape_cast %602 : vector<2x8xf32> to vector<2x8x1xf32>
    %604 = tpu.reciprocal %603 {approx = true} : vector<2x8x1xf32> -> vector<2x8x1xf32>
    %605 = vector.broadcast %604 : vector<2x8x1xf32> to vector<2x8x8xf32>
    %606 = arith.mulf %601, %605 : vector<2x8x8xf32>
    "tpu.trace_start"() <{level = 10 : i32, message = "bqk,bkd->bqd"}> : () -> ()
    %cst_258 = arith.constant dense<0.000000e+00> : vector<2x8x8xf32>
    %607 = tpu.matmul %606, %589, %cst_258 {dimension_numbers = #tpu.dot_dimension_numbers<[2], [1], [1], [2], [0, 0, 0, 1, 1, 2], [0], [0]>} : vector<2x8x8xf32>, vector<2x8x8xf32>, vector<2x8x8xf32> -> vector<2x8x8xf32>
    "tpu.trace_stop"() : () -> ()
    %608 = tpu.concatenate %544, %565, %586, %607 in 2 : vector<2x8x8xf32>, vector<2x8x8xf32>, vector<2x8x8xf32>, vector<2x8x8xf32> -> vector<2x8x32xf32>
    %609 = vector.shape_cast %608 : vector<2x8x32xf32> to vector<16x32xf32>
    %c1_259 = arith.constant 1 : index
    %c0_260 = arith.constant 0 : index
    %c0_261 = arith.constant 0 : index
    %610 = vector.load %arg18[%c1_259, %c0_260, %c0_261] : memref<2x32x32xbf16, #tpu.memory_space<vmem>>, vector<1x32x32xbf16>
    %611 = vector.shape_cast %610 : vector<1x32x32xbf16> to vector<32x32xbf16>
    %c1_262 = arith.constant 1 : index
    %c0_263 = arith.constant 0 : index
    %c0_264 = arith.constant 0 : index
    %612 = vector.load %arg19[%c1_262, %c0_263, %c0_264] : memref<2x1x32xf32, #tpu.memory_space<vmem>>, vector<1x1x32xf32>
    %613 = vector.shape_cast %612 : vector<1x1x32xf32> to vector<1x32xf32>
    %614 = arith.truncf %609 : vector<16x32xf32> to vector<16x32xbf16>
    %cst_265 = arith.constant dense<0.000000e+00> : vector<16x32xf32>
    %615 = tpu.matmul %614, %611, %cst_265 {dimension_numbers = #tpu.dot_dimension_numbers<[1], [0], [0], [1], [0, 0, 1, 1], [], []>} : vector<16x32xbf16>, vector<32x32xbf16>, vector<16x32xf32> -> vector<16x32xf32>
    %616 = vector.broadcast %613 : vector<1x32xf32> to vector<16x32xf32>
    %617 = arith.addf %615, %616 : vector<16x32xf32>
    %618 = arith.addf %476, %617 : vector<16x32xf32>
    %c1_266 = arith.constant 1 : index
    %c0_267 = arith.constant 0 : index
    %c0_268 = arith.constant 0 : index
    %619 = vector.load %arg20[%c1_266, %c0_267, %c0_268] : memref<2x1x32xf32, #tpu.memory_space<vmem>>, vector<1x1x32xf32>
    %620 = vector.shape_cast %619 : vector<1x1x32xf32> to vector<1x32xf32>
    %c1_269 = arith.constant 1 : index
    %c0_270 = arith.constant 0 : index
    %c0_271 = arith.constant 0 : index
    %621 = vector.load %arg21[%c1_269, %c0_270, %c0_271] : memref<2x1x32xf32, #tpu.memory_space<vmem>>, vector<1x1x32xf32>
    %622 = vector.shape_cast %621 : vector<1x1x32xf32> to vector<1x32xf32>
    %cst_272 = arith.constant dense<0.000000e+00> : vector<16xf32>
    %623 = vector.multi_reduction <add>, %618, %cst_272 [1] : vector<16x32xf32> to vector<16xf32>
    %624 = vector.shape_cast %623 : vector<16xf32> to vector<16x1xf32>
    %cst_273 = arith.constant 3.200000e+01 : f32
    %625 = vector.broadcast %cst_273 : f32 to vector<16x1xf32>
    %626 = arith.divf %624, %625 : vector<16x1xf32>
    %627 = vector.broadcast %626 : vector<16x1xf32> to vector<16x32xf32>
    %628 = arith.subf %618, %627 : vector<16x32xf32>
    %629 = arith.mulf %628, %628 : vector<16x32xf32>
    %cst_274 = arith.constant dense<0.000000e+00> : vector<16xf32>
    %630 = vector.multi_reduction <add>, %629, %cst_274 [1] : vector<16x32xf32> to vector<16xf32>
    %631 = vector.shape_cast %630 : vector<16xf32> to vector<16x1xf32>
    %cst_275 = arith.constant 0.0322580636 : f32
    %632 = vector.broadcast %cst_275 : f32 to vector<16x1xf32>
    %633 = arith.mulf %631, %632 : vector<16x1xf32>
    %634 = math.sqrt %633 : vector<16x1xf32>
    %cst_276 = arith.constant 9.99999997E-7 : f32
    %635 = vector.broadcast %cst_276 : f32 to vector<16x1xf32>
    %636 = arith.addf %634, %635 : vector<16x1xf32>
    %637 = tpu.reciprocal %636 : vector<16x1xf32> -> vector<16x1xf32>
    %638 = vector.broadcast %626 : vector<16x1xf32> to vector<16x32xf32>
    %639 = arith.subf %618, %638 : vector<16x32xf32>
    %640 = vector.broadcast %637 : vector<16x1xf32> to vector<16x32xf32>
    %641 = arith.mulf %639, %640 : vector<16x32xf32>
    %642 = vector.broadcast %620 : vector<1x32xf32> to vector<16x32xf32>
    %643 = arith.mulf %642, %641 : vector<16x32xf32>
    %644 = vector.broadcast %622 : vector<1x32xf32> to vector<16x32xf32>
    %645 = arith.addf %643, %644 : vector<16x32xf32>
    %c1_277 = arith.constant 1 : index
    %c0_278 = arith.constant 0 : index
    %c0_279 = arith.constant 0 : index
    %646 = vector.load %arg22[%c1_277, %c0_278, %c0_279] : memref<2x32x2048xbf16, #tpu.memory_space<vmem>>, vector<1x32x2048xbf16>
    %647 = vector.shape_cast %646 : vector<1x32x2048xbf16> to vector<32x2048xbf16>
    %c1_280 = arith.constant 1 : index
    %c0_281 = arith.constant 0 : index
    %c0_282 = arith.constant 0 : index
    %648 = vector.load %arg23[%c1_280, %c0_281, %c0_282] : memref<2x1x2048xf32, #tpu.memory_space<vmem>>, vector<1x1x2048xf32>
    %649 = vector.shape_cast %648 : vector<1x1x2048xf32> to vector<1x2048xf32>
    %650 = arith.truncf %645 : vector<16x32xf32> to vector<16x32xbf16>
    %cst_283 = arith.constant dense<0.000000e+00> : vector<16x2048xf32>
    %651 = tpu.matmul %650, %647, %cst_283 {dimension_numbers = #tpu.dot_dimension_numbers<[1], [0], [0], [1], [0, 0, 1, 1], [], []>} : vector<16x32xbf16>, vector<32x2048xbf16>, vector<16x2048xf32> -> vector<16x2048xf32>
    %652 = vector.broadcast %649 : vector<1x2048xf32> to vector<16x2048xf32>
    %653 = arith.addf %651, %652 : vector<16x2048xf32>
    %cst_284 = arith.constant 0.000000e+00 : f32
    %654 = vector.broadcast %cst_284 : f32 to vector<16x2048xf32>
    %655 = arith.maximumf %653, %654 : vector<16x2048xf32>
    %c1_285 = arith.constant 1 : index
    %c0_286 = arith.constant 0 : index
    %c0_287 = arith.constant 0 : index
    %656 = vector.load %arg24[%c1_285, %c0_286, %c0_287] : memref<2x2048x32xbf16, #tpu.memory_space<vmem>>, vector<1x2048x32xbf16>
    %657 = vector.shape_cast %656 : vector<1x2048x32xbf16> to vector<2048x32xbf16>
    %c1_288 = arith.constant 1 : index
    %c0_289 = arith.constant 0 : index
    %c0_290 = arith.constant 0 : index
    %658 = vector.load %arg25[%c1_288, %c0_289, %c0_290] : memref<2x1x32xf32, #tpu.memory_space<vmem>>, vector<1x1x32xf32>
    %659 = vector.shape_cast %658 : vector<1x1x32xf32> to vector<1x32xf32>
    %660 = arith.truncf %655 : vector<16x2048xf32> to vector<16x2048xbf16>
    %cst_291 = arith.constant dense<0.000000e+00> : vector<16x32xf32>
    %661 = tpu.matmul %660, %657, %cst_291 {dimension_numbers = #tpu.dot_dimension_numbers<[1], [0], [0], [1], [0, 0, 1, 1], [], []>} : vector<16x2048xbf16>, vector<2048x32xbf16>, vector<16x32xf32> -> vector<16x32xf32>
    %662 = vector.broadcast %659 : vector<1x32xf32> to vector<16x32xf32>
    %663 = arith.addf %661, %662 : vector<16x32xf32>
    %664 = arith.addf %618, %663 : vector<16x32xf32>
    %c0_292 = arith.constant 0 : index
    %c0_293 = arith.constant 0 : index
    %665 = vector.load %arg26[%c0_292, %c0_293] : memref<1x32xf32, #tpu.memory_space<vmem>>, vector<1x32xf32>
    %c0_294 = arith.constant 0 : index
    %c0_295 = arith.constant 0 : index
    %666 = vector.load %arg27[%c0_294, %c0_295] : memref<1x32xf32, #tpu.memory_space<vmem>>, vector<1x32xf32>
    %cst_296 = arith.constant dense<0.000000e+00> : vector<16xf32>
    %667 = vector.multi_reduction <add>, %664, %cst_296 [1] : vector<16x32xf32> to vector<16xf32>
    %668 = vector.shape_cast %667 : vector<16xf32> to vector<16x1xf32>
    %cst_297 = arith.constant 3.200000e+01 : f32
    %669 = vector.broadcast %cst_297 : f32 to vector<16x1xf32>
    %670 = arith.divf %668, %669 : vector<16x1xf32>
    %671 = vector.broadcast %670 : vector<16x1xf32> to vector<16x32xf32>
    %672 = arith.subf %664, %671 : vector<16x32xf32>
    %673 = arith.mulf %672, %672 : vector<16x32xf32>
    %cst_298 = arith.constant dense<0.000000e+00> : vector<16xf32>
    %674 = vector.multi_reduction <add>, %673, %cst_298 [1] : vector<16x32xf32> to vector<16xf32>
    %675 = vector.shape_cast %674 : vector<16xf32> to vector<16x1xf32>
    %cst_299 = arith.constant 0.0322580636 : f32
    %676 = vector.broadcast %cst_299 : f32 to vector<16x1xf32>
    %677 = arith.mulf %675, %676 : vector<16x1xf32>
    %678 = math.sqrt %677 : vector<16x1xf32>
    %cst_300 = arith.constant 9.99999997E-7 : f32
    %679 = vector.broadcast %cst_300 : f32 to vector<16x1xf32>
    %680 = arith.addf %678, %679 : vector<16x1xf32>
    %681 = tpu.reciprocal %680 : vector<16x1xf32> -> vector<16x1xf32>
    %682 = vector.broadcast %670 : vector<16x1xf32> to vector<16x32xf32>
    %683 = arith.subf %664, %682 : vector<16x32xf32>
    %684 = vector.broadcast %681 : vector<16x1xf32> to vector<16x32xf32>
    %685 = arith.mulf %683, %684 : vector<16x32xf32>
    %686 = vector.broadcast %665 : vector<1x32xf32> to vector<16x32xf32>
    %687 = arith.mulf %686, %685 : vector<16x32xf32>
    %688 = vector.broadcast %666 : vector<1x32xf32> to vector<16x32xf32>
    %689 = arith.addf %687, %688 : vector<16x32xf32>
    %690 = vector.shape_cast %689 : vector<16x32xf32> to vector<2x8x32xf32>
    %c0_301 = arith.constant 0 : index
    %c0_302 = arith.constant 0 : index
    %c0_303 = arith.constant 0 : index
    %691 = vector.load %arg28[%c0_301, %c0_302, %c0_303] : memref<2x8x32xf32, #tpu.memory_space<vmem>>, vector<2x8x32xf32>
    tpu.vector_store %arg28[%c0_301, %c0_302, %c0_303], %690 {strides = array<i32>} : memref<2x8x32xf32, #tpu.memory_space<vmem>>, vector<2x8x32xf32>,
    return
  }
}

</mosaic_0001>

<llo_original>
// kernel: decoder_forward.1
$region0: #{decoder_forward.1}
  #allocation0 [shape = 'u32[]', space=smem, size = 0x4, offset = 0x4, fixed_abs, tag = 'smem constant byte address 0x4 - core index']
  #allocation1 [shape = 'u32[144,128]{1,0:T(1,128)}', space=vmem, size = 0x12000, scoped, tag = 'internal scratch']
  %s0 = inlined_call_operand.vmem [shape: s32[16,1], index: 0, kind: input, shape index: {}]
  %s1 = inlined_call_operand.vmem [shape: f32[2,8,32], index: 1, kind: input, shape index: {}]
  %s2 = inlined_call_operand.vmem [shape: f32[2,8,8], index: 2, kind: input, shape index: {}]
  %s3 = inlined_call_operand.vmem [shape: f32[2,8,8], index: 3, kind: input, shape index: {}]
  %s4 = inlined_call_operand.vmem [shape: f32[40,32], index: 4, kind: input, shape index: {}]
  %s5 = inlined_call_operand.vmem [shape: f32[8,32], index: 5, kind: input, shape index: {}]
  %s6 = inlined_call_operand.vmem [shape: f32[2,1,32], index: 6, kind: input, shape index: {}]
  %s7 = inlined_call_operand.vmem [shape: f32[2,1,32], index: 7, kind: input, shape index: {}]
  %s8 = inlined_call_operand.vmem [shape: bf16[2,32,96], index: 8, kind: input, shape index: {}]
  %s9 = inlined_call_operand.vmem [shape: f32[2,1,96], index: 9, kind: input, shape index: {}]
  %s10 = inlined_call_operand.vmem [shape: bf16[2,32,32], index: 10, kind: input, shape index: {}]
  %s11 = inlined_call_operand.vmem [shape: f32[2,1,32], index: 11, kind: input, shape index: {}]
  %s12 = inlined_call_operand.vmem [shape: f32[2,1,32], index: 12, kind: input, shape index: {}]
  %s13 = inlined_call_operand.vmem [shape: f32[2,1,32], index: 13, kind: input, shape index: {}]
  %s14 = inlined_call_operand.vmem [shape: bf16[2,32,32], index: 14, kind: input, shape index: {}]
  %s15 = inlined_call_operand.vmem [shape: f32[2,1,32], index: 15, kind: input, shape index: {}]
  %s16 = inlined_call_operand.vmem [shape: bf16[2,32,64], index: 16, kind: input, shape index: {}]
  %s17 = inlined_call_operand.vmem [shape: f32[2,1,64], index: 17, kind: input, shape index: {}]
  %s18 = inlined_call_operand.vmem [shape: bf16[2,32,32], index: 18, kind: input, shape index: {}]
  %s19 = inlined_call_operand.vmem [shape: f32[2,1,32], index: 19, kind: input, shape index: {}]
  %s20 = inlined_call_operand.vmem [shape: f32[2,1,32], index: 20, kind: input, shape index: {}]
  %s21 = inlined_call_operand.vmem [shape: f32[2,1,32], index: 21, kind: input, shape index: {}]
  %s22 = inlined_call_operand.vmem [shape: bf16[2,32,2048], index: 22, kind: input, shape index: {}]
  %s23 = inlined_call_operand.vmem [shape: f32[2,1,2048], index: 23, kind: input, shape index: {}]
  %s24 = inlined_call_operand.vmem [shape: bf16[2,2048,32], index: 24, kind: input, shape index: {}]
  %s25 = inlined_call_operand.vmem [shape: f32[2,1,32], index: 25, kind: input, shape index: {}]
  %s26 = inlined_call_operand.vmem [shape: f32[1,32], index: 26, kind: input, shape index: {}]
  %s27 = inlined_call_operand.vmem [shape: f32[1,32], index: 27, kind: input, shape index: {}]
  %s28 = inlined_call_operand.hbm [shape: f32[2,8,32], index: 28, kind: output, shape index: {}]
  %s29 = sld [smem:[#allocation0]]
  $region122: #{decoder_forward.1} parent=0
    _
  %s31 = ssub.s32 1, %s29
  %s32 = scalar_select 0, %s31, %s29
  $region1: #{decoder_forward.1} parent=0
    #allocation2 [shape = 'u8[8192]{0}', space=vmem, size = 0x2000, scoped, tag = 'output window, operand 0, single buffered']
    #allocation3 [shape = 's32[1]{0}', space=sflag, size = 0x4, scoped, tag = 'scoped memory for decoder_forward.1']
    %33 = vsyncpa [#allocation3], 0
    // Predicated region
    $region2: #{decoder_forward.1} parent=1 // pred_check
      _
    $region3: #{decoder_forward.1} parent=1 // pred_check_branch
      %35 = sbr.rel (0) target = $region5
    $region4: #{decoder_forward.1} parent=1 // pred_region
      _
    $region5: #{decoder_forward.1} parent=1 // pred_fallthru
      _
    // Predicated region
    $region6: #{decoder_forward.1} parent=1 // pred_check
      _
    $region7: #{decoder_forward.1} parent=1 // pred_check_branch
      %37 = sbr.rel (0) target = $region9
    $region8: #{decoder_forward.1} parent=1 // pred_region
      _
    $region9: #{decoder_forward.1} parent=1 // pred_fallthru
      _
    // Predicated region
    $region10: #{decoder_forward.1} parent=1 // pred_check
      _
    $region11: #{decoder_forward.1} parent=1 // pred_check_branch
      %39 = sbr.rel (0) target = $region13
    $region12: #{decoder_forward.1} parent=1 // pred_region
      _
    $region13: #{decoder_forward.1} parent=1 // pred_fallthru
      _
    // Predicated region
    $region14: #{decoder_forward.1} parent=1 // pred_check
      _
    $region15: #{decoder_forward.1} parent=1 // pred_check_branch
      %41 = sbr.rel (0) target = $region17
    $region16: #{decoder_forward.1} parent=1 // pred_region
      _
    $region17: #{decoder_forward.1} parent=1 // pred_fallthru
      _
    // Predicated region
    $region18: #{decoder_forward.1} parent=1 // pred_check
      _
    $region19: #{decoder_forward.1} parent=1 // pred_check_branch
      %43 = sbr.rel (0) target = $region21
    $region20: #{decoder_forward.1} parent=1 // pred_region
      _
    $region21: #{decoder_forward.1} parent=1 // pred_fallthru
      _
    // Predicated region
    $region22: #{decoder_forward.1} parent=1 // pred_check
      _
    $region23: #{decoder_forward.1} parent=1 // pred_check_branch
      %45 = sbr.rel (0) target = $region25
    $region24: #{decoder_forward.1} parent=1 // pred_region
      _
    $region25: #{decoder_forward.1} parent=1 // pred_fallthru
      _
    // Predicated region
    $region26: #{decoder_forward.1} parent=1 // pred_check
      _
    $region27: #{decoder_forward.1} parent=1 // pred_check_branch
      %47 = sbr.rel (0) target = $region29
    $region28: #{decoder_forward.1} parent=1 // pred_region
      _
    $region29: #{decoder_forward.1} parent=1 // pred_fallthru
      _
    // Predicated region
    $region30: #{decoder_forward.1} parent=1 // pred_check
      _
    $region31: #{decoder_forward.1} parent=1 // pred_check_branch
      %49 = sbr.rel (0) target = $region33
    $region32: #{decoder_forward.1} parent=1 // pred_region
      _
    $region33: #{decoder_forward.1} parent=1 // pred_fallthru
      _
    // Predicated region
    $region34: #{decoder_forward.1} parent=1 // pred_check
      _
    $region35: #{decoder_forward.1} parent=1 // pred_check_branch
      %51 = sbr.rel (0) target = $region37
    $region36: #{decoder_forward.1} parent=1 // pred_region
      _
    $region37: #{decoder_forward.1} parent=1 // pred_fallthru
      _
    // Predicated region
    $region38: #{decoder_forward.1} parent=1 // pred_check
      _
    $region39: #{decoder_forward.1} parent=1 // pred_check_branch
      %53 = sbr.rel (0) target = $region41
    $region40: #{decoder_forward.1} parent=1 // pred_region
      _
    $region41: #{decoder_forward.1} parent=1 // pred_fallthru
      _
    // Predicated region
    $region42: #{decoder_forward.1} parent=1 // pred_check
      _
    $region43: #{decoder_forward.1} parent=1 // pred_check_branch
      %55 = sbr.rel (0) target = $region45
    $region44: #{decoder_forward.1} parent=1 // pred_region
      _
    $region45: #{decoder_forward.1} parent=1 // pred_fallthru
      _
    // Predicated region
    $region46: #{decoder_forward.1} parent=1 // pred_check
      _
    $region47: #{decoder_forward.1} parent=1 // pred_check_branch
      %57 = sbr.rel (0) target = $region49
    $region48: #{decoder_forward.1} parent=1 // pred_region
      _
    $region49: #{decoder_forward.1} parent=1 // pred_fallthru
      _
    // Predicated region
    $region50: #{decoder_forward.1} parent=1 // pred_check
      _
    $region51: #{decoder_forward.1} parent=1 // pred_check_branch
      %59 = sbr.rel (0) target = $region53
    $region52: #{decoder_forward.1} parent=1 // pred_region
      _
    $region53: #{decoder_forward.1} parent=1 // pred_fallthru
      _
    // Predicated region
    $region54: #{decoder_forward.1} parent=1 // pred_check
      _
    $region55: #{decoder_forward.1} parent=1 // pred_check_branch
      %61 = sbr.rel (0) target = $region57
    $region56: #{decoder_forward.1} parent=1 // pred_region
      _
    $region57: #{decoder_forward.1} parent=1 // pred_fallthru
      _
    // Predicated region
    $region58: #{decoder_forward.1} parent=1 // pred_check
      _
    $region59: #{decoder_forward.1} parent=1 // pred_check_branch
      %63 = sbr.rel (0) target = $region61
    $region60: #{decoder_forward.1} parent=1 // pred_region
      _
    $region61: #{decoder_forward.1} parent=1 // pred_fallthru
      _
    // Predicated region
    $region62: #{decoder_forward.1} parent=1 // pred_check
      _
    $region63: #{decoder_forward.1} parent=1 // pred_check_branch
      %65 = sbr.rel (0) target = $region65
    $region64: #{decoder_forward.1} parent=1 // pred_region
      _
    $region65: #{decoder_forward.1} parent=1 // pred_fallthru
      _
    // Predicated region
    $region66: #{decoder_forward.1} parent=1 // pred_check
      _
    $region67: #{decoder_forward.1} parent=1 // pred_check_branch
      %67 = sbr.rel (0) target = $region69
    $region68: #{decoder_forward.1} parent=1 // pred_region
      _
    $region69: #{decoder_forward.1} parent=1 // pred_fallthru
      _
    // Predicated region
    $region70: #{decoder_forward.1} parent=1 // pred_check
      _
    $region71: #{decoder_forward.1} parent=1 // pred_check_branch
      %69 = sbr.rel (0) target = $region73
    $region72: #{decoder_forward.1} parent=1 // pred_region
      _
    $region73: #{decoder_forward.1} parent=1 // pred_fallthru
      _
    // Predicated region
    $region74: #{decoder_forward.1} parent=1 // pred_check
      _
    $region75: #{decoder_forward.1} parent=1 // pred_check_branch
      %71 = sbr.rel (0) target = $region77
    $region76: #{decoder_forward.1} parent=1 // pred_region
      _
    $region77: #{decoder_forward.1} parent=1 // pred_fallthru
      _
    // Predicated region
    $region78: #{decoder_forward.1} parent=1 // pred_check
      _
    $region79: #{decoder_forward.1} parent=1 // pred_check_branch
      %73 = sbr.rel (0) target = $region81
    $region80: #{decoder_forward.1} parent=1 // pred_region
      _
    $region81: #{decoder_forward.1} parent=1 // pred_fallthru
      _
    // Predicated region
    $region82: #{decoder_forward.1} parent=1 // pred_check
      _
    $region83: #{decoder_forward.1} parent=1 // pred_check_branch
      %75 = sbr.rel (0) target = $region85
    $region84: #{decoder_forward.1} parent=1 // pred_region
      _
    $region85: #{decoder_forward.1} parent=1 // pred_fallthru
      _
    // Predicated region
    $region86: #{decoder_forward.1} parent=1 // pred_check
      _
    $region87: #{decoder_forward.1} parent=1 // pred_check_branch
      %77 = sbr.rel (0) target = $region89
    $region88: #{decoder_forward.1} parent=1 // pred_region
      _
    $region89: #{decoder_forward.1} parent=1 // pred_fallthru
      _
    // Predicated region
    $region90: #{decoder_forward.1} parent=1 // pred_check
      _
    $region91: #{decoder_forward.1} parent=1 // pred_check_branch
      %79 = sbr.rel (0) target = $region93
    $region92: #{decoder_forward.1} parent=1 // pred_region
      _
    $region93: #{decoder_forward.1} parent=1 // pred_fallthru
      _
    // Predicated region
    $region94: #{decoder_forward.1} parent=1 // pred_check
      _
    $region95: #{decoder_forward.1} parent=1 // pred_check_branch
      %81 = sbr.rel (0) target = $region97
    $region96: #{decoder_forward.1} parent=1 // pred_region
      _
    $region97: #{decoder_forward.1} parent=1 // pred_fallthru
      _
    // Predicated region
    $region98: #{decoder_forward.1} parent=1 // pred_check
      _
    $region99: #{decoder_forward.1} parent=1 // pred_check_branch
      %83 = sbr.rel (0) target = $region101
    $region100: #{decoder_forward.1} parent=1 // pred_region
      _
    $region101: #{decoder_forward.1} parent=1 // pred_fallthru
      _
    // Predicated region
    $region102: #{decoder_forward.1} parent=1 // pred_check
      _
    $region103: #{decoder_forward.1} parent=1 // pred_check_branch
      %85 = sbr.rel (0) target = $region105
    $region104: #{decoder_forward.1} parent=1 // pred_region
      _
    $region105: #{decoder_forward.1} parent=1 // pred_fallthru
      _
    // Predicated region
    $region106: #{decoder_forward.1} parent=1 // pred_check
      _
    $region107: #{decoder_forward.1} parent=1 // pred_check_branch
      %87 = sbr.rel (0) target = $region109
    $region108: #{decoder_forward.1} parent=1 // pred_region
      _
    $region109: #{decoder_forward.1} parent=1 // pred_fallthru
      _
    // Predicated region
    $region110: #{decoder_forward.1} parent=1 // pred_check
      _
    $region111: #{decoder_forward.1} parent=1 // pred_check_branch
      %89 = sbr.rel (0) target = $region113
    $region112: #{decoder_forward.1} parent=1 // pred_region
      _
    $region113: #{decoder_forward.1} parent=1 // pred_fallthru
      _
    %v91 = vld [vmem:[%s0] sm:$0xff]
    %v92 = vld [vmem:[%s0 + $0x8] sm:$0xff]
    %v93 = vlaneseq
    %v94 = vand.u32 %v93, 127
    %95 = vset.pattern.permute.xlu0 0
    %96 = vperm.xlu0 %95, %v91
    %v97 = vpop.permute.xlu0 %96
    %98 = vset.pattern.permute.xlu0 0
    %99 = vperm.xlu0 %98, %v92
    %v100 = vpop.permute.xlu0 %99
    %vm101 = vcmp.eq.s32.totalorder %v97, %v94
    %vm102 = vcmp.eq.s32.totalorder %v100, %v94
    %v103 = vsel %vm101, 1, 0
    %v104 = vsel %vm102, 1, 0
    %v105 = vcvt.s32.f32 %v103
    %v106 = vcvt.s32.f32 %v104
    %v107 = vld [vmem:[%s4] sm:$0xff]
    %v108 = vld [vmem:[%s4 + $0x8] sm:$0xff]
    %v109 = vld [vmem:[%s4 + $0x10] sm:$0xff]
    %v110 = vld [vmem:[%s4 + $0x18] sm:$0xff]
    %v111 = vld [vmem:[%s4 + $0x20] sm:$0xff]
    %vm112 = vcmask 326656
    %v114 = vsel %vm112, %v105, 0
    %v117 = vsel %vm112, %v106, 0
    %119 = vmatprep.subr.mxu0 0.0
    %120 = vmatpush1.msra.mxu0 0.0
    %121 = vmatprep.subr.mxu0 0.0
    %122 = vmatpush1.msra.mxu0 0.0
    %123 = vmatprep.subr.mxu0 0.0
    %124 = vmatpush1.msra.mxu0 0.0
    %125 = vmatprep.subr.mxu0 0.0
    %126 = vmatpush1.msra.mxu0 0.0
    %127 = vmatprep.subr.mxu0 0.0
    %128 = vmatpush1.msra.mxu0 0.0
    %129 = vmatprep.subr.mxu0 0.0
    %130 = vmatpush1.msra.mxu0 0.0
    %131 = vmatprep.subr.mxu0 0.0
    %132 = vmatpush1.msra.mxu0 0.0
    %133 = vmatprep.subr.mxu0 0.0
    %134 = vmatpush1.msra.mxu0 0.0
    %135 = vmatprep.subr.mxu0 0.0
    %136 = vmatpush1.msra.mxu0 0.0
    %137 = vmatprep.subr.mxu0 0.0
    %138 = vmatpush1.msra.mxu0 0.0
    %139 = vmatprep.subr.mxu0 0.0
    %140 = vmatpush1.msra.mxu0 0.0
    %141 = vmatprep.subr.mxu0 0.0
    %142 = vmatpush1.msra.mxu0 %v111
    %143 = vmatprep.subr.mxu0 0.0
    %144 = vmatpush1.msra.mxu0 %v110
    %145 = vmatprep.subr.mxu0 0.0
    %146 = vmatpush1.msra.mxu0 %v109
    %147 = vmatprep.subr.mxu0 0.0
    %148 = vmatpush1.msra.mxu0 %v108
    %149 = vmatprep.subr.mxu0 0.0
    %150 = vmatpush1.msra.mxu0 %v107
    %151 = vmatprep.subr.mxu0 0.0
    %152 = vmatpush2.msra.mxu0 0.0
    %153 = vmatprep.subr.mxu0 0.0
    %154 = vmatpush2.msra.mxu0 0.0
    %155 = vmatprep.subr.mxu0 0.0
    %156 = vmatpush2.msra.mxu0 0.0
    %157 = vmatprep.subr.mxu0 0.0
    %158 = vmatpush2.msra.mxu0 0.0
    %159 = vmatprep.subr.mxu0 0.0
    %160 = vmatpush2.msra.mxu0 0.0
    %161 = vmatprep.subr.mxu0 0.0
    %162 = vmatpush2.msra.mxu0 0.0
    %163 = vmatprep.subr.mxu0 0.0
    %164 = vmatpush2.msra.mxu0 0.0
    %165 = vmatprep.subr.mxu0 0.0
    %166 = vmatpush2.msra.mxu0 0.0
    %167 = vmatprep.subr.mxu0 0.0
    %168 = vmatpush2.msra.mxu0 0.0
    %169 = vmatprep.subr.mxu0 0.0
    %170 = vmatpush2.msra.mxu0 0.0
    %171 = vmatprep.subr.mxu0 0.0
    %172 = vmatpush2.msra.mxu0 0.0
    %173 = vmatprep.subr.mxu0 0.0
    %174 = vmatpush2.msra.mxu0 0.0
    %175 = vmatprep.subr.mxu0 0.0
    %176 = vmatpush2.msra.mxu0 0.0
    %177 = vmatprep.subr.mxu0 0.0
    %178 = vmatpush2.msra.mxu0 0.0
    %179 = vmatprep.subr.mxu0 0.0
    %180 = vmatpush2.msra.mxu0 0.0
    %181 = vmatprep.subr.mxu0 0.0
    %182 = vmatpush2.msra.mxu0 0.0
    %183 = vmatprep.mubr.f32.mxu0 0.0
    %184 = vmatmul.mubr.f32.gmra.mxu0 %v114
    %v185 = vpop.f32.mrf.mxu0
    %v186 = vadd.f32 0.0, %v185
    %v187 = vpop.f32.mrf.mxu0
    %188 = vmatprep.mubr.f32.mxu0 0.0
    %189 = vmatmul.mubr.f32.gmra.mxu0 %v117
    %v190 = vpop.f32.mrf.mxu0
    %v191 = vadd.f32 0.0, %v190
    %v192 = vpop.f32.mrf.mxu0
    %193 = vdwg.mxu0
    %v194 = vmul.f32 %v186, 5.656854
    %v195 = vmul.f32 %v191, 5.656854
    %v196 = vld [vmem:[%s5] sm:$0xff]
    %v197 = vadd.f32 %v194, %v196
    %v198 = vadd.f32 %v195, %v196
    %v199 = vld [vmem:[%s1] sm:$0xff]
    %v200 = vld [vmem:[%s1 + $0x8] sm:$0xff]
    %v201 = vld [vmem:[%s2] sm:$0xff]
    %v202 = vld [vmem:[%s2 + $0x8] sm:$0xff]
    %v203 = vld [vmem:[%s3] sm:$0xff]
    %v204 = vld [vmem:[%s3 + $0x8] sm:$0xff]
    %v205 = vld [vmem:[%s6] sm:$0x1]
    %v206 = vld [vmem:[%s7] sm:$0x1]
    %vm207 = vcmask 261120
    %v208 = vsel %vm207, %v197, 0.0
    %209 = vadd.xlane.f32.xlu0 %v208
    %v210 = vpop.xlane.xlu0 %209
    %v211 = vsel %vm207, %v198, 0.0
    %212 = vadd.xlane.f32.xlu0 %v211
    %v213 = vpop.xlane.xlu0 %212
    %v214 = vrcp.pop 32.0
    %v215 = vmul.f32 %v210, %v214
    %v216 = vmul.f32 %v213, %v214
    %v217 = vsub.f32 %v197, %v215
    %v218 = vsub.f32 %v198, %v216
    %v219 = vmul.f32 %v217, %v217
    %v220 = vmul.f32 %v218, %v218
    %v221 = vsel %vm207, %v219, 0.0
    %222 = vadd.xlane.f32.xlu0 %v221
    %v223 = vpop.xlane.xlu0 %222
    %v224 = vsel %vm207, %v220, 0.0
    %225 = vadd.xlane.f32.xlu0 %v224
    %v226 = vpop.xlane.xlu0 %225
    %v227 = vmul.f32 %v223, 0.032258064
    %v228 = vmul.f32 %v226, 0.032258064
    %v229 = vrsqrt.pop %v227
    %v230 = vmul.f32 %v227, %v229
    %vm231 = vcmp.eq.f32.partialorder %v227, inf
    %v232 = vsel %vm231, %v227, %v230
    %vm233 = vcmp.eq.f32.partialorder %v227, 0.0
    %v234 = vand.u32 %v227, 2147483648
    %v235 = vsel %vm233, %v234, %v232
    %v236 = vrsqrt.pop %v228
    %v237 = vmul.f32 %v228, %v236
    %vm238 = vcmp.eq.f32.partialorder %v228, inf
    %v239 = vsel %vm238, %v228, %v237
    %vm240 = vcmp.eq.f32.partialorder %v228, 0.0
    %v241 = vand.u32 %v228, 2147483648
    %v242 = vsel %vm240, %v241, %v239
    %v243 = vadd.f32 %v235, 1e-06
    %v244 = vadd.f32 %v242, 1e-06
    %v245 = vrcp.pop %v243
    %v246 = vrcp.pop %v244
    %v247 = vmul.f32 %v217, %v245
    %v248 = vmul.f32 %v218, %v246
    %v250 = vlaneseq
    %v251 = vshrl.u32 %v250, 7
    %v252 = vsub.s32 0, %v251
    %v253 = vrot.slane %v205, %v252
    %v255 = vmul.f32 %v253, %v247
    %v256 = vmul.f32 %v253, %v248
    %v258 = vlaneseq
    %v259 = vshrl.u32 %v258, 7
    %v260 = vsub.s32 0, %v259
    %v261 = vrot.slane %v206, %v260
    %v263 = vadd.f32 %v255, %v261
    %v264 = vadd.f32 %v256, %v261
    %v265 = vld [vmem:[%s8] sm:$0xf]
    %v266 = vld [vmem:[%s8 + $0x4] sm:$0xf]
    %v267 = vld [vmem:[%s8 + $0x8] sm:$0xf]
    %v268 = vld [vmem:[%s8 + $0xc] sm:$0xf]
    %v269 = vld [vmem:[%s9] sm:$0x1]
    %v270 = vpack.c.bf16 %v264, %v263
    %v272 = vlaneseq
    %v273 = vshrl.u32 %v272, 7
    %v274 = vsub.s32 0, %v273
    %v275 = vrot.slane %v269, %v274
    %v281 = vunpack.c.l.b16 %v265
    %v282 = vunpack.c.l.b16 %v266
    %v283 = vunpack.c.l.b16 %v267
    %v284 = vunpack.c.l.b16 %v268
    %v285 = vpack.c.b16 %v282, %v281
    %v286 = vpack.c.b16 %v284, %v283
    %v290 = vsel %vm207, %v270, 0
    %292 = vmatprep.subr.bf16.mxu0 0
    %293 = vmatpush1.bf16.msra.mxu0 0
    %294 = vmatprep.subr.bf16.mxu0 0
    %295 = vmatpush1.bf16.msra.mxu0 0
    %296 = vmatprep.subr.bf16.mxu0 0
    %297 = vmatpush1.bf16.msra.mxu0 0
    %298 = vmatprep.subr.bf16.mxu0 0
    %299 = vmatpush1.bf16.msra.mxu0 0
    %300 = vmatprep.subr.bf16.mxu0 0
    %301 = vmatpush1.bf16.msra.mxu0 0
    %302 = vmatprep.subr.bf16.mxu0 0
    %303 = vmatpush1.bf16.msra.mxu0 0
    %304 = vmatprep.subr.bf16.mxu0 0
    %305 = vmatpush1.bf16.msra.mxu0 %v286
    %306 = vmatprep.subr.bf16.mxu0 0
    %307 = vmatpush1.bf16.msra.mxu0 %v285
    %308 = vmatprep.subr.bf16.mxu0 0
    %309 = vmatpush2.bf16.msra.mxu0 0
    %310 = vmatprep.subr.bf16.mxu0 0
    %311 = vmatpush2.bf16.msra.mxu0 0
    %312 = vmatprep.subr.bf16.mxu0 0
    %313 = vmatpush2.bf16.msra.mxu0 0
    %314 = vmatprep.subr.bf16.mxu0 0
    %315 = vmatpush2.bf16.msra.mxu0 0
    %316 = vmatprep.subr.bf16.mxu0 0
    %317 = vmatpush2.bf16.msra.mxu0 0
    %318 = vmatprep.subr.bf16.mxu0 0
    %319 = vmatpush2.bf16.msra.mxu0 0
    %320 = vmatprep.subr.bf16.mxu0 0
    %321 = vmatpush2.bf16.msra.mxu0 0
    %322 = vmatprep.subr.bf16.mxu0 0
    %323 = vmatpush2.bf16.msra.mxu0 0
    %324 = vmatprep.mubr.bf16.mxu0 0
    %325 = vmatmul.mubr.bf16.gmra.mxu0 %v290
    %v326 = vpop.f32.mrf.mxu0
    %v327 = vadd.f32 %v275, %v326
    %v328 = vpop.f32.mrf.mxu0
    %v329 = vpop.f32.mrf.mxu0
    %v330 = vadd.f32 %v275, %v329
    %v331 = vpop.f32.mrf.mxu0
    %332 = vdwg.mxu0
    %334 = vrot.lane.b32.xlu0 %v327, 96
    %v335 = vpop.permute.xlu0 %334
    %vm336 = vcmask 64512
    %v337 = vsel %vm336, %v327, 0
    %v339 = vsel %vm336, %v335, 0
    %341 = vmatprep.subr.mxu0 0.0
    %342 = vmatpush1.xpose.msra.mxu0 0.0
    %343 = vmatprep.subr.mxu0 0.0
    %344 = vmatpush1.xpose.msra.mxu0 0.0
    %345 = vmatprep.subr.mxu0 0.0
    %346 = vmatpush1.xpose.msra.mxu0 0.0
    %347 = vmatprep.subr.mxu0 0.0
    %348 = vmatpush1.xpose.msra.mxu0 0.0
    %349 = vmatprep.subr.mxu0 0.0
    %350 = vmatpush1.xpose.msra.mxu0 0.0
    %351 = vmatprep.subr.mxu0 0.0
    %352 = vmatpush1.xpose.msra.mxu0 0.0
    %353 = vmatprep.subr.mxu0 0.0
    %354 = vmatpush1.xpose.msra.mxu0 0.0
    %355 = vmatprep.subr.mxu0 0.0
    %356 = vmatpush1.xpose.msra.mxu0 0.0
    %357 = vmatprep.subr.mxu0 0.0
    %358 = vmatpush1.xpose.msra.mxu0 0.0
    %359 = vmatprep.subr.mxu0 0.0
    %360 = vmatpush1.xpose.msra.mxu0 0.0
    %361 = vmatprep.subr.mxu0 0.0
    %362 = vmatpush1.xpose.msra.mxu0 0.0
    %363 = vmatprep.subr.mxu0 0.0
    %364 = vmatpush1.xpose.msra.mxu0 0.0
    %365 = vmatprep.subr.mxu0 0.0
    %366 = vmatpush1.xpose.msra.mxu0 0.0
    %367 = vmatprep.subr.mxu0 0.0
    %368 = vmatpush1.xpose.msra.mxu0 0.0
    %369 = vmatprep.subr.mxu0 0.0
    %370 = vmatpush1.xpose.msra.mxu0 0.0
    %371 = vmatprep.subr.mxu0 0.0
    %372 = vmatpush1.xpose.msra.mxu0 %v339
    %373 = vmatprep.subr.mxu0 0.0
    %374 = vmatpush2.xpose.msra.mxu0 0.0
    %375 = vmatprep.subr.mxu0 0.0
    %376 = vmatpush2.xpose.msra.mxu0 0.0
    %377 = vmatprep.subr.mxu0 0.0
    %378 = vmatpush2.xpose.msra.mxu0 0.0
    %379 = vmatprep.subr.mxu0 0.0
    %380 = vmatpush2.xpose.msra.mxu0 0.0
    %381 = vmatprep.subr.mxu0 0.0
    %382 = vmatpush2.xpose.msra.mxu0 0.0
    %383 = vmatprep.subr.mxu0 0.0
    %384 = vmatpush2.xpose.msra.mxu0 0.0
    %385 = vmatprep.subr.mxu0 0.0
    %386 = vmatpush2.xpose.msra.mxu0 0.0
    %387 = vmatprep.subr.mxu0 0.0
    %388 = vmatpush2.xpose.msra.mxu0 0.0
    %389 = vmatprep.subr.mxu0 0.0
    %390 = vmatpush2.xpose.msra.mxu0 0.0
    %391 = vmatprep.subr.mxu0 0.0
    %392 = vmatpush2.xpose.msra.mxu0 0.0
    %393 = vmatprep.subr.mxu0 0.0
    %394 = vmatpush2.xpose.msra.mxu0 0.0
    %395 = vmatprep.subr.mxu0 0.0
    %396 = vmatpush2.xpose.msra.mxu0 0.0
    %397 = vmatprep.subr.mxu0 0.0
    %398 = vmatpush2.xpose.msra.mxu0 0.0
    %399 = vmatprep.subr.mxu0 0.0
    %400 = vmatpush2.xpose.msra.mxu0 0.0
    %401 = vmatprep.subr.mxu0 0.0
    %402 = vmatpush2.xpose.msra.mxu0 0.0
    %403 = vmatprep.subr.mxu0 0.0
    %404 = vmatpush2.xpose.msra.mxu0 0.0
    %405 = vmatprep.mubr.f32.mxu0 0.0
    %406 = vmatmul.mubr.f32.gmra.mxu0 %v337
    %v407 = vpop.f32.mrf.mxu0
    %v408 = vadd.f32 0.0, %v407
    %v409 = vpop.f32.mrf.mxu0
    %410 = vdwg.mxu0
    %412 = vrot.lane.b32.xlu0 %v330, 96
    %v413 = vpop.permute.xlu0 %412
    %v414 = vsel %vm336, %v330, 0
    %v416 = vsel %vm336, %v413, 0
    %418 = vmatprep.subr.mxu0 0.0
    %419 = vmatpush1.xpose.msra.mxu0 0.0
    %420 = vmatprep.subr.mxu0 0.0
    %421 = vmatpush1.xpose.msra.mxu0 0.0
    %422 = vmatprep.subr.mxu0 0.0
    %423 = vmatpush1.xpose.msra.mxu0 0.0
    %424 = vmatprep.subr.mxu0 0.0
    %425 = vmatpush1.xpose.msra.mxu0 0.0
    %426 = vmatprep.subr.mxu0 0.0
    %427 = vmatpush1.xpose.msra.mxu0 0.0
    %428 = vmatprep.subr.mxu0 0.0
    %429 = vmatpush1.xpose.msra.mxu0 0.0
    %430 = vmatprep.subr.mxu0 0.0
    %431 = vmatpush1.xpose.msra.mxu0 0.0
    %432 = vmatprep.subr.mxu0 0.0
    %433 = vmatpush1.xpose.msra.mxu0 0.0
    %434 = vmatprep.subr.mxu0 0.0
    %435 = vmatpush1.xpose.msra.mxu0 0.0
    %436 = vmatprep.subr.mxu0 0.0
    %437 = vmatpush1.xpose.msra.mxu0 0.0
    %438 = vmatprep.subr.mxu0 0.0
    %439 = vmatpush1.xpose.msra.mxu0 0.0
    %440 = vmatprep.subr.mxu0 0.0
    %441 = vmatpush1.xpose.msra.mxu0 0.0
    %442 = vmatprep.subr.mxu0 0.0
    %443 = vmatpush1.xpose.msra.mxu0 0.0
    %444 = vmatprep.subr.mxu0 0.0
    %445 = vmatpush1.xpose.msra.mxu0 0.0
    %446 = vmatprep.subr.mxu0 0.0
    %447 = vmatpush1.xpose.msra.mxu0 0.0
    %448 = vmatprep.subr.mxu0 0.0
    %449 = vmatpush1.xpose.msra.mxu0 %v416
    %450 = vmatprep.subr.mxu0 0.0
    %451 = vmatpush2.xpose.msra.mxu0 0.0
    %452 = vmatprep.subr.mxu0 0.0
    %453 = vmatpush2.xpose.msra.mxu0 0.0
    %454 = vmatprep.subr.mxu0 0.0
    %455 = vmatpush2.xpose.msra.mxu0 0.0
    %456 = vmatprep.subr.mxu0 0.0
    %457 = vmatpush2.xpose.msra.mxu0 0.0
    %458 = vmatprep.subr.mxu0 0.0
    %459 = vmatpush2.xpose.msra.mxu0 0.0
    %460 = vmatprep.subr.mxu0 0.0
    %461 = vmatpush2.xpose.msra.mxu0 0.0
    %462 = vmatprep.subr.mxu0 0.0
    %463 = vmatpush2.xpose.msra.mxu0 0.0
    %464 = vmatprep.subr.mxu0 0.0
    %465 = vmatpush2.xpose.msra.mxu0 0.0
    %466 = vmatprep.subr.mxu0 0.0
    %467 = vmatpush2.xpose.msra.mxu0 0.0
    %468 = vmatprep.subr.mxu0 0.0
    %469 = vmatpush2.xpose.msra.mxu0 0.0
    %470 = vmatprep.subr.mxu0 0.0
    %471 = vmatpush2.xpose.msra.mxu0 0.0
    %472 = vmatprep.subr.mxu0 0.0
    %473 = vmatpush2.xpose.msra.mxu0 0.0
    %474 = vmatprep.subr.mxu0 0.0
    %475 = vmatpush2.xpose.msra.mxu0 0.0
    %476 = vmatprep.subr.mxu0 0.0
    %477 = vmatpush2.xpose.msra.mxu0 0.0
    %478 = vmatprep.subr.mxu0 0.0
    %479 = vmatpush2.xpose.msra.mxu0 0.0
    %480 = vmatprep.subr.mxu0 0.0
    %481 = vmatpush2.xpose.msra.mxu0 0.0
    %482 = vmatprep.mubr.f32.mxu0 0.0
    %483 = vmatmul.mubr.f32.gmra.mxu0 %v414
    %v484 = vpop.f32.mrf.mxu0
    %v485 = vadd.f32 0.0, %v484
    %v486 = vpop.f32.mrf.mxu0
    %487 = vdwg.mxu0
    %v488 = vmul.f32 %v408, 0.35355338
    %v489 = vmul.f32 %v485, 0.35355338
    %vm490 = vcmp.eq.f32.partialorder %v201, 0.0
    %vm491 = vcmp.eq.f32.partialorder %v202, 0.0
    %v492 = vsel %vm490, -1e+09, %v488
    %v493 = vsel %vm491, -1e+09, %v489
    %v494 = vsel %vm336, %v492, -inf
    %495 = vmax.xlane.f32.xlu0 %v494
    %v496 = vpop.xlane.xlu0 %495
    %v497 = vsel %vm336, %v493, -inf
    %498 = vmax.xlane.f32.xlu0 %v497
    %v499 = vpop.xlane.xlu0 %498
    %v500 = vsub.f32 %v492, %v496
    %v501 = vsub.f32 %v493, %v499
    %v502 = vmul.f32 %v500, 1.442695
    %v503 = vpow.pop %v502
    %v504 = vmul.f32 %v501, 1.442695
    %v505 = vpow.pop %v504
    %v506 = vsel %vm336, %v503, 0.0
    %507 = vadd.xlane.f32.xlu0 %v506
    %v508 = vpop.xlane.xlu0 %507
    %v509 = vsel %vm336, %v505, 0.0
    %510 = vadd.xlane.f32.xlu0 %v509
    %v511 = vpop.xlane.xlu0 %510
    %v512 = vrcp.pop %v508
    %v513 = vrcp.pop %v511
    %v514 = vmul.f32 %v503, %v512
    %v515 = vmul.f32 %v505, %v513
    %516 = vrot.lane.b32.xlu0 %v327, 64
    %v517 = vpop.permute.xlu0 %516
    %v520 = vsel %vm336, %v514, 0
    %522 = vmatprep.subr.mxu0 0.0
    %523 = vmatpush1.msra.mxu0 0.0
    %524 = vmatprep.subr.mxu0 0.0
    %525 = vmatpush1.msra.mxu0 0.0
    %526 = vmatprep.subr.mxu0 0.0
    %527 = vmatpush1.msra.mxu0 0.0
    %528 = vmatprep.subr.mxu0 0.0
    %529 = vmatpush1.msra.mxu0 0.0
    %530 = vmatprep.subr.mxu0 0.0
    %531 = vmatpush1.msra.mxu0 0.0
    %532 = vmatprep.subr.mxu0 0.0
    %533 = vmatpush1.msra.mxu0 0.0
    %534 = vmatprep.subr.mxu0 0.0
    %535 = vmatpush1.msra.mxu0 0.0
    %536 = vmatprep.subr.mxu0 0.0
    %537 = vmatpush1.msra.mxu0 0.0
    %538 = vmatprep.subr.mxu0 0.0
    %539 = vmatpush1.msra.mxu0 0.0
    %540 = vmatprep.subr.mxu0 0.0
    %541 = vmatpush1.msra.mxu0 0.0
    %542 = vmatprep.subr.mxu0 0.0
    %543 = vmatpush1.msra.mxu0 0.0
    %544 = vmatprep.subr.mxu0 0.0
    %545 = vmatpush1.msra.mxu0 0.0
    %546 = vmatprep.subr.mxu0 0.0
    %547 = vmatpush1.msra.mxu0 0.0
    %548 = vmatprep.subr.mxu0 0.0
    %549 = vmatpush1.msra.mxu0 0.0
    %550 = vmatprep.subr.mxu0 0.0
    %551 = vmatpush1.msra.mxu0 0.0
    %552 = vmatprep.subr.mxu0 0.0
    %553 = vmatpush1.msra.mxu0 %v517
    %554 = vmatprep.subr.mxu0 0.0
    %555 = vmatpush2.msra.mxu0 0.0
    %556 = vmatprep.subr.mxu0 0.0
    %557 = vmatpush2.msra.mxu0 0.0
    %558 = vmatprep.subr.mxu0 0.0
    %559 = vmatpush2.msra.mxu0 0.0
    %560 = vmatprep.subr.mxu0 0.0
    %561 = vmatpush2.msra.mxu0 0.0
    %562 = vmatprep.subr.mxu0 0.0
    %563 = vmatpush2.msra.mxu0 0.0
    %564 = vmatprep.subr.mxu0 0.0
    %565 = vmatpush2.msra.mxu0 0.0
    %566 = vmatprep.subr.mxu0 0.0
    %567 = vmatpush2.msra.mxu0 0.0
    %568 = vmatprep.subr.mxu0 0.0
    %569 = vmatpush2.msra.mxu0 0.0
    %570 = vmatprep.subr.mxu0 0.0
    %571 = vmatpush2.msra.mxu0 0.0
    %572 = vmatprep.subr.mxu0 0.0
    %573 = vmatpush2.msra.mxu0 0.0
    %574 = vmatprep.subr.mxu0 0.0
    %575 = vmatpush2.msra.mxu0 0.0
    %576 = vmatprep.subr.mxu0 0.0
    %577 = vmatpush2.msra.mxu0 0.0
    %578 = vmatprep.subr.mxu0 0.0
    %579 = vmatpush2.msra.mxu0 0.0
    %580 = vmatprep.subr.mxu0 0.0
    %581 = vmatpush2.msra.mxu0 0.0
    %582 = vmatprep.subr.mxu0 0.0
    %583 = vmatpush2.msra.mxu0 0.0
    %584 = vmatprep.subr.mxu0 0.0
    %585 = vmatpush2.msra.mxu0 0.0
    %586 = vmatprep.mubr.f32.mxu0 0.0
    %587 = vmatmul.mubr.f32.gmra.mxu0 %v520
    %v588 = vpop.f32.mrf.mxu0
    %v589 = vadd.f32 0.0, %v588
    %v590 = vpop.f32.mrf.mxu0
    %591 = vdwg.mxu0
    %592 = vrot.lane.b32.xlu0 %v330, 64
    %v593 = vpop.permute.xlu0 %592
    %v596 = vsel %vm336, %v515, 0
    %598 = vmatprep.subr.mxu0 0.0
    %599 = vmatpush1.msra.mxu0 0.0
    %600 = vmatprep.subr.mxu0 0.0
    %601 = vmatpush1.msra.mxu0 0.0
    %602 = vmatprep.subr.mxu0 0.0
    %603 = vmatpush1.msra.mxu0 0.0
    %604 = vmatprep.subr.mxu0 0.0
    %605 = vmatpush1.msra.mxu0 0.0
    %606 = vmatprep.subr.mxu0 0.0
    %607 = vmatpush1.msra.mxu0 0.0
    %608 = vmatprep.subr.mxu0 0.0
    %609 = vmatpush1.msra.mxu0 0.0
    %610 = vmatprep.subr.mxu0 0.0
    %611 = vmatpush1.msra.mxu0 0.0
    %612 = vmatprep.subr.mxu0 0.0
    %613 = vmatpush1.msra.mxu0 0.0
    %614 = vmatprep.subr.mxu0 0.0
    %615 = vmatpush1.msra.mxu0 0.0
    %616 = vmatprep.subr.mxu0 0.0
    %617 = vmatpush1.msra.mxu0 0.0
    %618 = vmatprep.subr.mxu0 0.0
    %619 = vmatpush1.msra.mxu0 0.0
    %620 = vmatprep.subr.mxu0 0.0
    %621 = vmatpush1.msra.mxu0 0.0
    %622 = vmatprep.subr.mxu0 0.0
    %623 = vmatpush1.msra.mxu0 0.0
    %624 = vmatprep.subr.mxu0 0.0
    %625 = vmatpush1.msra.mxu0 0.0
    %626 = vmatprep.subr.mxu0 0.0
    %627 = vmatpush1.msra.mxu0 0.0
    %628 = vmatprep.subr.mxu0 0.0
    %629 = vmatpush1.msra.mxu0 %v593
    %630 = vmatprep.subr.mxu0 0.0
    %631 = vmatpush2.msra.mxu0 0.0
    %632 = vmatprep.subr.mxu0 0.0
    %633 = vmatpush2.msra.mxu0 0.0
    %634 = vmatprep.subr.mxu0 0.0
    %635 = vmatpush2.msra.mxu0 0.0
    %636 = vmatprep.subr.mxu0 0.0
    %637 = vmatpush2.msra.mxu0 0.0
    %638 = vmatprep.subr.mxu0 0.0
    %639 = vmatpush2.msra.mxu0 0.0
    %640 = vmatprep.subr.mxu0 0.0
    %641 = vmatpush2.msra.mxu0 0.0
    %642 = vmatprep.subr.mxu0 0.0
    %643 = vmatpush2.msra.mxu0 0.0
    %644 = vmatprep.subr.mxu0 0.0
    %645 = vmatpush2.msra.mxu0 0.0
    %646 = vmatprep.subr.mxu0 0.0
    %647 = vmatpush2.msra.mxu0 0.0
    %648 = vmatprep.subr.mxu0 0.0
    %649 = vmatpush2.msra.mxu0 0.0
    %650 = vmatprep.subr.mxu0 0.0
    %651 = vmatpush2.msra.mxu0 0.0
    %652 = vmatprep.subr.mxu0 0.0
    %653 = vmatpush2.msra.mxu0 0.0
    %654 = vmatprep.subr.mxu0 0.0
    %655 = vmatpush2.msra.mxu0 0.0
    %656 = vmatprep.subr.mxu0 0.0
    %657 = vmatpush2.msra.mxu0 0.0
    %658 = vmatprep.subr.mxu0 0.0
    %659 = vmatpush2.msra.mxu0 0.0
    %660 = vmatprep.subr.mxu0 0.0
    %661 = vmatpush2.msra.mxu0 0.0
    %662 = vmatprep.mubr.f32.mxu0 0.0
    %663 = vmatmul.mubr.f32.gmra.mxu0 %v596
    %v664 = vpop.f32.mrf.mxu0
    %v665 = vadd.f32 0.0, %v664
    %v666 = vpop.f32.mrf.mxu0
    %667 = vdwg.mxu0
    %668 = vrot.lane.b32.xlu0 %v327, 120
    %v669 = vpop.permute.xlu0 %668
    %670 = vrot.lane.b32.xlu0 %v327, 88
    %v671 = vpop.permute.xlu0 %670
    %v672 = vsel %vm336, %v669, 0
    %v674 = vsel %vm336, %v671, 0
    %676 = vmatprep.subr.mxu0 0.0
    %677 = vmatpush1.xpose.msra.mxu0 0.0
    %678 = vmatprep.subr.mxu0 0.0
    %679 = vmatpush1.xpose.msra.mxu0 0.0
    %680 = vmatprep.subr.mxu0 0.0
    %681 = vmatpush1.xpose.msra.mxu0 0.0
    %682 = vmatprep.subr.mxu0 0.0
    %683 = vmatpush1.xpose.msra.mxu0 0.0
    %684 = vmatprep.subr.mxu0 0.0
    %685 = vmatpush1.xpose.msra.mxu0 0.0
    %686 = vmatprep.subr.mxu0 0.0
    %687 = vmatpush1.xpose.msra.mxu0 0.0
    %688 = vmatprep.subr.mxu0 0.0
    %689 = vmatpush1.xpose.msra.mxu0 0.0
    %690 = vmatprep.subr.mxu0 0.0
    %691 = vmatpush1.xpose.msra.mxu0 0.0
    %692 = vmatprep.subr.mxu0 0.0
    %693 = vmatpush1.xpose.msra.mxu0 0.0
    %694 = vmatprep.subr.mxu0 0.0
    %695 = vmatpush1.xpose.msra.mxu0 0.0
    %696 = vmatprep.subr.mxu0 0.0
    %697 = vmatpush1.xpose.msra.mxu0 0.0
    %698 = vmatprep.subr.mxu0 0.0
    %699 = vmatpush1.xpose.msra.mxu0 0.0
    %700 = vmatprep.subr.mxu0 0.0
    %701 = vmatpush1.xpose.msra.mxu0 0.0
    %702 = vmatprep.subr.mxu0 0.0
    %703 = vmatpush1.xpose.msra.mxu0 0.0
    %704 = vmatprep.subr.mxu0 0.0
    %705 = vmatpush1.xpose.msra.mxu0 0.0
    %706 = vmatprep.subr.mxu0 0.0
    %707 = vmatpush1.xpose.msra.mxu0 %v674
    %708 = vmatprep.subr.mxu0 0.0
    %709 = vmatpush2.xpose.msra.mxu0 0.0
    %710 = vmatprep.subr.mxu0 0.0
    %711 = vmatpush2.xpose.msra.mxu0 0.0
    %712 = vmatprep.subr.mxu0 0.0
    %713 = vmatpush2.xpose.msra.mxu0 0.0
    %714 = vmatprep.subr.mxu0 0.0
    %715 = vmatpush2.xpose.msra.mxu0 0.0
    %716 = vmatprep.subr.mxu0 0.0
    %717 = vmatpush2.xpose.msra.mxu0 0.0
    %718 = vmatprep.subr.mxu0 0.0
    %719 = vmatpush2.xpose.msra.mxu0 0.0
    %720 = vmatprep.subr.mxu0 0.0
    %721 = vmatpush2.xpose.msra.mxu0 0.0
    %722 = vmatprep.subr.mxu0 0.0
    %723 = vmatpush2.xpose.msra.mxu0 0.0
    %724 = vmatprep.subr.mxu0 0.0
    %725 = vmatpush2.xpose.msra.mxu0 0.0
    %726 = vmatprep.subr.mxu0 0.0
    %727 = vmatpush2.xpose.msra.mxu0 0.0
    %728 = vmatprep.subr.mxu0 0.0
    %729 = vmatpush2.xpose.msra.mxu0 0.0
    %730 = vmatprep.subr.mxu0 0.0
    %731 = vmatpush2.xpose.msra.mxu0 0.0
    %732 = vmatprep.subr.mxu0 0.0
    %733 = vmatpush2.xpose.msra.mxu0 0.0
    %734 = vmatprep.subr.mxu0 0.0
    %735 = vmatpush2.xpose.msra.mxu0 0.0
    %736 = vmatprep.subr.mxu0 0.0
    %737 = vmatpush2.xpose.msra.mxu0 0.0
    %738 = vmatprep.subr.mxu0 0.0
    %739 = vmatpush2.xpose.msra.mxu0 0.0
    %740 = vmatprep.mubr.f32.mxu0 0.0
    %741 = vmatmul.mubr.f32.gmra.mxu0 %v672
    %v742 = vpop.f32.mrf.mxu0
    %v743 = vadd.f32 0.0, %v742
    %v744 = vpop.f32.mrf.mxu0
    %745 = vdwg.mxu0
    %746 = vrot.lane.b32.xlu0 %v330, 120
    %v747 = vpop.permute.xlu0 %746
    %748 = vrot.lane.b32.xlu0 %v330, 88
    %v749 = vpop.permute.xlu0 %748
    %v750 = vsel %vm336, %v747, 0
    %v752 = vsel %vm336, %v749, 0
    %754 = vmatprep.subr.mxu0 0.0
    %755 = vmatpush1.xpose.msra.mxu0 0.0
    %756 = vmatprep.subr.mxu0 0.0
    %757 = vmatpush1.xpose.msra.mxu0 0.0
    %758 = vmatprep.subr.mxu0 0.0
    %759 = vmatpush1.xpose.msra.mxu0 0.0
    %760 = vmatprep.subr.mxu0 0.0
    %761 = vmatpush1.xpose.msra.mxu0 0.0
    %762 = vmatprep.subr.mxu0 0.0
    %763 = vmatpush1.xpose.msra.mxu0 0.0
    %764 = vmatprep.subr.mxu0 0.0
    %765 = vmatpush1.xpose.msra.mxu0 0.0
    %766 = vmatprep.subr.mxu0 0.0
    %767 = vmatpush1.xpose.msra.mxu0 0.0
    %768 = vmatprep.subr.mxu0 0.0
    %769 = vmatpush1.xpose.msra.mxu0 0.0
    %770 = vmatprep.subr.mxu0 0.0
    %771 = vmatpush1.xpose.msra.mxu0 0.0
    %772 = vmatprep.subr.mxu0 0.0
    %773 = vmatpush1.xpose.msra.mxu0 0.0
    %774 = vmatprep.subr.mxu0 0.0
    %775 = vmatpush1.xpose.msra.mxu0 0.0
    %776 = vmatprep.subr.mxu0 0.0
    %777 = vmatpush1.xpose.msra.mxu0 0.0
    %778 = vmatprep.subr.mxu0 0.0
    %779 = vmatpush1.xpose.msra.mxu0 0.0
    %780 = vmatprep.subr.mxu0 0.0
    %781 = vmatpush1.xpose.msra.mxu0 0.0
    %782 = vmatprep.subr.mxu0 0.0
    %783 = vmatpush1.xpose.msra.mxu0 0.0
    %784 = vmatprep.subr.mxu0 0.0
    %785 = vmatpush1.xpose.msra.mxu0 %v752
    %786 = vmatprep.subr.mxu0 0.0
    %787 = vmatpush2.xpose.msra.mxu0 0.0
    %788 = vmatprep.subr.mxu0 0.0
    %789 = vmatpush2.xpose.msra.mxu0 0.0
    %790 = vmatprep.subr.mxu0 0.0
    %791 = vmatpush2.xpose.msra.mxu0 0.0
    %792 = vmatprep.subr.mxu0 0.0
    %793 = vmatpush2.xpose.msra.mxu0 0.0
    %794 = vmatprep.subr.mxu0 0.0
    %795 = vmatpush2.xpose.msra.mxu0 0.0
    %796 = vmatprep.subr.mxu0 0.0
    %797 = vmatpush2.xpose.msra.mxu0 0.0
    %798 = vmatprep.subr.mxu0 0.0
    %799 = vmatpush2.xpose.msra.mxu0 0.0
    %800 = vmatprep.subr.mxu0 0.0
    %801 = vmatpush2.xpose.msra.mxu0 0.0
    %802 = vmatprep.subr.mxu0 0.0
    %803 = vmatpush2.xpose.msra.mxu0 0.0
    %804 = vmatprep.subr.mxu0 0.0
    %805 = vmatpush2.xpose.msra.mxu0 0.0
    %806 = vmatprep.subr.mxu0 0.0
    %807 = vmatpush2.xpose.msra.mxu0 0.0
    %808 = vmatprep.subr.mxu0 0.0
    %809 = vmatpush2.xpose.msra.mxu0 0.0
    %810 = vmatprep.subr.mxu0 0.0
    %811 = vmatpush2.xpose.msra.mxu0 0.0
    %812 = vmatprep.subr.mxu0 0.0
    %813 = vmatpush2.xpose.msra.mxu0 0.0
    %814 = vmatprep.subr.mxu0 0.0
    %815 = vmatpush2.xpose.msra.mxu0 0.0
    %816 = vmatprep.subr.mxu0 0.0
    %817 = vmatpush2.xpose.msra.mxu0 0.0
    %818 = vmatprep.mubr.f32.mxu0 0.0
    %819 = vmatmul.mubr.f32.gmra.mxu0 %v750
    %v820 = vpop.f32.mrf.mxu0
    %v821 = vadd.f32 0.0, %v820
    %v822 = vpop.f32.mrf.mxu0
    %823 = vdwg.mxu0
    %v824 = vmul.f32 %v743, 0.35355338
    %v825 = vmul.f32 %v821, 0.35355338
    %v826 = vsel %vm490, -1e+09, %v824
    %v827 = vsel %vm491, -1e+09, %v825
    %v828 = vsel %vm336, %v826, -inf
    %829 = vmax.xlane.f32.xlu0 %v828
    %v830 = vpop.xlane.xlu0 %829
    %v831 = vsel %vm336, %v827, -inf
    %832 = vmax.xlane.f32.xlu0 %v831
    %v833 = vpop.xlane.xlu0 %832
    %v834 = vsub.f32 %v826, %v830
    %v835 = vsub.f32 %v827, %v833
    %v836 = vmul.f32 %v834, 1.442695
    %v837 = vpow.pop %v836
    %v838 = vmul.f32 %v835, 1.442695
    %v839 = vpow.pop %v838
    %v840 = vsel %vm336, %v837, 0.0
    %841 = vadd.xlane.f32.xlu0 %v840
    %v842 = vpop.xlane.xlu0 %841
    %v843 = vsel %vm336, %v839, 0.0
    %844 = vadd.xlane.f32.xlu0 %v843
    %v845 = vpop.xlane.xlu0 %844
    %v846 = vrcp.pop %v842
    %v847 = vrcp.pop %v845
    %v848 = vmul.f32 %v837, %v846
    %v849 = vmul.f32 %v839, %v847
    %850 = vrot.lane.b32.xlu0 %v327, 56
    %v851 = vpop.permute.xlu0 %850
    %v854 = vsel %vm336, %v848, 0
    %856 = vmatprep.subr.mxu0 0.0
    %857 = vmatpush1.msra.mxu0 0.0
    %858 = vmatprep.subr.mxu0 0.0
    %859 = vmatpush1.msra.mxu0 0.0
    %860 = vmatprep.subr.mxu0 0.0
    %861 = vmatpush1.msra.mxu0 0.0
    %862 = vmatprep.subr.mxu0 0.0
    %863 = vmatpush1.msra.mxu0 0.0
    %864 = vmatprep.subr.mxu0 0.0
    %865 = vmatpush1.msra.mxu0 0.0
    %866 = vmatprep.subr.mxu0 0.0
    %867 = vmatpush1.msra.mxu0 0.0
    %868 = vmatprep.subr.mxu0 0.0
    %869 = vmatpush1.msra.mxu0 0.0
    %870 = vmatprep.subr.mxu0 0.0
    %871 = vmatpush1.msra.mxu0 0.0
    %872 = vmatprep.subr.mxu0 0.0
    %873 = vmatpush1.msra.mxu0 0.0
    %874 = vmatprep.subr.mxu0 0.0
    %875 = vmatpush1.msra.mxu0 0.0
    %876 = vmatprep.subr.mxu0 0.0
    %877 = vmatpush1.msra.mxu0 0.0
    %878 = vmatprep.subr.mxu0 0.0
    %879 = vmatpush1.msra.mxu0 0.0
    %880 = vmatprep.subr.mxu0 0.0
    %881 = vmatpush1.msra.mxu0 0.0
    %882 = vmatprep.subr.mxu0 0.0
    %883 = vmatpush1.msra.mxu0 0.0
    %884 = vmatprep.subr.mxu0 0.0
    %885 = vmatpush1.msra.mxu0 0.0
    %886 = vmatprep.subr.mxu0 0.0
    %887 = vmatpush1.msra.mxu0 %v851
    %888 = vmatprep.subr.mxu0 0.0
    %889 = vmatpush2.msra.mxu0 0.0
    %890 = vmatprep.subr.mxu0 0.0
    %891 = vmatpush2.msra.mxu0 0.0
    %892 = vmatprep.subr.mxu0 0.0
    %893 = vmatpush2.msra.mxu0 0.0
    %894 = vmatprep.subr.mxu0 0.0
    %895 = vmatpush2.msra.mxu0 0.0
    %896 = vmatprep.subr.mxu0 0.0
    %897 = vmatpush2.msra.mxu0 0.0
    %898 = vmatprep.subr.mxu0 0.0
    %899 = vmatpush2.msra.mxu0 0.0
    %900 = vmatprep.subr.mxu0 0.0
    %901 = vmatpush2.msra.mxu0 0.0
    %902 = vmatprep.subr.mxu0 0.0
    %903 = vmatpush2.msra.mxu0 0.0
    %904 = vmatprep.subr.mxu0 0.0
    %905 = vmatpush2.msra.mxu0 0.0
    %906 = vmatprep.subr.mxu0 0.0
    %907 = vmatpush2.msra.mxu0 0.0
    %908 = vmatprep.subr.mxu0 0.0
    %909 = vmatpush2.msra.mxu0 0.0
    %910 = vmatprep.subr.mxu0 0.0
    %911 = vmatpush2.msra.mxu0 0.0
    %912 = vmatprep.subr.mxu0 0.0
    %913 = vmatpush2.msra.mxu0 0.0
    %914 = vmatprep.subr.mxu0 0.0
    %915 = vmatpush2.msra.mxu0 0.0
    %916 = vmatprep.subr.mxu0 0.0
    %917 = vmatpush2.msra.mxu0 0.0
    %918 = vmatprep.subr.mxu0 0.0
    %919 = vmatpush2.msra.mxu0 0.0
    %920 = vmatprep.mubr.f32.mxu0 0.0
    %921 = vmatmul.mubr.f32.gmra.mxu0 %v854
    %v922 = vpop.f32.mrf.mxu0
    %v923 = vadd.f32 0.0, %v922
    %v924 = vpop.f32.mrf.mxu0
    %925 = vdwg.mxu0
    %926 = vrot.lane.b32.xlu0 %v330, 56
    %v927 = vpop.permute.xlu0 %926
    %v930 = vsel %vm336, %v849, 0
    %932 = vmatprep.subr.mxu0 0.0
    %933 = vmatpush1.msra.mxu0 0.0
    %934 = vmatprep.subr.mxu0 0.0
    %935 = vmatpush1.msra.mxu0 0.0
    %936 = vmatprep.subr.mxu0 0.0
    %937 = vmatpush1.msra.mxu0 0.0
    %938 = vmatprep.subr.mxu0 0.0
    %939 = vmatpush1.msra.mxu0 0.0
    %940 = vmatprep.subr.mxu0 0.0
    %941 = vmatpush1.msra.mxu0 0.0
    %942 = vmatprep.subr.mxu0 0.0
    %943 = vmatpush1.msra.mxu0 0.0
    %944 = vmatprep.subr.mxu0 0.0
    %945 = vmatpush1.msra.mxu0 0.0
    %946 = vmatprep.subr.mxu0 0.0
    %947 = vmatpush1.msra.mxu0 0.0
    %948 = vmatprep.subr.mxu0 0.0
    %949 = vmatpush1.msra.mxu0 0.0
    %950 = vmatprep.subr.mxu0 0.0
    %951 = vmatpush1.msra.mxu0 0.0
    %952 = vmatprep.subr.mxu0 0.0
    %953 = vmatpush1.msra.mxu0 0.0
    %954 = vmatprep.subr.mxu0 0.0
    %955 = vmatpush1.msra.mxu0 0.0
    %956 = vmatprep.subr.mxu0 0.0
    %957 = vmatpush1.msra.mxu0 0.0
    %958 = vmatprep.subr.mxu0 0.0
    %959 = vmatpush1.msra.mxu0 0.0
    %960 = vmatprep.subr.mxu0 0.0
    %961 = vmatpush1.msra.mxu0 0.0
    %962 = vmatprep.subr.mxu0 0.0
    %963 = vmatpush1.msra.mxu0 %v927
    %964 = vmatprep.subr.mxu0 0.0
    %965 = vmatpush2.msra.mxu0 0.0
    %966 = vmatprep.subr.mxu0 0.0
    %967 = vmatpush2.msra.mxu0 0.0
    %968 = vmatprep.subr.mxu0 0.0
    %969 = vmatpush2.msra.mxu0 0.0
    %970 = vmatprep.subr.mxu0 0.0
    %971 = vmatpush2.msra.mxu0 0.0
    %972 = vmatprep.subr.mxu0 0.0
    %973 = vmatpush2.msra.mxu0 0.0
    %974 = vmatprep.subr.mxu0 0.0
    %975 = vmatpush2.msra.mxu0 0.0
    %976 = vmatprep.subr.mxu0 0.0
    %977 = vmatpush2.msra.mxu0 0.0
    %978 = vmatprep.subr.mxu0 0.0
    %979 = vmatpush2.msra.mxu0 0.0
    %980 = vmatprep.subr.mxu0 0.0
    %981 = vmatpush2.msra.mxu0 0.0
    %982 = vmatprep.subr.mxu0 0.0
    %983 = vmatpush2.msra.mxu0 0.0
    %984 = vmatprep.subr.mxu0 0.0
    %985 = vmatpush2.msra.mxu0 0.0
    %986 = vmatprep.subr.mxu0 0.0
    %987 = vmatpush2.msra.mxu0 0.0
    %988 = vmatprep.subr.mxu0 0.0
    %989 = vmatpush2.msra.mxu0 0.0
    %990 = vmatprep.subr.mxu0 0.0
    %991 = vmatpush2.msra.mxu0 0.0
    %992 = vmatprep.subr.mxu0 0.0
    %993 = vmatpush2.msra.mxu0 0.0
    %994 = vmatprep.subr.mxu0 0.0
    %995 = vmatpush2.msra.mxu0 0.0
    %996 = vmatprep.mubr.f32.mxu0 0.0
    %997 = vmatmul.mubr.f32.gmra.mxu0 %v930
    %v998 = vpop.f32.mrf.mxu0
    %v999 = vadd.f32 0.0, %v998
    %v1000 = vpop.f32.mrf.mxu0
    %1001 = vdwg.mxu0
    %1002 = vrot.lane.b32.xlu0 %v327, 112
    %v1003 = vpop.permute.xlu0 %1002
    %1004 = vrot.lane.b32.xlu0 %v327, 80
    %v1005 = vpop.permute.xlu0 %1004
    %v1006 = vsel %vm336, %v1003, 0
    %v1008 = vsel %vm336, %v1005, 0
    %1010 = vmatprep.subr.mxu0 0.0
    %1011 = vmatpush1.xpose.msra.mxu0 0.0
    %1012 = vmatprep.subr.mxu0 0.0
    %1013 = vmatpush1.xpose.msra.mxu0 0.0
    %1014 = vmatprep.subr.mxu0 0.0
    %1015 = vmatpush1.xpose.msra.mxu0 0.0
    %1016 = vmatprep.subr.mxu0 0.0
    %1017 = vmatpush1.xpose.msra.mxu0 0.0
    %1018 = vmatprep.subr.mxu0 0.0
    %1019 = vmatpush1.xpose.msra.mxu0 0.0
    %1020 = vmatprep.subr.mxu0 0.0
    %1021 = vmatpush1.xpose.msra.mxu0 0.0
    %1022 = vmatprep.subr.mxu0 0.0
    %1023 = vmatpush1.xpose.msra.mxu0 0.0
    %1024 = vmatprep.subr.mxu0 0.0
    %1025 = vmatpush1.xpose.msra.mxu0 0.0
    %1026 = vmatprep.subr.mxu0 0.0
    %1027 = vmatpush1.xpose.msra.mxu0 0.0
    %1028 = vmatprep.subr.mxu0 0.0
    %1029 = vmatpush1.xpose.msra.mxu0 0.0
    %1030 = vmatprep.subr.mxu0 0.0
    %1031 = vmatpush1.xpose.msra.mxu0 0.0
    %1032 = vmatprep.subr.mxu0 0.0
    %1033 = vmatpush1.xpose.msra.mxu0 0.0
    %1034 = vmatprep.subr.mxu0 0.0
    %1035 = vmatpush1.xpose.msra.mxu0 0.0
    %1036 = vmatprep.subr.mxu0 0.0
    %1037 = vmatpush1.xpose.msra.mxu0 0.0
    %1038 = vmatprep.subr.mxu0 0.0
    %1039 = vmatpush1.xpose.msra.mxu0 0.0
    %1040 = vmatprep.subr.mxu0 0.0
    %1041 = vmatpush1.xpose.msra.mxu0 %v1008
    %1042 = vmatprep.subr.mxu0 0.0
    %1043 = vmatpush2.xpose.msra.mxu0 0.0
    %1044 = vmatprep.subr.mxu0 0.0
    %1045 = vmatpush2.xpose.msra.mxu0 0.0
    %1046 = vmatprep.subr.mxu0 0.0
    %1047 = vmatpush2.xpose.msra.mxu0 0.0
    %1048 = vmatprep.subr.mxu0 0.0
    %1049 = vmatpush2.xpose.msra.mxu0 0.0
    %1050 = vmatprep.subr.mxu0 0.0
    %1051 = vmatpush2.xpose.msra.mxu0 0.0
    %1052 = vmatprep.subr.mxu0 0.0
    %1053 = vmatpush2.xpose.msra.mxu0 0.0
    %1054 = vmatprep.subr.mxu0 0.0
    %1055 = vmatpush2.xpose.msra.mxu0 0.0
    %1056 = vmatprep.subr.mxu0 0.0
    %1057 = vmatpush2.xpose.msra.mxu0 0.0
    %1058 = vmatprep.subr.mxu0 0.0
    %1059 = vmatpush2.xpose.msra.mxu0 0.0
    %1060 = vmatprep.subr.mxu0 0.0
    %1061 = vmatpush2.xpose.msra.mxu0 0.0
    %1062 = vmatprep.subr.mxu0 0.0
    %1063 = vmatpush2.xpose.msra.mxu0 0.0
    %1064 = vmatprep.subr.mxu0 0.0
    %1065 = vmatpush2.xpose.msra.mxu0 0.0
    %1066 = vmatprep.subr.mxu0 0.0
    %1067 = vmatpush2.xpose.msra.mxu0 0.0
    %1068 = vmatprep.subr.mxu0 0.0
    %1069 = vmatpush2.xpose.msra.mxu0 0.0
    %1070 = vmatprep.subr.mxu0 0.0
    %1071 = vmatpush2.xpose.msra.mxu0 0.0
    %1072 = vmatprep.subr.mxu0 0.0
    %1073 = vmatpush2.xpose.msra.mxu0 0.0
    %1074 = vmatprep.mubr.f32.mxu0 0.0
    %1075 = vmatmul.mubr.f32.gmra.mxu0 %v1006
    %v1076 = vpop.f32.mrf.mxu0
    %v1077 = vadd.f32 0.0, %v1076
    %v1078 = vpop.f32.mrf.mxu0
    %1079 = vdwg.mxu0
    %1080 = vrot.lane.b32.xlu0 %v330, 112
    %v1081 = vpop.permute.xlu0 %1080
    %1082 = vrot.lane.b32.xlu0 %v330, 80
    %v1083 = vpop.permute.xlu0 %1082
    %v1084 = vsel %vm336, %v1081, 0
    %v1086 = vsel %vm336, %v1083, 0
    %1088 = vmatprep.subr.mxu0 0.0
    %1089 = vmatpush1.xpose.msra.mxu0 0.0
    %1090 = vmatprep.subr.mxu0 0.0
    %1091 = vmatpush1.xpose.msra.mxu0 0.0
    %1092 = vmatprep.subr.mxu0 0.0
    %1093 = vmatpush1.xpose.msra.mxu0 0.0
    %1094 = vmatprep.subr.mxu0 0.0
    %1095 = vmatpush1.xpose.msra.mxu0 0.0
    %1096 = vmatprep.subr.mxu0 0.0
    %1097 = vmatpush1.xpose.msra.mxu0 0.0
    %1098 = vmatprep.subr.mxu0 0.0
    %1099 = vmatpush1.xpose.msra.mxu0 0.0
    %1100 = vmatprep.subr.mxu0 0.0
    %1101 = vmatpush1.xpose.msra.mxu0 0.0
    %1102 = vmatprep.subr.mxu0 0.0
    %1103 = vmatpush1.xpose.msra.mxu0 0.0
    %1104 = vmatprep.subr.mxu0 0.0
    %1105 = vmatpush1.xpose.msra.mxu0 0.0
    %1106 = vmatprep.subr.mxu0 0.0
    %1107 = vmatpush1.xpose.msra.mxu0 0.0
    %1108 = vmatprep.subr.mxu0 0.0
    %1109 = vmatpush1.xpose.msra.mxu0 0.0
    %1110 = vmatprep.subr.mxu0 0.0
    %1111 = vmatpush1.xpose.msra.mxu0 0.0
    %1112 = vmatprep.subr.mxu0 0.0
    %1113 = vmatpush1.xpose.msra.mxu0 0.0
    %1114 = vmatprep.subr.mxu0 0.0
    %1115 = vmatpush1.xpose.msra.mxu0 0.0
    %1116 = vmatprep.subr.mxu0 0.0
    %1117 = vmatpush1.xpose.msra.mxu0 0.0
    %1118 = vmatprep.subr.mxu0 0.0
    %1119 = vmatpush1.xpose.msra.mxu0 %v1086
    %1120 = vmatprep.subr.mxu0 0.0
    %1121 = vmatpush2.xpose.msra.mxu0 0.0
    %1122 = vmatprep.subr.mxu0 0.0
    %1123 = vmatpush2.xpose.msra.mxu0 0.0
    %1124 = vmatprep.subr.mxu0 0.0
    %1125 = vmatpush2.xpose.msra.mxu0 0.0
    %1126 = vmatprep.subr.mxu0 0.0
    %1127 = vmatpush2.xpose.msra.mxu0 0.0
    %1128 = vmatprep.subr.mxu0 0.0
    %1129 = vmatpush2.xpose.msra.mxu0 0.0
    %1130 = vmatprep.subr.mxu0 0.0
    %1131 = vmatpush2.xpose.msra.mxu0 0.0
    %1132 = vmatprep.subr.mxu0 0.0
    %1133 = vmatpush2.xpose.msra.mxu0 0.0
    %1134 = vmatprep.subr.mxu0 0.0
    %1135 = vmatpush2.xpose.msra.mxu0 0.0
    %1136 = vmatprep.subr.mxu0 0.0
    %1137 = vmatpush2.xpose.msra.mxu0 0.0
    %1138 = vmatprep.subr.mxu0 0.0
    %1139 = vmatpush2.xpose.msra.mxu0 0.0
    %1140 = vmatprep.subr.mxu0 0.0
    %1141 = vmatpush2.xpose.msra.mxu0 0.0
    %1142 = vmatprep.subr.mxu0 0.0
    %1143 = vmatpush2.xpose.msra.mxu0 0.0
    %1144 = vmatprep.subr.mxu0 0.0
    %1145 = vmatpush2.xpose.msra.mxu0 0.0
    %1146 = vmatprep.subr.mxu0 0.0
    %1147 = vmatpush2.xpose.msra.mxu0 0.0
    %1148 = vmatprep.subr.mxu0 0.0
    %1149 = vmatpush2.xpose.msra.mxu0 0.0
    %1150 = vmatprep.subr.mxu0 0.0
    %1151 = vmatpush2.xpose.msra.mxu0 0.0
    %1152 = vmatprep.mubr.f32.mxu0 0.0
    %1153 = vmatmul.mubr.f32.gmra.mxu0 %v1084
    %v1154 = vpop.f32.mrf.mxu0
    %v1155 = vadd.f32 0.0, %v1154
    %v1156 = vpop.f32.mrf.mxu0
    %1157 = vdwg.mxu0
    %v1158 = vmul.f32 %v1077, 0.35355338
    %v1159 = vmul.f32 %v1155, 0.35355338
    %v1160 = vsel %vm490, -1e+09, %v1158
    %v1161 = vsel %vm491, -1e+09, %v1159
    %v1162 = vsel %vm336, %v1160, -inf
    %1163 = vmax.xlane.f32.xlu0 %v1162
    %v1164 = vpop.xlane.xlu0 %1163
    %v1165 = vsel %vm336, %v1161, -inf
    %1166 = vmax.xlane.f32.xlu0 %v1165
    %v1167 = vpop.xlane.xlu0 %1166
    %v1168 = vsub.f32 %v1160, %v1164
    %v1169 = vsub.f32 %v1161, %v1167
    %v1170 = vmul.f32 %v1168, 1.442695
    %v1171 = vpow.pop %v1170
    %v1172 = vmul.f32 %v1169, 1.442695
    %v1173 = vpow.pop %v1172
    %v1174 = vsel %vm336, %v1171, 0.0
    %1175 = vadd.xlane.f32.xlu0 %v1174
    %v1176 = vpop.xlane.xlu0 %1175
    %v1177 = vsel %vm336, %v1173, 0.0
    %1178 = vadd.xlane.f32.xlu0 %v1177
    %v1179 = vpop.xlane.xlu0 %1178
    %v1180 = vrcp.pop %v1176
    %v1181 = vrcp.pop %v1179
    %v1182 = vmul.f32 %v1171, %v1180
    %v1183 = vmul.f32 %v1173, %v1181
    %1184 = vrot.lane.b32.xlu0 %v327, 48
    %v1185 = vpop.permute.xlu0 %1184
    %v1188 = vsel %vm336, %v1182, 0
    %1190 = vmatprep.subr.mxu0 0.0
    %1191 = vmatpush1.msra.mxu0 0.0
    %1192 = vmatprep.subr.mxu0 0.0
    %1193 = vmatpush1.msra.mxu0 0.0
    %1194 = vmatprep.subr.mxu0 0.0
    %1195 = vmatpush1.msra.mxu0 0.0
    %1196 = vmatprep.subr.mxu0 0.0
    %1197 = vmatpush1.msra.mxu0 0.0
    %1198 = vmatprep.subr.mxu0 0.0
    %1199 = vmatpush1.msra.mxu0 0.0
    %1200 = vmatprep.subr.mxu0 0.0
    %1201 = vmatpush1.msra.mxu0 0.0
    %1202 = vmatprep.subr.mxu0 0.0
    %1203 = vmatpush1.msra.mxu0 0.0
    %1204 = vmatprep.subr.mxu0 0.0
    %1205 = vmatpush1.msra.mxu0 0.0
    %1206 = vmatprep.subr.mxu0 0.0
    %1207 = vmatpush1.msra.mxu0 0.0
    %1208 = vmatprep.subr.mxu0 0.0
    %1209 = vmatpush1.msra.mxu0 0.0
    %1210 = vmatprep.subr.mxu0 0.0
    %1211 = vmatpush1.msra.mxu0 0.0
    %1212 = vmatprep.subr.mxu0 0.0
    %1213 = vmatpush1.msra.mxu0 0.0
    %1214 = vmatprep.subr.mxu0 0.0
    %1215 = vmatpush1.msra.mxu0 0.0
    %1216 = vmatprep.subr.mxu0 0.0
    %1217 = vmatpush1.msra.mxu0 0.0
    %1218 = vmatprep.subr.mxu0 0.0
    %1219 = vmatpush1.msra.mxu0 0.0
    %1220 = vmatprep.subr.mxu0 0.0
    %1221 = vmatpush1.msra.mxu0 %v1185
    %1222 = vmatprep.subr.mxu0 0.0
    %1223 = vmatpush2.msra.mxu0 0.0
    %1224 = vmatprep.subr.mxu0 0.0
    %1225 = vmatpush2.msra.mxu0 0.0
    %1226 = vmatprep.subr.mxu0 0.0
    %1227 = vmatpush2.msra.mxu0 0.0
    %1228 = vmatprep.subr.mxu0 0.0
    %1229 = vmatpush2.msra.mxu0 0.0
    %1230 = vmatprep.subr.mxu0 0.0
    %1231 = vmatpush2.msra.mxu0 0.0
    %1232 = vmatprep.subr.mxu0 0.0
    %1233 = vmatpush2.msra.mxu0 0.0
    %1234 = vmatprep.subr.mxu0 0.0
    %1235 = vmatpush2.msra.mxu0 0.0
    %1236 = vmatprep.subr.mxu0 0.0
    %1237 = vmatpush2.msra.mxu0 0.0
    %1238 = vmatprep.subr.mxu0 0.0
    %1239 = vmatpush2.msra.mxu0 0.0
    %1240 = vmatprep.subr.mxu0 0.0
    %1241 = vmatpush2.msra.mxu0 0.0
    %1242 = vmatprep.subr.mxu0 0.0
    %1243 = vmatpush2.msra.mxu0 0.0
    %1244 = vmatprep.subr.mxu0 0.0
    %1245 = vmatpush2.msra.mxu0 0.0
    %1246 = vmatprep.subr.mxu0 0.0
    %1247 = vmatpush2.msra.mxu0 0.0
    %1248 = vmatprep.subr.mxu0 0.0
    %1249 = vmatpush2.msra.mxu0 0.0
    %1250 = vmatprep.subr.mxu0 0.0
    %1251 = vmatpush2.msra.mxu0 0.0
    %1252 = vmatprep.subr.mxu0 0.0
    %1253 = vmatpush2.msra.mxu0 0.0
    %1254 = vmatprep.mubr.f32.mxu0 0.0
    %1255 = vmatmul.mubr.f32.gmra.mxu0 %v1188
    %v1256 = vpop.f32.mrf.mxu0
    %v1257 = vadd.f32 0.0, %v1256
    %v1258 = vpop.f32.mrf.mxu0
    %1259 = vdwg.mxu0
    %1260 = vrot.lane.b32.xlu0 %v330, 48
    %v1261 = vpop.permute.xlu0 %1260
    %v1264 = vsel %vm336, %v1183, 0
    %1266 = vmatprep.subr.mxu0 0.0
    %1267 = vmatpush1.msra.mxu0 0.0
    %1268 = vmatprep.subr.mxu0 0.0
    %1269 = vmatpush1.msra.mxu0 0.0
    %1270 = vmatprep.subr.mxu0 0.0
    %1271 = vmatpush1.msra.mxu0 0.0
    %1272 = vmatprep.subr.mxu0 0.0
    %1273 = vmatpush1.msra.mxu0 0.0
    %1274 = vmatprep.subr.mxu0 0.0
    %1275 = vmatpush1.msra.mxu0 0.0
    %1276 = vmatprep.subr.mxu0 0.0
    %1277 = vmatpush1.msra.mxu0 0.0
    %1278 = vmatprep.subr.mxu0 0.0
    %1279 = vmatpush1.msra.mxu0 0.0
    %1280 = vmatprep.subr.mxu0 0.0
    %1281 = vmatpush1.msra.mxu0 0.0
    %1282 = vmatprep.subr.mxu0 0.0
    %1283 = vmatpush1.msra.mxu0 0.0
    %1284 = vmatprep.subr.mxu0 0.0
    %1285 = vmatpush1.msra.mxu0 0.0
    %1286 = vmatprep.subr.mxu0 0.0
    %1287 = vmatpush1.msra.mxu0 0.0
    %1288 = vmatprep.subr.mxu0 0.0
    %1289 = vmatpush1.msra.mxu0 0.0
    %1290 = vmatprep.subr.mxu0 0.0
    %1291 = vmatpush1.msra.mxu0 0.0
    %1292 = vmatprep.subr.mxu0 0.0
    %1293 = vmatpush1.msra.mxu0 0.0
    %1294 = vmatprep.subr.mxu0 0.0
    %1295 = vmatpush1.msra.mxu0 0.0
    %1296 = vmatprep.subr.mxu0 0.0
    %1297 = vmatpush1.msra.mxu0 %v1261
    %1298 = vmatprep.subr.mxu0 0.0
    %1299 = vmatpush2.msra.mxu0 0.0
    %1300 = vmatprep.subr.mxu0 0.0
    %1301 = vmatpush2.msra.mxu0 0.0
    %1302 = vmatprep.subr.mxu0 0.0
    %1303 = vmatpush2.msra.mxu0 0.0
    %1304 = vmatprep.subr.mxu0 0.0
    %1305 = vmatpush2.msra.mxu0 0.0
    %1306 = vmatprep.subr.mxu0 0.0
    %1307 = vmatpush2.msra.mxu0 0.0
    %1308 = vmatprep.subr.mxu0 0.0
    %1309 = vmatpush2.msra.mxu0 0.0
    %1310 = vmatprep.subr.mxu0 0.0
    %1311 = vmatpush2.msra.mxu0 0.0
    %1312 = vmatprep.subr.mxu0 0.0
    %1313 = vmatpush2.msra.mxu0 0.0
    %1314 = vmatprep.subr.mxu0 0.0
    %1315 = vmatpush2.msra.mxu0 0.0
    %1316 = vmatprep.subr.mxu0 0.0
    %1317 = vmatpush2.msra.mxu0 0.0
    %1318 = vmatprep.subr.mxu0 0.0
    %1319 = vmatpush2.msra.mxu0 0.0
    %1320 = vmatprep.subr.mxu0 0.0
    %1321 = vmatpush2.msra.mxu0 0.0
    %1322 = vmatprep.subr.mxu0 0.0
    %1323 = vmatpush2.msra.mxu0 0.0
    %1324 = vmatprep.subr.mxu0 0.0
    %1325 = vmatpush2.msra.mxu0 0.0
    %1326 = vmatprep.subr.mxu0 0.0
    %1327 = vmatpush2.msra.mxu0 0.0
    %1328 = vmatprep.subr.mxu0 0.0
    %1329 = vmatpush2.msra.mxu0 0.0
    %1330 = vmatprep.mubr.f32.mxu0 0.0
    %1331 = vmatmul.mubr.f32.gmra.mxu0 %v1264
    %v1332 = vpop.f32.mrf.mxu0
    %v1333 = vadd.f32 0.0, %v1332
    %v1334 = vpop.f32.mrf.mxu0
    %1335 = vdwg.mxu0
    %1336 = vrot.lane.b32.xlu0 %v327, 104
    %v1337 = vpop.permute.xlu0 %1336
    %1338 = vrot.lane.b32.xlu0 %v327, 72
    %v1339 = vpop.permute.xlu0 %1338
    %v1340 = vsel %vm336, %v1337, 0
    %v1342 = vsel %vm336, %v1339, 0
    %1344 = vmatprep.subr.mxu0 0.0
    %1345 = vmatpush1.xpose.msra.mxu0 0.0
    %1346 = vmatprep.subr.mxu0 0.0
    %1347 = vmatpush1.xpose.msra.mxu0 0.0
    %1348 = vmatprep.subr.mxu0 0.0
    %1349 = vmatpush1.xpose.msra.mxu0 0.0
    %1350 = vmatprep.subr.mxu0 0.0
    %1351 = vmatpush1.xpose.msra.mxu0 0.0
    %1352 = vmatprep.subr.mxu0 0.0
    %1353 = vmatpush1.xpose.msra.mxu0 0.0
    %1354 = vmatprep.subr.mxu0 0.0
    %1355 = vmatpush1.xpose.msra.mxu0 0.0
    %1356 = vmatprep.subr.mxu0 0.0
    %1357 = vmatpush1.xpose.msra.mxu0 0.0
    %1358 = vmatprep.subr.mxu0 0.0
    %1359 = vmatpush1.xpose.msra.mxu0 0.0
    %1360 = vmatprep.subr.mxu0 0.0
    %1361 = vmatpush1.xpose.msra.mxu0 0.0
    %1362 = vmatprep.subr.mxu0 0.0
    %1363 = vmatpush1.xpose.msra.mxu0 0.0
    %1364 = vmatprep.subr.mxu0 0.0
    %1365 = vmatpush1.xpose.msra.mxu0 0.0
    %1366 = vmatprep.subr.mxu0 0.0
    %1367 = vmatpush1.xpose.msra.mxu0 0.0
    %1368 = vmatprep.subr.mxu0 0.0
    %1369 = vmatpush1.xpose.msra.mxu0 0.0
    %1370 = vmatprep.subr.mxu0 0.0
    %1371 = vmatpush1.xpose.msra.mxu0 0.0
    %1372 = vmatprep.subr.mxu0 0.0
    %1373 = vmatpush1.xpose.msra.mxu0 0.0
    %1374 = vmatprep.subr.mxu0 0.0
    %1375 = vmatpush1.xpose.msra.mxu0 %v1342
    %1376 = vmatprep.subr.mxu0 0.0
    %1377 = vmatpush2.xpose.msra.mxu0 0.0
    %1378 = vmatprep.subr.mxu0 0.0
    %1379 = vmatpush2.xpose.msra.mxu0 0.0
    %1380 = vmatprep.subr.mxu0 0.0
    %1381 = vmatpush2.xpose.msra.mxu0 0.0
    %1382 = vmatprep.subr.mxu0 0.0
    %1383 = vmatpush2.xpose.msra.mxu0 0.0
    %1384 = vmatprep.subr.mxu0 0.0
    %1385 = vmatpush2.xpose.msra.mxu0 0.0
    %1386 = vmatprep.subr.mxu0 0.0
    %1387 = vmatpush2.xpose.msra.mxu0 0.0
    %1388 = vmatprep.subr.mxu0 0.0
    %1389 = vmatpush2.xpose.msra.mxu0 0.0
    %1390 = vmatprep.subr.mxu0 0.0
    %1391 = vmatpush2.xpose.msra.mxu0 0.0
    %1392 = vmatprep.subr.mxu0 0.0
    %1393 = vmatpush2.xpose.msra.mxu0 0.0
    %1394 = vmatprep.subr.mxu0 0.0
    %1395 = vmatpush2.xpose.msra.mxu0 0.0
    %1396 = vmatprep.subr.mxu0 0.0
    %1397 = vmatpush2.xpose.msra.mxu0 0.0
    %1398 = vmatprep.subr.mxu0 0.0
    %1399 = vmatpush2.xpose.msra.mxu0 0.0
    %1400 = vmatprep.subr.mxu0 0.0
    %1401 = vmatpush2.xpose.msra.mxu0 0.0
    %1402 = vmatprep.subr.mxu0 0.0
    %1403 = vmatpush2.xpose.msra.mxu0 0.0
    %1404 = vmatprep.subr.mxu0 0.0
    %1405 = vmatpush2.xpose.msra.mxu0 0.0
    %1406 = vmatprep.subr.mxu0 0.0
    %1407 = vmatpush2.xpose.msra.mxu0 0.0
    %1408 = vmatprep.mubr.f32.mxu0 0.0
    %1409 = vmatmul.mubr.f32.gmra.mxu0 %v1340
    %v1410 = vpop.f32.mrf.mxu0
    %v1411 = vadd.f32 0.0, %v1410
    %v1412 = vpop.f32.mrf.mxu0
    %1413 = vdwg.mxu0
    %1414 = vrot.lane.b32.xlu0 %v330, 104
    %v1415 = vpop.permute.xlu0 %1414
    %1416 = vrot.lane.b32.xlu0 %v330, 72
    %v1417 = vpop.permute.xlu0 %1416
    %v1418 = vsel %vm336, %v1415, 0
    %v1420 = vsel %vm336, %v1417, 0
    %1422 = vmatprep.subr.mxu0 0.0
    %1423 = vmatpush1.xpose.msra.mxu0 0.0
    %1424 = vmatprep.subr.mxu0 0.0
    %1425 = vmatpush1.xpose.msra.mxu0 0.0
    %1426 = vmatprep.subr.mxu0 0.0
    %1427 = vmatpush1.xpose.msra.mxu0 0.0
    %1428 = vmatprep.subr.mxu0 0.0
    %1429 = vmatpush1.xpose.msra.mxu0 0.0
    %1430 = vmatprep.subr.mxu0 0.0
    %1431 = vmatpush1.xpose.msra.mxu0 0.0
    %1432 = vmatprep.subr.mxu0 0.0
    %1433 = vmatpush1.xpose.msra.mxu0 0.0
    %1434 = vmatprep.subr.mxu0 0.0
    %1435 = vmatpush1.xpose.msra.mxu0 0.0
    %1436 = vmatprep.subr.mxu0 0.0
    %1437 = vmatpush1.xpose.msra.mxu0 0.0
    %1438 = vmatprep.subr.mxu0 0.0
    %1439 = vmatpush1.xpose.msra.mxu0 0.0
    %1440 = vmatprep.subr.mxu0 0.0
    %1441 = vmatpush1.xpose.msra.mxu0 0.0
    %1442 = vmatprep.subr.mxu0 0.0
    %1443 = vmatpush1.xpose.msra.mxu0 0.0
    %1444 = vmatprep.subr.mxu0 0.0
    %1445 = vmatpush1.xpose.msra.mxu0 0.0
    %1446 = vmatprep.subr.mxu0 0.0
    %1447 = vmatpush1.xpose.msra.mxu0 0.0
    %1448 = vmatprep.subr.mxu0 0.0
    %1449 = vmatpush1.xpose.msra.mxu0 0.0
    %1450 = vmatprep.subr.mxu0 0.0
    %1451 = vmatpush1.xpose.msra.mxu0 0.0
    %1452 = vmatprep.subr.mxu0 0.0
    %1453 = vmatpush1.xpose.msra.mxu0 %v1420
    %1454 = vmatprep.subr.mxu0 0.0
    %1455 = vmatpush2.xpose.msra.mxu0 0.0
    %1456 = vmatprep.subr.mxu0 0.0
    %1457 = vmatpush2.xpose.msra.mxu0 0.0
    %1458 = vmatprep.subr.mxu0 0.0
    %1459 = vmatpush2.xpose.msra.mxu0 0.0
    %1460 = vmatprep.subr.mxu0 0.0
    %1461 = vmatpush2.xpose.msra.mxu0 0.0
    %1462 = vmatprep.subr.mxu0 0.0
    %1463 = vmatpush2.xpose.msra.mxu0 0.0
    %1464 = vmatprep.subr.mxu0 0.0
    %1465 = vmatpush2.xpose.msra.mxu0 0.0
    %1466 = vmatprep.subr.mxu0 0.0
    %1467 = vmatpush2.xpose.msra.mxu0 0.0
    %1468 = vmatprep.subr.mxu0 0.0
    %1469 = vmatpush2.xpose.msra.mxu0 0.0
    %1470 = vmatprep.subr.mxu0 0.0
    %1471 = vmatpush2.xpose.msra.mxu0 0.0
    %1472 = vmatprep.subr.mxu0 0.0
    %1473 = vmatpush2.xpose.msra.mxu0 0.0
    %1474 = vmatprep.subr.mxu0 0.0
    %1475 = vmatpush2.xpose.msra.mxu0 0.0
    %1476 = vmatprep.subr.mxu0 0.0
    %1477 = vmatpush2.xpose.msra.mxu0 0.0
    %1478 = vmatprep.subr.mxu0 0.0
    %1479 = vmatpush2.xpose.msra.mxu0 0.0
    %1480 = vmatprep.subr.mxu0 0.0
    %1481 = vmatpush2.xpose.msra.mxu0 0.0
    %1482 = vmatprep.subr.mxu0 0.0
    %1483 = vmatpush2.xpose.msra.mxu0 0.0
    %1484 = vmatprep.subr.mxu0 0.0
    %1485 = vmatpush2.xpose.msra.mxu0 0.0
    %1486 = vmatprep.mubr.f32.mxu0 0.0
    %1487 = vmatmul.mubr.f32.gmra.mxu0 %v1418
    %v1488 = vpop.f32.mrf.mxu0
    %v1489 = vadd.f32 0.0, %v1488
    %v1490 = vpop.f32.mrf.mxu0
    %1491 = vdwg.mxu0
    %v1492 = vmul.f32 %v1411, 0.35355338
    %v1493 = vmul.f32 %v1489, 0.35355338
    %v1494 = vsel %vm490, -1e+09, %v1492
    %v1495 = vsel %vm491, -1e+09, %v1493
    %v1496 = vsel %vm336, %v1494, -inf
    %1497 = vmax.xlane.f32.xlu0 %v1496
    %v1498 = vpop.xlane.xlu0 %1497
    %v1499 = vsel %vm336, %v1495, -inf
    %1500 = vmax.xlane.f32.xlu0 %v1499
    %v1501 = vpop.xlane.xlu0 %1500
    %v1502 = vsub.f32 %v1494, %v1498
    %v1503 = vsub.f32 %v1495, %v1501
    %v1504 = vmul.f32 %v1502, 1.442695
    %v1505 = vpow.pop %v1504
    %v1506 = vmul.f32 %v1503, 1.442695
    %v1507 = vpow.pop %v1506
    %v1508 = vsel %vm336, %v1505, 0.0
    %1509 = vadd.xlane.f32.xlu0 %v1508
    %v1510 = vpop.xlane.xlu0 %1509
    %v1511 = vsel %vm336, %v1507, 0.0
    %1512 = vadd.xlane.f32.xlu0 %v1511
    %v1513 = vpop.xlane.xlu0 %1512
    %v1514 = vrcp.pop %v1510
    %v1515 = vrcp.pop %v1513
    %v1516 = vmul.f32 %v1505, %v1514
    %v1517 = vmul.f32 %v1507, %v1515
    %1518 = vrot.lane.b32.xlu0 %v327, 40
    %v1519 = vpop.permute.xlu0 %1518
    %v1522 = vsel %vm336, %v1516, 0
    %1524 = vmatprep.subr.mxu0 0.0
    %1525 = vmatpush1.msra.mxu0 0.0
    %1526 = vmatprep.subr.mxu0 0.0
    %1527 = vmatpush1.msra.mxu0 0.0
    %1528 = vmatprep.subr.mxu0 0.0
    %1529 = vmatpush1.msra.mxu0 0.0
    %1530 = vmatprep.subr.mxu0 0.0
    %1531 = vmatpush1.msra.mxu0 0.0
    %1532 = vmatprep.subr.mxu0 0.0
    %1533 = vmatpush1.msra.mxu0 0.0
    %1534 = vmatprep.subr.mxu0 0.0
    %1535 = vmatpush1.msra.mxu0 0.0
    %1536 = vmatprep.subr.mxu0 0.0
    %1537 = vmatpush1.msra.mxu0 0.0
    %1538 = vmatprep.subr.mxu0 0.0
    %1539 = vmatpush1.msra.mxu0 0.0
    %1540 = vmatprep.subr.mxu0 0.0
    %1541 = vmatpush1.msra.mxu0 0.0
    %1542 = vmatprep.subr.mxu0 0.0
    %1543 = vmatpush1.msra.mxu0 0.0
    %1544 = vmatprep.subr.mxu0 0.0
    %1545 = vmatpush1.msra.mxu0 0.0
    %1546 = vmatprep.subr.mxu0 0.0
    %1547 = vmatpush1.msra.mxu0 0.0
    %1548 = vmatprep.subr.mxu0 0.0
    %1549 = vmatpush1.msra.mxu0 0.0
    %1550 = vmatprep.subr.mxu0 0.0
    %1551 = vmatpush1.msra.mxu0 0.0
    %1552 = vmatprep.subr.mxu0 0.0
    %1553 = vmatpush1.msra.mxu0 0.0
    %1554 = vmatprep.subr.mxu0 0.0
    %1555 = vmatpush1.msra.mxu0 %v1519
    %1556 = vmatprep.subr.mxu0 0.0
    %1557 = vmatpush2.msra.mxu0 0.0
    %1558 = vmatprep.subr.mxu0 0.0
    %1559 = vmatpush2.msra.mxu0 0.0
    %1560 = vmatprep.subr.mxu0 0.0
    %1561 = vmatpush2.msra.mxu0 0.0
    %1562 = vmatprep.subr.mxu0 0.0
    %1563 = vmatpush2.msra.mxu0 0.0
    %1564 = vmatprep.subr.mxu0 0.0
    %1565 = vmatpush2.msra.mxu0 0.0
    %1566 = vmatprep.subr.mxu0 0.0
    %1567 = vmatpush2.msra.mxu0 0.0
    %1568 = vmatprep.subr.mxu0 0.0
    %1569 = vmatpush2.msra.mxu0 0.0
    %1570 = vmatprep.subr.mxu0 0.0
    %1571 = vmatpush2.msra.mxu0 0.0
    %1572 = vmatprep.subr.mxu0 0.0
    %1573 = vmatpush2.msra.mxu0 0.0
    %1574 = vmatprep.subr.mxu0 0.0
    %1575 = vmatpush2.msra.mxu0 0.0
    %1576 = vmatprep.subr.mxu0 0.0
    %1577 = vmatpush2.msra.mxu0 0.0
    %1578 = vmatprep.subr.mxu0 0.0
    %1579 = vmatpush2.msra.mxu0 0.0
    %1580 = vmatprep.subr.mxu0 0.0
    %1581 = vmatpush2.msra.mxu0 0.0
    %1582 = vmatprep.subr.mxu0 0.0
    %1583 = vmatpush2.msra.mxu0 0.0
    %1584 = vmatprep.subr.mxu0 0.0
    %1585 = vmatpush2.msra.mxu0 0.0
    %1586 = vmatprep.subr.mxu0 0.0
    %1587 = vmatpush2.msra.mxu0 0.0
    %1588 = vmatprep.mubr.f32.mxu0 0.0
    %1589 = vmatmul.mubr.f32.gmra.mxu0 %v1522
    %v1590 = vpop.f32.mrf.mxu0
    %v1591 = vadd.f32 0.0, %v1590
    %v1592 = vpop.f32.mrf.mxu0
    %1593 = vdwg.mxu0
    %1594 = vrot.lane.b32.xlu0 %v330, 40
    %v1595 = vpop.permute.xlu0 %1594
    %v1598 = vsel %vm336, %v1517, 0
    %1600 = vmatprep.subr.mxu0 0.0
    %1601 = vmatpush1.msra.mxu0 0.0
    %1602 = vmatprep.subr.mxu0 0.0
    %1603 = vmatpush1.msra.mxu0 0.0
    %1604 = vmatprep.subr.mxu0 0.0
    %1605 = vmatpush1.msra.mxu0 0.0
    %1606 = vmatprep.subr.mxu0 0.0
    %1607 = vmatpush1.msra.mxu0 0.0
    %1608 = vmatprep.subr.mxu0 0.0
    %1609 = vmatpush1.msra.mxu0 0.0
    %1610 = vmatprep.subr.mxu0 0.0
    %1611 = vmatpush1.msra.mxu0 0.0
    %1612 = vmatprep.subr.mxu0 0.0
    %1613 = vmatpush1.msra.mxu0 0.0
    %1614 = vmatprep.subr.mxu0 0.0
    %1615 = vmatpush1.msra.mxu0 0.0
    %1616 = vmatprep.subr.mxu0 0.0
    %1617 = vmatpush1.msra.mxu0 0.0
    %1618 = vmatprep.subr.mxu0 0.0
    %1619 = vmatpush1.msra.mxu0 0.0
    %1620 = vmatprep.subr.mxu0 0.0
    %1621 = vmatpush1.msra.mxu0 0.0
    %1622 = vmatprep.subr.mxu0 0.0
    %1623 = vmatpush1.msra.mxu0 0.0
    %1624 = vmatprep.subr.mxu0 0.0
    %1625 = vmatpush1.msra.mxu0 0.0
    %1626 = vmatprep.subr.mxu0 0.0
    %1627 = vmatpush1.msra.mxu0 0.0
    %1628 = vmatprep.subr.mxu0 0.0
    %1629 = vmatpush1.msra.mxu0 0.0
    %1630 = vmatprep.subr.mxu0 0.0
    %1631 = vmatpush1.msra.mxu0 %v1595
    %1632 = vmatprep.subr.mxu0 0.0
    %1633 = vmatpush2.msra.mxu0 0.0
    %1634 = vmatprep.subr.mxu0 0.0
    %1635 = vmatpush2.msra.mxu0 0.0
    %1636 = vmatprep.subr.mxu0 0.0
    %1637 = vmatpush2.msra.mxu0 0.0
    %1638 = vmatprep.subr.mxu0 0.0
    %1639 = vmatpush2.msra.mxu0 0.0
    %1640 = vmatprep.subr.mxu0 0.0
    %1641 = vmatpush2.msra.mxu0 0.0
    %1642 = vmatprep.subr.mxu0 0.0
    %1643 = vmatpush2.msra.mxu0 0.0
    %1644 = vmatprep.subr.mxu0 0.0
    %1645 = vmatpush2.msra.mxu0 0.0
    %1646 = vmatprep.subr.mxu0 0.0
    %1647 = vmatpush2.msra.mxu0 0.0
    %1648 = vmatprep.subr.mxu0 0.0
    %1649 = vmatpush2.msra.mxu0 0.0
    %1650 = vmatprep.subr.mxu0 0.0
    %1651 = vmatpush2.msra.mxu0 0.0
    %1652 = vmatprep.subr.mxu0 0.0
    %1653 = vmatpush2.msra.mxu0 0.0
    %1654 = vmatprep.subr.mxu0 0.0
    %1655 = vmatpush2.msra.mxu0 0.0
    %1656 = vmatprep.subr.mxu0 0.0
    %1657 = vmatpush2.msra.mxu0 0.0
    %1658 = vmatprep.subr.mxu0 0.0
    %1659 = vmatpush2.msra.mxu0 0.0
    %1660 = vmatprep.subr.mxu0 0.0
    %1661 = vmatpush2.msra.mxu0 0.0
    %1662 = vmatprep.subr.mxu0 0.0
    %1663 = vmatpush2.msra.mxu0 0.0
    %1664 = vmatprep.mubr.f32.mxu0 0.0
    %1665 = vmatmul.mubr.f32.gmra.mxu0 %v1598
    %v1666 = vpop.f32.mrf.mxu0
    %v1667 = vadd.f32 0.0, %v1666
    %v1668 = vpop.f32.mrf.mxu0
    %1669 = vdwg.mxu0
    %1672 = vrot.lane.b32.xlu0 %v923, 8
    %v1673 = vpop.permute.xlu0 %1672
    %1674 = vrot.lane.b32.xlu0 %v999, 8
    %v1675 = vpop.permute.xlu0 %1674
    %1680 = vrot.lane.b32.xlu0 %v1257, 16
    %v1681 = vpop.permute.xlu0 %1680
    %1682 = vrot.lane.b32.xlu0 %v1333, 16
    %v1683 = vpop.permute.xlu0 %1682
    %1688 = vrot.lane.b32.xlu0 %v1591, 24
    %v1689 = vpop.permute.xlu0 %1688
    %1690 = vrot.lane.b32.xlu0 %v1667, 24
    %v1691 = vpop.permute.xlu0 %1690
    %v1694 = vsel %vm336, %v589, %v1673
    %v1695 = vsel %vm336, %v665, %v1675
    %vm1696 = vcmask 130048
    %v1697 = vsel %vm1696, %v1694, %v1681
    %v1698 = vsel %vm1696, %v1695, %v1683
    %vm1699 = vcmask 195584
    %v1700 = vsel %vm1699, %v1697, %v1689
    %v1701 = vsel %vm1699, %v1698, %v1691
    %v1702 = vld [vmem:[%s10] sm:$0xf]
    %v1703 = vld [vmem:[%s10 + $0x4] sm:$0xf]
    %v1704 = vld [vmem:[%s10 + $0x8] sm:$0xf]
    %v1705 = vld [vmem:[%s10 + $0xc] sm:$0xf]
    %v1706 = vld [vmem:[%s11] sm:$0x1]
    %v1707 = vpack.c.bf16 %v1701, %v1700
    %v1709 = vlaneseq
    %v1710 = vshrl.u32 %v1709, 7
    %v1711 = vsub.s32 0, %v1710
    %v1712 = vrot.slane %v1706, %v1711
    %v1718 = vunpack.c.l.b16 %v1702
    %v1719 = vunpack.c.l.b16 %v1703
    %v1720 = vunpack.c.l.b16 %v1704
    %v1721 = vunpack.c.l.b16 %v1705
    %v1722 = vpack.c.b16 %v1719, %v1718
    %v1723 = vpack.c.b16 %v1721, %v1720
    %v1727 = vsel %vm207, %v1707, 0
    %1729 = vmatprep.subr.bf16.mxu0 0
    %1730 = vmatpush1.bf16.msra.mxu0 0
    %1731 = vmatprep.subr.bf16.mxu0 0
    %1732 = vmatpush1.bf16.msra.mxu0 0
    %1733 = vmatprep.subr.bf16.mxu0 0
    %1734 = vmatpush1.bf16.msra.mxu0 0
    %1735 = vmatprep.subr.bf16.mxu0 0
    %1736 = vmatpush1.bf16.msra.mxu0 0
    %1737 = vmatprep.subr.bf16.mxu0 0
    %1738 = vmatpush1.bf16.msra.mxu0 0
    %1739 = vmatprep.subr.bf16.mxu0 0
    %1740 = vmatpush1.bf16.msra.mxu0 0
    %1741 = vmatprep.subr.bf16.mxu0 0
    %1742 = vmatpush1.bf16.msra.mxu0 %v1723
    %1743 = vmatprep.subr.bf16.mxu0 0
    %1744 = vmatpush1.bf16.msra.mxu0 %v1722
    %1745 = vmatprep.subr.bf16.mxu0 0
    %1746 = vmatpush2.bf16.msra.mxu0 0
    %1747 = vmatprep.subr.bf16.mxu0 0
    %1748 = vmatpush2.bf16.msra.mxu0 0
    %1749 = vmatprep.subr.bf16.mxu0 0
    %1750 = vmatpush2.bf16.msra.mxu0 0
    %1751 = vmatprep.subr.bf16.mxu0 0
    %1752 = vmatpush2.bf16.msra.mxu0 0
    %1753 = vmatprep.subr.bf16.mxu0 0
    %1754 = vmatpush2.bf16.msra.mxu0 0
    %1755 = vmatprep.subr.bf16.mxu0 0
    %1756 = vmatpush2.bf16.msra.mxu0 0
    %1757 = vmatprep.subr.bf16.mxu0 0
    %1758 = vmatpush2.bf16.msra.mxu0 0
    %1759 = vmatprep.subr.bf16.mxu0 0
    %1760 = vmatpush2.bf16.msra.mxu0 0
    %1761 = vmatprep.mubr.bf16.mxu0 0
    %1762 = vmatmul.mubr.bf16.gmra.mxu0 %v1727
    %v1763 = vpop.f32.mrf.mxu0
    %v1764 = vadd.f32 %v1712, %v1763
    %v1765 = vpop.f32.mrf.mxu0
    %v1766 = vpop.f32.mrf.mxu0
    %v1767 = vadd.f32 %v1712, %v1766
    %v1768 = vpop.f32.mrf.mxu0
    %1769 = vdwg.mxu0
    %v1770 = vadd.f32 %v197, %v1764
    %v1771 = vadd.f32 %v198, %v1767
    %v1772 = vld [vmem:[%s12] sm:$0x1]
    %v1773 = vld [vmem:[%s13] sm:$0x1]
    %v1774 = vsel %vm207, %v1770, 0.0
    %1775 = vadd.xlane.f32.xlu0 %v1774
    %v1776 = vpop.xlane.xlu0 %1775
    %v1777 = vsel %vm207, %v1771, 0.0
    %1778 = vadd.xlane.f32.xlu0 %v1777
    %v1779 = vpop.xlane.xlu0 %1778
    %v1780 = vmul.f32 %v1776, %v214
    %v1781 = vmul.f32 %v1779, %v214
    %v1782 = vsub.f32 %v1770, %v1780
    %v1783 = vsub.f32 %v1771, %v1781
    %v1784 = vmul.f32 %v1782, %v1782
    %v1785 = vmul.f32 %v1783, %v1783
    %v1786 = vsel %vm207, %v1784, 0.0
    %1787 = vadd.xlane.f32.xlu0 %v1786
    %v1788 = vpop.xlane.xlu0 %1787
    %v1789 = vsel %vm207, %v1785, 0.0
    %1790 = vadd.xlane.f32.xlu0 %v1789
    %v1791 = vpop.xlane.xlu0 %1790
    %v1792 = vmul.f32 %v1788, 0.032258064
    %v1793 = vmul.f32 %v1791, 0.032258064
    %v1794 = vrsqrt.pop %v1792
    %v1795 = vmul.f32 %v1792, %v1794
    %vm1796 = vcmp.eq.f32.partialorder %v1792, inf
    %v1797 = vsel %vm1796, %v1792, %v1795
    %vm1798 = vcmp.eq.f32.partialorder %v1792, 0.0
    %v1799 = vand.u32 %v1792, 2147483648
    %v1800 = vsel %vm1798, %v1799, %v1797
    %v1801 = vrsqrt.pop %v1793
    %v1802 = vmul.f32 %v1793, %v1801
    %vm1803 = vcmp.eq.f32.partialorder %v1793, inf
    %v1804 = vsel %vm1803, %v1793, %v1802
    %vm1805 = vcmp.eq.f32.partialorder %v1793, 0.0
    %v1806 = vand.u32 %v1793, 2147483648
    %v1807 = vsel %vm1805, %v1806, %v1804
    %v1808 = vadd.f32 %v1800, 1e-06
    %v1809 = vadd.f32 %v1807, 1e-06
    %v1810 = vrcp.pop %v1808
    %v1811 = vrcp.pop %v1809
    %v1812 = vmul.f32 %v1782, %v1810
    %v1813 = vmul.f32 %v1783, %v1811
    %v1815 = vlaneseq
    %v1816 = vshrl.u32 %v1815, 7
    %v1817 = vsub.s32 0, %v1816
    %v1818 = vrot.slane %v1772, %v1817
    %v1820 = vmul.f32 %v1818, %v1812
    %v1821 = vmul.f32 %v1818, %v1813
    %v1823 = vlaneseq
    %v1824 = vshrl.u32 %v1823, 7
    %v1825 = vsub.s32 0, %v1824
    %v1826 = vrot.slane %v1773, %v1825
    %v1828 = vadd.f32 %v1820, %v1826
    %v1829 = vadd.f32 %v1821, %v1826
    %v1830 = vld [vmem:[%s14] sm:$0xf]
    %v1831 = vld [vmem:[%s14 + $0x4] sm:$0xf]
    %v1832 = vld [vmem:[%s14 + $0x8] sm:$0xf]
    %v1833 = vld [vmem:[%s14 + $0xc] sm:$0xf]
    %v1834 = vld [vmem:[%s15] sm:$0x1]
    %v1835 = vpack.c.bf16 %v1829, %v1828
    %v1837 = vlaneseq
    %v1838 = vshrl.u32 %v1837, 7
    %v1839 = vsub.s32 0, %v1838
    %v1840 = vrot.slane %v1834, %v1839
    %v1846 = vunpack.c.l.b16 %v1830
    %v1847 = vunpack.c.l.b16 %v1831
    %v1848 = vunpack.c.l.b16 %v1832
    %v1849 = vunpack.c.l.b16 %v1833
    %v1850 = vpack.c.b16 %v1847, %v1846
    %v1851 = vpack.c.b16 %v1849, %v1848
    %v1855 = vsel %vm207, %v1835, 0
    %1857 = vmatprep.subr.bf16.mxu0 0
    %1858 = vmatpush1.bf16.msra.mxu0 0
    %1859 = vmatprep.subr.bf16.mxu0 0
    %1860 = vmatpush1.bf16.msra.mxu0 0
    %1861 = vmatprep.subr.bf16.mxu0 0
    %1862 = vmatpush1.bf16.msra.mxu0 0
    %1863 = vmatprep.subr.bf16.mxu0 0
    %1864 = vmatpush1.bf16.msra.mxu0 0
    %1865 = vmatprep.subr.bf16.mxu0 0
    %1866 = vmatpush1.bf16.msra.mxu0 0
    %1867 = vmatprep.subr.bf16.mxu0 0
    %1868 = vmatpush1.bf16.msra.mxu0 0
    %1869 = vmatprep.subr.bf16.mxu0 0
    %1870 = vmatpush1.bf16.msra.mxu0 %v1851
    %1871 = vmatprep.subr.bf16.mxu0 0
    %1872 = vmatpush1.bf16.msra.mxu0 %v1850
    %1873 = vmatprep.subr.bf16.mxu0 0
    %1874 = vmatpush2.bf16.msra.mxu0 0
    %1875 = vmatprep.subr.bf16.mxu0 0
    %1876 = vmatpush2.bf16.msra.mxu0 0
    %1877 = vmatprep.subr.bf16.mxu0 0
    %1878 = vmatpush2.bf16.msra.mxu0 0
    %1879 = vmatprep.subr.bf16.mxu0 0
    %1880 = vmatpush2.bf16.msra.mxu0 0
    %1881 = vmatprep.subr.bf16.mxu0 0
    %1882 = vmatpush2.bf16.msra.mxu0 0
    %1883 = vmatprep.subr.bf16.mxu0 0
    %1884 = vmatpush2.bf16.msra.mxu0 0
    %1885 = vmatprep.subr.bf16.mxu0 0
    %1886 = vmatpush2.bf16.msra.mxu0 0
    %1887 = vmatprep.subr.bf16.mxu0 0
    %1888 = vmatpush2.bf16.msra.mxu0 0
    %1889 = vmatprep.mubr.bf16.mxu0 0
    %1890 = vmatmul.mubr.bf16.gmra.mxu0 %v1855
    %v1891 = vpop.f32.mrf.mxu0
    %v1892 = vadd.f32 %v1840, %v1891
    %v1893 = vpop.f32.mrf.mxu0
    %v1894 = vpop.f32.mrf.mxu0
    %v1895 = vadd.f32 %v1840, %v1894
    %v1896 = vpop.f32.mrf.mxu0
    %1897 = vdwg.mxu0
    %v1898 = vld [vmem:[%s16] sm:$0xf]
    %v1899 = vld [vmem:[%s16 + $0x4] sm:$0xf]
    %v1900 = vld [vmem:[%s16 + $0x8] sm:$0xf]
    %v1901 = vld [vmem:[%s16 + $0xc] sm:$0xf]
    %v1902 = vld [vmem:[%s17] sm:$0x1]
    %v1903 = vpack.c.bf16 %v200, %v199
    %v1905 = vlaneseq
    %v1906 = vshrl.u32 %v1905, 7
    %v1907 = vsub.s32 0, %v1906
    %v1908 = vrot.slane %v1902, %v1907
    %v1914 = vunpack.c.l.b16 %v1898
    %v1915 = vunpack.c.l.b16 %v1899
    %v1916 = vunpack.c.l.b16 %v1900
    %v1917 = vunpack.c.l.b16 %v1901
    %v1918 = vpack.c.b16 %v1915, %v1914
    %v1919 = vpack.c.b16 %v1917, %v1916
    %v1923 = vsel %vm207, %v1903, 0
    %1925 = vmatprep.subr.bf16.mxu0 0
    %1926 = vmatpush1.bf16.msra.mxu0 0
    %1927 = vmatprep.subr.bf16.mxu0 0
    %1928 = vmatpush1.bf16.msra.mxu0 0
    %1929 = vmatprep.subr.bf16.mxu0 0
    %1930 = vmatpush1.bf16.msra.mxu0 0
    %1931 = vmatprep.subr.bf16.mxu0 0
    %1932 = vmatpush1.bf16.msra.mxu0 0
    %1933 = vmatprep.subr.bf16.mxu0 0
    %1934 = vmatpush1.bf16.msra.mxu0 0
    %1935 = vmatprep.subr.bf16.mxu0 0
    %1936 = vmatpush1.bf16.msra.mxu0 0
    %1937 = vmatprep.subr.bf16.mxu0 0
    %1938 = vmatpush1.bf16.msra.mxu0 %v1919
    %1939 = vmatprep.subr.bf16.mxu0 0
    %1940 = vmatpush1.bf16.msra.mxu0 %v1918
    %1941 = vmatprep.subr.bf16.mxu0 0
    %1942 = vmatpush2.bf16.msra.mxu0 0
    %1943 = vmatprep.subr.bf16.mxu0 0
    %1944 = vmatpush2.bf16.msra.mxu0 0
    %1945 = vmatprep.subr.bf16.mxu0 0
    %1946 = vmatpush2.bf16.msra.mxu0 0
    %1947 = vmatprep.subr.bf16.mxu0 0
    %1948 = vmatpush2.bf16.msra.mxu0 0
    %1949 = vmatprep.subr.bf16.mxu0 0
    %1950 = vmatpush2.bf16.msra.mxu0 0
    %1951 = vmatprep.subr.bf16.mxu0 0
    %1952 = vmatpush2.bf16.msra.mxu0 0
    %1953 = vmatprep.subr.bf16.mxu0 0
    %1954 = vmatpush2.bf16.msra.mxu0 0
    %1955 = vmatprep.subr.bf16.mxu0 0
    %1956 = vmatpush2.bf16.msra.mxu0 0
    %1957 = vmatprep.mubr.bf16.mxu0 0
    %1958 = vmatmul.mubr.bf16.gmra.mxu0 %v1923
    %v1959 = vpop.f32.mrf.mxu0
    %v1960 = vadd.f32 %v1908, %v1959
    %v1961 = vpop.f32.mrf.mxu0
    %v1962 = vpop.f32.mrf.mxu0
    %v1963 = vadd.f32 %v1908, %v1962
    %v1964 = vpop.f32.mrf.mxu0
    %1965 = vdwg.mxu0
    %v1967 = vsel %vm336, %v1892, 0
    %v1970 = vsel %vm336, %v1960, 0
    %1972 = vmatprep.subr.mxu0 0.0
    %1973 = vmatpush1.xpose.msra.mxu0 0.0
    %1974 = vmatprep.subr.mxu0 0.0
    %1975 = vmatpush1.xpose.msra.mxu0 0.0
    %1976 = vmatprep.subr.mxu0 0.0
    %1977 = vmatpush1.xpose.msra.mxu0 0.0
    %1978 = vmatprep.subr.mxu0 0.0
    %1979 = vmatpush1.xpose.msra.mxu0 0.0
    %1980 = vmatprep.subr.mxu0 0.0
    %1981 = vmatpush1.xpose.msra.mxu0 0.0
    %1982 = vmatprep.subr.mxu0 0.0
    %1983 = vmatpush1.xpose.msra.mxu0 0.0
    %1984 = vmatprep.subr.mxu0 0.0
    %1985 = vmatpush1.xpose.msra.mxu0 0.0
    %1986 = vmatprep.subr.mxu0 0.0
    %1987 = vmatpush1.xpose.msra.mxu0 0.0
    %1988 = vmatprep.subr.mxu0 0.0
    %1989 = vmatpush1.xpose.msra.mxu0 0.0
    %1990 = vmatprep.subr.mxu0 0.0
    %1991 = vmatpush1.xpose.msra.mxu0 0.0
    %1992 = vmatprep.subr.mxu0 0.0
    %1993 = vmatpush1.xpose.msra.mxu0 0.0
    %1994 = vmatprep.subr.mxu0 0.0
    %1995 = vmatpush1.xpose.msra.mxu0 0.0
    %1996 = vmatprep.subr.mxu0 0.0
    %1997 = vmatpush1.xpose.msra.mxu0 0.0
    %1998 = vmatprep.subr.mxu0 0.0
    %1999 = vmatpush1.xpose.msra.mxu0 0.0
    %2000 = vmatprep.subr.mxu0 0.0
    %2001 = vmatpush1.xpose.msra.mxu0 0.0
    %2002 = vmatprep.subr.mxu0 0.0
    %2003 = vmatpush1.xpose.msra.mxu0 %v1970
    %2004 = vmatprep.subr.mxu0 0.0
    %2005 = vmatpush2.xpose.msra.mxu0 0.0
    %2006 = vmatprep.subr.mxu0 0.0
    %2007 = vmatpush2.xpose.msra.mxu0 0.0
    %2008 = vmatprep.subr.mxu0 0.0
    %2009 = vmatpush2.xpose.msra.mxu0 0.0
    %2010 = vmatprep.subr.mxu0 0.0
    %2011 = vmatpush2.xpose.msra.mxu0 0.0
    %2012 = vmatprep.subr.mxu0 0.0
    %2013 = vmatpush2.xpose.msra.mxu0 0.0
    %2014 = vmatprep.subr.mxu0 0.0
    %2015 = vmatpush2.xpose.msra.mxu0 0.0
    %2016 = vmatprep.subr.mxu0 0.0
    %2017 = vmatpush2.xpose.msra.mxu0 0.0
    %2018 = vmatprep.subr.mxu0 0.0
    %2019 = vmatpush2.xpose.msra.mxu0 0.0
    %2020 = vmatprep.subr.mxu0 0.0
    %2021 = vmatpush2.xpose.msra.mxu0 0.0
    %2022 = vmatprep.subr.mxu0 0.0
    %2023 = vmatpush2.xpose.msra.mxu0 0.0
    %2024 = vmatprep.subr.mxu0 0.0
    %2025 = vmatpush2.xpose.msra.mxu0 0.0
    %2026 = vmatprep.subr.mxu0 0.0
    %2027 = vmatpush2.xpose.msra.mxu0 0.0
    %2028 = vmatprep.subr.mxu0 0.0
    %2029 = vmatpush2.xpose.msra.mxu0 0.0
    %2030 = vmatprep.subr.mxu0 0.0
    %2031 = vmatpush2.xpose.msra.mxu0 0.0
    %2032 = vmatprep.subr.mxu0 0.0
    %2033 = vmatpush2.xpose.msra.mxu0 0.0
    %2034 = vmatprep.subr.mxu0 0.0
    %2035 = vmatpush2.xpose.msra.mxu0 0.0
    %2036 = vmatprep.mubr.f32.mxu0 0.0
    %2037 = vmatmul.mubr.f32.gmra.mxu0 %v1967
    %v2038 = vpop.f32.mrf.mxu0
    %v2039 = vadd.f32 0.0, %v2038
    %v2040 = vpop.f32.mrf.mxu0
    %2041 = vdwg.mxu0
    %v2043 = vsel %vm336, %v1895, 0
    %v2046 = vsel %vm336, %v1963, 0
    %2048 = vmatprep.subr.mxu0 0.0
    %2049 = vmatpush1.xpose.msra.mxu0 0.0
    %2050 = vmatprep.subr.mxu0 0.0
    %2051 = vmatpush1.xpose.msra.mxu0 0.0
    %2052 = vmatprep.subr.mxu0 0.0
    %2053 = vmatpush1.xpose.msra.mxu0 0.0
    %2054 = vmatprep.subr.mxu0 0.0
    %2055 = vmatpush1.xpose.msra.mxu0 0.0
    %2056 = vmatprep.subr.mxu0 0.0
    %2057 = vmatpush1.xpose.msra.mxu0 0.0
    %2058 = vmatprep.subr.mxu0 0.0
    %2059 = vmatpush1.xpose.msra.mxu0 0.0
    %2060 = vmatprep.subr.mxu0 0.0
    %2061 = vmatpush1.xpose.msra.mxu0 0.0
    %2062 = vmatprep.subr.mxu0 0.0
    %2063 = vmatpush1.xpose.msra.mxu0 0.0
    %2064 = vmatprep.subr.mxu0 0.0
    %2065 = vmatpush1.xpose.msra.mxu0 0.0
    %2066 = vmatprep.subr.mxu0 0.0
    %2067 = vmatpush1.xpose.msra.mxu0 0.0
    %2068 = vmatprep.subr.mxu0 0.0
    %2069 = vmatpush1.xpose.msra.mxu0 0.0
    %2070 = vmatprep.subr.mxu0 0.0
    %2071 = vmatpush1.xpose.msra.mxu0 0.0
    %2072 = vmatprep.subr.mxu0 0.0
    %2073 = vmatpush1.xpose.msra.mxu0 0.0
    %2074 = vmatprep.subr.mxu0 0.0
    %2075 = vmatpush1.xpose.msra.mxu0 0.0
    %2076 = vmatprep.subr.mxu0 0.0
    %2077 = vmatpush1.xpose.msra.mxu0 0.0
    %2078 = vmatprep.subr.mxu0 0.0
    %2079 = vmatpush1.xpose.msra.mxu0 %v2046
    %2080 = vmatprep.subr.mxu0 0.0
    %2081 = vmatpush2.xpose.msra.mxu0 0.0
    %2082 = vmatprep.subr.mxu0 0.0
    %2083 = vmatpush2.xpose.msra.mxu0 0.0
    %2084 = vmatprep.subr.mxu0 0.0
    %2085 = vmatpush2.xpose.msra.mxu0 0.0
    %2086 = vmatprep.subr.mxu0 0.0
    %2087 = vmatpush2.xpose.msra.mxu0 0.0
    %2088 = vmatprep.subr.mxu0 0.0
    %2089 = vmatpush2.xpose.msra.mxu0 0.0
    %2090 = vmatprep.subr.mxu0 0.0
    %2091 = vmatpush2.xpose.msra.mxu0 0.0
    %2092 = vmatprep.subr.mxu0 0.0
    %2093 = vmatpush2.xpose.msra.mxu0 0.0
    %2094 = vmatprep.subr.mxu0 0.0
    %2095 = vmatpush2.xpose.msra.mxu0 0.0
    %2096 = vmatprep.subr.mxu0 0.0
    %2097 = vmatpush2.xpose.msra.mxu0 0.0
    %2098 = vmatprep.subr.mxu0 0.0
    %2099 = vmatpush2.xpose.msra.mxu0 0.0
    %2100 = vmatprep.subr.mxu0 0.0
    %2101 = vmatpush2.xpose.msra.mxu0 0.0
    %2102 = vmatprep.subr.mxu0 0.0
    %2103 = vmatpush2.xpose.msra.mxu0 0.0
    %2104 = vmatprep.subr.mxu0 0.0
    %2105 = vmatpush2.xpose.msra.mxu0 0.0
    %2106 = vmatprep.subr.mxu0 0.0
    %2107 = vmatpush2.xpose.msra.mxu0 0.0
    %2108 = vmatprep.subr.mxu0 0.0
    %2109 = vmatpush2.xpose.msra.mxu0 0.0
    %2110 = vmatprep.subr.mxu0 0.0
    %2111 = vmatpush2.xpose.msra.mxu0 0.0
    %2112 = vmatprep.mubr.f32.mxu0 0.0
    %2113 = vmatmul.mubr.f32.gmra.mxu0 %v2043
    %v2114 = vpop.f32.mrf.mxu0
    %v2115 = vadd.f32 0.0, %v2114
    %v2116 = vpop.f32.mrf.mxu0
    %2117 = vdwg.mxu0
    %v2118 = vmul.f32 %v2039, 0.35355338
    %v2119 = vmul.f32 %v2115, 0.35355338
    %vm2120 = vcmp.eq.f32.partialorder %v203, 0.0
    %vm2121 = vcmp.eq.f32.partialorder %v204, 0.0
    %v2122 = vsel %vm2120, -1e+09, %v2118
    %v2123 = vsel %vm2121, -1e+09, %v2119
    %v2124 = vsel %vm336, %v2122, -inf
    %2125 = vmax.xlane.f32.xlu0 %v2124
    %v2126 = vpop.xlane.xlu0 %2125
    %v2127 = vsel %vm336, %v2123, -inf
    %2128 = vmax.xlane.f32.xlu0 %v2127
    %v2129 = vpop.xlane.xlu0 %2128
    %v2130 = vsub.f32 %v2122, %v2126
    %v2131 = vsub.f32 %v2123, %v2129
    %v2132 = vmul.f32 %v2130, 1.442695
    %v2133 = vpow.pop %v2132
    %v2134 = vmul.f32 %v2131, 1.442695
    %v2135 = vpow.pop %v2134
    %v2136 = vsel %vm336, %v2133, 0.0
    %2137 = vadd.xlane.f32.xlu0 %v2136
    %v2138 = vpop.xlane.xlu0 %2137
    %v2139 = vsel %vm336, %v2135, 0.0
    %2140 = vadd.xlane.f32.xlu0 %v2139
    %v2141 = vpop.xlane.xlu0 %2140
    %v2142 = vrcp.pop %v2138
    %v2143 = vrcp.pop %v2141
    %v2144 = vmul.f32 %v2133, %v2142
    %v2145 = vmul.f32 %v2135, %v2143
    %2146 = vrot.lane.b32.xlu0 %v1960, 96
    %v2147 = vpop.permute.xlu0 %2146
    %v2150 = vsel %vm336, %v2144, 0
    %2152 = vmatprep.subr.mxu0 0.0
    %2153 = vmatpush1.msra.mxu0 0.0
    %2154 = vmatprep.subr.mxu0 0.0
    %2155 = vmatpush1.msra.mxu0 0.0
    %2156 = vmatprep.subr.mxu0 0.0
    %2157 = vmatpush1.msra.mxu0 0.0
    %2158 = vmatprep.subr.mxu0 0.0
    %2159 = vmatpush1.msra.mxu0 0.0
    %2160 = vmatprep.subr.mxu0 0.0
    %2161 = vmatpush1.msra.mxu0 0.0
    %2162 = vmatprep.subr.mxu0 0.0
    %2163 = vmatpush1.msra.mxu0 0.0
    %2164 = vmatprep.subr.mxu0 0.0
    %2165 = vmatpush1.msra.mxu0 0.0
    %2166 = vmatprep.subr.mxu0 0.0
    %2167 = vmatpush1.msra.mxu0 0.0
    %2168 = vmatprep.subr.mxu0 0.0
    %2169 = vmatpush1.msra.mxu0 0.0
    %2170 = vmatprep.subr.mxu0 0.0
    %2171 = vmatpush1.msra.mxu0 0.0
    %2172 = vmatprep.subr.mxu0 0.0
    %2173 = vmatpush1.msra.mxu0 0.0
    %2174 = vmatprep.subr.mxu0 0.0
    %2175 = vmatpush1.msra.mxu0 0.0
    %2176 = vmatprep.subr.mxu0 0.0
    %2177 = vmatpush1.msra.mxu0 0.0
    %2178 = vmatprep.subr.mxu0 0.0
    %2179 = vmatpush1.msra.mxu0 0.0
    %2180 = vmatprep.subr.mxu0 0.0
    %2181 = vmatpush1.msra.mxu0 0.0
    %2182 = vmatprep.subr.mxu0 0.0
    %2183 = vmatpush1.msra.mxu0 %v2147
    %2184 = vmatprep.subr.mxu0 0.0
    %2185 = vmatpush2.msra.mxu0 0.0
    %2186 = vmatprep.subr.mxu0 0.0
    %2187 = vmatpush2.msra.mxu0 0.0
    %2188 = vmatprep.subr.mxu0 0.0
    %2189 = vmatpush2.msra.mxu0 0.0
    %2190 = vmatprep.subr.mxu0 0.0
    %2191 = vmatpush2.msra.mxu0 0.0
    %2192 = vmatprep.subr.mxu0 0.0
    %2193 = vmatpush2.msra.mxu0 0.0
    %2194 = vmatprep.subr.mxu0 0.0
    %2195 = vmatpush2.msra.mxu0 0.0
    %2196 = vmatprep.subr.mxu0 0.0
    %2197 = vmatpush2.msra.mxu0 0.0
    %2198 = vmatprep.subr.mxu0 0.0
    %2199 = vmatpush2.msra.mxu0 0.0
    %2200 = vmatprep.subr.mxu0 0.0
    %2201 = vmatpush2.msra.mxu0 0.0
    %2202 = vmatprep.subr.mxu0 0.0
    %2203 = vmatpush2.msra.mxu0 0.0
    %2204 = vmatprep.subr.mxu0 0.0
    %2205 = vmatpush2.msra.mxu0 0.0
    %2206 = vmatprep.subr.mxu0 0.0
    %2207 = vmatpush2.msra.mxu0 0.0
    %2208 = vmatprep.subr.mxu0 0.0
    %2209 = vmatpush2.msra.mxu0 0.0
    %2210 = vmatprep.subr.mxu0 0.0
    %2211 = vmatpush2.msra.mxu0 0.0
    %2212 = vmatprep.subr.mxu0 0.0
    %2213 = vmatpush2.msra.mxu0 0.0
    %2214 = vmatprep.subr.mxu0 0.0
    %2215 = vmatpush2.msra.mxu0 0.0
    %2216 = vmatprep.mubr.f32.mxu0 0.0
    %2217 = vmatmul.mubr.f32.gmra.mxu0 %v2150
    %v2218 = vpop.f32.mrf.mxu0
    %v2219 = vadd.f32 0.0, %v2218
    %v2220 = vpop.f32.mrf.mxu0
    %2221 = vdwg.mxu0
    %2222 = vrot.lane.b32.xlu0 %v1963, 96
    %v2223 = vpop.permute.xlu0 %2222
    %v2226 = vsel %vm336, %v2145, 0
    %2228 = vmatprep.subr.mxu0 0.0
    %2229 = vmatpush1.msra.mxu0 0.0
    %2230 = vmatprep.subr.mxu0 0.0
    %2231 = vmatpush1.msra.mxu0 0.0
    %2232 = vmatprep.subr.mxu0 0.0
    %2233 = vmatpush1.msra.mxu0 0.0
    %2234 = vmatprep.subr.mxu0 0.0
    %2235 = vmatpush1.msra.mxu0 0.0
    %2236 = vmatprep.subr.mxu0 0.0
    %2237 = vmatpush1.msra.mxu0 0.0
    %2238 = vmatprep.subr.mxu0 0.0
    %2239 = vmatpush1.msra.mxu0 0.0
    %2240 = vmatprep.subr.mxu0 0.0
    %2241 = vmatpush1.msra.mxu0 0.0
    %2242 = vmatprep.subr.mxu0 0.0
    %2243 = vmatpush1.msra.mxu0 0.0
    %2244 = vmatprep.subr.mxu0 0.0
    %2245 = vmatpush1.msra.mxu0 0.0
    %2246 = vmatprep.subr.mxu0 0.0
    %2247 = vmatpush1.msra.mxu0 0.0
    %2248 = vmatprep.subr.mxu0 0.0
    %2249 = vmatpush1.msra.mxu0 0.0
    %2250 = vmatprep.subr.mxu0 0.0
    %2251 = vmatpush1.msra.mxu0 0.0
    %2252 = vmatprep.subr.mxu0 0.0
    %2253 = vmatpush1.msra.mxu0 0.0
    %2254 = vmatprep.subr.mxu0 0.0
    %2255 = vmatpush1.msra.mxu0 0.0
    %2256 = vmatprep.subr.mxu0 0.0
    %2257 = vmatpush1.msra.mxu0 0.0
    %2258 = vmatprep.subr.mxu0 0.0
    %2259 = vmatpush1.msra.mxu0 %v2223
    %2260 = vmatprep.subr.mxu0 0.0
    %2261 = vmatpush2.msra.mxu0 0.0
    %2262 = vmatprep.subr.mxu0 0.0
    %2263 = vmatpush2.msra.mxu0 0.0
    %2264 = vmatprep.subr.mxu0 0.0
    %2265 = vmatpush2.msra.mxu0 0.0
    %2266 = vmatprep.subr.mxu0 0.0
    %2267 = vmatpush2.msra.mxu0 0.0
    %2268 = vmatprep.subr.mxu0 0.0
    %2269 = vmatpush2.msra.mxu0 0.0
    %2270 = vmatprep.subr.mxu0 0.0
    %2271 = vmatpush2.msra.mxu0 0.0
    %2272 = vmatprep.subr.mxu0 0.0
    %2273 = vmatpush2.msra.mxu0 0.0
    %2274 = vmatprep.subr.mxu0 0.0
    %2275 = vmatpush2.msra.mxu0 0.0
    %2276 = vmatprep.subr.mxu0 0.0
    %2277 = vmatpush2.msra.mxu0 0.0
    %2278 = vmatprep.subr.mxu0 0.0
    %2279 = vmatpush2.msra.mxu0 0.0
    %2280 = vmatprep.subr.mxu0 0.0
    %2281 = vmatpush2.msra.mxu0 0.0
    %2282 = vmatprep.subr.mxu0 0.0
    %2283 = vmatpush2.msra.mxu0 0.0
    %2284 = vmatprep.subr.mxu0 0.0
    %2285 = vmatpush2.msra.mxu0 0.0
    %2286 = vmatprep.subr.mxu0 0.0
    %2287 = vmatpush2.msra.mxu0 0.0
    %2288 = vmatprep.subr.mxu0 0.0
    %2289 = vmatpush2.msra.mxu0 0.0
    %2290 = vmatprep.subr.mxu0 0.0
    %2291 = vmatpush2.msra.mxu0 0.0
    %2292 = vmatprep.mubr.f32.mxu0 0.0
    %2293 = vmatmul.mubr.f32.gmra.mxu0 %v2226
    %v2294 = vpop.f32.mrf.mxu0
    %v2295 = vadd.f32 0.0, %v2294
    %v2296 = vpop.f32.mrf.mxu0
    %2297 = vdwg.mxu0
    %2298 = vrot.lane.b32.xlu0 %v1892, 120
    %v2299 = vpop.permute.xlu0 %2298
    %2300 = vrot.lane.b32.xlu0 %v1960, 120
    %v2301 = vpop.permute.xlu0 %2300
    %v2302 = vsel %vm336, %v2299, 0
    %v2304 = vsel %vm336, %v2301, 0
    %2306 = vmatprep.subr.mxu0 0.0
    %2307 = vmatpush1.xpose.msra.mxu0 0.0
    %2308 = vmatprep.subr.mxu0 0.0
    %2309 = vmatpush1.xpose.msra.mxu0 0.0
    %2310 = vmatprep.subr.mxu0 0.0
    %2311 = vmatpush1.xpose.msra.mxu0 0.0
    %2312 = vmatprep.subr.mxu0 0.0
    %2313 = vmatpush1.xpose.msra.mxu0 0.0
    %2314 = vmatprep.subr.mxu0 0.0
    %2315 = vmatpush1.xpose.msra.mxu0 0.0
    %2316 = vmatprep.subr.mxu0 0.0
    %2317 = vmatpush1.xpose.msra.mxu0 0.0
    %2318 = vmatprep.subr.mxu0 0.0
    %2319 = vmatpush1.xpose.msra.mxu0 0.0
    %2320 = vmatprep.subr.mxu0 0.0
    %2321 = vmatpush1.xpose.msra.mxu0 0.0
    %2322 = vmatprep.subr.mxu0 0.0
    %2323 = vmatpush1.xpose.msra.mxu0 0.0
    %2324 = vmatprep.subr.mxu0 0.0
    %2325 = vmatpush1.xpose.msra.mxu0 0.0
    %2326 = vmatprep.subr.mxu0 0.0
    %2327 = vmatpush1.xpose.msra.mxu0 0.0
    %2328 = vmatprep.subr.mxu0 0.0
    %2329 = vmatpush1.xpose.msra.mxu0 0.0
    %2330 = vmatprep.subr.mxu0 0.0
    %2331 = vmatpush1.xpose.msra.mxu0 0.0
    %2332 = vmatprep.subr.mxu0 0.0
    %2333 = vmatpush1.xpose.msra.mxu0 0.0
    %2334 = vmatprep.subr.mxu0 0.0
    %2335 = vmatpush1.xpose.msra.mxu0 0.0
    %2336 = vmatprep.subr.mxu0 0.0
    %2337 = vmatpush1.xpose.msra.mxu0 %v2304
    %2338 = vmatprep.subr.mxu0 0.0
    %2339 = vmatpush2.xpose.msra.mxu0 0.0
    %2340 = vmatprep.subr.mxu0 0.0
    %2341 = vmatpush2.xpose.msra.mxu0 0.0
    %2342 = vmatprep.subr.mxu0 0.0
    %2343 = vmatpush2.xpose.msra.mxu0 0.0
    %2344 = vmatprep.subr.mxu0 0.0
    %2345 = vmatpush2.xpose.msra.mxu0 0.0
    %2346 = vmatprep.subr.mxu0 0.0
    %2347 = vmatpush2.xpose.msra.mxu0 0.0
    %2348 = vmatprep.subr.mxu0 0.0
    %2349 = vmatpush2.xpose.msra.mxu0 0.0
    %2350 = vmatprep.subr.mxu0 0.0
    %2351 = vmatpush2.xpose.msra.mxu0 0.0
    %2352 = vmatprep.subr.mxu0 0.0
    %2353 = vmatpush2.xpose.msra.mxu0 0.0
    %2354 = vmatprep.subr.mxu0 0.0
    %2355 = vmatpush2.xpose.msra.mxu0 0.0
    %2356 = vmatprep.subr.mxu0 0.0
    %2357 = vmatpush2.xpose.msra.mxu0 0.0
    %2358 = vmatprep.subr.mxu0 0.0
    %2359 = vmatpush2.xpose.msra.mxu0 0.0
    %2360 = vmatprep.subr.mxu0 0.0
    %2361 = vmatpush2.xpose.msra.mxu0 0.0
    %2362 = vmatprep.subr.mxu0 0.0
    %2363 = vmatpush2.xpose.msra.mxu0 0.0
    %2364 = vmatprep.subr.mxu0 0.0
    %2365 = vmatpush2.xpose.msra.mxu0 0.0
    %2366 = vmatprep.subr.mxu0 0.0
    %2367 = vmatpush2.xpose.msra.mxu0 0.0
    %2368 = vmatprep.subr.mxu0 0.0
    %2369 = vmatpush2.xpose.msra.mxu0 0.0
    %2370 = vmatprep.mubr.f32.mxu0 0.0
    %2371 = vmatmul.mubr.f32.gmra.mxu0 %v2302
    %v2372 = vpop.f32.mrf.mxu0
    %v2373 = vadd.f32 0.0, %v2372
    %v2374 = vpop.f32.mrf.mxu0
    %2375 = vdwg.mxu0
    %2376 = vrot.lane.b32.xlu0 %v1895, 120
    %v2377 = vpop.permute.xlu0 %2376
    %2378 = vrot.lane.b32.xlu0 %v1963, 120
    %v2379 = vpop.permute.xlu0 %2378
    %v2380 = vsel %vm336, %v2377, 0
    %v2382 = vsel %vm336, %v2379, 0
    %2384 = vmatprep.subr.mxu0 0.0
    %2385 = vmatpush1.xpose.msra.mxu0 0.0
    %2386 = vmatprep.subr.mxu0 0.0
    %2387 = vmatpush1.xpose.msra.mxu0 0.0
    %2388 = vmatprep.subr.mxu0 0.0
    %2389 = vmatpush1.xpose.msra.mxu0 0.0
    %2390 = vmatprep.subr.mxu0 0.0
    %2391 = vmatpush1.xpose.msra.mxu0 0.0
    %2392 = vmatprep.subr.mxu0 0.0
    %2393 = vmatpush1.xpose.msra.mxu0 0.0
    %2394 = vmatprep.subr.mxu0 0.0
    %2395 = vmatpush1.xpose.msra.mxu0 0.0
    %2396 = vmatprep.subr.mxu0 0.0
    %2397 = vmatpush1.xpose.msra.mxu0 0.0
    %2398 = vmatprep.subr.mxu0 0.0
    %2399 = vmatpush1.xpose.msra.mxu0 0.0
    %2400 = vmatprep.subr.mxu0 0.0
    %2401 = vmatpush1.xpose.msra.mxu0 0.0
    %2402 = vmatprep.subr.mxu0 0.0
    %2403 = vmatpush1.xpose.msra.mxu0 0.0
    %2404 = vmatprep.subr.mxu0 0.0
    %2405 = vmatpush1.xpose.msra.mxu0 0.0
    %2406 = vmatprep.subr.mxu0 0.0
    %2407 = vmatpush1.xpose.msra.mxu0 0.0
    %2408 = vmatprep.subr.mxu0 0.0
    %2409 = vmatpush1.xpose.msra.mxu0 0.0
    %2410 = vmatprep.subr.mxu0 0.0
    %2411 = vmatpush1.xpose.msra.mxu0 0.0
    %2412 = vmatprep.subr.mxu0 0.0
    %2413 = vmatpush1.xpose.msra.mxu0 0.0
    %2414 = vmatprep.subr.mxu0 0.0
    %2415 = vmatpush1.xpose.msra.mxu0 %v2382
    %2416 = vmatprep.subr.mxu0 0.0
    %2417 = vmatpush2.xpose.msra.mxu0 0.0
    %2418 = vmatprep.subr.mxu0 0.0
    %2419 = vmatpush2.xpose.msra.mxu0 0.0
    %2420 = vmatprep.subr.mxu0 0.0
    %2421 = vmatpush2.xpose.msra.mxu0 0.0
    %2422 = vmatprep.subr.mxu0 0.0
    %2423 = vmatpush2.xpose.msra.mxu0 0.0
    %2424 = vmatprep.subr.mxu0 0.0
    %2425 = vmatpush2.xpose.msra.mxu0 0.0
    %2426 = vmatprep.subr.mxu0 0.0
    %2427 = vmatpush2.xpose.msra.mxu0 0.0
    %2428 = vmatprep.subr.mxu0 0.0
    %2429 = vmatpush2.xpose.msra.mxu0 0.0
    %2430 = vmatprep.subr.mxu0 0.0
    %2431 = vmatpush2.xpose.msra.mxu0 0.0
    %2432 = vmatprep.subr.mxu0 0.0
    %2433 = vmatpush2.xpose.msra.mxu0 0.0
    %2434 = vmatprep.subr.mxu0 0.0
    %2435 = vmatpush2.xpose.msra.mxu0 0.0
    %2436 = vmatprep.subr.mxu0 0.0
    %2437 = vmatpush2.xpose.msra.mxu0 0.0
    %2438 = vmatprep.subr.mxu0 0.0
    %2439 = vmatpush2.xpose.msra.mxu0 0.0
    %2440 = vmatprep.subr.mxu0 0.0
    %2441 = vmatpush2.xpose.msra.mxu0 0.0
    %2442 = vmatprep.subr.mxu0 0.0
    %2443 = vmatpush2.xpose.msra.mxu0 0.0
    %2444 = vmatprep.subr.mxu0 0.0
    %2445 = vmatpush2.xpose.msra.mxu0 0.0
    %2446 = vmatprep.subr.mxu0 0.0
    %2447 = vmatpush2.xpose.msra.mxu0 0.0
    %2448 = vmatprep.mubr.f32.mxu0 0.0
    %2449 = vmatmul.mubr.f32.gmra.mxu0 %v2380
    %v2450 = vpop.f32.mrf.mxu0
    %v2451 = vadd.f32 0.0, %v2450
    %v2452 = vpop.f32.mrf.mxu0
    %2453 = vdwg.mxu0
    %v2454 = vmul.f32 %v2373, 0.35355338
    %v2455 = vmul.f32 %v2451, 0.35355338
    %v2456 = vsel %vm2120, -1e+09, %v2454
    %v2457 = vsel %vm2121, -1e+09, %v2455
    %v2458 = vsel %vm336, %v2456, -inf
    %2459 = vmax.xlane.f32.xlu0 %v2458
    %v2460 = vpop.xlane.xlu0 %2459
    %v2461 = vsel %vm336, %v2457, -inf
    %2462 = vmax.xlane.f32.xlu0 %v2461
    %v2463 = vpop.xlane.xlu0 %2462
    %v2464 = vsub.f32 %v2456, %v2460
    %v2465 = vsub.f32 %v2457, %v2463
    %v2466 = vmul.f32 %v2464, 1.442695
    %v2467 = vpow.pop %v2466
    %v2468 = vmul.f32 %v2465, 1.442695
    %v2469 = vpow.pop %v2468
    %v2470 = vsel %vm336, %v2467, 0.0
    %2471 = vadd.xlane.f32.xlu0 %v2470
    %v2472 = vpop.xlane.xlu0 %2471
    %v2473 = vsel %vm336, %v2469, 0.0
    %2474 = vadd.xlane.f32.xlu0 %v2473
    %v2475 = vpop.xlane.xlu0 %2474
    %v2476 = vrcp.pop %v2472
    %v2477 = vrcp.pop %v2475
    %v2478 = vmul.f32 %v2467, %v2476
    %v2479 = vmul.f32 %v2469, %v2477
    %2480 = vrot.lane.b32.xlu0 %v1960, 88
    %v2481 = vpop.permute.xlu0 %2480
    %v2484 = vsel %vm336, %v2478, 0
    %2486 = vmatprep.subr.mxu0 0.0
    %2487 = vmatpush1.msra.mxu0 0.0
    %2488 = vmatprep.subr.mxu0 0.0
    %2489 = vmatpush1.msra.mxu0 0.0
    %2490 = vmatprep.subr.mxu0 0.0
    %2491 = vmatpush1.msra.mxu0 0.0
    %2492 = vmatprep.subr.mxu0 0.0
    %2493 = vmatpush1.msra.mxu0 0.0
    %2494 = vmatprep.subr.mxu0 0.0
    %2495 = vmatpush1.msra.mxu0 0.0
    %2496 = vmatprep.subr.mxu0 0.0
    %2497 = vmatpush1.msra.mxu0 0.0
    %2498 = vmatprep.subr.mxu0 0.0
    %2499 = vmatpush1.msra.mxu0 0.0
    %2500 = vmatprep.subr.mxu0 0.0
    %2501 = vmatpush1.msra.mxu0 0.0
    %2502 = vmatprep.subr.mxu0 0.0
    %2503 = vmatpush1.msra.mxu0 0.0
    %2504 = vmatprep.subr.mxu0 0.0
    %2505 = vmatpush1.msra.mxu0 0.0
    %2506 = vmatprep.subr.mxu0 0.0
    %2507 = vmatpush1.msra.mxu0 0.0
    %2508 = vmatprep.subr.mxu0 0.0
    %2509 = vmatpush1.msra.mxu0 0.0
    %2510 = vmatprep.subr.mxu0 0.0
    %2511 = vmatpush1.msra.mxu0 0.0
    %2512 = vmatprep.subr.mxu0 0.0
    %2513 = vmatpush1.msra.mxu0 0.0
    %2514 = vmatprep.subr.mxu0 0.0
    %2515 = vmatpush1.msra.mxu0 0.0
    %2516 = vmatprep.subr.mxu0 0.0
    %2517 = vmatpush1.msra.mxu0 %v2481
    %2518 = vmatprep.subr.mxu0 0.0
    %2519 = vmatpush2.msra.mxu0 0.0
    %2520 = vmatprep.subr.mxu0 0.0
    %2521 = vmatpush2.msra.mxu0 0.0
    %2522 = vmatprep.subr.mxu0 0.0
    %2523 = vmatpush2.msra.mxu0 0.0
    %2524 = vmatprep.subr.mxu0 0.0
    %2525 = vmatpush2.msra.mxu0 0.0
    %2526 = vmatprep.subr.mxu0 0.0
    %2527 = vmatpush2.msra.mxu0 0.0
    %2528 = vmatprep.subr.mxu0 0.0
    %2529 = vmatpush2.msra.mxu0 0.0
    %2530 = vmatprep.subr.mxu0 0.0
    %2531 = vmatpush2.msra.mxu0 0.0
    %2532 = vmatprep.subr.mxu0 0.0
    %2533 = vmatpush2.msra.mxu0 0.0
    %2534 = vmatprep.subr.mxu0 0.0
    %2535 = vmatpush2.msra.mxu0 0.0
    %2536 = vmatprep.subr.mxu0 0.0
    %2537 = vmatpush2.msra.mxu0 0.0
    %2538 = vmatprep.subr.mxu0 0.0
    %2539 = vmatpush2.msra.mxu0 0.0
    %2540 = vmatprep.subr.mxu0 0.0
    %2541 = vmatpush2.msra.mxu0 0.0
    %2542 = vmatprep.subr.mxu0 0.0
    %2543 = vmatpush2.msra.mxu0 0.0
    %2544 = vmatprep.subr.mxu0 0.0
    %2545 = vmatpush2.msra.mxu0 0.0
    %2546 = vmatprep.subr.mxu0 0.0
    %2547 = vmatpush2.msra.mxu0 0.0
    %2548 = vmatprep.subr.mxu0 0.0
    %2549 = vmatpush2.msra.mxu0 0.0
    %2550 = vmatprep.mubr.f32.mxu0 0.0
    %2551 = vmatmul.mubr.f32.gmra.mxu0 %v2484
    %v2552 = vpop.f32.mrf.mxu0
    %v2553 = vadd.f32 0.0, %v2552
    %v2554 = vpop.f32.mrf.mxu0
    %2555 = vdwg.mxu0
    %2556 = vrot.lane.b32.xlu0 %v1963, 88
    %v2557 = vpop.permute.xlu0 %2556
    %v2560 = vsel %vm336, %v2479, 0
    %2562 = vmatprep.subr.mxu0 0.0
    %2563 = vmatpush1.msra.mxu0 0.0
    %2564 = vmatprep.subr.mxu0 0.0
    %2565 = vmatpush1.msra.mxu0 0.0
    %2566 = vmatprep.subr.mxu0 0.0
    %2567 = vmatpush1.msra.mxu0 0.0
    %2568 = vmatprep.subr.mxu0 0.0
    %2569 = vmatpush1.msra.mxu0 0.0
    %2570 = vmatprep.subr.mxu0 0.0
    %2571 = vmatpush1.msra.mxu0 0.0
    %2572 = vmatprep.subr.mxu0 0.0
    %2573 = vmatpush1.msra.mxu0 0.0
    %2574 = vmatprep.subr.mxu0 0.0
    %2575 = vmatpush1.msra.mxu0 0.0
    %2576 = vmatprep.subr.mxu0 0.0
    %2577 = vmatpush1.msra.mxu0 0.0
    %2578 = vmatprep.subr.mxu0 0.0
    %2579 = vmatpush1.msra.mxu0 0.0
    %2580 = vmatprep.subr.mxu0 0.0
    %2581 = vmatpush1.msra.mxu0 0.0
    %2582 = vmatprep.subr.mxu0 0.0
    %2583 = vmatpush1.msra.mxu0 0.0
    %2584 = vmatprep.subr.mxu0 0.0
    %2585 = vmatpush1.msra.mxu0 0.0
    %2586 = vmatprep.subr.mxu0 0.0
    %2587 = vmatpush1.msra.mxu0 0.0
    %2588 = vmatprep.subr.mxu0 0.0
    %2589 = vmatpush1.msra.mxu0 0.0
    %2590 = vmatprep.subr.mxu0 0.0
    %2591 = vmatpush1.msra.mxu0 0.0
    %2592 = vmatprep.subr.mxu0 0.0
    %2593 = vmatpush1.msra.mxu0 %v2557
    %2594 = vmatprep.subr.mxu0 0.0
    %2595 = vmatpush2.msra.mxu0 0.0
    %2596 = vmatprep.subr.mxu0 0.0
    %2597 = vmatpush2.msra.mxu0 0.0
    %2598 = vmatprep.subr.mxu0 0.0
    %2599 = vmatpush2.msra.mxu0 0.0
    %2600 = vmatprep.subr.mxu0 0.0
    %2601 = vmatpush2.msra.mxu0 0.0
    %2602 = vmatprep.subr.mxu0 0.0
    %2603 = vmatpush2.msra.mxu0 0.0
    %2604 = vmatprep.subr.mxu0 0.0
    %2605 = vmatpush2.msra.mxu0 0.0
    %2606 = vmatprep.subr.mxu0 0.0
    %2607 = vmatpush2.msra.mxu0 0.0
    %2608 = vmatprep.subr.mxu0 0.0
    %2609 = vmatpush2.msra.mxu0 0.0
    %2610 = vmatprep.subr.mxu0 0.0
    %2611 = vmatpush2.msra.mxu0 0.0
    %2612 = vmatprep.subr.mxu0 0.0
    %2613 = vmatpush2.msra.mxu0 0.0
    %2614 = vmatprep.subr.mxu0 0.0
    %2615 = vmatpush2.msra.mxu0 0.0
    %2616 = vmatprep.subr.mxu0 0.0
    %2617 = vmatpush2.msra.mxu0 0.0
    %2618 = vmatprep.subr.mxu0 0.0
    %2619 = vmatpush2.msra.mxu0 0.0
    %2620 = vmatprep.subr.mxu0 0.0
    %2621 = vmatpush2.msra.mxu0 0.0
    %2622 = vmatprep.subr.mxu0 0.0
    %2623 = vmatpush2.msra.mxu0 0.0
    %2624 = vmatprep.subr.mxu0 0.0
    %2625 = vmatpush2.msra.mxu0 0.0
    %2626 = vmatprep.mubr.f32.mxu0 0.0
    %2627 = vmatmul.mubr.f32.gmra.mxu0 %v2560
    %v2628 = vpop.f32.mrf.mxu0
    %v2629 = vadd.f32 0.0, %v2628
    %v2630 = vpop.f32.mrf.mxu0
    %2631 = vdwg.mxu0
    %2632 = vrot.lane.b32.xlu0 %v1892, 112
    %v2633 = vpop.permute.xlu0 %2632
    %2634 = vrot.lane.b32.xlu0 %v1960, 112
    %v2635 = vpop.permute.xlu0 %2634
    %v2636 = vsel %vm336, %v2633, 0
    %v2638 = vsel %vm336, %v2635, 0
    %2640 = vmatprep.subr.mxu0 0.0
    %2641 = vmatpush1.xpose.msra.mxu0 0.0
    %2642 = vmatprep.subr.mxu0 0.0
    %2643 = vmatpush1.xpose.msra.mxu0 0.0
    %2644 = vmatprep.subr.mxu0 0.0
    %2645 = vmatpush1.xpose.msra.mxu0 0.0
    %2646 = vmatprep.subr.mxu0 0.0
    %2647 = vmatpush1.xpose.msra.mxu0 0.0
    %2648 = vmatprep.subr.mxu0 0.0
    %2649 = vmatpush1.xpose.msra.mxu0 0.0
    %2650 = vmatprep.subr.mxu0 0.0
    %2651 = vmatpush1.xpose.msra.mxu0 0.0
    %2652 = vmatprep.subr.mxu0 0.0
    %2653 = vmatpush1.xpose.msra.mxu0 0.0
    %2654 = vmatprep.subr.mxu0 0.0
    %2655 = vmatpush1.xpose.msra.mxu0 0.0
    %2656 = vmatprep.subr.mxu0 0.0
    %2657 = vmatpush1.xpose.msra.mxu0 0.0
    %2658 = vmatprep.subr.mxu0 0.0
    %2659 = vmatpush1.xpose.msra.mxu0 0.0
    %2660 = vmatprep.subr.mxu0 0.0
    %2661 = vmatpush1.xpose.msra.mxu0 0.0
    %2662 = vmatprep.subr.mxu0 0.0
    %2663 = vmatpush1.xpose.msra.mxu0 0.0
    %2664 = vmatprep.subr.mxu0 0.0
    %2665 = vmatpush1.xpose.msra.mxu0 0.0
    %2666 = vmatprep.subr.mxu0 0.0
    %2667 = vmatpush1.xpose.msra.mxu0 0.0
    %2668 = vmatprep.subr.mxu0 0.0
    %2669 = vmatpush1.xpose.msra.mxu0 0.0
    %2670 = vmatprep.subr.mxu0 0.0
    %2671 = vmatpush1.xpose.msra.mxu0 %v2638
    %2672 = vmatprep.subr.mxu0 0.0
    %2673 = vmatpush2.xpose.msra.mxu0 0.0
    %2674 = vmatprep.subr.mxu0 0.0
    %2675 = vmatpush2.xpose.msra.mxu0 0.0
    %2676 = vmatprep.subr.mxu0 0.0
    %2677 = vmatpush2.xpose.msra.mxu0 0.0
    %2678 = vmatprep.subr.mxu0 0.0
    %2679 = vmatpush2.xpose.msra.mxu0 0.0
    %2680 = vmatprep.subr.mxu0 0.0
    %2681 = vmatpush2.xpose.msra.mxu0 0.0
    %2682 = vmatprep.subr.mxu0 0.0
    %2683 = vmatpush2.xpose.msra.mxu0 0.0
    %2684 = vmatprep.subr.mxu0 0.0
    %2685 = vmatpush2.xpose.msra.mxu0 0.0
    %2686 = vmatprep.subr.mxu0 0.0
    %2687 = vmatpush2.xpose.msra.mxu0 0.0
    %2688 = vmatprep.subr.mxu0 0.0
    %2689 = vmatpush2.xpose.msra.mxu0 0.0
    %2690 = vmatprep.subr.mxu0 0.0
    %2691 = vmatpush2.xpose.msra.mxu0 0.0
    %2692 = vmatprep.subr.mxu0 0.0
    %2693 = vmatpush2.xpose.msra.mxu0 0.0
    %2694 = vmatprep.subr.mxu0 0.0
    %2695 = vmatpush2.xpose.msra.mxu0 0.0
    %2696 = vmatprep.subr.mxu0 0.0
    %2697 = vmatpush2.xpose.msra.mxu0 0.0
    %2698 = vmatprep.subr.mxu0 0.0
    %2699 = vmatpush2.xpose.msra.mxu0 0.0
    %2700 = vmatprep.subr.mxu0 0.0
    %2701 = vmatpush2.xpose.msra.mxu0 0.0
    %2702 = vmatprep.subr.mxu0 0.0
    %2703 = vmatpush2.xpose.msra.mxu0 0.0
    %2704 = vmatprep.mubr.f32.mxu0 0.0
    %2705 = vmatmul.mubr.f32.gmra.mxu0 %v2636
    %v2706 = vpop.f32.mrf.mxu0
    %v2707 = vadd.f32 0.0, %v2706
    %v2708 = vpop.f32.mrf.mxu0
    %2709 = vdwg.mxu0
    %2710 = vrot.lane.b32.xlu0 %v1895, 112
    %v2711 = vpop.permute.xlu0 %2710
    %2712 = vrot.lane.b32.xlu0 %v1963, 112
    %v2713 = vpop.permute.xlu0 %2712
    %v2714 = vsel %vm336, %v2711, 0
    %v2716 = vsel %vm336, %v2713, 0
    %2718 = vmatprep.subr.mxu0 0.0
    %2719 = vmatpush1.xpose.msra.mxu0 0.0
    %2720 = vmatprep.subr.mxu0 0.0
    %2721 = vmatpush1.xpose.msra.mxu0 0.0
    %2722 = vmatprep.subr.mxu0 0.0
    %2723 = vmatpush1.xpose.msra.mxu0 0.0
    %2724 = vmatprep.subr.mxu0 0.0
    %2725 = vmatpush1.xpose.msra.mxu0 0.0
    %2726 = vmatprep.subr.mxu0 0.0
    %2727 = vmatpush1.xpose.msra.mxu0 0.0
    %2728 = vmatprep.subr.mxu0 0.0
    %2729 = vmatpush1.xpose.msra.mxu0 0.0
    %2730 = vmatprep.subr.mxu0 0.0
    %2731 = vmatpush1.xpose.msra.mxu0 0.0
    %2732 = vmatprep.subr.mxu0 0.0
    %2733 = vmatpush1.xpose.msra.mxu0 0.0
    %2734 = vmatprep.subr.mxu0 0.0
    %2735 = vmatpush1.xpose.msra.mxu0 0.0
    %2736 = vmatprep.subr.mxu0 0.0
    %2737 = vmatpush1.xpose.msra.mxu0 0.0
    %2738 = vmatprep.subr.mxu0 0.0
    %2739 = vmatpush1.xpose.msra.mxu0 0.0
    %2740 = vmatprep.subr.mxu0 0.0
    %2741 = vmatpush1.xpose.msra.mxu0 0.0
    %2742 = vmatprep.subr.mxu0 0.0
    %2743 = vmatpush1.xpose.msra.mxu0 0.0
    %2744 = vmatprep.subr.mxu0 0.0
    %2745 = vmatpush1.xpose.msra.mxu0 0.0
    %2746 = vmatprep.subr.mxu0 0.0
    %2747 = vmatpush1.xpose.msra.mxu0 0.0
    %2748 = vmatprep.subr.mxu0 0.0
    %2749 = vmatpush1.xpose.msra.mxu0 %v2716
    %2750 = vmatprep.subr.mxu0 0.0
    %2751 = vmatpush2.xpose.msra.mxu0 0.0
    %2752 = vmatprep.subr.mxu0 0.0
    %2753 = vmatpush2.xpose.msra.mxu0 0.0
    %2754 = vmatprep.subr.mxu0 0.0
    %2755 = vmatpush2.xpose.msra.mxu0 0.0
    %2756 = vmatprep.subr.mxu0 0.0
    %2757 = vmatpush2.xpose.msra.mxu0 0.0
    %2758 = vmatprep.subr.mxu0 0.0
    %2759 = vmatpush2.xpose.msra.mxu0 0.0
    %2760 = vmatprep.subr.mxu0 0.0
    %2761 = vmatpush2.xpose.msra.mxu0 0.0
    %2762 = vmatprep.subr.mxu0 0.0
    %2763 = vmatpush2.xpose.msra.mxu0 0.0
    %2764 = vmatprep.subr.mxu0 0.0
    %2765 = vmatpush2.xpose.msra.mxu0 0.0
    %2766 = vmatprep.subr.mxu0 0.0
    %2767 = vmatpush2.xpose.msra.mxu0 0.0
    %2768 = vmatprep.subr.mxu0 0.0
    %2769 = vmatpush2.xpose.msra.mxu0 0.0
    %2770 = vmatprep.subr.mxu0 0.0
    %2771 = vmatpush2.xpose.msra.mxu0 0.0
    %2772 = vmatprep.subr.mxu0 0.0
    %2773 = vmatpush2.xpose.msra.mxu0 0.0
    %2774 = vmatprep.subr.mxu0 0.0
    %2775 = vmatpush2.xpose.msra.mxu0 0.0
    %2776 = vmatprep.subr.mxu0 0.0
    %2777 = vmatpush2.xpose.msra.mxu0 0.0
    %2778 = vmatprep.subr.mxu0 0.0
    %2779 = vmatpush2.xpose.msra.mxu0 0.0
    %2780 = vmatprep.subr.mxu0 0.0
    %2781 = vmatpush2.xpose.msra.mxu0 0.0
    %2782 = vmatprep.mubr.f32.mxu0 0.0
    %2783 = vmatmul.mubr.f32.gmra.mxu0 %v2714
    %v2784 = vpop.f32.mrf.mxu0
    %v2785 = vadd.f32 0.0, %v2784
    %v2786 = vpop.f32.mrf.mxu0
    %2787 = vdwg.mxu0
    %v2788 = vmul.f32 %v2707, 0.35355338
    %v2789 = vmul.f32 %v2785, 0.35355338
    %v2790 = vsel %vm2120, -1e+09, %v2788
    %v2791 = vsel %vm2121, -1e+09, %v2789
    %v2792 = vsel %vm336, %v2790, -inf
    %2793 = vmax.xlane.f32.xlu0 %v2792
    %v2794 = vpop.xlane.xlu0 %2793
    %v2795 = vsel %vm336, %v2791, -inf
    %2796 = vmax.xlane.f32.xlu0 %v2795
    %v2797 = vpop.xlane.xlu0 %2796
    %v2798 = vsub.f32 %v2790, %v2794
    %v2799 = vsub.f32 %v2791, %v2797
    %v2800 = vmul.f32 %v2798, 1.442695
    %v2801 = vpow.pop %v2800
    %v2802 = vmul.f32 %v2799, 1.442695
    %v2803 = vpow.pop %v2802
    %v2804 = vsel %vm336, %v2801, 0.0
    %2805 = vadd.xlane.f32.xlu0 %v2804
    %v2806 = vpop.xlane.xlu0 %2805
    %v2807 = vsel %vm336, %v2803, 0.0
    %2808 = vadd.xlane.f32.xlu0 %v2807
    %v2809 = vpop.xlane.xlu0 %2808
    %v2810 = vrcp.pop %v2806
    %v2811 = vrcp.pop %v2809
    %v2812 = vmul.f32 %v2801, %v2810
    %v2813 = vmul.f32 %v2803, %v2811
    %2814 = vrot.lane.b32.xlu0 %v1960, 80
    %v2815 = vpop.permute.xlu0 %2814
    %v2818 = vsel %vm336, %v2812, 0
    %2820 = vmatprep.subr.mxu0 0.0
    %2821 = vmatpush1.msra.mxu0 0.0
    %2822 = vmatprep.subr.mxu0 0.0
    %2823 = vmatpush1.msra.mxu0 0.0
    %2824 = vmatprep.subr.mxu0 0.0
    %2825 = vmatpush1.msra.mxu0 0.0
    %2826 = vmatprep.subr.mxu0 0.0
    %2827 = vmatpush1.msra.mxu0 0.0
    %2828 = vmatprep.subr.mxu0 0.0
    %2829 = vmatpush1.msra.mxu0 0.0
    %2830 = vmatprep.subr.mxu0 0.0
    %2831 = vmatpush1.msra.mxu0 0.0
    %2832 = vmatprep.subr.mxu0 0.0
    %2833 = vmatpush1.msra.mxu0 0.0
    %2834 = vmatprep.subr.mxu0 0.0
    %2835 = vmatpush1.msra.mxu0 0.0
    %2836 = vmatprep.subr.mxu0 0.0
    %2837 = vmatpush1.msra.mxu0 0.0
    %2838 = vmatprep.subr.mxu0 0.0
    %2839 = vmatpush1.msra.mxu0 0.0
    %2840 = vmatprep.subr.mxu0 0.0
    %2841 = vmatpush1.msra.mxu0 0.0
    %2842 = vmatprep.subr.mxu0 0.0
    %2843 = vmatpush1.msra.mxu0 0.0
    %2844 = vmatprep.subr.mxu0 0.0
    %2845 = vmatpush1.msra.mxu0 0.0
    %2846 = vmatprep.subr.mxu0 0.0
    %2847 = vmatpush1.msra.mxu0 0.0
    %2848 = vmatprep.subr.mxu0 0.0
    %2849 = vmatpush1.msra.mxu0 0.0
    %2850 = vmatprep.subr.mxu0 0.0
    %2851 = vmatpush1.msra.mxu0 %v2815
    %2852 = vmatprep.subr.mxu0 0.0
    %2853 = vmatpush2.msra.mxu0 0.0
    %2854 = vmatprep.subr.mxu0 0.0
    %2855 = vmatpush2.msra.mxu0 0.0
    %2856 = vmatprep.subr.mxu0 0.0
    %2857 = vmatpush2.msra.mxu0 0.0
    %2858 = vmatprep.subr.mxu0 0.0
    %2859 = vmatpush2.msra.mxu0 0.0
    %2860 = vmatprep.subr.mxu0 0.0
    %2861 = vmatpush2.msra.mxu0 0.0
    %2862 = vmatprep.subr.mxu0 0.0
    %2863 = vmatpush2.msra.mxu0 0.0
    %2864 = vmatprep.subr.mxu0 0.0
    %2865 = vmatpush2.msra.mxu0 0.0
    %2866 = vmatprep.subr.mxu0 0.0
    %2867 = vmatpush2.msra.mxu0 0.0
    %2868 = vmatprep.subr.mxu0 0.0
    %2869 = vmatpush2.msra.mxu0 0.0
    %2870 = vmatprep.subr.mxu0 0.0
    %2871 = vmatpush2.msra.mxu0 0.0
    %2872 = vmatprep.subr.mxu0 0.0
    %2873 = vmatpush2.msra.mxu0 0.0
    %2874 = vmatprep.subr.mxu0 0.0
    %2875 = vmatpush2.msra.mxu0 0.0
    %2876 = vmatprep.subr.mxu0 0.0
    %2877 = vmatpush2.msra.mxu0 0.0
    %2878 = vmatprep.subr.mxu0 0.0
    %2879 = vmatpush2.msra.mxu0 0.0
    %2880 = vmatprep.subr.mxu0 0.0
    %2881 = vmatpush2.msra.mxu0 0.0
    %2882 = vmatprep.subr.mxu0 0.0
    %2883 = vmatpush2.msra.mxu0 0.0
    %2884 = vmatprep.mubr.f32.mxu0 0.0
    %2885 = vmatmul.mubr.f32.gmra.mxu0 %v2818
    %v2886 = vpop.f32.mrf.mxu0
    %v2887 = vadd.f32 0.0, %v2886
    %v2888 = vpop.f32.mrf.mxu0
    %2889 = vdwg.mxu0
    %2890 = vrot.lane.b32.xlu0 %v1963, 80
    %v2891 = vpop.permute.xlu0 %2890
    %v2894 = vsel %vm336, %v2813, 0
    %2896 = vmatprep.subr.mxu0 0.0
    %2897 = vmatpush1.msra.mxu0 0.0
    %2898 = vmatprep.subr.mxu0 0.0
    %2899 = vmatpush1.msra.mxu0 0.0
    %2900 = vmatprep.subr.mxu0 0.0
    %2901 = vmatpush1.msra.mxu0 0.0
    %2902 = vmatprep.subr.mxu0 0.0
    %2903 = vmatpush1.msra.mxu0 0.0
    %2904 = vmatprep.subr.mxu0 0.0
    %2905 = vmatpush1.msra.mxu0 0.0
    %2906 = vmatprep.subr.mxu0 0.0
    %2907 = vmatpush1.msra.mxu0 0.0
    %2908 = vmatprep.subr.mxu0 0.0
    %2909 = vmatpush1.msra.mxu0 0.0
    %2910 = vmatprep.subr.mxu0 0.0
    %2911 = vmatpush1.msra.mxu0 0.0
    %2912 = vmatprep.subr.mxu0 0.0
    %2913 = vmatpush1.msra.mxu0 0.0
    %2914 = vmatprep.subr.mxu0 0.0
    %2915 = vmatpush1.msra.mxu0 0.0
    %2916 = vmatprep.subr.mxu0 0.0
    %2917 = vmatpush1.msra.mxu0 0.0
    %2918 = vmatprep.subr.mxu0 0.0
    %2919 = vmatpush1.msra.mxu0 0.0
    %2920 = vmatprep.subr.mxu0 0.0
    %2921 = vmatpush1.msra.mxu0 0.0
    %2922 = vmatprep.subr.mxu0 0.0
    %2923 = vmatpush1.msra.mxu0 0.0
    %2924 = vmatprep.subr.mxu0 0.0
    %2925 = vmatpush1.msra.mxu0 0.0
    %2926 = vmatprep.subr.mxu0 0.0
    %2927 = vmatpush1.msra.mxu0 %v2891
    %2928 = vmatprep.subr.mxu0 0.0
    %2929 = vmatpush2.msra.mxu0 0.0
    %2930 = vmatprep.subr.mxu0 0.0
    %2931 = vmatpush2.msra.mxu0 0.0
    %2932 = vmatprep.subr.mxu0 0.0
    %2933 = vmatpush2.msra.mxu0 0.0
    %2934 = vmatprep.subr.mxu0 0.0
    %2935 = vmatpush2.msra.mxu0 0.0
    %2936 = vmatprep.subr.mxu0 0.0
    %2937 = vmatpush2.msra.mxu0 0.0
    %2938 = vmatprep.subr.mxu0 0.0
    %2939 = vmatpush2.msra.mxu0 0.0
    %2940 = vmatprep.subr.mxu0 0.0
    %2941 = vmatpush2.msra.mxu0 0.0
    %2942 = vmatprep.subr.mxu0 0.0
    %2943 = vmatpush2.msra.mxu0 0.0
    %2944 = vmatprep.subr.mxu0 0.0
    %2945 = vmatpush2.msra.mxu0 0.0
    %2946 = vmatprep.subr.mxu0 0.0
    %2947 = vmatpush2.msra.mxu0 0.0
    %2948 = vmatprep.subr.mxu0 0.0
    %2949 = vmatpush2.msra.mxu0 0.0
    %2950 = vmatprep.subr.mxu0 0.0
    %2951 = vmatpush2.msra.mxu0 0.0
    %2952 = vmatprep.subr.mxu0 0.0
    %2953 = vmatpush2.msra.mxu0 0.0
    %2954 = vmatprep.subr.mxu0 0.0
    %2955 = vmatpush2.msra.mxu0 0.0
    %2956 = vmatprep.subr.mxu0 0.0
    %2957 = vmatpush2.msra.mxu0 0.0
    %2958 = vmatprep.subr.mxu0 0.0
    %2959 = vmatpush2.msra.mxu0 0.0
    %2960 = vmatprep.mubr.f32.mxu0 0.0
    %2961 = vmatmul.mubr.f32.gmra.mxu0 %v2894
    %v2962 = vpop.f32.mrf.mxu0
    %v2963 = vadd.f32 0.0, %v2962
    %v2964 = vpop.f32.mrf.mxu0
    %2965 = vdwg.mxu0
    %2966 = vrot.lane.b32.xlu0 %v1892, 104
    %v2967 = vpop.permute.xlu0 %2966
    %2968 = vrot.lane.b32.xlu0 %v1960, 104
    %v2969 = vpop.permute.xlu0 %2968
    %v2970 = vsel %vm336, %v2967, 0
    %v2972 = vsel %vm336, %v2969, 0
    %2974 = vmatprep.subr.mxu0 0.0
    %2975 = vmatpush1.xpose.msra.mxu0 0.0
    %2976 = vmatprep.subr.mxu0 0.0
    %2977 = vmatpush1.xpose.msra.mxu0 0.0
    %2978 = vmatprep.subr.mxu0 0.0
    %2979 = vmatpush1.xpose.msra.mxu0 0.0
    %2980 = vmatprep.subr.mxu0 0.0
    %2981 = vmatpush1.xpose.msra.mxu0 0.0
    %2982 = vmatprep.subr.mxu0 0.0
    %2983 = vmatpush1.xpose.msra.mxu0 0.0
    %2984 = vmatprep.subr.mxu0 0.0
    %2985 = vmatpush1.xpose.msra.mxu0 0.0
    %2986 = vmatprep.subr.mxu0 0.0
    %2987 = vmatpush1.xpose.msra.mxu0 0.0
    %2988 = vmatprep.subr.mxu0 0.0
    %2989 = vmatpush1.xpose.msra.mxu0 0.0
    %2990 = vmatprep.subr.mxu0 0.0
    %2991 = vmatpush1.xpose.msra.mxu0 0.0
    %2992 = vmatprep.subr.mxu0 0.0
    %2993 = vmatpush1.xpose.msra.mxu0 0.0
    %2994 = vmatprep.subr.mxu0 0.0
    %2995 = vmatpush1.xpose.msra.mxu0 0.0
    %2996 = vmatprep.subr.mxu0 0.0
    %2997 = vmatpush1.xpose.msra.mxu0 0.0
    %2998 = vmatprep.subr.mxu0 0.0
    %2999 = vmatpush1.xpose.msra.mxu0 0.0
    %3000 = vmatprep.subr.mxu0 0.0
    %3001 = vmatpush1.xpose.msra.mxu0 0.0
    %3002 = vmatprep.subr.mxu0 0.0
    %3003 = vmatpush1.xpose.msra.mxu0 0.0
    %3004 = vmatprep.subr.mxu0 0.0
    %3005 = vmatpush1.xpose.msra.mxu0 %v2972
    %3006 = vmatprep.subr.mxu0 0.0
    %3007 = vmatpush2.xpose.msra.mxu0 0.0
    %3008 = vmatprep.subr.mxu0 0.0
    %3009 = vmatpush2.xpose.msra.mxu0 0.0
    %3010 = vmatprep.subr.mxu0 0.0
    %3011 = vmatpush2.xpose.msra.mxu0 0.0
    %3012 = vmatprep.subr.mxu0 0.0
    %3013 = vmatpush2.xpose.msra.mxu0 0.0
    %3014 = vmatprep.subr.mxu0 0.0
    %3015 = vmatpush2.xpose.msra.mxu0 0.0
    %3016 = vmatprep.subr.mxu0 0.0
    %3017 = vmatpush2.xpose.msra.mxu0 0.0
    %3018 = vmatprep.subr.mxu0 0.0
    %3019 = vmatpush2.xpose.msra.mxu0 0.0
    %3020 = vmatprep.subr.mxu0 0.0
    %3021 = vmatpush2.xpose.msra.mxu0 0.0
    %3022 = vmatprep.subr.mxu0 0.0
    %3023 = vmatpush2.xpose.msra.mxu0 0.0
    %3024 = vmatprep.subr.mxu0 0.0
    %3025 = vmatpush2.xpose.msra.mxu0 0.0
    %3026 = vmatprep.subr.mxu0 0.0
    %3027 = vmatpush2.xpose.msra.mxu0 0.0
    %3028 = vmatprep.subr.mxu0 0.0
    %3029 = vmatpush2.xpose.msra.mxu0 0.0
    %3030 = vmatprep.subr.mxu0 0.0
    %3031 = vmatpush2.xpose.msra.mxu0 0.0
    %3032 = vmatprep.subr.mxu0 0.0
    %3033 = vmatpush2.xpose.msra.mxu0 0.0
    %3034 = vmatprep.subr.mxu0 0.0
    %3035 = vmatpush2.xpose.msra.mxu0 0.0
    %3036 = vmatprep.subr.mxu0 0.0
    %3037 = vmatpush2.xpose.msra.mxu0 0.0
    %3038 = vmatprep.mubr.f32.mxu0 0.0
    %3039 = vmatmul.mubr.f32.gmra.mxu0 %v2970
    %v3040 = vpop.f32.mrf.mxu0
    %v3041 = vadd.f32 0.0, %v3040
    %v3042 = vpop.f32.mrf.mxu0
    %3043 = vdwg.mxu0
    %3044 = vrot.lane.b32.xlu0 %v1895, 104
    %v3045 = vpop.permute.xlu0 %3044
    %3046 = vrot.lane.b32.xlu0 %v1963, 104
    %v3047 = vpop.permute.xlu0 %3046
    %v3048 = vsel %vm336, %v3045, 0
    %v3050 = vsel %vm336, %v3047, 0
    %3052 = vmatprep.subr.mxu0 0.0
    %3053 = vmatpush1.xpose.msra.mxu0 0.0
    %3054 = vmatprep.subr.mxu0 0.0
    %3055 = vmatpush1.xpose.msra.mxu0 0.0
    %3056 = vmatprep.subr.mxu0 0.0
    %3057 = vmatpush1.xpose.msra.mxu0 0.0
    %3058 = vmatprep.subr.mxu0 0.0
    %3059 = vmatpush1.xpose.msra.mxu0 0.0
    %3060 = vmatprep.subr.mxu0 0.0
    %3061 = vmatpush1.xpose.msra.mxu0 0.0
    %3062 = vmatprep.subr.mxu0 0.0
    %3063 = vmatpush1.xpose.msra.mxu0 0.0
    %3064 = vmatprep.subr.mxu0 0.0
    %3065 = vmatpush1.xpose.msra.mxu0 0.0
    %3066 = vmatprep.subr.mxu0 0.0
    %3067 = vmatpush1.xpose.msra.mxu0 0.0
    %3068 = vmatprep.subr.mxu0 0.0
    %3069 = vmatpush1.xpose.msra.mxu0 0.0
    %3070 = vmatprep.subr.mxu0 0.0
    %3071 = vmatpush1.xpose.msra.mxu0 0.0
    %3072 = vmatprep.subr.mxu0 0.0
    %3073 = vmatpush1.xpose.msra.mxu0 0.0
    %3074 = vmatprep.subr.mxu0 0.0
    %3075 = vmatpush1.xpose.msra.mxu0 0.0
    %3076 = vmatprep.subr.mxu0 0.0
    %3077 = vmatpush1.xpose.msra.mxu0 0.0
    %3078 = vmatprep.subr.mxu0 0.0
    %3079 = vmatpush1.xpose.msra.mxu0 0.0
    %3080 = vmatprep.subr.mxu0 0.0
    %3081 = vmatpush1.xpose.msra.mxu0 0.0
    %3082 = vmatprep.subr.mxu0 0.0
    %3083 = vmatpush1.xpose.msra.mxu0 %v3050
    %3084 = vmatprep.subr.mxu0 0.0
    %3085 = vmatpush2.xpose.msra.mxu0 0.0
    %3086 = vmatprep.subr.mxu0 0.0
    %3087 = vmatpush2.xpose.msra.mxu0 0.0
    %3088 = vmatprep.subr.mxu0 0.0
    %3089 = vmatpush2.xpose.msra.mxu0 0.0
    %3090 = vmatprep.subr.mxu0 0.0
    %3091 = vmatpush2.xpose.msra.mxu0 0.0
    %3092 = vmatprep.subr.mxu0 0.0
    %3093 = vmatpush2.xpose.msra.mxu0 0.0
    %3094 = vmatprep.subr.mxu0 0.0
    %3095 = vmatpush2.xpose.msra.mxu0 0.0
    %3096 = vmatprep.subr.mxu0 0.0
    %3097 = vmatpush2.xpose.msra.mxu0 0.0
    %3098 = vmatprep.subr.mxu0 0.0
    %3099 = vmatpush2.xpose.msra.mxu0 0.0
    %3100 = vmatprep.subr.mxu0 0.0
    %3101 = vmatpush2.xpose.msra.mxu0 0.0
    %3102 = vmatprep.subr.mxu0 0.0
    %3103 = vmatpush2.xpose.msra.mxu0 0.0
    %3104 = vmatprep.subr.mxu0 0.0
    %3105 = vmatpush2.xpose.msra.mxu0 0.0
    %3106 = vmatprep.subr.mxu0 0.0
    %3107 = vmatpush2.xpose.msra.mxu0 0.0
    %3108 = vmatprep.subr.mxu0 0.0
    %3109 = vmatpush2.xpose.msra.mxu0 0.0
    %3110 = vmatprep.subr.mxu0 0.0
    %3111 = vmatpush2.xpose.msra.mxu0 0.0
    %3112 = vmatprep.subr.mxu0 0.0
    %3113 = vmatpush2.xpose.msra.mxu0 0.0
    %3114 = vmatprep.subr.mxu0 0.0
    %3115 = vmatpush2.xpose.msra.mxu0 0.0
    %3116 = vmatprep.mubr.f32.mxu0 0.0
    %3117 = vmatmul.mubr.f32.gmra.mxu0 %v3048
    %v3118 = vpop.f32.mrf.mxu0
    %v3119 = vadd.f32 0.0, %v3118
    %v3120 = vpop.f32.mrf.mxu0
    %3121 = vdwg.mxu0
    %v3122 = vmul.f32 %v3041, 0.35355338
    %v3123 = vmul.f32 %v3119, 0.35355338
    %v3124 = vsel %vm2120, -1e+09, %v3122
    %v3125 = vsel %vm2121, -1e+09, %v3123
    %v3126 = vsel %vm336, %v3124, -inf
    %3127 = vmax.xlane.f32.xlu0 %v3126
    %v3128 = vpop.xlane.xlu0 %3127
    %v3129 = vsel %vm336, %v3125, -inf
    %3130 = vmax.xlane.f32.xlu0 %v3129
    %v3131 = vpop.xlane.xlu0 %3130
    %v3132 = vsub.f32 %v3124, %v3128
    %v3133 = vsub.f32 %v3125, %v3131
    %v3134 = vmul.f32 %v3132, 1.442695
    %v3135 = vpow.pop %v3134
    %v3136 = vmul.f32 %v3133, 1.442695
    %v3137 = vpow.pop %v3136
    %v3138 = vsel %vm336, %v3135, 0.0
    %3139 = vadd.xlane.f32.xlu0 %v3138
    %v3140 = vpop.xlane.xlu0 %3139
    %v3141 = vsel %vm336, %v3137, 0.0
    %3142 = vadd.xlane.f32.xlu0 %v3141
    %v3143 = vpop.xlane.xlu0 %3142
    %v3144 = vrcp.pop %v3140
    %v3145 = vrcp.pop %v3143
    %v3146 = vmul.f32 %v3135, %v3144
    %v3147 = vmul.f32 %v3137, %v3145
    %3148 = vrot.lane.b32.xlu0 %v1960, 72
    %v3149 = vpop.permute.xlu0 %3148
    %v3152 = vsel %vm336, %v3146, 0
    %3154 = vmatprep.subr.mxu0 0.0
    %3155 = vmatpush1.msra.mxu0 0.0
    %3156 = vmatprep.subr.mxu0 0.0
    %3157 = vmatpush1.msra.mxu0 0.0
    %3158 = vmatprep.subr.mxu0 0.0
    %3159 = vmatpush1.msra.mxu0 0.0
    %3160 = vmatprep.subr.mxu0 0.0
    %3161 = vmatpush1.msra.mxu0 0.0
    %3162 = vmatprep.subr.mxu0 0.0
    %3163 = vmatpush1.msra.mxu0 0.0
    %3164 = vmatprep.subr.mxu0 0.0
    %3165 = vmatpush1.msra.mxu0 0.0
    %3166 = vmatprep.subr.mxu0 0.0
    %3167 = vmatpush1.msra.mxu0 0.0
    %3168 = vmatprep.subr.mxu0 0.0
    %3169 = vmatpush1.msra.mxu0 0.0
    %3170 = vmatprep.subr.mxu0 0.0
    %3171 = vmatpush1.msra.mxu0 0.0
    %3172 = vmatprep.subr.mxu0 0.0
    %3173 = vmatpush1.msra.mxu0 0.0
    %3174 = vmatprep.subr.mxu0 0.0
    %3175 = vmatpush1.msra.mxu0 0.0
    %3176 = vmatprep.subr.mxu0 0.0
    %3177 = vmatpush1.msra.mxu0 0.0
    %3178 = vmatprep.subr.mxu0 0.0
    %3179 = vmatpush1.msra.mxu0 0.0
    %3180 = vmatprep.subr.mxu0 0.0
    %3181 = vmatpush1.msra.mxu0 0.0
    %3182 = vmatprep.subr.mxu0 0.0
    %3183 = vmatpush1.msra.mxu0 0.0
    %3184 = vmatprep.subr.mxu0 0.0
    %3185 = vmatpush1.msra.mxu0 %v3149
    %3186 = vmatprep.subr.mxu0 0.0
    %3187 = vmatpush2.msra.mxu0 0.0
    %3188 = vmatprep.subr.mxu0 0.0
    %3189 = vmatpush2.msra.mxu0 0.0
    %3190 = vmatprep.subr.mxu0 0.0
    %3191 = vmatpush2.msra.mxu0 0.0
    %3192 = vmatprep.subr.mxu0 0.0
    %3193 = vmatpush2.msra.mxu0 0.0
    %3194 = vmatprep.subr.mxu0 0.0
    %3195 = vmatpush2.msra.mxu0 0.0
    %3196 = vmatprep.subr.mxu0 0.0
    %3197 = vmatpush2.msra.mxu0 0.0
    %3198 = vmatprep.subr.mxu0 0.0
    %3199 = vmatpush2.msra.mxu0 0.0
    %3200 = vmatprep.subr.mxu0 0.0
    %3201 = vmatpush2.msra.mxu0 0.0
    %3202 = vmatprep.subr.mxu0 0.0
    %3203 = vmatpush2.msra.mxu0 0.0
    %3204 = vmatprep.subr.mxu0 0.0
    %3205 = vmatpush2.msra.mxu0 0.0
    %3206 = vmatprep.subr.mxu0 0.0
    %3207 = vmatpush2.msra.mxu0 0.0
    %3208 = vmatprep.subr.mxu0 0.0
    %3209 = vmatpush2.msra.mxu0 0.0
    %3210 = vmatprep.subr.mxu0 0.0
    %3211 = vmatpush2.msra.mxu0 0.0
    %3212 = vmatprep.subr.mxu0 0.0
    %3213 = vmatpush2.msra.mxu0 0.0
    %3214 = vmatprep.subr.mxu0 0.0
    %3215 = vmatpush2.msra.mxu0 0.0
    %3216 = vmatprep.subr.mxu0 0.0
    %3217 = vmatpush2.msra.mxu0 0.0
    %3218 = vmatprep.mubr.f32.mxu0 0.0
    %3219 = vmatmul.mubr.f32.gmra.mxu0 %v3152
    %v3220 = vpop.f32.mrf.mxu0
    %v3221 = vadd.f32 0.0, %v3220
    %v3222 = vpop.f32.mrf.mxu0
    %3223 = vdwg.mxu0
    %3224 = vrot.lane.b32.xlu0 %v1963, 72
    %v3225 = vpop.permute.xlu0 %3224
    %v3228 = vsel %vm336, %v3147, 0
    %3230 = vmatprep.subr.mxu0 0.0
    %3231 = vmatpush1.msra.mxu0 0.0
    %3232 = vmatprep.subr.mxu0 0.0
    %3233 = vmatpush1.msra.mxu0 0.0
    %3234 = vmatprep.subr.mxu0 0.0
    %3235 = vmatpush1.msra.mxu0 0.0
    %3236 = vmatprep.subr.mxu0 0.0
    %3237 = vmatpush1.msra.mxu0 0.0
    %3238 = vmatprep.subr.mxu0 0.0
    %3239 = vmatpush1.msra.mxu0 0.0
    %3240 = vmatprep.subr.mxu0 0.0
    %3241 = vmatpush1.msra.mxu0 0.0
    %3242 = vmatprep.subr.mxu0 0.0
    %3243 = vmatpush1.msra.mxu0 0.0
    %3244 = vmatprep.subr.mxu0 0.0
    %3245 = vmatpush1.msra.mxu0 0.0
    %3246 = vmatprep.subr.mxu0 0.0
    %3247 = vmatpush1.msra.mxu0 0.0
    %3248 = vmatprep.subr.mxu0 0.0
    %3249 = vmatpush1.msra.mxu0 0.0
    %3250 = vmatprep.subr.mxu0 0.0
    %3251 = vmatpush1.msra.mxu0 0.0
    %3252 = vmatprep.subr.mxu0 0.0
    %3253 = vmatpush1.msra.mxu0 0.0
    %3254 = vmatprep.subr.mxu0 0.0
    %3255 = vmatpush1.msra.mxu0 0.0
    %3256 = vmatprep.subr.mxu0 0.0
    %3257 = vmatpush1.msra.mxu0 0.0
    %3258 = vmatprep.subr.mxu0 0.0
    %3259 = vmatpush1.msra.mxu0 0.0
    %3260 = vmatprep.subr.mxu0 0.0
    %3261 = vmatpush1.msra.mxu0 %v3225
    %3262 = vmatprep.subr.mxu0 0.0
    %3263 = vmatpush2.msra.mxu0 0.0
    %3264 = vmatprep.subr.mxu0 0.0
    %3265 = vmatpush2.msra.mxu0 0.0
    %3266 = vmatprep.subr.mxu0 0.0
    %3267 = vmatpush2.msra.mxu0 0.0
    %3268 = vmatprep.subr.mxu0 0.0
    %3269 = vmatpush2.msra.mxu0 0.0
    %3270 = vmatprep.subr.mxu0 0.0
    %3271 = vmatpush2.msra.mxu0 0.0
    %3272 = vmatprep.subr.mxu0 0.0
    %3273 = vmatpush2.msra.mxu0 0.0
    %3274 = vmatprep.subr.mxu0 0.0
    %3275 = vmatpush2.msra.mxu0 0.0
    %3276 = vmatprep.subr.mxu0 0.0
    %3277 = vmatpush2.msra.mxu0 0.0
    %3278 = vmatprep.subr.mxu0 0.0
    %3279 = vmatpush2.msra.mxu0 0.0
    %3280 = vmatprep.subr.mxu0 0.0
    %3281 = vmatpush2.msra.mxu0 0.0
    %3282 = vmatprep.subr.mxu0 0.0
    %3283 = vmatpush2.msra.mxu0 0.0
    %3284 = vmatprep.subr.mxu0 0.0
    %3285 = vmatpush2.msra.mxu0 0.0
    %3286 = vmatprep.subr.mxu0 0.0
    %3287 = vmatpush2.msra.mxu0 0.0
    %3288 = vmatprep.subr.mxu0 0.0
    %3289 = vmatpush2.msra.mxu0 0.0
    %3290 = vmatprep.subr.mxu0 0.0
    %3291 = vmatpush2.msra.mxu0 0.0
    %3292 = vmatprep.subr.mxu0 0.0
    %3293 = vmatpush2.msra.mxu0 0.0
    %3294 = vmatprep.mubr.f32.mxu0 0.0
    %3295 = vmatmul.mubr.f32.gmra.mxu0 %v3228
    %v3296 = vpop.f32.mrf.mxu0
    %v3297 = vadd.f32 0.0, %v3296
    %v3298 = vpop.f32.mrf.mxu0
    %3299 = vdwg.mxu0
    %3302 = vrot.lane.b32.xlu0 %v2553, 8
    %v3303 = vpop.permute.xlu0 %3302
    %3304 = vrot.lane.b32.xlu0 %v2629, 8
    %v3305 = vpop.permute.xlu0 %3304
    %3310 = vrot.lane.b32.xlu0 %v2887, 16
    %v3311 = vpop.permute.xlu0 %3310
    %3312 = vrot.lane.b32.xlu0 %v2963, 16
    %v3313 = vpop.permute.xlu0 %3312
    %3318 = vrot.lane.b32.xlu0 %v3221, 24
    %v3319 = vpop.permute.xlu0 %3318
    %3320 = vrot.lane.b32.xlu0 %v3297, 24
    %v3321 = vpop.permute.xlu0 %3320
    %v3324 = vsel %vm336, %v2219, %v3303
    %v3325 = vsel %vm336, %v2295, %v3305
    %v3326 = vsel %vm1696, %v3324, %v3311
    %v3327 = vsel %vm1696, %v3325, %v3313
    %v3328 = vsel %vm1699, %v3326, %v3319
    %v3329 = vsel %vm1699, %v3327, %v3321
    %v3330 = vld [vmem:[%s18] sm:$0xf]
    %v3331 = vld [vmem:[%s18 + $0x4] sm:$0xf]
    %v3332 = vld [vmem:[%s18 + $0x8] sm:$0xf]
    %v3333 = vld [vmem:[%s18 + $0xc] sm:$0xf]
    %v3334 = vld [vmem:[%s19] sm:$0x1]
    %v3335 = vpack.c.bf16 %v3329, %v3328
    %v3337 = vlaneseq
    %v3338 = vshrl.u32 %v3337, 7
    %v3339 = vsub.s32 0, %v3338
    %v3340 = vrot.slane %v3334, %v3339
    %v3346 = vunpack.c.l.b16 %v3330
    %v3347 = vunpack.c.l.b16 %v3331
    %v3348 = vunpack.c.l.b16 %v3332
    %v3349 = vunpack.c.l.b16 %v3333
    %v3350 = vpack.c.b16 %v3347, %v3346
    %v3351 = vpack.c.b16 %v3349, %v3348
    %v3355 = vsel %vm207, %v3335, 0
    %3357 = vmatprep.subr.bf16.mxu0 0
    %3358 = vmatpush1.bf16.msra.mxu0 0
    %3359 = vmatprep.subr.bf16.mxu0 0
    %3360 = vmatpush1.bf16.msra.mxu0 0
    %3361 = vmatprep.subr.bf16.mxu0 0
    %3362 = vmatpush1.bf16.msra.mxu0 0
    %3363 = vmatprep.subr.bf16.mxu0 0
    %3364 = vmatpush1.bf16.msra.mxu0 0
    %3365 = vmatprep.subr.bf16.mxu0 0
    %3366 = vmatpush1.bf16.msra.mxu0 0
    %3367 = vmatprep.subr.bf16.mxu0 0
    %3368 = vmatpush1.bf16.msra.mxu0 0
    %3369 = vmatprep.subr.bf16.mxu0 0
    %3370 = vmatpush1.bf16.msra.mxu0 %v3351
    %3371 = vmatprep.subr.bf16.mxu0 0
    %3372 = vmatpush1.bf16.msra.mxu0 %v3350
    %3373 = vmatprep.subr.bf16.mxu0 0
    %3374 = vmatpush2.bf16.msra.mxu0 0
    %3375 = vmatprep.subr.bf16.mxu0 0
    %3376 = vmatpush2.bf16.msra.mxu0 0
    %3377 = vmatprep.subr.bf16.mxu0 0
    %3378 = vmatpush2.bf16.msra.mxu0 0
    %3379 = vmatprep.subr.bf16.mxu0 0
    %3380 = vmatpush2.bf16.msra.mxu0 0
    %3381 = vmatprep.subr.bf16.mxu0 0
    %3382 = vmatpush2.bf16.msra.mxu0 0
    %3383 = vmatprep.subr.bf16.mxu0 0
    %3384 = vmatpush2.bf16.msra.mxu0 0
    %3385 = vmatprep.subr.bf16.mxu0 0
    %3386 = vmatpush2.bf16.msra.mxu0 0
    %3387 = vmatprep.subr.bf16.mxu0 0
    %3388 = vmatpush2.bf16.msra.mxu0 0
    %3389 = vmatprep.mubr.bf16.mxu0 0
    %3390 = vmatmul.mubr.bf16.gmra.mxu0 %v3355
    %v3391 = vpop.f32.mrf.mxu0
    %v3392 = vadd.f32 %v3340, %v3391
    %v3393 = vpop.f32.mrf.mxu0
    %v3394 = vpop.f32.mrf.mxu0
    %v3395 = vadd.f32 %v3340, %v3394
    %v3396 = vpop.f32.mrf.mxu0
    %3397 = vdwg.mxu0
    %v3398 = vadd.f32 %v1770, %v3392
    %v3399 = vadd.f32 %v1771, %v3395
    %v3400 = vld [vmem:[%s20] sm:$0x1]
    %v3401 = vld [vmem:[%s21] sm:$0x1]
    %v3402 = vsel %vm207, %v3398, 0.0
    %3403 = vadd.xlane.f32.xlu0 %v3402
    %v3404 = vpop.xlane.xlu0 %3403
    %v3405 = vsel %vm207, %v3399, 0.0
    %3406 = vadd.xlane.f32.xlu0 %v3405
    %v3407 = vpop.xlane.xlu0 %3406
    %v3408 = vmul.f32 %v3404, %v214
    %v3409 = vmul.f32 %v3407, %v214
    %v3410 = vsub.f32 %v3398, %v3408
    %v3411 = vsub.f32 %v3399, %v3409
    %v3412 = vmul.f32 %v3410, %v3410
    %v3413 = vmul.f32 %v3411, %v3411
    %v3414 = vsel %vm207, %v3412, 0.0
    %3415 = vadd.xlane.f32.xlu0 %v3414
    %v3416 = vpop.xlane.xlu0 %3415
    %v3417 = vsel %vm207, %v3413, 0.0
    %3418 = vadd.xlane.f32.xlu0 %v3417
    %v3419 = vpop.xlane.xlu0 %3418
    %v3420 = vmul.f32 %v3416, 0.032258064
    %v3421 = vmul.f32 %v3419, 0.032258064
    %v3422 = vrsqrt.pop %v3420
    %v3423 = vmul.f32 %v3420, %v3422
    %vm3424 = vcmp.eq.f32.partialorder %v3420, inf
    %v3425 = vsel %vm3424, %v3420, %v3423
    %vm3426 = vcmp.eq.f32.partialorder %v3420, 0.0
    %v3427 = vand.u32 %v3420, 2147483648
    %v3428 = vsel %vm3426, %v3427, %v3425
    %v3429 = vrsqrt.pop %v3421
    %v3430 = vmul.f32 %v3421, %v3429
    %vm3431 = vcmp.eq.f32.partialorder %v3421, inf
    %v3432 = vsel %vm3431, %v3421, %v3430
    %vm3433 = vcmp.eq.f32.partialorder %v3421, 0.0
    %v3434 = vand.u32 %v3421, 2147483648
    %v3435 = vsel %vm3433, %v3434, %v3432
    %v3436 = vadd.f32 %v3428, 1e-06
    %v3437 = vadd.f32 %v3435, 1e-06
    %v3438 = vrcp.pop %v3436
    %v3439 = vrcp.pop %v3437
    %v3440 = vmul.f32 %v3410, %v3438
    %v3441 = vmul.f32 %v3411, %v3439
    %v3443 = vlaneseq
    %v3444 = vshrl.u32 %v3443, 7
    %v3445 = vsub.s32 0, %v3444
    %v3446 = vrot.slane %v3400, %v3445
    %v3448 = vmul.f32 %v3446, %v3440
    %v3449 = vmul.f32 %v3446, %v3441
    %v3451 = vlaneseq
    %v3452 = vshrl.u32 %v3451, 7
    %v3453 = vsub.s32 0, %v3452
    %v3454 = vrot.slane %v3401, %v3453
    %v3456 = vadd.f32 %v3448, %v3454
    %v3457 = vadd.f32 %v3449, %v3454
    %v3458 = vld [vmem:[%s22] sm:$0xff]
    %v3459 = vld [vmem:[%s22 + $0x8] sm:$0xff]
    %v3460 = vld [vmem:[%s22 + $0x10] sm:$0xff]
    %v3461 = vld [vmem:[%s22 + $0x18] sm:$0xff]
    %v3462 = vld [vmem:[%s22 + $0x20] sm:$0xff]
    %v3463 = vld [vmem:[%s22 + $0x28] sm:$0xff]
    %v3464 = vld [vmem:[%s22 + $0x30] sm:$0xff]
    %v3465 = vld [vmem:[%s22 + $0x38] sm:$0xff]
    %v3466 = vld [vmem:[%s22 + $0x40] sm:$0xff]
    %v3467 = vld [vmem:[%s22 + $0x48] sm:$0xff]
    %v3468 = vld [vmem:[%s22 + $0x50] sm:$0xff]
    %v3469 = vld [vmem:[%s22 + $0x58] sm:$0xff]
    %v3470 = vld [vmem:[%s22 + $0x60] sm:$0xff]
    %v3471 = vld [vmem:[%s22 + $0x68] sm:$0xff]
    %v3472 = vld [vmem:[%s22 + $0x70] sm:$0xff]
    %v3473 = vld [vmem:[%s22 + $0x78] sm:$0xff]
    %v3474 = vld [vmem:[%s22 + $0x80] sm:$0xff]
    %v3475 = vld [vmem:[%s22 + $0x88] sm:$0xff]
    %v3476 = vld [vmem:[%s22 + $0x90] sm:$0xff]
    %v3477 = vld [vmem:[%s22 + $0x98] sm:$0xff]
    %v3478 = vld [vmem:[%s22 + $0xa0] sm:$0xff]
    %v3479 = vld [vmem:[%s22 + $0xa8] sm:$0xff]
    %v3480 = vld [vmem:[%s22 + $0xb0] sm:$0xff]
    %v3481 = vld [vmem:[%s22 + $0xb8] sm:$0xff]
    %v3482 = vld [vmem:[%s22 + $0xc0] sm:$0xff]
    %v3483 = vld [vmem:[%s22 + $0xc8] sm:$0xff]
    %v3484 = vld [vmem:[%s22 + $0xd0] sm:$0xff]
    %v3485 = vld [vmem:[%s22 + $0xd8] sm:$0xff]
    %v3486 = vld [vmem:[%s22 + $0xe0] sm:$0xff]
    %v3487 = vld [vmem:[%s22 + $0xe8] sm:$0xff]
    %v3488 = vld [vmem:[%s22 + $0xf0] sm:$0xff]
    %v3489 = vld [vmem:[%s22 + $0xf8] sm:$0xff]
    %v3490 = vld [vmem:[%s23] sm:$0xff]
    %v3491 = vld [vmem:[%s23 + $0x8] sm:$0xff]
    %v3492 = vpack.c.bf16 %v3457, %v3456
    %v3495 = vlaneseq
    %v3496 = vshrl.u32 %v3495, 7
    %v3497 = vsub.s32 0, %v3496
    %v3498 = vrot.slane %v3490, %v3497
    %v3499 = vlaneseq
    %v3500 = vshrl.u32 %v3499, 7
    %v3501 = vsub.s32 1, %v3500
    %v3502 = vrot.slane %v3490, %v3501
    %v3503 = vlaneseq
    %v3504 = vshrl.u32 %v3503, 7
    %v3505 = vsub.s32 2, %v3504
    %v3506 = vrot.slane %v3490, %v3505
    %v3507 = vlaneseq
    %v3508 = vshrl.u32 %v3507, 7
    %v3509 = vsub.s32 3, %v3508
    %v3510 = vrot.slane %v3490, %v3509
    %v3511 = vlaneseq
    %v3512 = vshrl.u32 %v3511, 7
    %v3513 = vsub.s32 4, %v3512
    %v3514 = vrot.slane %v3490, %v3513
    %v3515 = vlaneseq
    %v3516 = vshrl.u32 %v3515, 7
    %v3517 = vsub.s32 5, %v3516
    %v3518 = vrot.slane %v3490, %v3517
    %v3519 = vlaneseq
    %v3520 = vshrl.u32 %v3519, 7
    %v3521 = vsub.s32 6, %v3520
    %v3522 = vrot.slane %v3490, %v3521
    %v3523 = vlaneseq
    %v3524 = vshrl.u32 %v3523, 7
    %v3525 = vsub.s32 7, %v3524
    %v3526 = vrot.slane %v3490, %v3525
    %v3527 = vlaneseq
    %v3528 = vshrl.u32 %v3527, 7
    %v3529 = vsub.s32 0, %v3528
    %v3530 = vrot.slane %v3491, %v3529
    %v3531 = vlaneseq
    %v3532 = vshrl.u32 %v3531, 7
    %v3533 = vsub.s32 1, %v3532
    %v3534 = vrot.slane %v3491, %v3533
    %v3535 = vlaneseq
    %v3536 = vshrl.u32 %v3535, 7
    %v3537 = vsub.s32 2, %v3536
    %v3538 = vrot.slane %v3491, %v3537
    %v3539 = vlaneseq
    %v3540 = vshrl.u32 %v3539, 7
    %v3541 = vsub.s32 3, %v3540
    %v3542 = vrot.slane %v3491, %v3541
    %v3543 = vlaneseq
    %v3544 = vshrl.u32 %v3543, 7
    %v3545 = vsub.s32 4, %v3544
    %v3546 = vrot.slane %v3491, %v3545
    %v3547 = vlaneseq
    %v3548 = vshrl.u32 %v3547, 7
    %v3549 = vsub.s32 5, %v3548
    %v3550 = vrot.slane %v3491, %v3549
    %v3551 = vlaneseq
    %v3552 = vshrl.u32 %v3551, 7
    %v3553 = vsub.s32 6, %v3552
    %v3554 = vrot.slane %v3491, %v3553
    %v3555 = vlaneseq
    %v3556 = vshrl.u32 %v3555, 7
    %v3557 = vsub.s32 7, %v3556
    %v3558 = vrot.slane %v3491, %v3557
    %v3607 = vunpack.c.l.b16 %v3458
    %v3608 = vunpack.c.h.b16 %v3458
    %v3609 = vunpack.c.l.b16 %v3459
    %v3610 = vunpack.c.h.b16 %v3459
    %v3611 = vunpack.c.l.b16 %v3460
    %v3612 = vunpack.c.h.b16 %v3460
    %v3613 = vunpack.c.l.b16 %v3461
    %v3614 = vunpack.c.h.b16 %v3461
    %v3615 = vunpack.c.l.b16 %v3462
    %v3616 = vunpack.c.h.b16 %v3462
    %v3617 = vunpack.c.l.b16 %v3463
    %v3618 = vunpack.c.h.b16 %v3463
    %v3619 = vunpack.c.l.b16 %v3464
    %v3620 = vunpack.c.h.b16 %v3464
    %v3621 = vunpack.c.l.b16 %v3465
    %v3622 = vunpack.c.h.b16 %v3465
    %v3623 = vunpack.c.l.b16 %v3466
    %v3624 = vunpack.c.h.b16 %v3466
    %v3625 = vunpack.c.l.b16 %v3467
    %v3626 = vunpack.c.h.b16 %v3467
    %v3627 = vunpack.c.l.b16 %v3468
    %v3628 = vunpack.c.h.b16 %v3468
    %v3629 = vunpack.c.l.b16 %v3469
    %v3630 = vunpack.c.h.b16 %v3469
    %v3631 = vunpack.c.l.b16 %v3470
    %v3632 = vunpack.c.h.b16 %v3470
    %v3633 = vunpack.c.l.b16 %v3471
    %v3634 = vunpack.c.h.b16 %v3471
    %v3635 = vunpack.c.l.b16 %v3472
    %v3636 = vunpack.c.h.b16 %v3472
    %v3637 = vunpack.c.l.b16 %v3473
    %v3638 = vunpack.c.h.b16 %v3473
    %v3639 = vunpack.c.l.b16 %v3474
    %v3640 = vunpack.c.h.b16 %v3474
    %v3641 = vunpack.c.l.b16 %v3475
    %v3642 = vunpack.c.h.b16 %v3475
    %v3643 = vunpack.c.l.b16 %v3476
    %v3644 = vunpack.c.h.b16 %v3476
    %v3645 = vunpack.c.l.b16 %v3477
    %v3646 = vunpack.c.h.b16 %v3477
    %v3647 = vunpack.c.l.b16 %v3478
    %v3648 = vunpack.c.h.b16 %v3478
    %v3649 = vunpack.c.l.b16 %v3479
    %v3650 = vunpack.c.h.b16 %v3479
    %v3651 = vunpack.c.l.b16 %v3480
    %v3652 = vunpack.c.h.b16 %v3480
    %v3653 = vunpack.c.l.b16 %v3481
    %v3654 = vunpack.c.h.b16 %v3481
    %v3655 = vunpack.c.l.b16 %v3482
    %v3656 = vunpack.c.h.b16 %v3482
    %v3657 = vunpack.c.l.b16 %v3483
    %v3658 = vunpack.c.h.b16 %v3483
    %v3659 = vunpack.c.l.b16 %v3484
    %v3660 = vunpack.c.h.b16 %v3484
    %v3661 = vunpack.c.l.b16 %v3485
    %v3662 = vunpack.c.h.b16 %v3485
    %v3663 = vunpack.c.l.b16 %v3486
    %v3664 = vunpack.c.h.b16 %v3486
    %v3665 = vunpack.c.l.b16 %v3487
    %v3666 = vunpack.c.h.b16 %v3487
    %v3667 = vunpack.c.l.b16 %v3488
    %v3668 = vunpack.c.h.b16 %v3488
    %v3669 = vunpack.c.l.b16 %v3489
    %v3670 = vunpack.c.h.b16 %v3489
    %v3671 = vpack.c.b16 %v3623, %v3607
    %v3672 = vpack.c.b16 %v3624, %v3608
    %v3673 = vpack.c.b16 %v3625, %v3609
    %v3674 = vpack.c.b16 %v3626, %v3610
    %v3675 = vpack.c.b16 %v3627, %v3611
    %v3676 = vpack.c.b16 %v3628, %v3612
    %v3677 = vpack.c.b16 %v3629, %v3613
    %v3678 = vpack.c.b16 %v3630, %v3614
    %v3679 = vpack.c.b16 %v3631, %v3615
    %v3680 = vpack.c.b16 %v3632, %v3616
    %v3681 = vpack.c.b16 %v3633, %v3617
    %v3682 = vpack.c.b16 %v3634, %v3618
    %v3683 = vpack.c.b16 %v3635, %v3619
    %v3684 = vpack.c.b16 %v3636, %v3620
    %v3685 = vpack.c.b16 %v3637, %v3621
    %v3686 = vpack.c.b16 %v3638, %v3622
    %v3687 = vpack.c.b16 %v3655, %v3639
    %v3688 = vpack.c.b16 %v3656, %v3640
    %v3689 = vpack.c.b16 %v3657, %v3641
    %v3690 = vpack.c.b16 %v3658, %v3642
    %v3691 = vpack.c.b16 %v3659, %v3643
    %v3692 = vpack.c.b16 %v3660, %v3644
    %v3693 = vpack.c.b16 %v3661, %v3645
    %v3694 = vpack.c.b16 %v3662, %v3646
    %v3695 = vpack.c.b16 %v3663, %v3647
    %v3696 = vpack.c.b16 %v3664, %v3648
    %v3697 = vpack.c.b16 %v3665, %v3649
    %v3698 = vpack.c.b16 %v3666, %v3650
    %v3699 = vpack.c.b16 %v3667, %v3651
    %v3700 = vpack.c.b16 %v3668, %v3652
    %v3701 = vpack.c.b16 %v3669, %v3653
    %v3702 = vpack.c.b16 %v3670, %v3654
    %v3736 = vsel %vm207, %v3492, 0
    %3738 = vmatprep.subr.bf16.mxu0 0
    %3739 = vmatpush1.bf16.msra.mxu0 0
    %3740 = vmatprep.subr.bf16.mxu0 0
    %3741 = vmatpush1.bf16.msra.mxu0 0
    %3742 = vmatprep.subr.bf16.mxu0 0
    %3743 = vmatpush1.bf16.msra.mxu0 0
    %3744 = vmatprep.subr.bf16.mxu0 0
    %3745 = vmatpush1.bf16.msra.mxu0 0
    %3746 = vmatprep.subr.bf16.mxu0 0
    %3747 = vmatpush1.bf16.msra.mxu0 0
    %3748 = vmatprep.subr.bf16.mxu0 0
    %3749 = vmatpush1.bf16.msra.mxu0 0
    %3750 = vmatprep.subr.bf16.mxu0 %v3688
    %3751 = vmatpush1.bf16.msra.mxu0 %v3687
    %3752 = vmatprep.subr.bf16.mxu0 %v3672
    %3753 = vmatpush1.bf16.msra.mxu0 %v3671
    %3754 = vmatprep.subr.bf16.mxu0 0
    %3755 = vmatpush2.bf16.msra.mxu0 0
    %3756 = vmatprep.subr.bf16.mxu0 0
    %3757 = vmatpush2.bf16.msra.mxu0 0
    %3758 = vmatprep.subr.bf16.mxu0 0
    %3759 = vmatpush2.bf16.msra.mxu0 0
    %3760 = vmatprep.subr.bf16.mxu0 0
    %3761 = vmatpush2.bf16.msra.mxu0 0
    %3762 = vmatprep.subr.bf16.mxu0 0
    %3763 = vmatpush2.bf16.msra.mxu0 0
    %3764 = vmatprep.subr.bf16.mxu0 0
    %3765 = vmatpush2.bf16.msra.mxu0 0
    %3766 = vmatprep.subr.bf16.mxu0 0
    %3767 = vmatpush2.bf16.msra.mxu0 0
    %3768 = vmatprep.subr.bf16.mxu0 0
    %3769 = vmatpush2.bf16.msra.mxu0 0
    %3770 = vmatprep.mubr.bf16.mxu0 0
    %3771 = vmatmul.mubr.bf16.gmra.mxu0 %v3736
    %v3772 = vpop.f32.mrf.mxu0
    %v3773 = vadd.f32 %v3498, %v3772
    %v3774 = vpop.f32.mrf.mxu0
    %v3775 = vadd.f32 %v3502, %v3774
    %v3776 = vpop.f32.mrf.mxu0
    %v3777 = vadd.f32 %v3498, %v3776
    %v3778 = vpop.f32.mrf.mxu0
    %v3779 = vadd.f32 %v3502, %v3778
    %3780 = vdwg.mxu0
    %3781 = vmatprep.subr.bf16.mxu0 0
    %3782 = vmatpush1.bf16.msra.mxu0 0
    %3783 = vmatprep.subr.bf16.mxu0 0
    %3784 = vmatpush1.bf16.msra.mxu0 0
    %3785 = vmatprep.subr.bf16.mxu0 0
    %3786 = vmatpush1.bf16.msra.mxu0 0
    %3787 = vmatprep.subr.bf16.mxu0 0
    %3788 = vmatpush1.bf16.msra.mxu0 0
    %3789 = vmatprep.subr.bf16.mxu0 0
    %3790 = vmatpush1.bf16.msra.mxu0 0
    %3791 = vmatprep.subr.bf16.mxu0 0
    %3792 = vmatpush1.bf16.msra.mxu0 0
    %3793 = vmatprep.subr.bf16.mxu0 %v3690
    %3794 = vmatpush1.bf16.msra.mxu0 %v3689
    %3795 = vmatprep.subr.bf16.mxu0 %v3674
    %3796 = vmatpush1.bf16.msra.mxu0 %v3673
    %3797 = vmatprep.subr.bf16.mxu0 0
    %3798 = vmatpush2.bf16.msra.mxu0 0
    %3799 = vmatprep.subr.bf16.mxu0 0
    %3800 = vmatpush2.bf16.msra.mxu0 0
    %3801 = vmatprep.subr.bf16.mxu0 0
    %3802 = vmatpush2.bf16.msra.mxu0 0
    %3803 = vmatprep.subr.bf16.mxu0 0
    %3804 = vmatpush2.bf16.msra.mxu0 0
    %3805 = vmatprep.subr.bf16.mxu0 0
    %3806 = vmatpush2.bf16.msra.mxu0 0
    %3807 = vmatprep.subr.bf16.mxu0 0
    %3808 = vmatpush2.bf16.msra.mxu0 0
    %3809 = vmatprep.subr.bf16.mxu0 0
    %3810 = vmatpush2.bf16.msra.mxu0 0
    %3811 = vmatprep.subr.bf16.mxu0 0
    %3812 = vmatpush2.bf16.msra.mxu0 0
    %3813 = vmatprep.mubr.bf16.mxu0 0
    %3814 = vmatmul.mubr.bf16.gmra.mxu0 %v3736
    %v3815 = vpop.f32.mrf.mxu0
    %v3816 = vadd.f32 %v3506, %v3815
    %v3817 = vpop.f32.mrf.mxu0
    %v3818 = vadd.f32 %v3510, %v3817
    %v3819 = vpop.f32.mrf.mxu0
    %v3820 = vadd.f32 %v3506, %v3819
    %v3821 = vpop.f32.mrf.mxu0
    %v3822 = vadd.f32 %v3510, %v3821
    %3823 = vdwg.mxu0
    %3824 = vmatprep.subr.bf16.mxu0 0
    %3825 = vmatpush1.bf16.msra.mxu0 0
    %3826 = vmatprep.subr.bf16.mxu0 0
    %3827 = vmatpush1.bf16.msra.mxu0 0
    %3828 = vmatprep.subr.bf16.mxu0 0
    %3829 = vmatpush1.bf16.msra.mxu0 0
    %3830 = vmatprep.subr.bf16.mxu0 0
    %3831 = vmatpush1.bf16.msra.mxu0 0
    %3832 = vmatprep.subr.bf16.mxu0 0
    %3833 = vmatpush1.bf16.msra.mxu0 0
    %3834 = vmatprep.subr.bf16.mxu0 0
    %3835 = vmatpush1.bf16.msra.mxu0 0
    %3836 = vmatprep.subr.bf16.mxu0 %v3692
    %3837 = vmatpush1.bf16.msra.mxu0 %v3691
    %3838 = vmatprep.subr.bf16.mxu0 %v3676
    %3839 = vmatpush1.bf16.msra.mxu0 %v3675
    %3840 = vmatprep.subr.bf16.mxu0 0
    %3841 = vmatpush2.bf16.msra.mxu0 0
    %3842 = vmatprep.subr.bf16.mxu0 0
    %3843 = vmatpush2.bf16.msra.mxu0 0
    %3844 = vmatprep.subr.bf16.mxu0 0
    %3845 = vmatpush2.bf16.msra.mxu0 0
    %3846 = vmatprep.subr.bf16.mxu0 0
    %3847 = vmatpush2.bf16.msra.mxu0 0
    %3848 = vmatprep.subr.bf16.mxu0 0
    %3849 = vmatpush2.bf16.msra.mxu0 0
    %3850 = vmatprep.subr.bf16.mxu0 0
    %3851 = vmatpush2.bf16.msra.mxu0 0
    %3852 = vmatprep.subr.bf16.mxu0 0
    %3853 = vmatpush2.bf16.msra.mxu0 0
    %3854 = vmatprep.subr.bf16.mxu0 0
    %3855 = vmatpush2.bf16.msra.mxu0 0
    %3856 = vmatprep.mubr.bf16.mxu0 0
    %3857 = vmatmul.mubr.bf16.gmra.mxu0 %v3736
    %v3858 = vpop.f32.mrf.mxu0
    %v3859 = vadd.f32 %v3514, %v3858
    %v3860 = vpop.f32.mrf.mxu0
    %v3861 = vadd.f32 %v3518, %v3860
    %v3862 = vpop.f32.mrf.mxu0
    %v3863 = vadd.f32 %v3514, %v3862
    %v3864 = vpop.f32.mrf.mxu0
    %v3865 = vadd.f32 %v3518, %v3864
    %3866 = vdwg.mxu0
    %3867 = vmatprep.subr.bf16.mxu0 0
    %3868 = vmatpush1.bf16.msra.mxu0 0
    %3869 = vmatprep.subr.bf16.mxu0 0
    %3870 = vmatpush1.bf16.msra.mxu0 0
    %3871 = vmatprep.subr.bf16.mxu0 0
    %3872 = vmatpush1.bf16.msra.mxu0 0
    %3873 = vmatprep.subr.bf16.mxu0 0
    %3874 = vmatpush1.bf16.msra.mxu0 0
    %3875 = vmatprep.subr.bf16.mxu0 0
    %3876 = vmatpush1.bf16.msra.mxu0 0
    %3877 = vmatprep.subr.bf16.mxu0 0
    %3878 = vmatpush1.bf16.msra.mxu0 0
    %3879 = vmatprep.subr.bf16.mxu0 %v3694
    %3880 = vmatpush1.bf16.msra.mxu0 %v3693
    %3881 = vmatprep.subr.bf16.mxu0 %v3678
    %3882 = vmatpush1.bf16.msra.mxu0 %v3677
    %3883 = vmatprep.subr.bf16.mxu0 0
    %3884 = vmatpush2.bf16.msra.mxu0 0
    %3885 = vmatprep.subr.bf16.mxu0 0
    %3886 = vmatpush2.bf16.msra.mxu0 0
    %3887 = vmatprep.subr.bf16.mxu0 0
    %3888 = vmatpush2.bf16.msra.mxu0 0
    %3889 = vmatprep.subr.bf16.mxu0 0
    %3890 = vmatpush2.bf16.msra.mxu0 0
    %3891 = vmatprep.subr.bf16.mxu0 0
    %3892 = vmatpush2.bf16.msra.mxu0 0
    %3893 = vmatprep.subr.bf16.mxu0 0
    %3894 = vmatpush2.bf16.msra.mxu0 0
    %3895 = vmatprep.subr.bf16.mxu0 0
    %3896 = vmatpush2.bf16.msra.mxu0 0
    %3897 = vmatprep.subr.bf16.mxu0 0
    %3898 = vmatpush2.bf16.msra.mxu0 0
    %3899 = vmatprep.mubr.bf16.mxu0 0
    %3900 = vmatmul.mubr.bf16.gmra.mxu0 %v3736
    %v3901 = vpop.f32.mrf.mxu0
    %v3902 = vadd.f32 %v3522, %v3901
    %v3903 = vpop.f32.mrf.mxu0
    %v3904 = vadd.f32 %v3526, %v3903
    %v3905 = vpop.f32.mrf.mxu0
    %v3906 = vadd.f32 %v3522, %v3905
    %v3907 = vpop.f32.mrf.mxu0
    %v3908 = vadd.f32 %v3526, %v3907
    %3909 = vdwg.mxu0
    %3910 = vmatprep.subr.bf16.mxu0 0
    %3911 = vmatpush1.bf16.msra.mxu0 0
    %3912 = vmatprep.subr.bf16.mxu0 0
    %3913 = vmatpush1.bf16.msra.mxu0 0
    %3914 = vmatprep.subr.bf16.mxu0 0
    %3915 = vmatpush1.bf16.msra.mxu0 0
    %3916 = vmatprep.subr.bf16.mxu0 0
    %3917 = vmatpush1.bf16.msra.mxu0 0
    %3918 = vmatprep.subr.bf16.mxu0 0
    %3919 = vmatpush1.bf16.msra.mxu0 0
    %3920 = vmatprep.subr.bf16.mxu0 0
    %3921 = vmatpush1.bf16.msra.mxu0 0
    %3922 = vmatprep.subr.bf16.mxu0 %v3696
    %3923 = vmatpush1.bf16.msra.mxu0 %v3695
    %3924 = vmatprep.subr.bf16.mxu0 %v3680
    %3925 = vmatpush1.bf16.msra.mxu0 %v3679
    %3926 = vmatprep.subr.bf16.mxu0 0
    %3927 = vmatpush2.bf16.msra.mxu0 0
    %3928 = vmatprep.subr.bf16.mxu0 0
    %3929 = vmatpush2.bf16.msra.mxu0 0
    %3930 = vmatprep.subr.bf16.mxu0 0
    %3931 = vmatpush2.bf16.msra.mxu0 0
    %3932 = vmatprep.subr.bf16.mxu0 0
    %3933 = vmatpush2.bf16.msra.mxu0 0
    %3934 = vmatprep.subr.bf16.mxu0 0
    %3935 = vmatpush2.bf16.msra.mxu0 0
    %3936 = vmatprep.subr.bf16.mxu0 0
    %3937 = vmatpush2.bf16.msra.mxu0 0
    %3938 = vmatprep.subr.bf16.mxu0 0
    %3939 = vmatpush2.bf16.msra.mxu0 0
    %3940 = vmatprep.subr.bf16.mxu0 0
    %3941 = vmatpush2.bf16.msra.mxu0 0
    %3942 = vmatprep.mubr.bf16.mxu0 0
    %3943 = vmatmul.mubr.bf16.gmra.mxu0 %v3736
    %v3944 = vpop.f32.mrf.mxu0
    %v3945 = vadd.f32 %v3530, %v3944
    %v3946 = vpop.f32.mrf.mxu0
    %v3947 = vadd.f32 %v3534, %v3946
    %v3948 = vpop.f32.mrf.mxu0
    %v3949 = vadd.f32 %v3530, %v3948
    %v3950 = vpop.f32.mrf.mxu0
    %v3951 = vadd.f32 %v3534, %v3950
    %3952 = vdwg.mxu0
    %3953 = vmatprep.subr.bf16.mxu0 0
    %3954 = vmatpush1.bf16.msra.mxu0 0
    %3955 = vmatprep.subr.bf16.mxu0 0
    %3956 = vmatpush1.bf16.msra.mxu0 0
    %3957 = vmatprep.subr.bf16.mxu0 0
    %3958 = vmatpush1.bf16.msra.mxu0 0
    %3959 = vmatprep.subr.bf16.mxu0 0
    %3960 = vmatpush1.bf16.msra.mxu0 0
    %3961 = vmatprep.subr.bf16.mxu0 0
    %3962 = vmatpush1.bf16.msra.mxu0 0
    %3963 = vmatprep.subr.bf16.mxu0 0
    %3964 = vmatpush1.bf16.msra.mxu0 0
    %3965 = vmatprep.subr.bf16.mxu0 %v3698
    %3966 = vmatpush1.bf16.msra.mxu0 %v3697
    %3967 = vmatprep.subr.bf16.mxu0 %v3682
    %3968 = vmatpush1.bf16.msra.mxu0 %v3681
    %3969 = vmatprep.subr.bf16.mxu0 0
    %3970 = vmatpush2.bf16.msra.mxu0 0
    %3971 = vmatprep.subr.bf16.mxu0 0
    %3972 = vmatpush2.bf16.msra.mxu0 0
    %3973 = vmatprep.subr.bf16.mxu0 0
    %3974 = vmatpush2.bf16.msra.mxu0 0
    %3975 = vmatprep.subr.bf16.mxu0 0
    %3976 = vmatpush2.bf16.msra.mxu0 0
    %3977 = vmatprep.subr.bf16.mxu0 0
    %3978 = vmatpush2.bf16.msra.mxu0 0
    %3979 = vmatprep.subr.bf16.mxu0 0
    %3980 = vmatpush2.bf16.msra.mxu0 0
    %3981 = vmatprep.subr.bf16.mxu0 0
    %3982 = vmatpush2.bf16.msra.mxu0 0
    %3983 = vmatprep.subr.bf16.mxu0 0
    %3984 = vmatpush2.bf16.msra.mxu0 0
    %3985 = vmatprep.mubr.bf16.mxu0 0
    %3986 = vmatmul.mubr.bf16.gmra.mxu0 %v3736
    %v3987 = vpop.f32.mrf.mxu0
    %v3988 = vadd.f32 %v3538, %v3987
    %v3989 = vpop.f32.mrf.mxu0
    %v3990 = vadd.f32 %v3542, %v3989
    %v3991 = vpop.f32.mrf.mxu0
    %v3992 = vadd.f32 %v3538, %v3991
    %v3993 = vpop.f32.mrf.mxu0
    %v3994 = vadd.f32 %v3542, %v3993
    %3995 = vdwg.mxu0
    %3996 = vmatprep.subr.bf16.mxu0 0
    %3997 = vmatpush1.bf16.msra.mxu0 0
    %3998 = vmatprep.subr.bf16.mxu0 0
    %3999 = vmatpush1.bf16.msra.mxu0 0
    %4000 = vmatprep.subr.bf16.mxu0 0
    %4001 = vmatpush1.bf16.msra.mxu0 0
    %4002 = vmatprep.subr.bf16.mxu0 0
    %4003 = vmatpush1.bf16.msra.mxu0 0
    %4004 = vmatprep.subr.bf16.mxu0 0
    %4005 = vmatpush1.bf16.msra.mxu0 0
    %4006 = vmatprep.subr.bf16.mxu0 0
    %4007 = vmatpush1.bf16.msra.mxu0 0
    %4008 = vmatprep.subr.bf16.mxu0 %v3700
    %4009 = vmatpush1.bf16.msra.mxu0 %v3699
    %4010 = vmatprep.subr.bf16.mxu0 %v3684
    %4011 = vmatpush1.bf16.msra.mxu0 %v3683
    %4012 = vmatprep.subr.bf16.mxu0 0
    %4013 = vmatpush2.bf16.msra.mxu0 0
    %4014 = vmatprep.subr.bf16.mxu0 0
    %4015 = vmatpush2.bf16.msra.mxu0 0
    %4016 = vmatprep.subr.bf16.mxu0 0
    %4017 = vmatpush2.bf16.msra.mxu0 0
    %4018 = vmatprep.subr.bf16.mxu0 0
    %4019 = vmatpush2.bf16.msra.mxu0 0
    %4020 = vmatprep.subr.bf16.mxu0 0
    %4021 = vmatpush2.bf16.msra.mxu0 0
    %4022 = vmatprep.subr.bf16.mxu0 0
    %4023 = vmatpush2.bf16.msra.mxu0 0
    %4024 = vmatprep.subr.bf16.mxu0 0
    %4025 = vmatpush2.bf16.msra.mxu0 0
    %4026 = vmatprep.subr.bf16.mxu0 0
    %4027 = vmatpush2.bf16.msra.mxu0 0
    %4028 = vmatprep.mubr.bf16.mxu0 0
    %4029 = vmatmul.mubr.bf16.gmra.mxu0 %v3736
    %v4030 = vpop.f32.mrf.mxu0
    %v4031 = vadd.f32 %v3546, %v4030
    %v4032 = vpop.f32.mrf.mxu0
    %v4033 = vadd.f32 %v3550, %v4032
    %v4034 = vpop.f32.mrf.mxu0
    %v4035 = vadd.f32 %v3546, %v4034
    %v4036 = vpop.f32.mrf.mxu0
    %v4037 = vadd.f32 %v3550, %v4036
    %4038 = vdwg.mxu0
    %4039 = vmatprep.subr.bf16.mxu0 0
    %4040 = vmatpush1.bf16.msra.mxu0 0
    %4041 = vmatprep.subr.bf16.mxu0 0
    %4042 = vmatpush1.bf16.msra.mxu0 0
    %4043 = vmatprep.subr.bf16.mxu0 0
    %4044 = vmatpush1.bf16.msra.mxu0 0
    %4045 = vmatprep.subr.bf16.mxu0 0
    %4046 = vmatpush1.bf16.msra.mxu0 0
    %4047 = vmatprep.subr.bf16.mxu0 0
    %4048 = vmatpush1.bf16.msra.mxu0 0
    %4049 = vmatprep.subr.bf16.mxu0 0
    %4050 = vmatpush1.bf16.msra.mxu0 0
    %4051 = vmatprep.subr.bf16.mxu0 %v3702
    %4052 = vmatpush1.bf16.msra.mxu0 %v3701
    %4053 = vmatprep.subr.bf16.mxu0 %v3686
    %4054 = vmatpush1.bf16.msra.mxu0 %v3685
    %4055 = vmatprep.subr.bf16.mxu0 0
    %4056 = vmatpush2.bf16.msra.mxu0 0
    %4057 = vmatprep.subr.bf16.mxu0 0
    %4058 = vmatpush2.bf16.msra.mxu0 0
    %4059 = vmatprep.subr.bf16.mxu0 0
    %4060 = vmatpush2.bf16.msra.mxu0 0
    %4061 = vmatprep.subr.bf16.mxu0 0
    %4062 = vmatpush2.bf16.msra.mxu0 0
    %4063 = vmatprep.subr.bf16.mxu0 0
    %4064 = vmatpush2.bf16.msra.mxu0 0
    %4065 = vmatprep.subr.bf16.mxu0 0
    %4066 = vmatpush2.bf16.msra.mxu0 0
    %4067 = vmatprep.subr.bf16.mxu0 0
    %4068 = vmatpush2.bf16.msra.mxu0 0
    %4069 = vmatprep.subr.bf16.mxu0 0
    %4070 = vmatpush2.bf16.msra.mxu0 0
    %4071 = vmatprep.mubr.bf16.mxu0 0
    %4072 = vmatmul.mubr.bf16.gmra.mxu0 %v3736
    %v4073 = vpop.f32.mrf.mxu0
    %v4074 = vadd.f32 %v3554, %v4073
    %v4075 = vpop.f32.mrf.mxu0
    %v4076 = vadd.f32 %v3558, %v4075
    %v4077 = vpop.f32.mrf.mxu0
    %v4078 = vadd.f32 %v3554, %v4077
    %v4079 = vpop.f32.mrf.mxu0
    %v4080 = vadd.f32 %v3558, %v4079
    %4081 = vdwg.mxu0
    %v4082 = vmax.f32 %v3773, 0.0
    %v4083 = vmax.f32 %v3775, 0.0
    %v4084 = vmax.f32 %v3816, 0.0
    %v4085 = vmax.f32 %v3818, 0.0
    %v4086 = vmax.f32 %v3859, 0.0
    %v4087 = vmax.f32 %v3861, 0.0
    %v4088 = vmax.f32 %v3902, 0.0
    %v4089 = vmax.f32 %v3904, 0.0
    %v4090 = vmax.f32 %v3945, 0.0
    %v4091 = vmax.f32 %v3947, 0.0
    %v4092 = vmax.f32 %v3988, 0.0
    %v4093 = vmax.f32 %v3990, 0.0
    %v4094 = vmax.f32 %v4031, 0.0
    %v4095 = vmax.f32 %v4033, 0.0
    %v4096 = vmax.f32 %v4074, 0.0
    %v4097 = vmax.f32 %v4076, 0.0
    %v4098 = vmax.f32 %v3777, 0.0
    %v4099 = vmax.f32 %v3779, 0.0
    %v4100 = vmax.f32 %v3820, 0.0
    %v4101 = vmax.f32 %v3822, 0.0
    %v4102 = vmax.f32 %v3863, 0.0
    %v4103 = vmax.f32 %v3865, 0.0
    %v4104 = vmax.f32 %v3906, 0.0
    %v4105 = vmax.f32 %v3908, 0.0
    %v4106 = vmax.f32 %v3949, 0.0
    %v4107 = vmax.f32 %v3951, 0.0
    %v4108 = vmax.f32 %v3992, 0.0
    %v4109 = vmax.f32 %v3994, 0.0
    %v4110 = vmax.f32 %v4035, 0.0
    %v4111 = vmax.f32 %v4037, 0.0
    %v4112 = vmax.f32 %v4078, 0.0
    %v4113 = vmax.f32 %v4080, 0.0
    %v4114 = vld [vmem:[%s24] sm:$0xf]
    %v4115 = vld [vmem:[%s24 + $0x4] sm:$0xf]
    %v4116 = vld [vmem:[%s24 + $0x8] sm:$0xf]
    %v4117 = vld [vmem:[%s24 + $0xc] sm:$0xf]
    %v4118 = vld [vmem:[%s24 + $0x10] sm:$0xf]
    %v4119 = vld [vmem:[%s24 + $0x14] sm:$0xf]
    %v4120 = vld [vmem:[%s24 + $0x18] sm:$0xf]
    %v4121 = vld [vmem:[%s24 + $0x1c] sm:$0xf]
    %v4122 = vld [vmem:[%s24 + $0x20] sm:$0xf]
    %v4123 = vld [vmem:[%s24 + $0x24] sm:$0xf]
    %v4124 = vld [vmem:[%s24 + $0x28] sm:$0xf]
    %v4125 = vld [vmem:[%s24 + $0x2c] sm:$0xf]
    %v4126 = vld [vmem:[%s24 + $0x30] sm:$0xf]
    %v4127 = vld [vmem:[%s24 + $0x34] sm:$0xf]
    %v4128 = vld [vmem:[%s24 + $0x38] sm:$0xf]
    %v4129 = vld [vmem:[%s24 + $0x3c] sm:$0xf]
    %v4130 = vld [vmem:[%s24 + $0x40] sm:$0xf]
    %v4131 = vld [vmem:[%s24 + $0x44] sm:$0xf]
    %v4132 = vld [vmem:[%s24 + $0x48] sm:$0xf]
    %v4133 = vld [vmem:[%s24 + $0x4c] sm:$0xf]
    %v4134 = vld [vmem:[%s24 + $0x50] sm:$0xf]
    %v4135 = vld [vmem:[%s24 + $0x54] sm:$0xf]
    %v4136 = vld [vmem:[%s24 + $0x58] sm:$0xf]
    %v4137 = vld [vmem:[%s24 + $0x5c] sm:$0xf]
    %v4138 = vld [vmem:[%s24 + $0x60] sm:$0xf]
    %v4139 = vld [vmem:[%s24 + $0x64] sm:$0xf]
    %v4140 = vld [vmem:[%s24 + $0x68] sm:$0xf]
    %v4141 = vld [vmem:[%s24 + $0x6c] sm:$0xf]
    %v4142 = vld [vmem:[%s24 + $0x70] sm:$0xf]
    %v4143 = vld [vmem:[%s24 + $0x74] sm:$0xf]
    %v4144 = vld [vmem:[%s24 + $0x78] sm:$0xf]
    %v4145 = vld [vmem:[%s24 + $0x7c] sm:$0xf]
    %v4146 = vld [vmem:[%s24 + $0x80] sm:$0xf]
    %v4147 = vld [vmem:[%s24 + $0x84] sm:$0xf]
    %v4148 = vld [vmem:[%s24 + $0x88] sm:$0xf]
    %v4149 = vld [vmem:[%s24 + $0x8c] sm:$0xf]
    %v4150 = vld [vmem:[%s24 + $0x90] sm:$0xf]
    %v4151 = vld [vmem:[%s24 + $0x94] sm:$0xf]
    %v4152 = vld [vmem:[%s24 + $0x98] sm:$0xf]
    %v4153 = vld [vmem:[%s24 + $0x9c] sm:$0xf]
    %v4154 = vld [vmem:[%s24 + $0xa0] sm:$0xf]
    %v4155 = vld [vmem:[%s24 + $0xa4] sm:$0xf]
    %v4156 = vld [vmem:[%s24 + $0xa8] sm:$0xf]
    %v4157 = vld [vmem:[%s24 + $0xac] sm:$0xf]
    %v4158 = vld [vmem:[%s24 + $0xb0] sm:$0xf]
    %v4159 = vld [vmem:[%s24 + $0xb4] sm:$0xf]
    %v4160 = vld [vmem:[%s24 + $0xb8] sm:$0xf]
    %v4161 = vld [vmem:[%s24 + $0xbc] sm:$0xf]
    %v4162 = vld [vmem:[%s24 + $0xc0] sm:$0xf]
    %v4163 = vld [vmem:[%s24 + $0xc4] sm:$0xf]
    %v4164 = vld [vmem:[%s24 + $0xc8] sm:$0xf]
    %v4165 = vld [vmem:[%s24 + $0xcc] sm:$0xf]
    %v4166 = vld [vmem:[%s24 + $0xd0] sm:$0xf]
    %v4167 = vld [vmem:[%s24 + $0xd4] sm:$0xf]
    %v4168 = vld [vmem:[%s24 + $0xd8] sm:$0xf]
    %v4169 = vld [vmem:[%s24 + $0xdc] sm:$0xf]
    %v4170 = vld [vmem:[%s24 + $0xe0] sm:$0xf]
    %v4171 = vld [vmem:[%s24 + $0xe4] sm:$0xf]
    %v4172 = vld [vmem:[%s24 + $0xe8] sm:$0xf]
    %v4173 = vld [vmem:[%s24 + $0xec] sm:$0xf]
    %v4174 = vld [vmem:[%s24 + $0xf0] sm:$0xf]
    %v4175 = vld [vmem:[%s24 + $0xf4] sm:$0xf]
    %v4176 = vld [vmem:[%s24 + $0xf8] sm:$0xf]
    %v4177 = vld [vmem:[%s24 + $0xfc] sm:$0xf]
    %v4178 = vld [vmem:[%s24 + $0x100] sm:$0xf]
    %v4179 = vld [vmem:[%s24 + $0x104] sm:$0xf]
    %v4180 = vld [vmem:[%s24 + $0x108] sm:$0xf]
    %v4181 = vld [vmem:[%s24 + $0x10c] sm:$0xf]
    %v4182 = vld [vmem:[%s24 + $0x110] sm:$0xf]
    %v4183 = vld [vmem:[%s24 + $0x114] sm:$0xf]
    %v4184 = vld [vmem:[%s24 + $0x118] sm:$0xf]
    %v4185 = vld [vmem:[%s24 + $0x11c] sm:$0xf]
    %v4186 = vld [vmem:[%s24 + $0x120] sm:$0xf]
    %v4187 = vld [vmem:[%s24 + $0x124] sm:$0xf]
    %v4188 = vld [vmem:[%s24 + $0x128] sm:$0xf]
    %v4189 = vld [vmem:[%s24 + $0x12c] sm:$0xf]
    %v4190 = vld [vmem:[%s24 + $0x130] sm:$0xf]
    %v4191 = vld [vmem:[%s24 + $0x134] sm:$0xf]
    %v4192 = vld [vmem:[%s24 + $0x138] sm:$0xf]
    %v4193 = vld [vmem:[%s24 + $0x13c] sm:$0xf]
    %v4194 = vld [vmem:[%s24 + $0x140] sm:$0xf]
    %v4195 = vld [vmem:[%s24 + $0x144] sm:$0xf]
    %v4196 = vld [vmem:[%s24 + $0x148] sm:$0xf]
    %v4197 = vld [vmem:[%s24 + $0x14c] sm:$0xf]
    %v4198 = vld [vmem:[%s24 + $0x150] sm:$0xf]
    %v4199 = vld [vmem:[%s24 + $0x154] sm:$0xf]
    %v4200 = vld [vmem:[%s24 + $0x158] sm:$0xf]
    %v4201 = vld [vmem:[%s24 + $0x15c] sm:$0xf]
    %v4202 = vld [vmem:[%s24 + $0x160] sm:$0xf]
    %v4203 = vld [vmem:[%s24 + $0x164] sm:$0xf]
    %v4204 = vld [vmem:[%s24 + $0x168] sm:$0xf]
    %v4205 = vld [vmem:[%s24 + $0x16c] sm:$0xf]
    %v4206 = vld [vmem:[%s24 + $0x170] sm:$0xf]
    %v4207 = vld [vmem:[%s24 + $0x174] sm:$0xf]
    %v4208 = vld [vmem:[%s24 + $0x178] sm:$0xf]
    %v4209 = vld [vmem:[%s24 + $0x17c] sm:$0xf]
    %v4210 = vld [vmem:[%s24 + $0x180] sm:$0xf]
    %v4211 = vld [vmem:[%s24 + $0x184] sm:$0xf]
    %v4212 = vld [vmem:[%s24 + $0x188] sm:$0xf]
    %v4213 = vld [vmem:[%s24 + $0x18c] sm:$0xf]
    %v4214 = vld [vmem:[%s24 + $0x190] sm:$0xf]
    %v4215 = vld [vmem:[%s24 + $0x194] sm:$0xf]
    %v4216 = vld [vmem:[%s24 + $0x198] sm:$0xf]
    %v4217 = vld [vmem:[%s24 + $0x19c] sm:$0xf]
    %v4218 = vld [vmem:[%s24 + $0x1a0] sm:$0xf]
    %v4219 = vld [vmem:[%s24 + $0x1a4] sm:$0xf]
    %v4220 = vld [vmem:[%s24 + $0x1a8] sm:$0xf]
    %v4221 = vld [vmem:[%s24 + $0x1ac] sm:$0xf]
    %v4222 = vld [vmem:[%s24 + $0x1b0] sm:$0xf]
    %v4223 = vld [vmem:[%s24 + $0x1b4] sm:$0xf]
    %v4224 = vld [vmem:[%s24 + $0x1b8] sm:$0xf]
    %v4225 = vld [vmem:[%s24 + $0x1bc] sm:$0xf]
    %v4226 = vld [vmem:[%s24 + $0x1c0] sm:$0xf]
    %v4227 = vld [vmem:[%s24 + $0x1c4] sm:$0xf]
    %v4228 = vld [vmem:[%s24 + $0x1c8] sm:$0xf]
    %v4229 = vld [vmem:[%s24 + $0x1cc] sm:$0xf]
    %v4230 = vld [vmem:[%s24 + $0x1d0] sm:$0xf]
    %v4231 = vld [vmem:[%s24 + $0x1d4] sm:$0xf]
    %v4232 = vld [vmem:[%s24 + $0x1d8] sm:$0xf]
    %v4233 = vld [vmem:[%s24 + $0x1dc] sm:$0xf]
    %v4234 = vld [vmem:[%s24 + $0x1e0] sm:$0xf]
    %v4235 = vld [vmem:[%s24 + $0x1e4] sm:$0xf]
    %v4236 = vld [vmem:[%s24 + $0x1e8] sm:$0xf]
    %v4237 = vld [vmem:[%s24 + $0x1ec] sm:$0xf]
    %v4238 = vld [vmem:[%s24 + $0x1f0] sm:$0xf]
    %v4239 = vld [vmem:[%s24 + $0x1f4] sm:$0xf]
    %v4240 = vld [vmem:[%s24 + $0x1f8] sm:$0xf]
    %v4241 = vld [vmem:[%s24 + $0x1fc] sm:$0xf]
    %v4242 = vld [vmem:[%s24 + $0x200] sm:$0xf]
    %v4243 = vld [vmem:[%s24 + $0x204] sm:$0xf]
    %v4244 = vld [vmem:[%s24 + $0x208] sm:$0xf]
    %v4245 = vld [vmem:[%s24 + $0x20c] sm:$0xf]
    %v4246 = vld [vmem:[%s24 + $0x210] sm:$0xf]
    %v4247 = vld [vmem:[%s24 + $0x214] sm:$0xf]
    %v4248 = vld [vmem:[%s24 + $0x218] sm:$0xf]
    %v4249 = vld [vmem:[%s24 + $0x21c] sm:$0xf]
    %v4250 = vld [vmem:[%s24 + $0x220] sm:$0xf]
    %v4251 = vld [vmem:[%s24 + $0x224] sm:$0xf]
    %v4252 = vld [vmem:[%s24 + $0x228] sm:$0xf]
    %v4253 = vld [vmem:[%s24 + $0x22c] sm:$0xf]
    %v4254 = vld [vmem:[%s24 + $0x230] sm:$0xf]
    %v4255 = vld [vmem:[%s24 + $0x234] sm:$0xf]
    %v4256 = vld [vmem:[%s24 + $0x238] sm:$0xf]
    %v4257 = vld [vmem:[%s24 + $0x23c] sm:$0xf]
    %v4258 = vld [vmem:[%s24 + $0x240] sm:$0xf]
    %v4259 = vld [vmem:[%s24 + $0x244] sm:$0xf]
    %v4260 = vld [vmem:[%s24 + $0x248] sm:$0xf]
    %v4261 = vld [vmem:[%s24 + $0x24c] sm:$0xf]
    %v4262 = vld [vmem:[%s24 + $0x250] sm:$0xf]
    %v4263 = vld [vmem:[%s24 + $0x254] sm:$0xf]
    %v4264 = vld [vmem:[%s24 + $0x258] sm:$0xf]
    %v4265 = vld [vmem:[%s24 + $0x25c] sm:$0xf]
    %v4266 = vld [vmem:[%s24 + $0x260] sm:$0xf]
    %v4267 = vld [vmem:[%s24 + $0x264] sm:$0xf]
    %v4268 = vld [vmem:[%s24 + $0x268] sm:$0xf]
    %v4269 = vld [vmem:[%s24 + $0x26c] sm:$0xf]
    %v4270 = vld [vmem:[%s24 + $0x270] sm:$0xf]
    %v4271 = vld [vmem:[%s24 + $0x274] sm:$0xf]
    %v4272 = vld [vmem:[%s24 + $0x278] sm:$0xf]
    %v4273 = vld [vmem:[%s24 + $0x27c] sm:$0xf]
    %v4274 = vld [vmem:[%s24 + $0x280] sm:$0xf]
    %v4275 = vld [vmem:[%s24 + $0x284] sm:$0xf]
    %v4276 = vld [vmem:[%s24 + $0x288] sm:$0xf]
    %v4277 = vld [vmem:[%s24 + $0x28c] sm:$0xf]
    %v4278 = vld [vmem:[%s24 + $0x290] sm:$0xf]
    %v4279 = vld [vmem:[%s24 + $0x294] sm:$0xf]
    %v4280 = vld [vmem:[%s24 + $0x298] sm:$0xf]
    %v4281 = vld [vmem:[%s24 + $0x29c] sm:$0xf]
    %v4282 = vld [vmem:[%s24 + $0x2a0] sm:$0xf]
    %v4283 = vld [vmem:[%s24 + $0x2a4] sm:$0xf]
    %v4284 = vld [vmem:[%s24 + $0x2a8] sm:$0xf]
    %v4285 = vld [vmem:[%s24 + $0x2ac] sm:$0xf]
    %v4286 = vld [vmem:[%s24 + $0x2b0] sm:$0xf]
    %v4287 = vld [vmem:[%s24 + $0x2b4] sm:$0xf]
    %v4288 = vld [vmem:[%s24 + $0x2b8] sm:$0xf]
    %v4289 = vld [vmem:[%s24 + $0x2bc] sm:$0xf]
    %v4290 = vld [vmem:[%s24 + $0x2c0] sm:$0xf]
    %v4291 = vld [vmem:[%s24 + $0x2c4] sm:$0xf]
    %v4292 = vld [vmem:[%s24 + $0x2c8] sm:$0xf]
    %v4293 = vld [vmem:[%s24 + $0x2cc] sm:$0xf]
    %v4294 = vld [vmem:[%s24 + $0x2d0] sm:$0xf]
    %v4295 = vld [vmem:[%s24 + $0x2d4] sm:$0xf]
    %v4296 = vld [vmem:[%s24 + $0x2d8] sm:$0xf]
    %v4297 = vld [vmem:[%s24 + $0x2dc] sm:$0xf]
    %v4298 = vld [vmem:[%s24 + $0x2e0] sm:$0xf]
    %v4299 = vld [vmem:[%s24 + $0x2e4] sm:$0xf]
    %v4300 = vld [vmem:[%s24 + $0x2e8] sm:$0xf]
    %v4301 = vld [vmem:[%s24 + $0x2ec] sm:$0xf]
    %v4302 = vld [vmem:[%s24 + $0x2f0] sm:$0xf]
    %v4303 = vld [vmem:[%s24 + $0x2f4] sm:$0xf]
    %v4304 = vld [vmem:[%s24 + $0x2f8] sm:$0xf]
    %v4305 = vld [vmem:[%s24 + $0x2fc] sm:$0xf]
    %v4306 = vld [vmem:[%s24 + $0x300] sm:$0xf]
    %v4307 = vld [vmem:[%s24 + $0x304] sm:$0xf]
    %v4308 = vld [vmem:[%s24 + $0x308] sm:$0xf]
    %v4309 = vld [vmem:[%s24 + $0x30c] sm:$0xf]
    %v4310 = vld [vmem:[%s24 + $0x310] sm:$0xf]
    %v4311 = vld [vmem:[%s24 + $0x314] sm:$0xf]
    %v4312 = vld [vmem:[%s24 + $0x318] sm:$0xf]
    %v4313 = vld [vmem:[%s24 + $0x31c] sm:$0xf]
    %v4314 = vld [vmem:[%s24 + $0x320] sm:$0xf]
    %v4315 = vld [vmem:[%s24 + $0x324] sm:$0xf]
    %v4316 = vld [vmem:[%s24 + $0x328] sm:$0xf]
    %v4317 = vld [vmem:[%s24 + $0x32c] sm:$0xf]
    %v4318 = vld [vmem:[%s24 + $0x330] sm:$0xf]
    %v4319 = vld [vmem:[%s24 + $0x334] sm:$0xf]
    %v4320 = vld [vmem:[%s24 + $0x338] sm:$0xf]
    %v4321 = vld [vmem:[%s24 + $0x33c] sm:$0xf]
    %v4322 = vld [vmem:[%s24 + $0x340] sm:$0xf]
    %v4323 = vld [vmem:[%s24 + $0x344] sm:$0xf]
    %v4324 = vld [vmem:[%s24 + $0x348] sm:$0xf]
    %v4325 = vld [vmem:[%s24 + $0x34c] sm:$0xf]
    %v4326 = vld [vmem:[%s24 + $0x350] sm:$0xf]
    %v4327 = vld [vmem:[%s24 + $0x354] sm:$0xf]
    %v4328 = vld [vmem:[%s24 + $0x358] sm:$0xf]
    %v4329 = vld [vmem:[%s24 + $0x35c] sm:$0xf]
    %v4330 = vld [vmem:[%s24 + $0x360] sm:$0xf]
    %v4331 = vld [vmem:[%s24 + $0x364] sm:$0xf]
    %v4332 = vld [vmem:[%s24 + $0x368] sm:$0xf]
    %v4333 = vld [vmem:[%s24 + $0x36c] sm:$0xf]
    %v4334 = vld [vmem:[%s24 + $0x370] sm:$0xf]
    %v4335 = vld [vmem:[%s24 + $0x374] sm:$0xf]
    %v4336 = vld [vmem:[%s24 + $0x378] sm:$0xf]
    %v4337 = vld [vmem:[%s24 + $0x37c] sm:$0xf]
    %v4338 = vld [vmem:[%s24 + $0x380] sm:$0xf]
    %v4339 = vld [vmem:[%s24 + $0x384] sm:$0xf]
    %v4340 = vld [vmem:[%s24 + $0x388] sm:$0xf]
    %v4341 = vld [vmem:[%s24 + $0x38c] sm:$0xf]
    %v4342 = vld [vmem:[%s24 + $0x390] sm:$0xf]
    %v4343 = vld [vmem:[%s24 + $0x394] sm:$0xf]
    %v4344 = vld [vmem:[%s24 + $0x398] sm:$0xf]
    %v4345 = vld [vmem:[%s24 + $0x39c] sm:$0xf]
    %v4346 = vld [vmem:[%s24 + $0x3a0] sm:$0xf]
    %v4347 = vld [vmem:[%s24 + $0x3a4] sm:$0xf]
    %v4348 = vld [vmem:[%s24 + $0x3a8] sm:$0xf]
    %v4349 = vld [vmem:[%s24 + $0x3ac] sm:$0xf]
    %v4350 = vld [vmem:[%s24 + $0x3b0] sm:$0xf]
    %v4351 = vld [vmem:[%s24 + $0x3b4] sm:$0xf]
    %v4352 = vld [vmem:[%s24 + $0x3b8] sm:$0xf]
    %v4353 = vld [vmem:[%s24 + $0x3bc] sm:$0xf]
    %v4354 = vld [vmem:[%s24 + $0x3c0] sm:$0xf]
    %v4355 = vld [vmem:[%s24 + $0x3c4] sm:$0xf]
    %v4356 = vld [vmem:[%s24 + $0x3c8] sm:$0xf]
    %v4357 = vld [vmem:[%s24 + $0x3cc] sm:$0xf]
    %v4358 = vld [vmem:[%s24 + $0x3d0] sm:$0xf]
    %v4359 = vld [vmem:[%s24 + $0x3d4] sm:$0xf]
    %v4360 = vld [vmem:[%s24 + $0x3d8] sm:$0xf]
    %v4361 = vld [vmem:[%s24 + $0x3dc] sm:$0xf]
    %v4362 = vld [vmem:[%s24 + $0x3e0] sm:$0xf]
    %v4363 = vld [vmem:[%s24 + $0x3e4] sm:$0xf]
    %v4364 = vld [vmem:[%s24 + $0x3e8] sm:$0xf]
    %v4365 = vld [vmem:[%s24 + $0x3ec] sm:$0xf]
    %v4366 = vld [vmem:[%s24 + $0x3f0] sm:$0xf]
    %v4367 = vld [vmem:[%s24 + $0x3f4] sm:$0xf]
    %v4368 = vld [vmem:[%s24 + $0x3f8] sm:$0xf]
    %v4369 = vld [vmem:[%s24 + $0x3fc] sm:$0xf]
    %v4370 = vld [vmem:[%s25] sm:$0x1]
    %v4371 = vpack.c.bf16 %v4098, %v4082
    %v4372 = vpack.c.bf16 %v4099, %v4083
    %v4373 = vpack.c.bf16 %v4100, %v4084
    %v4374 = vpack.c.bf16 %v4101, %v4085
    %v4375 = vpack.c.bf16 %v4102, %v4086
    %v4376 = vpack.c.bf16 %v4103, %v4087
    %v4377 = vpack.c.bf16 %v4104, %v4088
    %v4378 = vpack.c.bf16 %v4105, %v4089
    %v4379 = vpack.c.bf16 %v4106, %v4090
    %v4380 = vpack.c.bf16 %v4107, %v4091
    %v4381 = vpack.c.bf16 %v4108, %v4092
    %v4382 = vpack.c.bf16 %v4109, %v4093
    %v4383 = vpack.c.bf16 %v4110, %v4094
    %v4384 = vpack.c.bf16 %v4111, %v4095
    %v4385 = vpack.c.bf16 %v4112, %v4096
    %v4386 = vpack.c.bf16 %v4113, %v4097
    %v4388 = vlaneseq
    %v4389 = vshrl.u32 %v4388, 7
    %v4390 = vsub.s32 0, %v4389
    %v4391 = vrot.slane %v4370, %v4390
    %v4649 = vunpack.c.l.b16 %v4114
    %v4650 = vunpack.c.l.b16 %v4115
    %v4651 = vunpack.c.l.b16 %v4116
    %v4652 = vunpack.c.l.b16 %v4117
    %v4653 = vunpack.c.l.b16 %v4118
    %v4654 = vunpack.c.l.b16 %v4119
    %v4655 = vunpack.c.l.b16 %v4120
    %v4656 = vunpack.c.l.b16 %v4121
    %v4657 = vunpack.c.l.b16 %v4122
    %v4658 = vunpack.c.l.b16 %v4123
    %v4659 = vunpack.c.l.b16 %v4124
    %v4660 = vunpack.c.l.b16 %v4125
    %v4661 = vunpack.c.l.b16 %v4126
    %v4662 = vunpack.c.l.b16 %v4127
    %v4663 = vunpack.c.l.b16 %v4128
    %v4664 = vunpack.c.l.b16 %v4129
    %v4665 = vunpack.c.l.b16 %v4130
    %v4666 = vunpack.c.l.b16 %v4131
    %v4667 = vunpack.c.l.b16 %v4132
    %v4668 = vunpack.c.l.b16 %v4133
    %v4669 = vunpack.c.l.b16 %v4134
    %v4670 = vunpack.c.l.b16 %v4135
    %v4671 = vunpack.c.l.b16 %v4136
    %v4672 = vunpack.c.l.b16 %v4137
    %v4673 = vunpack.c.l.b16 %v4138
    %v4674 = vunpack.c.l.b16 %v4139
    %v4675 = vunpack.c.l.b16 %v4140
    %v4676 = vunpack.c.l.b16 %v4141
    %v4677 = vunpack.c.l.b16 %v4142
    %v4678 = vunpack.c.l.b16 %v4143
    %v4679 = vunpack.c.l.b16 %v4144
    %v4680 = vunpack.c.l.b16 %v4145
    %v4681 = vunpack.c.l.b16 %v4146
    %v4682 = vunpack.c.l.b16 %v4147
    %v4683 = vunpack.c.l.b16 %v4148
    %v4684 = vunpack.c.l.b16 %v4149
    %v4685 = vunpack.c.l.b16 %v4150
    %v4686 = vunpack.c.l.b16 %v4151
    %v4687 = vunpack.c.l.b16 %v4152
    %v4688 = vunpack.c.l.b16 %v4153
    %v4689 = vunpack.c.l.b16 %v4154
    %v4690 = vunpack.c.l.b16 %v4155
    %v4691 = vunpack.c.l.b16 %v4156
    %v4692 = vunpack.c.l.b16 %v4157
    %v4693 = vunpack.c.l.b16 %v4158
    %v4694 = vunpack.c.l.b16 %v4159
    %v4695 = vunpack.c.l.b16 %v4160
    %v4696 = vunpack.c.l.b16 %v4161
    %v4697 = vunpack.c.l.b16 %v4162
    %v4698 = vunpack.c.l.b16 %v4163
    %v4699 = vunpack.c.l.b16 %v4164
    %v4700 = vunpack.c.l.b16 %v4165
    %v4701 = vunpack.c.l.b16 %v4166
    %v4702 = vunpack.c.l.b16 %v4167
    %v4703 = vunpack.c.l.b16 %v4168
    %v4704 = vunpack.c.l.b16 %v4169
    %v4705 = vunpack.c.l.b16 %v4170
    %v4706 = vunpack.c.l.b16 %v4171
    %v4707 = vunpack.c.l.b16 %v4172
    %v4708 = vunpack.c.l.b16 %v4173
    %v4709 = vunpack.c.l.b16 %v4174
    %v4710 = vunpack.c.l.b16 %v4175
    %v4711 = vunpack.c.l.b16 %v4176
    %v4712 = vunpack.c.l.b16 %v4177
    %v4713 = vunpack.c.l.b16 %v4178
    %v4714 = vunpack.c.l.b16 %v4179
    %v4715 = vunpack.c.l.b16 %v4180
    %v4716 = vunpack.c.l.b16 %v4181
    %v4717 = vunpack.c.l.b16 %v4182
    %v4718 = vunpack.c.l.b16 %v4183
    %v4719 = vunpack.c.l.b16 %v4184
    %v4720 = vunpack.c.l.b16 %v4185
    %v4721 = vunpack.c.l.b16 %v4186
    %v4722 = vunpack.c.l.b16 %v4187
    %v4723 = vunpack.c.l.b16 %v4188
    %v4724 = vunpack.c.l.b16 %v4189
    %v4725 = vunpack.c.l.b16 %v4190
    %v4726 = vunpack.c.l.b16 %v4191
    %v4727 = vunpack.c.l.b16 %v4192
    %v4728 = vunpack.c.l.b16 %v4193
    %v4729 = vunpack.c.l.b16 %v4194
    %v4730 = vunpack.c.l.b16 %v4195
    %v4731 = vunpack.c.l.b16 %v4196
    %v4732 = vunpack.c.l.b16 %v4197
    %v4733 = vunpack.c.l.b16 %v4198
    %v4734 = vunpack.c.l.b16 %v4199
    %v4735 = vunpack.c.l.b16 %v4200
    %v4736 = vunpack.c.l.b16 %v4201
    %v4737 = vunpack.c.l.b16 %v4202
    %v4738 = vunpack.c.l.b16 %v4203
    %v4739 = vunpack.c.l.b16 %v4204
    %v4740 = vunpack.c.l.b16 %v4205
    %v4741 = vunpack.c.l.b16 %v4206
    %v4742 = vunpack.c.l.b16 %v4207
    %v4743 = vunpack.c.l.b16 %v4208
    %v4744 = vunpack.c.l.b16 %v4209
    %v4745 = vunpack.c.l.b16 %v4210
    %v4746 = vunpack.c.l.b16 %v4211
    %v4747 = vunpack.c.l.b16 %v4212
    %v4748 = vunpack.c.l.b16 %v4213
    %v4749 = vunpack.c.l.b16 %v4214
    %v4750 = vunpack.c.l.b16 %v4215
    %v4751 = vunpack.c.l.b16 %v4216
    %v4752 = vunpack.c.l.b16 %v4217
    %v4753 = vunpack.c.l.b16 %v4218
    %v4754 = vunpack.c.l.b16 %v4219
    %v4755 = vunpack.c.l.b16 %v4220
    %v4756 = vunpack.c.l.b16 %v4221
    %v4757 = vunpack.c.l.b16 %v4222
    %v4758 = vunpack.c.l.b16 %v4223
    %v4759 = vunpack.c.l.b16 %v4224
    %v4760 = vunpack.c.l.b16 %v4225
    %v4761 = vunpack.c.l.b16 %v4226
    %v4762 = vunpack.c.l.b16 %v4227
    %v4763 = vunpack.c.l.b16 %v4228
    %v4764 = vunpack.c.l.b16 %v4229
    %v4765 = vunpack.c.l.b16 %v4230
    %v4766 = vunpack.c.l.b16 %v4231
    %v4767 = vunpack.c.l.b16 %v4232
    %v4768 = vunpack.c.l.b16 %v4233
    %v4769 = vunpack.c.l.b16 %v4234
    %v4770 = vunpack.c.l.b16 %v4235
    %v4771 = vunpack.c.l.b16 %v4236
    %v4772 = vunpack.c.l.b16 %v4237
    %v4773 = vunpack.c.l.b16 %v4238
    %v4774 = vunpack.c.l.b16 %v4239
    %v4775 = vunpack.c.l.b16 %v4240
    %v4776 = vunpack.c.l.b16 %v4241
    %v4777 = vunpack.c.l.b16 %v4242
    %v4778 = vunpack.c.l.b16 %v4243
    %v4779 = vunpack.c.l.b16 %v4244
    %v4780 = vunpack.c.l.b16 %v4245
    %v4781 = vunpack.c.l.b16 %v4246
    %v4782 = vunpack.c.l.b16 %v4247
    %v4783 = vunpack.c.l.b16 %v4248
    %v4784 = vunpack.c.l.b16 %v4249
    %v4785 = vunpack.c.l.b16 %v4250
    %v4786 = vunpack.c.l.b16 %v4251
    %v4787 = vunpack.c.l.b16 %v4252
    %v4788 = vunpack.c.l.b16 %v4253
    %v4789 = vunpack.c.l.b16 %v4254
    %v4790 = vunpack.c.l.b16 %v4255
    %v4791 = vunpack.c.l.b16 %v4256
    %v4792 = vunpack.c.l.b16 %v4257
    %v4793 = vunpack.c.l.b16 %v4258
    %v4794 = vunpack.c.l.b16 %v4259
    %v4795 = vunpack.c.l.b16 %v4260
    %v4796 = vunpack.c.l.b16 %v4261
    %v4797 = vunpack.c.l.b16 %v4262
    %v4798 = vunpack.c.l.b16 %v4263
    %v4799 = vunpack.c.l.b16 %v4264
    %v4800 = vunpack.c.l.b16 %v4265
    %v4801 = vunpack.c.l.b16 %v4266
    %v4802 = vunpack.c.l.b16 %v4267
    %v4803 = vunpack.c.l.b16 %v4268
    %v4804 = vunpack.c.l.b16 %v4269
    %v4805 = vunpack.c.l.b16 %v4270
    %v4806 = vunpack.c.l.b16 %v4271
    %v4807 = vunpack.c.l.b16 %v4272
    %v4808 = vunpack.c.l.b16 %v4273
    %v4809 = vunpack.c.l.b16 %v4274
    %v4810 = vunpack.c.l.b16 %v4275
    %v4811 = vunpack.c.l.b16 %v4276
    %v4812 = vunpack.c.l.b16 %v4277
    %v4813 = vunpack.c.l.b16 %v4278
    %v4814 = vunpack.c.l.b16 %v4279
    %v4815 = vunpack.c.l.b16 %v4280
    %v4816 = vunpack.c.l.b16 %v4281
    %v4817 = vunpack.c.l.b16 %v4282
    %v4818 = vunpack.c.l.b16 %v4283
    %v4819 = vunpack.c.l.b16 %v4284
    %v4820 = vunpack.c.l.b16 %v4285
    %v4821 = vunpack.c.l.b16 %v4286
    %v4822 = vunpack.c.l.b16 %v4287
    %v4823 = vunpack.c.l.b16 %v4288
    %v4824 = vunpack.c.l.b16 %v4289
    %v4825 = vunpack.c.l.b16 %v4290
    %v4826 = vunpack.c.l.b16 %v4291
    %v4827 = vunpack.c.l.b16 %v4292
    %v4828 = vunpack.c.l.b16 %v4293
    %v4829 = vunpack.c.l.b16 %v4294
    %v4830 = vunpack.c.l.b16 %v4295
    %v4831 = vunpack.c.l.b16 %v4296
    %v4832 = vunpack.c.l.b16 %v4297
    %v4833 = vunpack.c.l.b16 %v4298
    %v4834 = vunpack.c.l.b16 %v4299
    %v4835 = vunpack.c.l.b16 %v4300
    %v4836 = vunpack.c.l.b16 %v4301
    %v4837 = vunpack.c.l.b16 %v4302
    %v4838 = vunpack.c.l.b16 %v4303
    %v4839 = vunpack.c.l.b16 %v4304
    %v4840 = vunpack.c.l.b16 %v4305
    %v4841 = vunpack.c.l.b16 %v4306
    %v4842 = vunpack.c.l.b16 %v4307
    %v4843 = vunpack.c.l.b16 %v4308
    %v4844 = vunpack.c.l.b16 %v4309
    %v4845 = vunpack.c.l.b16 %v4310
    %v4846 = vunpack.c.l.b16 %v4311
    %v4847 = vunpack.c.l.b16 %v4312
    %v4848 = vunpack.c.l.b16 %v4313
    %v4849 = vunpack.c.l.b16 %v4314
    %v4850 = vunpack.c.l.b16 %v4315
    %v4851 = vunpack.c.l.b16 %v4316
    %v4852 = vunpack.c.l.b16 %v4317
    %v4853 = vunpack.c.l.b16 %v4318
    %v4854 = vunpack.c.l.b16 %v4319
    %v4855 = vunpack.c.l.b16 %v4320
    %v4856 = vunpack.c.l.b16 %v4321
    %v4857 = vunpack.c.l.b16 %v4322
    %v4858 = vunpack.c.l.b16 %v4323
    %v4859 = vunpack.c.l.b16 %v4324
    %v4860 = vunpack.c.l.b16 %v4325
    %v4861 = vunpack.c.l.b16 %v4326
    %v4862 = vunpack.c.l.b16 %v4327
    %v4863 = vunpack.c.l.b16 %v4328
    %v4864 = vunpack.c.l.b16 %v4329
    %v4865 = vunpack.c.l.b16 %v4330
    %v4866 = vunpack.c.l.b16 %v4331
    %v4867 = vunpack.c.l.b16 %v4332
    %v4868 = vunpack.c.l.b16 %v4333
    %v4869 = vunpack.c.l.b16 %v4334
    %v4870 = vunpack.c.l.b16 %v4335
    %v4871 = vunpack.c.l.b16 %v4336
    %v4872 = vunpack.c.l.b16 %v4337
    %v4873 = vunpack.c.l.b16 %v4338
    %v4874 = vunpack.c.l.b16 %v4339
    %v4875 = vunpack.c.l.b16 %v4340
    %v4876 = vunpack.c.l.b16 %v4341
    %v4877 = vunpack.c.l.b16 %v4342
    %v4878 = vunpack.c.l.b16 %v4343
    %v4879 = vunpack.c.l.b16 %v4344
    %v4880 = vunpack.c.l.b16 %v4345
    %v4881 = vunpack.c.l.b16 %v4346
    %v4882 = vunpack.c.l.b16 %v4347
    %v4883 = vunpack.c.l.b16 %v4348
    %v4884 = vunpack.c.l.b16 %v4349
    %v4885 = vunpack.c.l.b16 %v4350
    %v4886 = vunpack.c.l.b16 %v4351
    %v4887 = vunpack.c.l.b16 %v4352
    %v4888 = vunpack.c.l.b16 %v4353
    %v4889 = vunpack.c.l.b16 %v4354
    %v4890 = vunpack.c.l.b16 %v4355
    %v4891 = vunpack.c.l.b16 %v4356
    %v4892 = vunpack.c.l.b16 %v4357
    %v4893 = vunpack.c.l.b16 %v4358
    %v4894 = vunpack.c.l.b16 %v4359
    %v4895 = vunpack.c.l.b16 %v4360
    %v4896 = vunpack.c.l.b16 %v4361
    %v4897 = vunpack.c.l.b16 %v4362
    %v4898 = vunpack.c.l.b16 %v4363
    %v4899 = vunpack.c.l.b16 %v4364
    %v4900 = vunpack.c.l.b16 %v4365
    %v4901 = vunpack.c.l.b16 %v4366
    %v4902 = vunpack.c.l.b16 %v4367
    %v4903 = vunpack.c.l.b16 %v4368
    %v4904 = vunpack.c.l.b16 %v4369
    %v4905 = vpack.c.b16 %v4650, %v4649
    %v4906 = vpack.c.b16 %v4652, %v4651
    %v4907 = vpack.c.b16 %v4654, %v4653
    %v4908 = vpack.c.b16 %v4656, %v4655
    %v4909 = vpack.c.b16 %v4658, %v4657
    %v4910 = vpack.c.b16 %v4660, %v4659
    %v4911 = vpack.c.b16 %v4662, %v4661
    %v4912 = vpack.c.b16 %v4664, %v4663
    %v4913 = vpack.c.b16 %v4666, %v4665
    %v4914 = vpack.c.b16 %v4668, %v4667
    %v4915 = vpack.c.b16 %v4670, %v4669
    %v4916 = vpack.c.b16 %v4672, %v4671
    %v4917 = vpack.c.b16 %v4674, %v4673
    %v4918 = vpack.c.b16 %v4676, %v4675
    %v4919 = vpack.c.b16 %v4678, %v4677
    %v4920 = vpack.c.b16 %v4680, %v4679
    %v4921 = vpack.c.b16 %v4682, %v4681
    %v4922 = vpack.c.b16 %v4684, %v4683
    %v4923 = vpack.c.b16 %v4686, %v4685
    %v4924 = vpack.c.b16 %v4688, %v4687
    %v4925 = vpack.c.b16 %v4690, %v4689
    %v4926 = vpack.c.b16 %v4692, %v4691
    %v4927 = vpack.c.b16 %v4694, %v4693
    %v4928 = vpack.c.b16 %v4696, %v4695
    %v4929 = vpack.c.b16 %v4698, %v4697
    %v4930 = vpack.c.b16 %v4700, %v4699
    %v4931 = vpack.c.b16 %v4702, %v4701
    %v4932 = vpack.c.b16 %v4704, %v4703
    %v4933 = vpack.c.b16 %v4706, %v4705
    %v4934 = vpack.c.b16 %v4708, %v4707
    %v4935 = vpack.c.b16 %v4710, %v4709
    %v4936 = vpack.c.b16 %v4712, %v4711
    %v4937 = vpack.c.b16 %v4714, %v4713
    %v4938 = vpack.c.b16 %v4716, %v4715
    %v4939 = vpack.c.b16 %v4718, %v4717
    %v4940 = vpack.c.b16 %v4720, %v4719
    %v4941 = vpack.c.b16 %v4722, %v4721
    %v4942 = vpack.c.b16 %v4724, %v4723
    %v4943 = vpack.c.b16 %v4726, %v4725
    %v4944 = vpack.c.b16 %v4728, %v4727
    %v4945 = vpack.c.b16 %v4730, %v4729
    %v4946 = vpack.c.b16 %v4732, %v4731
    %v4947 = vpack.c.b16 %v4734, %v4733
    %v4948 = vpack.c.b16 %v4736, %v4735
    %v4949 = vpack.c.b16 %v4738, %v4737
    %v4950 = vpack.c.b16 %v4740, %v4739
    %v4951 = vpack.c.b16 %v4742, %v4741
    %v4952 = vpack.c.b16 %v4744, %v4743
    %v4953 = vpack.c.b16 %v4746, %v4745
    %v4954 = vpack.c.b16 %v4748, %v4747
    %v4955 = vpack.c.b16 %v4750, %v4749
    %v4956 = vpack.c.b16 %v4752, %v4751
    %v4957 = vpack.c.b16 %v4754, %v4753
    %v4958 = vpack.c.b16 %v4756, %v4755
    %v4959 = vpack.c.b16 %v4758, %v4757
    %v4960 = vpack.c.b16 %v4760, %v4759
    %v4961 = vpack.c.b16 %v4762, %v4761
    %v4962 = vpack.c.b16 %v4764, %v4763
    %v4963 = vpack.c.b16 %v4766, %v4765
    %v4964 = vpack.c.b16 %v4768, %v4767
    %v4965 = vpack.c.b16 %v4770, %v4769
    %v4966 = vpack.c.b16 %v4772, %v4771
    %v4967 = vpack.c.b16 %v4774, %v4773
    %v4968 = vpack.c.b16 %v4776, %v4775
    %v4969 = vpack.c.b16 %v4778, %v4777
    %v4970 = vpack.c.b16 %v4780, %v4779
    %v4971 = vpack.c.b16 %v4782, %v4781
    %v4972 = vpack.c.b16 %v4784, %v4783
    %v4973 = vpack.c.b16 %v4786, %v4785
    %v4974 = vpack.c.b16 %v4788, %v4787
    %v4975 = vpack.c.b16 %v4790, %v4789
    %v4976 = vpack.c.b16 %v4792, %v4791
    %v4977 = vpack.c.b16 %v4794, %v4793
    %v4978 = vpack.c.b16 %v4796, %v4795
    %v4979 = vpack.c.b16 %v4798, %v4797
    %v4980 = vpack.c.b16 %v4800, %v4799
    %v4981 = vpack.c.b16 %v4802, %v4801
    %v4982 = vpack.c.b16 %v4804, %v4803
    %v4983 = vpack.c.b16 %v4806, %v4805
    %v4984 = vpack.c.b16 %v4808, %v4807
    %v4985 = vpack.c.b16 %v4810, %v4809
    %v4986 = vpack.c.b16 %v4812, %v4811
    %v4987 = vpack.c.b16 %v4814, %v4813
    %v4988 = vpack.c.b16 %v4816, %v4815
    %v4989 = vpack.c.b16 %v4818, %v4817
    %v4990 = vpack.c.b16 %v4820, %v4819
    %v4991 = vpack.c.b16 %v4822, %v4821
    %v4992 = vpack.c.b16 %v4824, %v4823
    %v4993 = vpack.c.b16 %v4826, %v4825
    %v4994 = vpack.c.b16 %v4828, %v4827
    %v4995 = vpack.c.b16 %v4830, %v4829
    %v4996 = vpack.c.b16 %v4832, %v4831
    %v4997 = vpack.c.b16 %v4834, %v4833
    %v4998 = vpack.c.b16 %v4836, %v4835
    %v4999 = vpack.c.b16 %v4838, %v4837
    %v5000 = vpack.c.b16 %v4840, %v4839
    %v5001 = vpack.c.b16 %v4842, %v4841
    %v5002 = vpack.c.b16 %v4844, %v4843
    %v5003 = vpack.c.b16 %v4846, %v4845
    %v5004 = vpack.c.b16 %v4848, %v4847
    %v5005 = vpack.c.b16 %v4850, %v4849
    %v5006 = vpack.c.b16 %v4852, %v4851
    %v5007 = vpack.c.b16 %v4854, %v4853
    %v5008 = vpack.c.b16 %v4856, %v4855
    %v5009 = vpack.c.b16 %v4858, %v4857
    %v5010 = vpack.c.b16 %v4860, %v4859
    %v5011 = vpack.c.b16 %v4862, %v4861
    %v5012 = vpack.c.b16 %v4864, %v4863
    %v5013 = vpack.c.b16 %v4866, %v4865
    %v5014 = vpack.c.b16 %v4868, %v4867
    %v5015 = vpack.c.b16 %v4870, %v4869
    %v5016 = vpack.c.b16 %v4872, %v4871
    %v5017 = vpack.c.b16 %v4874, %v4873
    %v5018 = vpack.c.b16 %v4876, %v4875
    %v5019 = vpack.c.b16 %v4878, %v4877
    %v5020 = vpack.c.b16 %v4880, %v4879
    %v5021 = vpack.c.b16 %v4882, %v4881
    %v5022 = vpack.c.b16 %v4884, %v4883
    %v5023 = vpack.c.b16 %v4886, %v4885
    %v5024 = vpack.c.b16 %v4888, %v4887
    %v5025 = vpack.c.b16 %v4890, %v4889
    %v5026 = vpack.c.b16 %v4892, %v4891
    %v5027 = vpack.c.b16 %v4894, %v4893
    %v5028 = vpack.c.b16 %v4896, %v4895
    %v5029 = vpack.c.b16 %v4898, %v4897
    %v5030 = vpack.c.b16 %v4900, %v4899
    %v5031 = vpack.c.b16 %v4902, %v4901
    %v5032 = vpack.c.b16 %v4904, %v4903
    %5161 = vmatprep.subr.bf16.mxu0 0
    %5162 = vmatpush1.bf16.msra.mxu0 %v4912
    %5163 = vmatprep.subr.bf16.mxu0 0
    %5164 = vmatpush1.bf16.msra.mxu0 %v4911
    %5165 = vmatprep.subr.bf16.mxu0 0
    %5166 = vmatpush1.bf16.msra.mxu0 %v4910
    %5167 = vmatprep.subr.bf16.mxu0 0
    %5168 = vmatpush1.bf16.msra.mxu0 %v4909
    %5169 = vmatprep.subr.bf16.mxu0 0
    %5170 = vmatpush1.bf16.msra.mxu0 %v4908
    %5171 = vmatprep.subr.bf16.mxu0 0
    %5172 = vmatpush1.bf16.msra.mxu0 %v4907
    %5173 = vmatprep.subr.bf16.mxu0 0
    %5174 = vmatpush1.bf16.msra.mxu0 %v4906
    %5175 = vmatprep.subr.bf16.mxu0 0
    %5176 = vmatpush1.bf16.msra.mxu0 %v4905
    %5177 = vmatprep.subr.bf16.mxu0 0
    %5178 = vmatpush2.bf16.msra.mxu0 %v4920
    %5179 = vmatprep.subr.bf16.mxu0 0
    %5180 = vmatpush2.bf16.msra.mxu0 %v4919
    %5181 = vmatprep.subr.bf16.mxu0 0
    %5182 = vmatpush2.bf16.msra.mxu0 %v4918
    %5183 = vmatprep.subr.bf16.mxu0 0
    %5184 = vmatpush2.bf16.msra.mxu0 %v4917
    %5185 = vmatprep.subr.bf16.mxu0 0
    %5186 = vmatpush2.bf16.msra.mxu0 %v4916
    %5187 = vmatprep.subr.bf16.mxu0 0
    %5188 = vmatpush2.bf16.msra.mxu0 %v4915
    %5189 = vmatprep.subr.bf16.mxu0 0
    %5190 = vmatpush2.bf16.msra.mxu0 %v4914
    %5191 = vmatprep.subr.bf16.mxu0 0
    %5192 = vmatpush2.bf16.msra.mxu0 %v4913
    %5193 = vmatprep.mubr.bf16.mxu0 %v4372
    %5194 = vmatmul.mubr.bf16.gmra.mxu0 %v4371
    %v5195 = vpop.f32.mrf.mxu0
    %v5196 = vadd.f32 %v4391, %v5195
    %v5197 = vpop.f32.mrf.mxu0
    %v5198 = vpop.f32.mrf.mxu0
    %v5199 = vadd.f32 %v4391, %v5198
    %v5200 = vpop.f32.mrf.mxu0
    %5201 = vdwg.mxu0
    %5202 = vmatprep.subr.bf16.mxu0 0
    %5203 = vmatpush1.bf16.msra.mxu0 %v4928
    %5204 = vmatprep.subr.bf16.mxu0 0
    %5205 = vmatpush1.bf16.msra.mxu0 %v4927
    %5206 = vmatprep.subr.bf16.mxu0 0
    %5207 = vmatpush1.bf16.msra.mxu0 %v4926
    %5208 = vmatprep.subr.bf16.mxu0 0
    %5209 = vmatpush1.bf16.msra.mxu0 %v4925
    %5210 = vmatprep.subr.bf16.mxu0 0
    %5211 = vmatpush1.bf16.msra.mxu0 %v4924
    %5212 = vmatprep.subr.bf16.mxu0 0
    %5213 = vmatpush1.bf16.msra.mxu0 %v4923
    %5214 = vmatprep.subr.bf16.mxu0 0
    %5215 = vmatpush1.bf16.msra.mxu0 %v4922
    %5216 = vmatprep.subr.bf16.mxu0 0
    %5217 = vmatpush1.bf16.msra.mxu0 %v4921
    %5218 = vmatprep.subr.bf16.mxu0 0
    %5219 = vmatpush2.bf16.msra.mxu0 %v4936
    %5220 = vmatprep.subr.bf16.mxu0 0
    %5221 = vmatpush2.bf16.msra.mxu0 %v4935
    %5222 = vmatprep.subr.bf16.mxu0 0
    %5223 = vmatpush2.bf16.msra.mxu0 %v4934
    %5224 = vmatprep.subr.bf16.mxu0 0
    %5225 = vmatpush2.bf16.msra.mxu0 %v4933
    %5226 = vmatprep.subr.bf16.mxu0 0
    %5227 = vmatpush2.bf16.msra.mxu0 %v4932
    %5228 = vmatprep.subr.bf16.mxu0 0
    %5229 = vmatpush2.bf16.msra.mxu0 %v4931
    %5230 = vmatprep.subr.bf16.mxu0 0
    %5231 = vmatpush2.bf16.msra.mxu0 %v4930
    %5232 = vmatprep.subr.bf16.mxu0 0
    %5233 = vmatpush2.bf16.msra.mxu0 %v4929
    %5234 = vmatprep.mubr.bf16.mxu0 %v4374
    %5235 = vmatmul.mubr.bf16.gmra.mxu0 %v4373
    %v5236 = vpop.f32.mrf.mxu0
    %v5237 = vadd.f32 %v5196, %v5236
    %v5238 = vpop.f32.mrf.mxu0
    %v5239 = vpop.f32.mrf.mxu0
    %v5240 = vadd.f32 %v5199, %v5239
    %v5241 = vpop.f32.mrf.mxu0
    %5242 = vdwg.mxu0
    %5243 = vmatprep.subr.bf16.mxu0 0
    %5244 = vmatpush1.bf16.msra.mxu0 %v4944
    %5245 = vmatprep.subr.bf16.mxu0 0
    %5246 = vmatpush1.bf16.msra.mxu0 %v4943
    %5247 = vmatprep.subr.bf16.mxu0 0
    %5248 = vmatpush1.bf16.msra.mxu0 %v4942
    %5249 = vmatprep.subr.bf16.mxu0 0
    %5250 = vmatpush1.bf16.msra.mxu0 %v4941
    %5251 = vmatprep.subr.bf16.mxu0 0
    %5252 = vmatpush1.bf16.msra.mxu0 %v4940
    %5253 = vmatprep.subr.bf16.mxu0 0
    %5254 = vmatpush1.bf16.msra.mxu0 %v4939
    %5255 = vmatprep.subr.bf16.mxu0 0
    %5256 = vmatpush1.bf16.msra.mxu0 %v4938
    %5257 = vmatprep.subr.bf16.mxu0 0
    %5258 = vmatpush1.bf16.msra.mxu0 %v4937
    %5259 = vmatprep.subr.bf16.mxu0 0
    %5260 = vmatpush2.bf16.msra.mxu0 %v4952
    %5261 = vmatprep.subr.bf16.mxu0 0
    %5262 = vmatpush2.bf16.msra.mxu0 %v4951
    %5263 = vmatprep.subr.bf16.mxu0 0
    %5264 = vmatpush2.bf16.msra.mxu0 %v4950
    %5265 = vmatprep.subr.bf16.mxu0 0
    %5266 = vmatpush2.bf16.msra.mxu0 %v4949
    %5267 = vmatprep.subr.bf16.mxu0 0
    %5268 = vmatpush2.bf16.msra.mxu0 %v4948
    %5269 = vmatprep.subr.bf16.mxu0 0
    %5270 = vmatpush2.bf16.msra.mxu0 %v4947
    %5271 = vmatprep.subr.bf16.mxu0 0
    %5272 = vmatpush2.bf16.msra.mxu0 %v4946
    %5273 = vmatprep.subr.bf16.mxu0 0
    %5274 = vmatpush2.bf16.msra.mxu0 %v4945
    %5275 = vmatprep.mubr.bf16.mxu0 %v4376
    %5276 = vmatmul.mubr.bf16.gmra.mxu0 %v4375
    %v5277 = vpop.f32.mrf.mxu0
    %v5278 = vadd.f32 %v5237, %v5277
    %v5279 = vpop.f32.mrf.mxu0
    %v5280 = vpop.f32.mrf.mxu0
    %v5281 = vadd.f32 %v5240, %v5280
    %v5282 = vpop.f32.mrf.mxu0
    %5283 = vdwg.mxu0
    %5284 = vmatprep.subr.bf16.mxu0 0
    %5285 = vmatpush1.bf16.msra.mxu0 %v4960
    %5286 = vmatprep.subr.bf16.mxu0 0
    %5287 = vmatpush1.bf16.msra.mxu0 %v4959
    %5288 = vmatprep.subr.bf16.mxu0 0
    %5289 = vmatpush1.bf16.msra.mxu0 %v4958
    %5290 = vmatprep.subr.bf16.mxu0 0
    %5291 = vmatpush1.bf16.msra.mxu0 %v4957
    %5292 = vmatprep.subr.bf16.mxu0 0
    %5293 = vmatpush1.bf16.msra.mxu0 %v4956
    %5294 = vmatprep.subr.bf16.mxu0 0
    %5295 = vmatpush1.bf16.msra.mxu0 %v4955
    %5296 = vmatprep.subr.bf16.mxu0 0
    %5297 = vmatpush1.bf16.msra.mxu0 %v4954
    %5298 = vmatprep.subr.bf16.mxu0 0
    %5299 = vmatpush1.bf16.msra.mxu0 %v4953
    %5300 = vmatprep.subr.bf16.mxu0 0
    %5301 = vmatpush2.bf16.msra.mxu0 %v4968
    %5302 = vmatprep.subr.bf16.mxu0 0
    %5303 = vmatpush2.bf16.msra.mxu0 %v4967
    %5304 = vmatprep.subr.bf16.mxu0 0
    %5305 = vmatpush2.bf16.msra.mxu0 %v4966
    %5306 = vmatprep.subr.bf16.mxu0 0
    %5307 = vmatpush2.bf16.msra.mxu0 %v4965
    %5308 = vmatprep.subr.bf16.mxu0 0
    %5309 = vmatpush2.bf16.msra.mxu0 %v4964
    %5310 = vmatprep.subr.bf16.mxu0 0
    %5311 = vmatpush2.bf16.msra.mxu0 %v4963
    %5312 = vmatprep.subr.bf16.mxu0 0
    %5313 = vmatpush2.bf16.msra.mxu0 %v4962
    %5314 = vmatprep.subr.bf16.mxu0 0
    %5315 = vmatpush2.bf16.msra.mxu0 %v4961
    %5316 = vmatprep.mubr.bf16.mxu0 %v4378
    %5317 = vmatmul.mubr.bf16.gmra.mxu0 %v4377
    %v5318 = vpop.f32.mrf.mxu0
    %v5319 = vadd.f32 %v5278, %v5318
    %v5320 = vpop.f32.mrf.mxu0
    %v5321 = vpop.f32.mrf.mxu0
    %v5322 = vadd.f32 %v5281, %v5321
    %v5323 = vpop.f32.mrf.mxu0
    %5324 = vdwg.mxu0
    %5325 = vmatprep.subr.bf16.mxu0 0
    %5326 = vmatpush1.bf16.msra.mxu0 %v4976
    %5327 = vmatprep.subr.bf16.mxu0 0
    %5328 = vmatpush1.bf16.msra.mxu0 %v4975
    %5329 = vmatprep.subr.bf16.mxu0 0
    %5330 = vmatpush1.bf16.msra.mxu0 %v4974
    %5331 = vmatprep.subr.bf16.mxu0 0
    %5332 = vmatpush1.bf16.msra.mxu0 %v4973
    %5333 = vmatprep.subr.bf16.mxu0 0
    %5334 = vmatpush1.bf16.msra.mxu0 %v4972
    %5335 = vmatprep.subr.bf16.mxu0 0
    %5336 = vmatpush1.bf16.msra.mxu0 %v4971
    %5337 = vmatprep.subr.bf16.mxu0 0
    %5338 = vmatpush1.bf16.msra.mxu0 %v4970
    %5339 = vmatprep.subr.bf16.mxu0 0
    %5340 = vmatpush1.bf16.msra.mxu0 %v4969
    %5341 = vmatprep.subr.bf16.mxu0 0
    %5342 = vmatpush2.bf16.msra.mxu0 %v4984
    %5343 = vmatprep.subr.bf16.mxu0 0
    %5344 = vmatpush2.bf16.msra.mxu0 %v4983
    %5345 = vmatprep.subr.bf16.mxu0 0
    %5346 = vmatpush2.bf16.msra.mxu0 %v4982
    %5347 = vmatprep.subr.bf16.mxu0 0
    %5348 = vmatpush2.bf16.msra.mxu0 %v4981
    %5349 = vmatprep.subr.bf16.mxu0 0
    %5350 = vmatpush2.bf16.msra.mxu0 %v4980
    %5351 = vmatprep.subr.bf16.mxu0 0
    %5352 = vmatpush2.bf16.msra.mxu0 %v4979
    %5353 = vmatprep.subr.bf16.mxu0 0
    %5354 = vmatpush2.bf16.msra.mxu0 %v4978
    %5355 = vmatprep.subr.bf16.mxu0 0
    %5356 = vmatpush2.bf16.msra.mxu0 %v4977
    %5357 = vmatprep.mubr.bf16.mxu0 %v4380
    %5358 = vmatmul.mubr.bf16.gmra.mxu0 %v4379
    %v5359 = vpop.f32.mrf.mxu0
    %v5360 = vadd.f32 %v5319, %v5359
    %v5361 = vpop.f32.mrf.mxu0
    %v5362 = vpop.f32.mrf.mxu0
    %v5363 = vadd.f32 %v5322, %v5362
    %v5364 = vpop.f32.mrf.mxu0
    %5365 = vdwg.mxu0
    %5366 = vmatprep.subr.bf16.mxu0 0
    %5367 = vmatpush1.bf16.msra.mxu0 %v4992
    %5368 = vmatprep.subr.bf16.mxu0 0
    %5369 = vmatpush1.bf16.msra.mxu0 %v4991
    %5370 = vmatprep.subr.bf16.mxu0 0
    %5371 = vmatpush1.bf16.msra.mxu0 %v4990
    %5372 = vmatprep.subr.bf16.mxu0 0
    %5373 = vmatpush1.bf16.msra.mxu0 %v4989
    %5374 = vmatprep.subr.bf16.mxu0 0
    %5375 = vmatpush1.bf16.msra.mxu0 %v4988
    %5376 = vmatprep.subr.bf16.mxu0 0
    %5377 = vmatpush1.bf16.msra.mxu0 %v4987
    %5378 = vmatprep.subr.bf16.mxu0 0
    %5379 = vmatpush1.bf16.msra.mxu0 %v4986
    %5380 = vmatprep.subr.bf16.mxu0 0
    %5381 = vmatpush1.bf16.msra.mxu0 %v4985
    %5382 = vmatprep.subr.bf16.mxu0 0
    %5383 = vmatpush2.bf16.msra.mxu0 %v5000
    %5384 = vmatprep.subr.bf16.mxu0 0
    %5385 = vmatpush2.bf16.msra.mxu0 %v4999
    %5386 = vmatprep.subr.bf16.mxu0 0
    %5387 = vmatpush2.bf16.msra.mxu0 %v4998
    %5388 = vmatprep.subr.bf16.mxu0 0
    %5389 = vmatpush2.bf16.msra.mxu0 %v4997
    %5390 = vmatprep.subr.bf16.mxu0 0
    %5391 = vmatpush2.bf16.msra.mxu0 %v4996
    %5392 = vmatprep.subr.bf16.mxu0 0
    %5393 = vmatpush2.bf16.msra.mxu0 %v4995
    %5394 = vmatprep.subr.bf16.mxu0 0
    %5395 = vmatpush2.bf16.msra.mxu0 %v4994
    %5396 = vmatprep.subr.bf16.mxu0 0
    %5397 = vmatpush2.bf16.msra.mxu0 %v4993
    %5398 = vmatprep.mubr.bf16.mxu0 %v4382
    %5399 = vmatmul.mubr.bf16.gmra.mxu0 %v4381
    %v5400 = vpop.f32.mrf.mxu0
    %v5401 = vadd.f32 %v5360, %v5400
    %v5402 = vpop.f32.mrf.mxu0
    %v5403 = vpop.f32.mrf.mxu0
    %v5404 = vadd.f32 %v5363, %v5403
    %v5405 = vpop.f32.mrf.mxu0
    %5406 = vdwg.mxu0
    %5407 = vmatprep.subr.bf16.mxu0 0
    %5408 = vmatpush1.bf16.msra.mxu0 %v5008
    %5409 = vmatprep.subr.bf16.mxu0 0
    %5410 = vmatpush1.bf16.msra.mxu0 %v5007
    %5411 = vmatprep.subr.bf16.mxu0 0
    %5412 = vmatpush1.bf16.msra.mxu0 %v5006
    %5413 = vmatprep.subr.bf16.mxu0 0
    %5414 = vmatpush1.bf16.msra.mxu0 %v5005
    %5415 = vmatprep.subr.bf16.mxu0 0
    %5416 = vmatpush1.bf16.msra.mxu0 %v5004
    %5417 = vmatprep.subr.bf16.mxu0 0
    %5418 = vmatpush1.bf16.msra.mxu0 %v5003
    %5419 = vmatprep.subr.bf16.mxu0 0
    %5420 = vmatpush1.bf16.msra.mxu0 %v5002
    %5421 = vmatprep.subr.bf16.mxu0 0
    %5422 = vmatpush1.bf16.msra.mxu0 %v5001
    %5423 = vmatprep.subr.bf16.mxu0 0
    %5424 = vmatpush2.bf16.msra.mxu0 %v5016
    %5425 = vmatprep.subr.bf16.mxu0 0
    %5426 = vmatpush2.bf16.msra.mxu0 %v5015
    %5427 = vmatprep.subr.bf16.mxu0 0
    %5428 = vmatpush2.bf16.msra.mxu0 %v5014
    %5429 = vmatprep.subr.bf16.mxu0 0
    %5430 = vmatpush2.bf16.msra.mxu0 %v5013
    %5431 = vmatprep.subr.bf16.mxu0 0
    %5432 = vmatpush2.bf16.msra.mxu0 %v5012
    %5433 = vmatprep.subr.bf16.mxu0 0
    %5434 = vmatpush2.bf16.msra.mxu0 %v5011
    %5435 = vmatprep.subr.bf16.mxu0 0
    %5436 = vmatpush2.bf16.msra.mxu0 %v5010
    %5437 = vmatprep.subr.bf16.mxu0 0
    %5438 = vmatpush2.bf16.msra.mxu0 %v5009
    %5439 = vmatprep.mubr.bf16.mxu0 %v4384
    %5440 = vmatmul.mubr.bf16.gmra.mxu0 %v4383
    %v5441 = vpop.f32.mrf.mxu0
    %v5442 = vadd.f32 %v5401, %v5441
    %v5443 = vpop.f32.mrf.mxu0
    %v5444 = vpop.f32.mrf.mxu0
    %v5445 = vadd.f32 %v5404, %v5444
    %v5446 = vpop.f32.mrf.mxu0
    %5447 = vdwg.mxu0
    %5448 = vmatprep.subr.bf16.mxu0 0
    %5449 = vmatpush1.bf16.msra.mxu0 %v5024
    %5450 = vmatprep.subr.bf16.mxu0 0
    %5451 = vmatpush1.bf16.msra.mxu0 %v5023
    %5452 = vmatprep.subr.bf16.mxu0 0
    %5453 = vmatpush1.bf16.msra.mxu0 %v5022
    %5454 = vmatprep.subr.bf16.mxu0 0
    %5455 = vmatpush1.bf16.msra.mxu0 %v5021
    %5456 = vmatprep.subr.bf16.mxu0 0
    %5457 = vmatpush1.bf16.msra.mxu0 %v5020
    %5458 = vmatprep.subr.bf16.mxu0 0
    %5459 = vmatpush1.bf16.msra.mxu0 %v5019
    %5460 = vmatprep.subr.bf16.mxu0 0
    %5461 = vmatpush1.bf16.msra.mxu0 %v5018
    %5462 = vmatprep.subr.bf16.mxu0 0
    %5463 = vmatpush1.bf16.msra.mxu0 %v5017
    %5464 = vmatprep.subr.bf16.mxu0 0
    %5465 = vmatpush2.bf16.msra.mxu0 %v5032
    %5466 = vmatprep.subr.bf16.mxu0 0
    %5467 = vmatpush2.bf16.msra.mxu0 %v5031
    %5468 = vmatprep.subr.bf16.mxu0 0
    %5469 = vmatpush2.bf16.msra.mxu0 %v5030
    %5470 = vmatprep.subr.bf16.mxu0 0
    %5471 = vmatpush2.bf16.msra.mxu0 %v5029
    %5472 = vmatprep.subr.bf16.mxu0 0
    %5473 = vmatpush2.bf16.msra.mxu0 %v5028
    %5474 = vmatprep.subr.bf16.mxu0 0
    %5475 = vmatpush2.bf16.msra.mxu0 %v5027
    %5476 = vmatprep.subr.bf16.mxu0 0
    %5477 = vmatpush2.bf16.msra.mxu0 %v5026
    %5478 = vmatprep.subr.bf16.mxu0 0
    %5479 = vmatpush2.bf16.msra.mxu0 %v5025
    %5480 = vmatprep.mubr.bf16.mxu0 %v4386
    %5481 = vmatmul.mubr.bf16.gmra.mxu0 %v4385
    %v5482 = vpop.f32.mrf.mxu0
    %v5483 = vadd.f32 %v5442, %v5482
    %v5484 = vpop.f32.mrf.mxu0
    %v5485 = vpop.f32.mrf.mxu0
    %v5486 = vadd.f32 %v5445, %v5485
    %v5487 = vpop.f32.mrf.mxu0
    %5488 = vdwg.mxu0
    %v5489 = vadd.f32 %v3398, %v5483
    %v5490 = vadd.f32 %v3399, %v5486
    %s5491 = scalar_lea.vmem %s6, 1
    %v5492 = vld [vmem:[%s5491] sm:$0x1]
    %s5493 = scalar_lea.vmem %s7, 1
    %v5494 = vld [vmem:[%s5493] sm:$0x1]
    %v5495 = vsel %vm207, %v5489, 0.0
    %5496 = vadd.xlane.f32.xlu0 %v5495
    %v5497 = vpop.xlane.xlu0 %5496
    %v5498 = vsel %vm207, %v5490, 0.0
    %5499 = vadd.xlane.f32.xlu0 %v5498
    %v5500 = vpop.xlane.xlu0 %5499
    %v5501 = vmul.f32 %v5497, %v214
    %v5502 = vmul.f32 %v5500, %v214
    %v5503 = vsub.f32 %v5489, %v5501
    %v5504 = vsub.f32 %v5490, %v5502
    %v5505 = vmul.f32 %v5503, %v5503
    %v5506 = vmul.f32 %v5504, %v5504
    %v5507 = vsel %vm207, %v5505, 0.0
    %5508 = vadd.xlane.f32.xlu0 %v5507
    %v5509 = vpop.xlane.xlu0 %5508
    %v5510 = vsel %vm207, %v5506, 0.0
    %5511 = vadd.xlane.f32.xlu0 %v5510
    %v5512 = vpop.xlane.xlu0 %5511
    %v5513 = vmul.f32 %v5509, 0.032258064
    %v5514 = vmul.f32 %v5512, 0.032258064
    %v5515 = vrsqrt.pop %v5513
    %v5516 = vmul.f32 %v5513, %v5515
    %vm5517 = vcmp.eq.f32.partialorder %v5513, inf
    %v5518 = vsel %vm5517, %v5513, %v5516
    %vm5519 = vcmp.eq.f32.partialorder %v5513, 0.0
    %v5520 = vand.u32 %v5513, 2147483648
    %v5521 = vsel %vm5519, %v5520, %v5518
    %v5522 = vrsqrt.pop %v5514
    %v5523 = vmul.f32 %v5514, %v5522
    %vm5524 = vcmp.eq.f32.partialorder %v5514, inf
    %v5525 = vsel %vm5524, %v5514, %v5523
    %vm5526 = vcmp.eq.f32.partialorder %v5514, 0.0
    %v5527 = vand.u32 %v5514, 2147483648
    %v5528 = vsel %vm5526, %v5527, %v5525
    %v5529 = vadd.f32 %v5521, 1e-06
    %v5530 = vadd.f32 %v5528, 1e-06
    %v5531 = vrcp.pop %v5529
    %v5532 = vrcp.pop %v5530
    %v5533 = vmul.f32 %v5503, %v5531
    %v5534 = vmul.f32 %v5504, %v5532
    %v5536 = vlaneseq
    %v5537 = vshrl.u32 %v5536, 7
    %v5538 = vsub.s32 0, %v5537
    %v5539 = vrot.slane %v5492, %v5538
    %v5541 = vmul.f32 %v5539, %v5533
    %v5542 = vmul.f32 %v5539, %v5534
    %v5544 = vlaneseq
    %v5545 = vshrl.u32 %v5544, 7
    %v5546 = vsub.s32 0, %v5545
    %v5547 = vrot.slane %v5494, %v5546
    %v5549 = vadd.f32 %v5541, %v5547
    %v5550 = vadd.f32 %v5542, %v5547
    %s5551 = scalar_lea.vmem %s8, 16
    %v5552 = vld [vmem:[%s5551] sm:$0xf]
    %v5553 = vld [vmem:[%s5551 + $0x4] sm:$0xf]
    %v5554 = vld [vmem:[%s5551 + $0x8] sm:$0xf]
    %v5555 = vld [vmem:[%s5551 + $0xc] sm:$0xf]
    %s5556 = scalar_lea.vmem %s9, 1
    %v5557 = vld [vmem:[%s5556] sm:$0x1]
    %v5558 = vpack.c.bf16 %v5550, %v5549
    %v5560 = vlaneseq
    %v5561 = vshrl.u32 %v5560, 7
    %v5562 = vsub.s32 0, %v5561
    %v5563 = vrot.slane %v5557, %v5562
    %v5569 = vunpack.c.l.b16 %v5552
    %v5570 = vunpack.c.l.b16 %v5553
    %v5571 = vunpack.c.l.b16 %v5554
    %v5572 = vunpack.c.l.b16 %v5555
    %v5573 = vpack.c.b16 %v5570, %v5569
    %v5574 = vpack.c.b16 %v5572, %v5571
    %v5578 = vsel %vm207, %v5558, 0
    %5580 = vmatprep.subr.bf16.mxu0 0
    %5581 = vmatpush1.bf16.msra.mxu0 0
    %5582 = vmatprep.subr.bf16.mxu0 0
    %5583 = vmatpush1.bf16.msra.mxu0 0
    %5584 = vmatprep.subr.bf16.mxu0 0
    %5585 = vmatpush1.bf16.msra.mxu0 0
    %5586 = vmatprep.subr.bf16.mxu0 0
    %5587 = vmatpush1.bf16.msra.mxu0 0
    %5588 = vmatprep.subr.bf16.mxu0 0
    %5589 = vmatpush1.bf16.msra.mxu0 0
    %5590 = vmatprep.subr.bf16.mxu0 0
    %5591 = vmatpush1.bf16.msra.mxu0 0
    %5592 = vmatprep.subr.bf16.mxu0 0
    %5593 = vmatpush1.bf16.msra.mxu0 %v5574
    %5594 = vmatprep.subr.bf16.mxu0 0
    %5595 = vmatpush1.bf16.msra.mxu0 %v5573
    %5596 = vmatprep.subr.bf16.mxu0 0
    %5597 = vmatpush2.bf16.msra.mxu0 0
    %5598 = vmatprep.subr.bf16.mxu0 0
    %5599 = vmatpush2.bf16.msra.mxu0 0
    %5600 = vmatprep.subr.bf16.mxu0 0
    %5601 = vmatpush2.bf16.msra.mxu0 0
    %5602 = vmatprep.subr.bf16.mxu0 0
    %5603 = vmatpush2.bf16.msra.mxu0 0
    %5604 = vmatprep.subr.bf16.mxu0 0
    %5605 = vmatpush2.bf16.msra.mxu0 0
    %5606 = vmatprep.subr.bf16.mxu0 0
    %5607 = vmatpush2.bf16.msra.mxu0 0
    %5608 = vmatprep.subr.bf16.mxu0 0
    %5609 = vmatpush2.bf16.msra.mxu0 0
    %5610 = vmatprep.subr.bf16.mxu0 0
    %5611 = vmatpush2.bf16.msra.mxu0 0
    %5612 = vmatprep.mubr.bf16.mxu0 0
    %5613 = vmatmul.mubr.bf16.gmra.mxu0 %v5578
    %v5614 = vpop.f32.mrf.mxu0
    %v5615 = vadd.f32 %v5563, %v5614
    %v5616 = vpop.f32.mrf.mxu0
    %v5617 = vpop.f32.mrf.mxu0
    %v5618 = vadd.f32 %v5563, %v5617
    %v5619 = vpop.f32.mrf.mxu0
    %5620 = vdwg.mxu0
    %5622 = vrot.lane.b32.xlu0 %v5615, 96
    %v5623 = vpop.permute.xlu0 %5622
    %v5624 = vsel %vm336, %v5615, 0
    %v5626 = vsel %vm336, %v5623, 0
    %5628 = vmatprep.subr.mxu0 0.0
    %5629 = vmatpush1.xpose.msra.mxu0 0.0
    %5630 = vmatprep.subr.mxu0 0.0
    %5631 = vmatpush1.xpose.msra.mxu0 0.0
    %5632 = vmatprep.subr.mxu0 0.0
    %5633 = vmatpush1.xpose.msra.mxu0 0.0
    %5634 = vmatprep.subr.mxu0 0.0
    %5635 = vmatpush1.xpose.msra.mxu0 0.0
    %5636 = vmatprep.subr.mxu0 0.0
    %5637 = vmatpush1.xpose.msra.mxu0 0.0
    %5638 = vmatprep.subr.mxu0 0.0
    %5639 = vmatpush1.xpose.msra.mxu0 0.0
    %5640 = vmatprep.subr.mxu0 0.0
    %5641 = vmatpush1.xpose.msra.mxu0 0.0
    %5642 = vmatprep.subr.mxu0 0.0
    %5643 = vmatpush1.xpose.msra.mxu0 0.0
    %5644 = vmatprep.subr.mxu0 0.0
    %5645 = vmatpush1.xpose.msra.mxu0 0.0
    %5646 = vmatprep.subr.mxu0 0.0
    %5647 = vmatpush1.xpose.msra.mxu0 0.0
    %5648 = vmatprep.subr.mxu0 0.0
    %5649 = vmatpush1.xpose.msra.mxu0 0.0
    %5650 = vmatprep.subr.mxu0 0.0
    %5651 = vmatpush1.xpose.msra.mxu0 0.0
    %5652 = vmatprep.subr.mxu0 0.0
    %5653 = vmatpush1.xpose.msra.mxu0 0.0
    %5654 = vmatprep.subr.mxu0 0.0
    %5655 = vmatpush1.xpose.msra.mxu0 0.0
    %5656 = vmatprep.subr.mxu0 0.0
    %5657 = vmatpush1.xpose.msra.mxu0 0.0
    %5658 = vmatprep.subr.mxu0 0.0
    %5659 = vmatpush1.xpose.msra.mxu0 %v5626
    %5660 = vmatprep.subr.mxu0 0.0
    %5661 = vmatpush2.xpose.msra.mxu0 0.0
    %5662 = vmatprep.subr.mxu0 0.0
    %5663 = vmatpush2.xpose.msra.mxu0 0.0
    %5664 = vmatprep.subr.mxu0 0.0
    %5665 = vmatpush2.xpose.msra.mxu0 0.0
    %5666 = vmatprep.subr.mxu0 0.0
    %5667 = vmatpush2.xpose.msra.mxu0 0.0
    %5668 = vmatprep.subr.mxu0 0.0
    %5669 = vmatpush2.xpose.msra.mxu0 0.0
    %5670 = vmatprep.subr.mxu0 0.0
    %5671 = vmatpush2.xpose.msra.mxu0 0.0
    %5672 = vmatprep.subr.mxu0 0.0
    %5673 = vmatpush2.xpose.msra.mxu0 0.0
    %5674 = vmatprep.subr.mxu0 0.0
    %5675 = vmatpush2.xpose.msra.mxu0 0.0
    %5676 = vmatprep.subr.mxu0 0.0
    %5677 = vmatpush2.xpose.msra.mxu0 0.0
    %5678 = vmatprep.subr.mxu0 0.0
    %5679 = vmatpush2.xpose.msra.mxu0 0.0
    %5680 = vmatprep.subr.mxu0 0.0
    %5681 = vmatpush2.xpose.msra.mxu0 0.0
    %5682 = vmatprep.subr.mxu0 0.0
    %5683 = vmatpush2.xpose.msra.mxu0 0.0
    %5684 = vmatprep.subr.mxu0 0.0
    %5685 = vmatpush2.xpose.msra.mxu0 0.0
    %5686 = vmatprep.subr.mxu0 0.0
    %5687 = vmatpush2.xpose.msra.mxu0 0.0
    %5688 = vmatprep.subr.mxu0 0.0
    %5689 = vmatpush2.xpose.msra.mxu0 0.0
    %5690 = vmatprep.subr.mxu0 0.0
    %5691 = vmatpush2.xpose.msra.mxu0 0.0
    %5692 = vmatprep.mubr.f32.mxu0 0.0
    %5693 = vmatmul.mubr.f32.gmra.mxu0 %v5624
    %v5694 = vpop.f32.mrf.mxu0
    %v5695 = vadd.f32 0.0, %v5694
    %v5696 = vpop.f32.mrf.mxu0
    %5697 = vdwg.mxu0
    %5699 = vrot.lane.b32.xlu0 %v5618, 96
    %v5700 = vpop.permute.xlu0 %5699
    %v5701 = vsel %vm336, %v5618, 0
    %v5703 = vsel %vm336, %v5700, 0
    %5705 = vmatprep.subr.mxu0 0.0
    %5706 = vmatpush1.xpose.msra.mxu0 0.0
    %5707 = vmatprep.subr.mxu0 0.0
    %5708 = vmatpush1.xpose.msra.mxu0 0.0
    %5709 = vmatprep.subr.mxu0 0.0
    %5710 = vmatpush1.xpose.msra.mxu0 0.0
    %5711 = vmatprep.subr.mxu0 0.0
    %5712 = vmatpush1.xpose.msra.mxu0 0.0
    %5713 = vmatprep.subr.mxu0 0.0
    %5714 = vmatpush1.xpose.msra.mxu0 0.0
    %5715 = vmatprep.subr.mxu0 0.0
    %5716 = vmatpush1.xpose.msra.mxu0 0.0
    %5717 = vmatprep.subr.mxu0 0.0
    %5718 = vmatpush1.xpose.msra.mxu0 0.0
    %5719 = vmatprep.subr.mxu0 0.0
    %5720 = vmatpush1.xpose.msra.mxu0 0.0
    %5721 = vmatprep.subr.mxu0 0.0
    %5722 = vmatpush1.xpose.msra.mxu0 0.0
    %5723 = vmatprep.subr.mxu0 0.0
    %5724 = vmatpush1.xpose.msra.mxu0 0.0
    %5725 = vmatprep.subr.mxu0 0.0
    %5726 = vmatpush1.xpose.msra.mxu0 0.0
    %5727 = vmatprep.subr.mxu0 0.0
    %5728 = vmatpush1.xpose.msra.mxu0 0.0
    %5729 = vmatprep.subr.mxu0 0.0
    %5730 = vmatpush1.xpose.msra.mxu0 0.0
    %5731 = vmatprep.subr.mxu0 0.0
    %5732 = vmatpush1.xpose.msra.mxu0 0.0
    %5733 = vmatprep.subr.mxu0 0.0
    %5734 = vmatpush1.xpose.msra.mxu0 0.0
    %5735 = vmatprep.subr.mxu0 0.0
    %5736 = vmatpush1.xpose.msra.mxu0 %v5703
    %5737 = vmatprep.subr.mxu0 0.0
    %5738 = vmatpush2.xpose.msra.mxu0 0.0
    %5739 = vmatprep.subr.mxu0 0.0
    %5740 = vmatpush2.xpose.msra.mxu0 0.0
    %5741 = vmatprep.subr.mxu0 0.0
    %5742 = vmatpush2.xpose.msra.mxu0 0.0
    %5743 = vmatprep.subr.mxu0 0.0
    %5744 = vmatpush2.xpose.msra.mxu0 0.0
    %5745 = vmatprep.subr.mxu0 0.0
    %5746 = vmatpush2.xpose.msra.mxu0 0.0
    %5747 = vmatprep.subr.mxu0 0.0
    %5748 = vmatpush2.xpose.msra.mxu0 0.0
    %5749 = vmatprep.subr.mxu0 0.0
    %5750 = vmatpush2.xpose.msra.mxu0 0.0
    %5751 = vmatprep.subr.mxu0 0.0
    %5752 = vmatpush2.xpose.msra.mxu0 0.0
    %5753 = vmatprep.subr.mxu0 0.0
    %5754 = vmatpush2.xpose.msra.mxu0 0.0
    %5755 = vmatprep.subr.mxu0 0.0
    %5756 = vmatpush2.xpose.msra.mxu0 0.0
    %5757 = vmatprep.subr.mxu0 0.0
    %5758 = vmatpush2.xpose.msra.mxu0 0.0
    %5759 = vmatprep.subr.mxu0 0.0
    %5760 = vmatpush2.xpose.msra.mxu0 0.0
    %5761 = vmatprep.subr.mxu0 0.0
    %5762 = vmatpush2.xpose.msra.mxu0 0.0
    %5763 = vmatprep.subr.mxu0 0.0
    %5764 = vmatpush2.xpose.msra.mxu0 0.0
    %5765 = vmatprep.subr.mxu0 0.0
    %5766 = vmatpush2.xpose.msra.mxu0 0.0
    %5767 = vmatprep.subr.mxu0 0.0
    %5768 = vmatpush2.xpose.msra.mxu0 0.0
    %5769 = vmatprep.mubr.f32.mxu0 0.0
    %5770 = vmatmul.mubr.f32.gmra.mxu0 %v5701
    %v5771 = vpop.f32.mrf.mxu0
    %v5772 = vadd.f32 0.0, %v5771
    %v5773 = vpop.f32.mrf.mxu0
    %5774 = vdwg.mxu0
    %v5775 = vmul.f32 %v5695, 0.35355338
    %v5776 = vmul.f32 %v5772, 0.35355338
    %v5777 = vsel %vm490, -1e+09, %v5775
    %v5778 = vsel %vm491, -1e+09, %v5776
    %v5779 = vsel %vm336, %v5777, -inf
    %5780 = vmax.xlane.f32.xlu0 %v5779
    %v5781 = vpop.xlane.xlu0 %5780
    %v5782 = vsel %vm336, %v5778, -inf
    %5783 = vmax.xlane.f32.xlu0 %v5782
    %v5784 = vpop.xlane.xlu0 %5783
    %v5785 = vsub.f32 %v5777, %v5781
    %v5786 = vsub.f32 %v5778, %v5784
    %v5787 = vmul.f32 %v5785, 1.442695
    %v5788 = vpow.pop %v5787
    %v5789 = vmul.f32 %v5786, 1.442695
    %v5790 = vpow.pop %v5789
    %v5791 = vsel %vm336, %v5788, 0.0
    %5792 = vadd.xlane.f32.xlu0 %v5791
    %v5793 = vpop.xlane.xlu0 %5792
    %v5794 = vsel %vm336, %v5790, 0.0
    %5795 = vadd.xlane.f32.xlu0 %v5794
    %v5796 = vpop.xlane.xlu0 %5795
    %v5797 = vrcp.pop %v5793
    %v5798 = vrcp.pop %v5796
    %v5799 = vmul.f32 %v5788, %v5797
    %v5800 = vmul.f32 %v5790, %v5798
    %5801 = vrot.lane.b32.xlu0 %v5615, 64
    %v5802 = vpop.permute.xlu0 %5801
    %v5805 = vsel %vm336, %v5799, 0
    %5807 = vmatprep.subr.mxu0 0.0
    %5808 = vmatpush1.msra.mxu0 0.0
    %5809 = vmatprep.subr.mxu0 0.0
    %5810 = vmatpush1.msra.mxu0 0.0
    %5811 = vmatprep.subr.mxu0 0.0
    %5812 = vmatpush1.msra.mxu0 0.0
    %5813 = vmatprep.subr.mxu0 0.0
    %5814 = vmatpush1.msra.mxu0 0.0
    %5815 = vmatprep.subr.mxu0 0.0
    %5816 = vmatpush1.msra.mxu0 0.0
    %5817 = vmatprep.subr.mxu0 0.0
    %5818 = vmatpush1.msra.mxu0 0.0
    %5819 = vmatprep.subr.mxu0 0.0
    %5820 = vmatpush1.msra.mxu0 0.0
    %5821 = vmatprep.subr.mxu0 0.0
    %5822 = vmatpush1.msra.mxu0 0.0
    %5823 = vmatprep.subr.mxu0 0.0
    %5824 = vmatpush1.msra.mxu0 0.0
    %5825 = vmatprep.subr.mxu0 0.0
    %5826 = vmatpush1.msra.mxu0 0.0
    %5827 = vmatprep.subr.mxu0 0.0
    %5828 = vmatpush1.msra.mxu0 0.0
    %5829 = vmatprep.subr.mxu0 0.0
    %5830 = vmatpush1.msra.mxu0 0.0
    %5831 = vmatprep.subr.mxu0 0.0
    %5832 = vmatpush1.msra.mxu0 0.0
    %5833 = vmatprep.subr.mxu0 0.0
    %5834 = vmatpush1.msra.mxu0 0.0
    %5835 = vmatprep.subr.mxu0 0.0
    %5836 = vmatpush1.msra.mxu0 0.0
    %5837 = vmatprep.subr.mxu0 0.0
    %5838 = vmatpush1.msra.mxu0 %v5802
    %5839 = vmatprep.subr.mxu0 0.0
    %5840 = vmatpush2.msra.mxu0 0.0
    %5841 = vmatprep.subr.mxu0 0.0
    %5842 = vmatpush2.msra.mxu0 0.0
    %5843 = vmatprep.subr.mxu0 0.0
    %5844 = vmatpush2.msra.mxu0 0.0
    %5845 = vmatprep.subr.mxu0 0.0
    %5846 = vmatpush2.msra.mxu0 0.0
    %5847 = vmatprep.subr.mxu0 0.0
    %5848 = vmatpush2.msra.mxu0 0.0
    %5849 = vmatprep.subr.mxu0 0.0
    %5850 = vmatpush2.msra.mxu0 0.0
    %5851 = vmatprep.subr.mxu0 0.0
    %5852 = vmatpush2.msra.mxu0 0.0
    %5853 = vmatprep.subr.mxu0 0.0
    %5854 = vmatpush2.msra.mxu0 0.0
    %5855 = vmatprep.subr.mxu0 0.0
    %5856 = vmatpush2.msra.mxu0 0.0
    %5857 = vmatprep.subr.mxu0 0.0
    %5858 = vmatpush2.msra.mxu0 0.0
    %5859 = vmatprep.subr.mxu0 0.0
    %5860 = vmatpush2.msra.mxu0 0.0
    %5861 = vmatprep.subr.mxu0 0.0
    %5862 = vmatpush2.msra.mxu0 0.0
    %5863 = vmatprep.subr.mxu0 0.0
    %5864 = vmatpush2.msra.mxu0 0.0
    %5865 = vmatprep.subr.mxu0 0.0
    %5866 = vmatpush2.msra.mxu0 0.0
    %5867 = vmatprep.subr.mxu0 0.0
    %5868 = vmatpush2.msra.mxu0 0.0
    %5869 = vmatprep.subr.mxu0 0.0
    %5870 = vmatpush2.msra.mxu0 0.0
    %5871 = vmatprep.mubr.f32.mxu0 0.0
    %5872 = vmatmul.mubr.f32.gmra.mxu0 %v5805
    %v5873 = vpop.f32.mrf.mxu0
    %v5874 = vadd.f32 0.0, %v5873
    %v5875 = vpop.f32.mrf.mxu0
    %5876 = vdwg.mxu0
    %5877 = vrot.lane.b32.xlu0 %v5618, 64
    %v5878 = vpop.permute.xlu0 %5877
    %v5881 = vsel %vm336, %v5800, 0
    %5883 = vmatprep.subr.mxu0 0.0
    %5884 = vmatpush1.msra.mxu0 0.0
    %5885 = vmatprep.subr.mxu0 0.0
    %5886 = vmatpush1.msra.mxu0 0.0
    %5887 = vmatprep.subr.mxu0 0.0
    %5888 = vmatpush1.msra.mxu0 0.0
    %5889 = vmatprep.subr.mxu0 0.0
    %5890 = vmatpush1.msra.mxu0 0.0
    %5891 = vmatprep.subr.mxu0 0.0
    %5892 = vmatpush1.msra.mxu0 0.0
    %5893 = vmatprep.subr.mxu0 0.0
    %5894 = vmatpush1.msra.mxu0 0.0
    %5895 = vmatprep.subr.mxu0 0.0
    %5896 = vmatpush1.msra.mxu0 0.0
    %5897 = vmatprep.subr.mxu0 0.0
    %5898 = vmatpush1.msra.mxu0 0.0
    %5899 = vmatprep.subr.mxu0 0.0
    %5900 = vmatpush1.msra.mxu0 0.0
    %5901 = vmatprep.subr.mxu0 0.0
    %5902 = vmatpush1.msra.mxu0 0.0
    %5903 = vmatprep.subr.mxu0 0.0
    %5904 = vmatpush1.msra.mxu0 0.0
    %5905 = vmatprep.subr.mxu0 0.0
    %5906 = vmatpush1.msra.mxu0 0.0
    %5907 = vmatprep.subr.mxu0 0.0
    %5908 = vmatpush1.msra.mxu0 0.0
    %5909 = vmatprep.subr.mxu0 0.0
    %5910 = vmatpush1.msra.mxu0 0.0
    %5911 = vmatprep.subr.mxu0 0.0
    %5912 = vmatpush1.msra.mxu0 0.0
    %5913 = vmatprep.subr.mxu0 0.0
    %5914 = vmatpush1.msra.mxu0 %v5878
    %5915 = vmatprep.subr.mxu0 0.0
    %5916 = vmatpush2.msra.mxu0 0.0
    %5917 = vmatprep.subr.mxu0 0.0
    %5918 = vmatpush2.msra.mxu0 0.0
    %5919 = vmatprep.subr.mxu0 0.0
    %5920 = vmatpush2.msra.mxu0 0.0
    %5921 = vmatprep.subr.mxu0 0.0
    %5922 = vmatpush2.msra.mxu0 0.0
    %5923 = vmatprep.subr.mxu0 0.0
    %5924 = vmatpush2.msra.mxu0 0.0
    %5925 = vmatprep.subr.mxu0 0.0
    %5926 = vmatpush2.msra.mxu0 0.0
    %5927 = vmatprep.subr.mxu0 0.0
    %5928 = vmatpush2.msra.mxu0 0.0
    %5929 = vmatprep.subr.mxu0 0.0
    %5930 = vmatpush2.msra.mxu0 0.0
    %5931 = vmatprep.subr.mxu0 0.0
    %5932 = vmatpush2.msra.mxu0 0.0
    %5933 = vmatprep.subr.mxu0 0.0
    %5934 = vmatpush2.msra.mxu0 0.0
    %5935 = vmatprep.subr.mxu0 0.0
    %5936 = vmatpush2.msra.mxu0 0.0
    %5937 = vmatprep.subr.mxu0 0.0
    %5938 = vmatpush2.msra.mxu0 0.0
    %5939 = vmatprep.subr.mxu0 0.0
    %5940 = vmatpush2.msra.mxu0 0.0
    %5941 = vmatprep.subr.mxu0 0.0
    %5942 = vmatpush2.msra.mxu0 0.0
    %5943 = vmatprep.subr.mxu0 0.0
    %5944 = vmatpush2.msra.mxu0 0.0
    %5945 = vmatprep.subr.mxu0 0.0
    %5946 = vmatpush2.msra.mxu0 0.0
    %5947 = vmatprep.mubr.f32.mxu0 0.0
    %5948 = vmatmul.mubr.f32.gmra.mxu0 %v5881
    %v5949 = vpop.f32.mrf.mxu0
    %v5950 = vadd.f32 0.0, %v5949
    %v5951 = vpop.f32.mrf.mxu0
    %5952 = vdwg.mxu0
    %5953 = vrot.lane.b32.xlu0 %v5615, 120
    %v5954 = vpop.permute.xlu0 %5953
    %5955 = vrot.lane.b32.xlu0 %v5615, 88
    %v5956 = vpop.permute.xlu0 %5955
    %v5957 = vsel %vm336, %v5954, 0
    %v5959 = vsel %vm336, %v5956, 0
    %5961 = vmatprep.subr.mxu0 0.0
    %5962 = vmatpush1.xpose.msra.mxu0 0.0
    %5963 = vmatprep.subr.mxu0 0.0
    %5964 = vmatpush1.xpose.msra.mxu0 0.0
    %5965 = vmatprep.subr.mxu0 0.0
    %5966 = vmatpush1.xpose.msra.mxu0 0.0
    %5967 = vmatprep.subr.mxu0 0.0
    %5968 = vmatpush1.xpose.msra.mxu0 0.0
    %5969 = vmatprep.subr.mxu0 0.0
    %5970 = vmatpush1.xpose.msra.mxu0 0.0
    %5971 = vmatprep.subr.mxu0 0.0
    %5972 = vmatpush1.xpose.msra.mxu0 0.0
    %5973 = vmatprep.subr.mxu0 0.0
    %5974 = vmatpush1.xpose.msra.mxu0 0.0
    %5975 = vmatprep.subr.mxu0 0.0
    %5976 = vmatpush1.xpose.msra.mxu0 0.0
    %5977 = vmatprep.subr.mxu0 0.0
    %5978 = vmatpush1.xpose.msra.mxu0 0.0
    %5979 = vmatprep.subr.mxu0 0.0
    %5980 = vmatpush1.xpose.msra.mxu0 0.0
    %5981 = vmatprep.subr.mxu0 0.0
    %5982 = vmatpush1.xpose.msra.mxu0 0.0
    %5983 = vmatprep.subr.mxu0 0.0
    %5984 = vmatpush1.xpose.msra.mxu0 0.0
    %5985 = vmatprep.subr.mxu0 0.0
    %5986 = vmatpush1.xpose.msra.mxu0 0.0
    %5987 = vmatprep.subr.mxu0 0.0
    %5988 = vmatpush1.xpose.msra.mxu0 0.0
    %5989 = vmatprep.subr.mxu0 0.0
    %5990 = vmatpush1.xpose.msra.mxu0 0.0
    %5991 = vmatprep.subr.mxu0 0.0
    %5992 = vmatpush1.xpose.msra.mxu0 %v5959
    %5993 = vmatprep.subr.mxu0 0.0
    %5994 = vmatpush2.xpose.msra.mxu0 0.0
    %5995 = vmatprep.subr.mxu0 0.0
    %5996 = vmatpush2.xpose.msra.mxu0 0.0
    %5997 = vmatprep.subr.mxu0 0.0
    %5998 = vmatpush2.xpose.msra.mxu0 0.0
    %5999 = vmatprep.subr.mxu0 0.0
    %6000 = vmatpush2.xpose.msra.mxu0 0.0
    %6001 = vmatprep.subr.mxu0 0.0
    %6002 = vmatpush2.xpose.msra.mxu0 0.0
    %6003 = vmatprep.subr.mxu0 0.0
    %6004 = vmatpush2.xpose.msra.mxu0 0.0
    %6005 = vmatprep.subr.mxu0 0.0
    %6006 = vmatpush2.xpose.msra.mxu0 0.0
    %6007 = vmatprep.subr.mxu0 0.0
    %6008 = vmatpush2.xpose.msra.mxu0 0.0
    %6009 = vmatprep.subr.mxu0 0.0
    %6010 = vmatpush2.xpose.msra.mxu0 0.0
    %6011 = vmatprep.subr.mxu0 0.0
    %6012 = vmatpush2.xpose.msra.mxu0 0.0
    %6013 = vmatprep.subr.mxu0 0.0
    %6014 = vmatpush2.xpose.msra.mxu0 0.0
    %6015 = vmatprep.subr.mxu0 0.0
    %6016 = vmatpush2.xpose.msra.mxu0 0.0
    %6017 = vmatprep.subr.mxu0 0.0
    %6018 = vmatpush2.xpose.msra.mxu0 0.0
    %6019 = vmatprep.subr.mxu0 0.0
    %6020 = vmatpush2.xpose.msra.mxu0 0.0
    %6021 = vmatprep.subr.mxu0 0.0
    %6022 = vmatpush2.xpose.msra.mxu0 0.0
    %6023 = vmatprep.subr.mxu0 0.0
    %6024 = vmatpush2.xpose.msra.mxu0 0.0
    %6025 = vmatprep.mubr.f32.mxu0 0.0
    %6026 = vmatmul.mubr.f32.gmra.mxu0 %v5957
    %v6027 = vpop.f32.mrf.mxu0
    %v6028 = vadd.f32 0.0, %v6027
    %v6029 = vpop.f32.mrf.mxu0
    %6030 = vdwg.mxu0
    %6031 = vrot.lane.b32.xlu0 %v5618, 120
    %v6032 = vpop.permute.xlu0 %6031
    %6033 = vrot.lane.b32.xlu0 %v5618, 88
    %v6034 = vpop.permute.xlu0 %6033
    %v6035 = vsel %vm336, %v6032, 0
    %v6037 = vsel %vm336, %v6034, 0
    %6039 = vmatprep.subr.mxu0 0.0
    %6040 = vmatpush1.xpose.msra.mxu0 0.0
    %6041 = vmatprep.subr.mxu0 0.0
    %6042 = vmatpush1.xpose.msra.mxu0 0.0
    %6043 = vmatprep.subr.mxu0 0.0
    %6044 = vmatpush1.xpose.msra.mxu0 0.0
    %6045 = vmatprep.subr.mxu0 0.0
    %6046 = vmatpush1.xpose.msra.mxu0 0.0
    %6047 = vmatprep.subr.mxu0 0.0
    %6048 = vmatpush1.xpose.msra.mxu0 0.0
    %6049 = vmatprep.subr.mxu0 0.0
    %6050 = vmatpush1.xpose.msra.mxu0 0.0
    %6051 = vmatprep.subr.mxu0 0.0
    %6052 = vmatpush1.xpose.msra.mxu0 0.0
    %6053 = vmatprep.subr.mxu0 0.0
    %6054 = vmatpush1.xpose.msra.mxu0 0.0
    %6055 = vmatprep.subr.mxu0 0.0
    %6056 = vmatpush1.xpose.msra.mxu0 0.0
    %6057 = vmatprep.subr.mxu0 0.0
    %6058 = vmatpush1.xpose.msra.mxu0 0.0
    %6059 = vmatprep.subr.mxu0 0.0
    %6060 = vmatpush1.xpose.msra.mxu0 0.0
    %6061 = vmatprep.subr.mxu0 0.0
    %6062 = vmatpush1.xpose.msra.mxu0 0.0
    %6063 = vmatprep.subr.mxu0 0.0
    %6064 = vmatpush1.xpose.msra.mxu0 0.0
    %6065 = vmatprep.subr.mxu0 0.0
    %6066 = vmatpush1.xpose.msra.mxu0 0.0
    %6067 = vmatprep.subr.mxu0 0.0
    %6068 = vmatpush1.xpose.msra.mxu0 0.0
    %6069 = vmatprep.subr.mxu0 0.0
    %6070 = vmatpush1.xpose.msra.mxu0 %v6037
    %6071 = vmatprep.subr.mxu0 0.0
    %6072 = vmatpush2.xpose.msra.mxu0 0.0
    %6073 = vmatprep.subr.mxu0 0.0
    %6074 = vmatpush2.xpose.msra.mxu0 0.0
    %6075 = vmatprep.subr.mxu0 0.0
    %6076 = vmatpush2.xpose.msra.mxu0 0.0
    %6077 = vmatprep.subr.mxu0 0.0
    %6078 = vmatpush2.xpose.msra.mxu0 0.0
    %6079 = vmatprep.subr.mxu0 0.0
    %6080 = vmatpush2.xpose.msra.mxu0 0.0
    %6081 = vmatprep.subr.mxu0 0.0
    %6082 = vmatpush2.xpose.msra.mxu0 0.0
    %6083 = vmatprep.subr.mxu0 0.0
    %6084 = vmatpush2.xpose.msra.mxu0 0.0
    %6085 = vmatprep.subr.mxu0 0.0
    %6086 = vmatpush2.xpose.msra.mxu0 0.0
    %6087 = vmatprep.subr.mxu0 0.0
    %6088 = vmatpush2.xpose.msra.mxu0 0.0
    %6089 = vmatprep.subr.mxu0 0.0
    %6090 = vmatpush2.xpose.msra.mxu0 0.0
    %6091 = vmatprep.subr.mxu0 0.0
    %6092 = vmatpush2.xpose.msra.mxu0 0.0
    %6093 = vmatprep.subr.mxu0 0.0
    %6094 = vmatpush2.xpose.msra.mxu0 0.0
    %6095 = vmatprep.subr.mxu0 0.0
    %6096 = vmatpush2.xpose.msra.mxu0 0.0
    %6097 = vmatprep.subr.mxu0 0.0
    %6098 = vmatpush2.xpose.msra.mxu0 0.0
    %6099 = vmatprep.subr.mxu0 0.0
    %6100 = vmatpush2.xpose.msra.mxu0 0.0
    %6101 = vmatprep.subr.mxu0 0.0
    %6102 = vmatpush2.xpose.msra.mxu0 0.0
    %6103 = vmatprep.mubr.f32.mxu0 0.0
    %6104 = vmatmul.mubr.f32.gmra.mxu0 %v6035
    %v6105 = vpop.f32.mrf.mxu0
    %v6106 = vadd.f32 0.0, %v6105
    %v6107 = vpop.f32.mrf.mxu0
    %6108 = vdwg.mxu0
    %v6109 = vmul.f32 %v6028, 0.35355338
    %v6110 = vmul.f32 %v6106, 0.35355338
    %v6111 = vsel %vm490, -1e+09, %v6109
    %v6112 = vsel %vm491, -1e+09, %v6110
    %v6113 = vsel %vm336, %v6111, -inf
    %6114 = vmax.xlane.f32.xlu0 %v6113
    %v6115 = vpop.xlane.xlu0 %6114
    %v6116 = vsel %vm336, %v6112, -inf
    %6117 = vmax.xlane.f32.xlu0 %v6116
    %v6118 = vpop.xlane.xlu0 %6117
    %v6119 = vsub.f32 %v6111, %v6115
    %v6120 = vsub.f32 %v6112, %v6118
    %v6121 = vmul.f32 %v6119, 1.442695
    %v6122 = vpow.pop %v6121
    %v6123 = vmul.f32 %v6120, 1.442695
    %v6124 = vpow.pop %v6123
    %v6125 = vsel %vm336, %v6122, 0.0
    %6126 = vadd.xlane.f32.xlu0 %v6125
    %v6127 = vpop.xlane.xlu0 %6126
    %v6128 = vsel %vm336, %v6124, 0.0
    %6129 = vadd.xlane.f32.xlu0 %v6128
    %v6130 = vpop.xlane.xlu0 %6129
    %v6131 = vrcp.pop %v6127
    %v6132 = vrcp.pop %v6130
    %v6133 = vmul.f32 %v6122, %v6131
    %v6134 = vmul.f32 %v6124, %v6132
    %6135 = vrot.lane.b32.xlu0 %v5615, 56
    %v6136 = vpop.permute.xlu0 %6135
    %v6139 = vsel %vm336, %v6133, 0
    %6141 = vmatprep.subr.mxu0 0.0
    %6142 = vmatpush1.msra.mxu0 0.0
    %6143 = vmatprep.subr.mxu0 0.0
    %6144 = vmatpush1.msra.mxu0 0.0
    %6145 = vmatprep.subr.mxu0 0.0
    %6146 = vmatpush1.msra.mxu0 0.0
    %6147 = vmatprep.subr.mxu0 0.0
    %6148 = vmatpush1.msra.mxu0 0.0
    %6149 = vmatprep.subr.mxu0 0.0
    %6150 = vmatpush1.msra.mxu0 0.0
    %6151 = vmatprep.subr.mxu0 0.0
    %6152 = vmatpush1.msra.mxu0 0.0
    %6153 = vmatprep.subr.mxu0 0.0
    %6154 = vmatpush1.msra.mxu0 0.0
    %6155 = vmatprep.subr.mxu0 0.0
    %6156 = vmatpush1.msra.mxu0 0.0
    %6157 = vmatprep.subr.mxu0 0.0
    %6158 = vmatpush1.msra.mxu0 0.0
    %6159 = vmatprep.subr.mxu0 0.0
    %6160 = vmatpush1.msra.mxu0 0.0
    %6161 = vmatprep.subr.mxu0 0.0
    %6162 = vmatpush1.msra.mxu0 0.0
    %6163 = vmatprep.subr.mxu0 0.0
    %6164 = vmatpush1.msra.mxu0 0.0
    %6165 = vmatprep.subr.mxu0 0.0
    %6166 = vmatpush1.msra.mxu0 0.0
    %6167 = vmatprep.subr.mxu0 0.0
    %6168 = vmatpush1.msra.mxu0 0.0
    %6169 = vmatprep.subr.mxu0 0.0
    %6170 = vmatpush1.msra.mxu0 0.0
    %6171 = vmatprep.subr.mxu0 0.0
    %6172 = vmatpush1.msra.mxu0 %v6136
    %6173 = vmatprep.subr.mxu0 0.0
    %6174 = vmatpush2.msra.mxu0 0.0
    %6175 = vmatprep.subr.mxu0 0.0
    %6176 = vmatpush2.msra.mxu0 0.0
    %6177 = vmatprep.subr.mxu0 0.0
    %6178 = vmatpush2.msra.mxu0 0.0
    %6179 = vmatprep.subr.mxu0 0.0
    %6180 = vmatpush2.msra.mxu0 0.0
    %6181 = vmatprep.subr.mxu0 0.0
    %6182 = vmatpush2.msra.mxu0 0.0
    %6183 = vmatprep.subr.mxu0 0.0
    %6184 = vmatpush2.msra.mxu0 0.0
    %6185 = vmatprep.subr.mxu0 0.0
    %6186 = vmatpush2.msra.mxu0 0.0
    %6187 = vmatprep.subr.mxu0 0.0
    %6188 = vmatpush2.msra.mxu0 0.0
    %6189 = vmatprep.subr.mxu0 0.0
    %6190 = vmatpush2.msra.mxu0 0.0
    %6191 = vmatprep.subr.mxu0 0.0
    %6192 = vmatpush2.msra.mxu0 0.0
    %6193 = vmatprep.subr.mxu0 0.0
    %6194 = vmatpush2.msra.mxu0 0.0
    %6195 = vmatprep.subr.mxu0 0.0
    %6196 = vmatpush2.msra.mxu0 0.0
    %6197 = vmatprep.subr.mxu0 0.0
    %6198 = vmatpush2.msra.mxu0 0.0
    %6199 = vmatprep.subr.mxu0 0.0
    %6200 = vmatpush2.msra.mxu0 0.0
    %6201 = vmatprep.subr.mxu0 0.0
    %6202 = vmatpush2.msra.mxu0 0.0
    %6203 = vmatprep.subr.mxu0 0.0
    %6204 = vmatpush2.msra.mxu0 0.0
    %6205 = vmatprep.mubr.f32.mxu0 0.0
    %6206 = vmatmul.mubr.f32.gmra.mxu0 %v6139
    %v6207 = vpop.f32.mrf.mxu0
    %v6208 = vadd.f32 0.0, %v6207
    %v6209 = vpop.f32.mrf.mxu0
    %6210 = vdwg.mxu0
    %6211 = vrot.lane.b32.xlu0 %v5618, 56
    %v6212 = vpop.permute.xlu0 %6211
    %v6215 = vsel %vm336, %v6134, 0
    %6217 = vmatprep.subr.mxu0 0.0
    %6218 = vmatpush1.msra.mxu0 0.0
    %6219 = vmatprep.subr.mxu0 0.0
    %6220 = vmatpush1.msra.mxu0 0.0
    %6221 = vmatprep.subr.mxu0 0.0
    %6222 = vmatpush1.msra.mxu0 0.0
    %6223 = vmatprep.subr.mxu0 0.0
    %6224 = vmatpush1.msra.mxu0 0.0
    %6225 = vmatprep.subr.mxu0 0.0
    %6226 = vmatpush1.msra.mxu0 0.0
    %6227 = vmatprep.subr.mxu0 0.0
    %6228 = vmatpush1.msra.mxu0 0.0
    %6229 = vmatprep.subr.mxu0 0.0
    %6230 = vmatpush1.msra.mxu0 0.0
    %6231 = vmatprep.subr.mxu0 0.0
    %6232 = vmatpush1.msra.mxu0 0.0
    %6233 = vmatprep.subr.mxu0 0.0
    %6234 = vmatpush1.msra.mxu0 0.0
    %6235 = vmatprep.subr.mxu0 0.0
    %6236 = vmatpush1.msra.mxu0 0.0
    %6237 = vmatprep.subr.mxu0 0.0
    %6238 = vmatpush1.msra.mxu0 0.0
    %6239 = vmatprep.subr.mxu0 0.0
    %6240 = vmatpush1.msra.mxu0 0.0
    %6241 = vmatprep.subr.mxu0 0.0
    %6242 = vmatpush1.msra.mxu0 0.0
    %6243 = vmatprep.subr.mxu0 0.0
    %6244 = vmatpush1.msra.mxu0 0.0
    %6245 = vmatprep.subr.mxu0 0.0
    %6246 = vmatpush1.msra.mxu0 0.0
    %6247 = vmatprep.subr.mxu0 0.0
    %6248 = vmatpush1.msra.mxu0 %v6212
    %6249 = vmatprep.subr.mxu0 0.0
    %6250 = vmatpush2.msra.mxu0 0.0
    %6251 = vmatprep.subr.mxu0 0.0
    %6252 = vmatpush2.msra.mxu0 0.0
    %6253 = vmatprep.subr.mxu0 0.0
    %6254 = vmatpush2.msra.mxu0 0.0
    %6255 = vmatprep.subr.mxu0 0.0
    %6256 = vmatpush2.msra.mxu0 0.0
    %6257 = vmatprep.subr.mxu0 0.0
    %6258 = vmatpush2.msra.mxu0 0.0
    %6259 = vmatprep.subr.mxu0 0.0
    %6260 = vmatpush2.msra.mxu0 0.0
    %6261 = vmatprep.subr.mxu0 0.0
    %6262 = vmatpush2.msra.mxu0 0.0
    %6263 = vmatprep.subr.mxu0 0.0
    %6264 = vmatpush2.msra.mxu0 0.0
    %6265 = vmatprep.subr.mxu0 0.0
    %6266 = vmatpush2.msra.mxu0 0.0
    %6267 = vmatprep.subr.mxu0 0.0
    %6268 = vmatpush2.msra.mxu0 0.0
    %6269 = vmatprep.subr.mxu0 0.0
    %6270 = vmatpush2.msra.mxu0 0.0
    %6271 = vmatprep.subr.mxu0 0.0
    %6272 = vmatpush2.msra.mxu0 0.0
    %6273 = vmatprep.subr.mxu0 0.0
    %6274 = vmatpush2.msra.mxu0 0.0
    %6275 = vmatprep.subr.mxu0 0.0
    %6276 = vmatpush2.msra.mxu0 0.0
    %6277 = vmatprep.subr.mxu0 0.0
    %6278 = vmatpush2.msra.mxu0 0.0
    %6279 = vmatprep.subr.mxu0 0.0
    %6280 = vmatpush2.msra.mxu0 0.0
    %6281 = vmatprep.mubr.f32.mxu0 0.0
    %6282 = vmatmul.mubr.f32.gmra.mxu0 %v6215
    %v6283 = vpop.f32.mrf.mxu0
    %v6284 = vadd.f32 0.0, %v6283
    %v6285 = vpop.f32.mrf.mxu0
    %6286 = vdwg.mxu0
    %6287 = vrot.lane.b32.xlu0 %v5615, 112
    %v6288 = vpop.permute.xlu0 %6287
    %6289 = vrot.lane.b32.xlu0 %v5615, 80
    %v6290 = vpop.permute.xlu0 %6289
    %v6291 = vsel %vm336, %v6288, 0
    %v6293 = vsel %vm336, %v6290, 0
    %6295 = vmatprep.subr.mxu0 0.0
    %6296 = vmatpush1.xpose.msra.mxu0 0.0
    %6297 = vmatprep.subr.mxu0 0.0
    %6298 = vmatpush1.xpose.msra.mxu0 0.0
    %6299 = vmatprep.subr.mxu0 0.0
    %6300 = vmatpush1.xpose.msra.mxu0 0.0
    %6301 = vmatprep.subr.mxu0 0.0
    %6302 = vmatpush1.xpose.msra.mxu0 0.0
    %6303 = vmatprep.subr.mxu0 0.0
    %6304 = vmatpush1.xpose.msra.mxu0 0.0
    %6305 = vmatprep.subr.mxu0 0.0
    %6306 = vmatpush1.xpose.msra.mxu0 0.0
    %6307 = vmatprep.subr.mxu0 0.0
    %6308 = vmatpush1.xpose.msra.mxu0 0.0
    %6309 = vmatprep.subr.mxu0 0.0
    %6310 = vmatpush1.xpose.msra.mxu0 0.0
    %6311 = vmatprep.subr.mxu0 0.0
    %6312 = vmatpush1.xpose.msra.mxu0 0.0
    %6313 = vmatprep.subr.mxu0 0.0
    %6314 = vmatpush1.xpose.msra.mxu0 0.0
    %6315 = vmatprep.subr.mxu0 0.0
    %6316 = vmatpush1.xpose.msra.mxu0 0.0
    %6317 = vmatprep.subr.mxu0 0.0
    %6318 = vmatpush1.xpose.msra.mxu0 0.0
    %6319 = vmatprep.subr.mxu0 0.0
    %6320 = vmatpush1.xpose.msra.mxu0 0.0
    %6321 = vmatprep.subr.mxu0 0.0
    %6322 = vmatpush1.xpose.msra.mxu0 0.0
    %6323 = vmatprep.subr.mxu0 0.0
    %6324 = vmatpush1.xpose.msra.mxu0 0.0
    %6325 = vmatprep.subr.mxu0 0.0
    %6326 = vmatpush1.xpose.msra.mxu0 %v6293
    %6327 = vmatprep.subr.mxu0 0.0
    %6328 = vmatpush2.xpose.msra.mxu0 0.0
    %6329 = vmatprep.subr.mxu0 0.0
    %6330 = vmatpush2.xpose.msra.mxu0 0.0
    %6331 = vmatprep.subr.mxu0 0.0
    %6332 = vmatpush2.xpose.msra.mxu0 0.0
    %6333 = vmatprep.subr.mxu0 0.0
    %6334 = vmatpush2.xpose.msra.mxu0 0.0
    %6335 = vmatprep.subr.mxu0 0.0
    %6336 = vmatpush2.xpose.msra.mxu0 0.0
    %6337 = vmatprep.subr.mxu0 0.0
    %6338 = vmatpush2.xpose.msra.mxu0 0.0
    %6339 = vmatprep.subr.mxu0 0.0
    %6340 = vmatpush2.xpose.msra.mxu0 0.0
    %6341 = vmatprep.subr.mxu0 0.0
    %6342 = vmatpush2.xpose.msra.mxu0 0.0
    %6343 = vmatprep.subr.mxu0 0.0
    %6344 = vmatpush2.xpose.msra.mxu0 0.0
    %6345 = vmatprep.subr.mxu0 0.0
    %6346 = vmatpush2.xpose.msra.mxu0 0.0
    %6347 = vmatprep.subr.mxu0 0.0
    %6348 = vmatpush2.xpose.msra.mxu0 0.0
    %6349 = vmatprep.subr.mxu0 0.0
    %6350 = vmatpush2.xpose.msra.mxu0 0.0
    %6351 = vmatprep.subr.mxu0 0.0
    %6352 = vmatpush2.xpose.msra.mxu0 0.0
    %6353 = vmatprep.subr.mxu0 0.0
    %6354 = vmatpush2.xpose.msra.mxu0 0.0
    %6355 = vmatprep.subr.mxu0 0.0
    %6356 = vmatpush2.xpose.msra.mxu0 0.0
    %6357 = vmatprep.subr.mxu0 0.0
    %6358 = vmatpush2.xpose.msra.mxu0 0.0
    %6359 = vmatprep.mubr.f32.mxu0 0.0
    %6360 = vmatmul.mubr.f32.gmra.mxu0 %v6291
    %v6361 = vpop.f32.mrf.mxu0
    %v6362 = vadd.f32 0.0, %v6361
    %v6363 = vpop.f32.mrf.mxu0
    %6364 = vdwg.mxu0
    %6365 = vrot.lane.b32.xlu0 %v5618, 112
    %v6366 = vpop.permute.xlu0 %6365
    %6367 = vrot.lane.b32.xlu0 %v5618, 80
    %v6368 = vpop.permute.xlu0 %6367
    %v6369 = vsel %vm336, %v6366, 0
    %v6371 = vsel %vm336, %v6368, 0
    %6373 = vmatprep.subr.mxu0 0.0
    %6374 = vmatpush1.xpose.msra.mxu0 0.0
    %6375 = vmatprep.subr.mxu0 0.0
    %6376 = vmatpush1.xpose.msra.mxu0 0.0
    %6377 = vmatprep.subr.mxu0 0.0
    %6378 = vmatpush1.xpose.msra.mxu0 0.0
    %6379 = vmatprep.subr.mxu0 0.0
    %6380 = vmatpush1.xpose.msra.mxu0 0.0
    %6381 = vmatprep.subr.mxu0 0.0
    %6382 = vmatpush1.xpose.msra.mxu0 0.0
    %6383 = vmatprep.subr.mxu0 0.0
    %6384 = vmatpush1.xpose.msra.mxu0 0.0
    %6385 = vmatprep.subr.mxu0 0.0
    %6386 = vmatpush1.xpose.msra.mxu0 0.0
    %6387 = vmatprep.subr.mxu0 0.0
    %6388 = vmatpush1.xpose.msra.mxu0 0.0
    %6389 = vmatprep.subr.mxu0 0.0
    %6390 = vmatpush1.xpose.msra.mxu0 0.0
    %6391 = vmatprep.subr.mxu0 0.0
    %6392 = vmatpush1.xpose.msra.mxu0 0.0
    %6393 = vmatprep.subr.mxu0 0.0
    %6394 = vmatpush1.xpose.msra.mxu0 0.0
    %6395 = vmatprep.subr.mxu0 0.0
    %6396 = vmatpush1.xpose.msra.mxu0 0.0
    %6397 = vmatprep.subr.mxu0 0.0
    %6398 = vmatpush1.xpose.msra.mxu0 0.0
    %6399 = vmatprep.subr.mxu0 0.0
    %6400 = vmatpush1.xpose.msra.mxu0 0.0
    %6401 = vmatprep.subr.mxu0 0.0
    %6402 = vmatpush1.xpose.msra.mxu0 0.0
    %6403 = vmatprep.subr.mxu0 0.0
    %6404 = vmatpush1.xpose.msra.mxu0 %v6371
    %6405 = vmatprep.subr.mxu0 0.0
    %6406 = vmatpush2.xpose.msra.mxu0 0.0
    %6407 = vmatprep.subr.mxu0 0.0
    %6408 = vmatpush2.xpose.msra.mxu0 0.0
    %6409 = vmatprep.subr.mxu0 0.0
    %6410 = vmatpush2.xpose.msra.mxu0 0.0
    %6411 = vmatprep.subr.mxu0 0.0
    %6412 = vmatpush2.xpose.msra.mxu0 0.0
    %6413 = vmatprep.subr.mxu0 0.0
    %6414 = vmatpush2.xpose.msra.mxu0 0.0
    %6415 = vmatprep.subr.mxu0 0.0
    %6416 = vmatpush2.xpose.msra.mxu0 0.0
    %6417 = vmatprep.subr.mxu0 0.0
    %6418 = vmatpush2.xpose.msra.mxu0 0.0
    %6419 = vmatprep.subr.mxu0 0.0
    %6420 = vmatpush2.xpose.msra.mxu0 0.0
    %6421 = vmatprep.subr.mxu0 0.0
    %6422 = vmatpush2.xpose.msra.mxu0 0.0
    %6423 = vmatprep.subr.mxu0 0.0
    %6424 = vmatpush2.xpose.msra.mxu0 0.0
    %6425 = vmatprep.subr.mxu0 0.0
    %6426 = vmatpush2.xpose.msra.mxu0 0.0
    %6427 = vmatprep.subr.mxu0 0.0
    %6428 = vmatpush2.xpose.msra.mxu0 0.0
    %6429 = vmatprep.subr.mxu0 0.0
    %6430 = vmatpush2.xpose.msra.mxu0 0.0
    %6431 = vmatprep.subr.mxu0 0.0
    %6432 = vmatpush2.xpose.msra.mxu0 0.0
    %6433 = vmatprep.subr.mxu0 0.0
    %6434 = vmatpush2.xpose.msra.mxu0 0.0
    %6435 = vmatprep.subr.mxu0 0.0
    %6436 = vmatpush2.xpose.msra.mxu0 0.0
    %6437 = vmatprep.mubr.f32.mxu0 0.0
    %6438 = vmatmul.mubr.f32.gmra.mxu0 %v6369
    %v6439 = vpop.f32.mrf.mxu0
    %v6440 = vadd.f32 0.0, %v6439
    %v6441 = vpop.f32.mrf.mxu0
    %6442 = vdwg.mxu0
    %v6443 = vmul.f32 %v6362, 0.35355338
    %v6444 = vmul.f32 %v6440, 0.35355338
    %v6445 = vsel %vm490, -1e+09, %v6443
    %v6446 = vsel %vm491, -1e+09, %v6444
    %v6447 = vsel %vm336, %v6445, -inf
    %6448 = vmax.xlane.f32.xlu0 %v6447
    %v6449 = vpop.xlane.xlu0 %6448
    %v6450 = vsel %vm336, %v6446, -inf
    %6451 = vmax.xlane.f32.xlu0 %v6450
    %v6452 = vpop.xlane.xlu0 %6451
    %v6453 = vsub.f32 %v6445, %v6449
    %v6454 = vsub.f32 %v6446, %v6452
    %v6455 = vmul.f32 %v6453, 1.442695
    %v6456 = vpow.pop %v6455
    %v6457 = vmul.f32 %v6454, 1.442695
    %v6458 = vpow.pop %v6457
    %v6459 = vsel %vm336, %v6456, 0.0
    %6460 = vadd.xlane.f32.xlu0 %v6459
    %v6461 = vpop.xlane.xlu0 %6460
    %v6462 = vsel %vm336, %v6458, 0.0
    %6463 = vadd.xlane.f32.xlu0 %v6462
    %v6464 = vpop.xlane.xlu0 %6463
    %v6465 = vrcp.pop %v6461
    %v6466 = vrcp.pop %v6464
    %v6467 = vmul.f32 %v6456, %v6465
    %v6468 = vmul.f32 %v6458, %v6466
    %6469 = vrot.lane.b32.xlu0 %v5615, 48
    %v6470 = vpop.permute.xlu0 %6469
    %v6473 = vsel %vm336, %v6467, 0
    %6475 = vmatprep.subr.mxu0 0.0
    %6476 = vmatpush1.msra.mxu0 0.0
    %6477 = vmatprep.subr.mxu0 0.0
    %6478 = vmatpush1.msra.mxu0 0.0
    %6479 = vmatprep.subr.mxu0 0.0
    %6480 = vmatpush1.msra.mxu0 0.0
    %6481 = vmatprep.subr.mxu0 0.0
    %6482 = vmatpush1.msra.mxu0 0.0
    %6483 = vmatprep.subr.mxu0 0.0
    %6484 = vmatpush1.msra.mxu0 0.0
    %6485 = vmatprep.subr.mxu0 0.0
    %6486 = vmatpush1.msra.mxu0 0.0
    %6487 = vmatprep.subr.mxu0 0.0
    %6488 = vmatpush1.msra.mxu0 0.0
    %6489 = vmatprep.subr.mxu0 0.0
    %6490 = vmatpush1.msra.mxu0 0.0
    %6491 = vmatprep.subr.mxu0 0.0
    %6492 = vmatpush1.msra.mxu0 0.0
    %6493 = vmatprep.subr.mxu0 0.0
    %6494 = vmatpush1.msra.mxu0 0.0
    %6495 = vmatprep.subr.mxu0 0.0
    %6496 = vmatpush1.msra.mxu0 0.0
    %6497 = vmatprep.subr.mxu0 0.0
    %6498 = vmatpush1.msra.mxu0 0.0
    %6499 = vmatprep.subr.mxu0 0.0
    %6500 = vmatpush1.msra.mxu0 0.0
    %6501 = vmatprep.subr.mxu0 0.0
    %6502 = vmatpush1.msra.mxu0 0.0
    %6503 = vmatprep.subr.mxu0 0.0
    %6504 = vmatpush1.msra.mxu0 0.0
    %6505 = vmatprep.subr.mxu0 0.0
    %6506 = vmatpush1.msra.mxu0 %v6470
    %6507 = vmatprep.subr.mxu0 0.0
    %6508 = vmatpush2.msra.mxu0 0.0
    %6509 = vmatprep.subr.mxu0 0.0
    %6510 = vmatpush2.msra.mxu0 0.0
    %6511 = vmatprep.subr.mxu0 0.0
    %6512 = vmatpush2.msra.mxu0 0.0
    %6513 = vmatprep.subr.mxu0 0.0
    %6514 = vmatpush2.msra.mxu0 0.0
    %6515 = vmatprep.subr.mxu0 0.0
    %6516 = vmatpush2.msra.mxu0 0.0
    %6517 = vmatprep.subr.mxu0 0.0
    %6518 = vmatpush2.msra.mxu0 0.0
    %6519 = vmatprep.subr.mxu0 0.0
    %6520 = vmatpush2.msra.mxu0 0.0
    %6521 = vmatprep.subr.mxu0 0.0
    %6522 = vmatpush2.msra.mxu0 0.0
    %6523 = vmatprep.subr.mxu0 0.0
    %6524 = vmatpush2.msra.mxu0 0.0
    %6525 = vmatprep.subr.mxu0 0.0
    %6526 = vmatpush2.msra.mxu0 0.0
    %6527 = vmatprep.subr.mxu0 0.0
    %6528 = vmatpush2.msra.mxu0 0.0
    %6529 = vmatprep.subr.mxu0 0.0
    %6530 = vmatpush2.msra.mxu0 0.0
    %6531 = vmatprep.subr.mxu0 0.0
    %6532 = vmatpush2.msra.mxu0 0.0
    %6533 = vmatprep.subr.mxu0 0.0
    %6534 = vmatpush2.msra.mxu0 0.0
    %6535 = vmatprep.subr.mxu0 0.0
    %6536 = vmatpush2.msra.mxu0 0.0
    %6537 = vmatprep.subr.mxu0 0.0
    %6538 = vmatpush2.msra.mxu0 0.0
    %6539 = vmatprep.mubr.f32.mxu0 0.0
    %6540 = vmatmul.mubr.f32.gmra.mxu0 %v6473
    %v6541 = vpop.f32.mrf.mxu0
    %v6542 = vadd.f32 0.0, %v6541
    %v6543 = vpop.f32.mrf.mxu0
    %6544 = vdwg.mxu0
    %6545 = vrot.lane.b32.xlu0 %v5618, 48
    %v6546 = vpop.permute.xlu0 %6545
    %v6549 = vsel %vm336, %v6468, 0
    %6551 = vmatprep.subr.mxu0 0.0
    %6552 = vmatpush1.msra.mxu0 0.0
    %6553 = vmatprep.subr.mxu0 0.0
    %6554 = vmatpush1.msra.mxu0 0.0
    %6555 = vmatprep.subr.mxu0 0.0
    %6556 = vmatpush1.msra.mxu0 0.0
    %6557 = vmatprep.subr.mxu0 0.0
    %6558 = vmatpush1.msra.mxu0 0.0
    %6559 = vmatprep.subr.mxu0 0.0
    %6560 = vmatpush1.msra.mxu0 0.0
    %6561 = vmatprep.subr.mxu0 0.0
    %6562 = vmatpush1.msra.mxu0 0.0
    %6563 = vmatprep.subr.mxu0 0.0
    %6564 = vmatpush1.msra.mxu0 0.0
    %6565 = vmatprep.subr.mxu0 0.0
    %6566 = vmatpush1.msra.mxu0 0.0
    %6567 = vmatprep.subr.mxu0 0.0
    %6568 = vmatpush1.msra.mxu0 0.0
    %6569 = vmatprep.subr.mxu0 0.0
    %6570 = vmatpush1.msra.mxu0 0.0
    %6571 = vmatprep.subr.mxu0 0.0
    %6572 = vmatpush1.msra.mxu0 0.0
    %6573 = vmatprep.subr.mxu0 0.0
    %6574 = vmatpush1.msra.mxu0 0.0
    %6575 = vmatprep.subr.mxu0 0.0
    %6576 = vmatpush1.msra.mxu0 0.0
    %6577 = vmatprep.subr.mxu0 0.0
    %6578 = vmatpush1.msra.mxu0 0.0
    %6579 = vmatprep.subr.mxu0 0.0
    %6580 = vmatpush1.msra.mxu0 0.0
    %6581 = vmatprep.subr.mxu0 0.0
    %6582 = vmatpush1.msra.mxu0 %v6546
    %6583 = vmatprep.subr.mxu0 0.0
    %6584 = vmatpush2.msra.mxu0 0.0
    %6585 = vmatprep.subr.mxu0 0.0
    %6586 = vmatpush2.msra.mxu0 0.0
    %6587 = vmatprep.subr.mxu0 0.0
    %6588 = vmatpush2.msra.mxu0 0.0
    %6589 = vmatprep.subr.mxu0 0.0
    %6590 = vmatpush2.msra.mxu0 0.0
    %6591 = vmatprep.subr.mxu0 0.0
    %6592 = vmatpush2.msra.mxu0 0.0
    %6593 = vmatprep.subr.mxu0 0.0
    %6594 = vmatpush2.msra.mxu0 0.0
    %6595 = vmatprep.subr.mxu0 0.0
    %6596 = vmatpush2.msra.mxu0 0.0
    %6597 = vmatprep.subr.mxu0 0.0
    %6598 = vmatpush2.msra.mxu0 0.0
    %6599 = vmatprep.subr.mxu0 0.0
    %6600 = vmatpush2.msra.mxu0 0.0
    %6601 = vmatprep.subr.mxu0 0.0
    %6602 = vmatpush2.msra.mxu0 0.0
    %6603 = vmatprep.subr.mxu0 0.0
    %6604 = vmatpush2.msra.mxu0 0.0
    %6605 = vmatprep.subr.mxu0 0.0
    %6606 = vmatpush2.msra.mxu0 0.0
    %6607 = vmatprep.subr.mxu0 0.0
    %6608 = vmatpush2.msra.mxu0 0.0
    %6609 = vmatprep.subr.mxu0 0.0
    %6610 = vmatpush2.msra.mxu0 0.0
    %6611 = vmatprep.subr.mxu0 0.0
    %6612 = vmatpush2.msra.mxu0 0.0
    %6613 = vmatprep.subr.mxu0 0.0
    %6614 = vmatpush2.msra.mxu0 0.0
    %6615 = vmatprep.mubr.f32.mxu0 0.0
    %6616 = vmatmul.mubr.f32.gmra.mxu0 %v6549
    %v6617 = vpop.f32.mrf.mxu0
    %v6618 = vadd.f32 0.0, %v6617
    %v6619 = vpop.f32.mrf.mxu0
    %6620 = vdwg.mxu0
    %6621 = vrot.lane.b32.xlu0 %v5615, 104
    %v6622 = vpop.permute.xlu0 %6621
    %6623 = vrot.lane.b32.xlu0 %v5615, 72
    %v6624 = vpop.permute.xlu0 %6623
    %v6625 = vsel %vm336, %v6622, 0
    %v6627 = vsel %vm336, %v6624, 0
    %6629 = vmatprep.subr.mxu0 0.0
    %6630 = vmatpush1.xpose.msra.mxu0 0.0
    %6631 = vmatprep.subr.mxu0 0.0
    %6632 = vmatpush1.xpose.msra.mxu0 0.0
    %6633 = vmatprep.subr.mxu0 0.0
    %6634 = vmatpush1.xpose.msra.mxu0 0.0
    %6635 = vmatprep.subr.mxu0 0.0
    %6636 = vmatpush1.xpose.msra.mxu0 0.0
    %6637 = vmatprep.subr.mxu0 0.0
    %6638 = vmatpush1.xpose.msra.mxu0 0.0
    %6639 = vmatprep.subr.mxu0 0.0
    %6640 = vmatpush1.xpose.msra.mxu0 0.0
    %6641 = vmatprep.subr.mxu0 0.0
    %6642 = vmatpush1.xpose.msra.mxu0 0.0
    %6643 = vmatprep.subr.mxu0 0.0
    %6644 = vmatpush1.xpose.msra.mxu0 0.0
    %6645 = vmatprep.subr.mxu0 0.0
    %6646 = vmatpush1.xpose.msra.mxu0 0.0
    %6647 = vmatprep.subr.mxu0 0.0
    %6648 = vmatpush1.xpose.msra.mxu0 0.0
    %6649 = vmatprep.subr.mxu0 0.0
    %6650 = vmatpush1.xpose.msra.mxu0 0.0
    %6651 = vmatprep.subr.mxu0 0.0
    %6652 = vmatpush1.xpose.msra.mxu0 0.0
    %6653 = vmatprep.subr.mxu0 0.0
    %6654 = vmatpush1.xpose.msra.mxu0 0.0
    %6655 = vmatprep.subr.mxu0 0.0
    %6656 = vmatpush1.xpose.msra.mxu0 0.0
    %6657 = vmatprep.subr.mxu0 0.0
    %6658 = vmatpush1.xpose.msra.mxu0 0.0
    %6659 = vmatprep.subr.mxu0 0.0
    %6660 = vmatpush1.xpose.msra.mxu0 %v6627
    %6661 = vmatprep.subr.mxu0 0.0
    %6662 = vmatpush2.xpose.msra.mxu0 0.0
    %6663 = vmatprep.subr.mxu0 0.0
    %6664 = vmatpush2.xpose.msra.mxu0 0.0
    %6665 = vmatprep.subr.mxu0 0.0
    %6666 = vmatpush2.xpose.msra.mxu0 0.0
    %6667 = vmatprep.subr.mxu0 0.0
    %6668 = vmatpush2.xpose.msra.mxu0 0.0
    %6669 = vmatprep.subr.mxu0 0.0
    %6670 = vmatpush2.xpose.msra.mxu0 0.0
    %6671 = vmatprep.subr.mxu0 0.0
    %6672 = vmatpush2.xpose.msra.mxu0 0.0
    %6673 = vmatprep.subr.mxu0 0.0
    %6674 = vmatpush2.xpose.msra.mxu0 0.0
    %6675 = vmatprep.subr.mxu0 0.0
    %6676 = vmatpush2.xpose.msra.mxu0 0.0
    %6677 = vmatprep.subr.mxu0 0.0
    %6678 = vmatpush2.xpose.msra.mxu0 0.0
    %6679 = vmatprep.subr.mxu0 0.0
    %6680 = vmatpush2.xpose.msra.mxu0 0.0
    %6681 = vmatprep.subr.mxu0 0.0
    %6682 = vmatpush2.xpose.msra.mxu0 0.0
    %6683 = vmatprep.subr.mxu0 0.0
    %6684 = vmatpush2.xpose.msra.mxu0 0.0
    %6685 = vmatprep.subr.mxu0 0.0
    %6686 = vmatpush2.xpose.msra.mxu0 0.0
    %6687 = vmatprep.subr.mxu0 0.0
    %6688 = vmatpush2.xpose.msra.mxu0 0.0
    %6689 = vmatprep.subr.mxu0 0.0
    %6690 = vmatpush2.xpose.msra.mxu0 0.0
    %6691 = vmatprep.subr.mxu0 0.0
    %6692 = vmatpush2.xpose.msra.mxu0 0.0
    %6693 = vmatprep.mubr.f32.mxu0 0.0
    %6694 = vmatmul.mubr.f32.gmra.mxu0 %v6625
    %v6695 = vpop.f32.mrf.mxu0
    %v6696 = vadd.f32 0.0, %v6695
    %v6697 = vpop.f32.mrf.mxu0
    %6698 = vdwg.mxu0
    %6699 = vrot.lane.b32.xlu0 %v5618, 104
    %v6700 = vpop.permute.xlu0 %6699
    %6701 = vrot.lane.b32.xlu0 %v5618, 72
    %v6702 = vpop.permute.xlu0 %6701
    %v6703 = vsel %vm336, %v6700, 0
    %v6705 = vsel %vm336, %v6702, 0
    %6707 = vmatprep.subr.mxu0 0.0
    %6708 = vmatpush1.xpose.msra.mxu0 0.0
    %6709 = vmatprep.subr.mxu0 0.0
    %6710 = vmatpush1.xpose.msra.mxu0 0.0
    %6711 = vmatprep.subr.mxu0 0.0
    %6712 = vmatpush1.xpose.msra.mxu0 0.0
    %6713 = vmatprep.subr.mxu0 0.0
    %6714 = vmatpush1.xpose.msra.mxu0 0.0
    %6715 = vmatprep.subr.mxu0 0.0
    %6716 = vmatpush1.xpose.msra.mxu0 0.0
    %6717 = vmatprep.subr.mxu0 0.0
    %6718 = vmatpush1.xpose.msra.mxu0 0.0
    %6719 = vmatprep.subr.mxu0 0.0
    %6720 = vmatpush1.xpose.msra.mxu0 0.0
    %6721 = vmatprep.subr.mxu0 0.0
    %6722 = vmatpush1.xpose.msra.mxu0 0.0
    %6723 = vmatprep.subr.mxu0 0.0
    %6724 = vmatpush1.xpose.msra.mxu0 0.0
    %6725 = vmatprep.subr.mxu0 0.0
    %6726 = vmatpush1.xpose.msra.mxu0 0.0
    %6727 = vmatprep.subr.mxu0 0.0
    %6728 = vmatpush1.xpose.msra.mxu0 0.0
    %6729 = vmatprep.subr.mxu0 0.0
    %6730 = vmatpush1.xpose.msra.mxu0 0.0
    %6731 = vmatprep.subr.mxu0 0.0
    %6732 = vmatpush1.xpose.msra.mxu0 0.0
    %6733 = vmatprep.subr.mxu0 0.0
    %6734 = vmatpush1.xpose.msra.mxu0 0.0
    %6735 = vmatprep.subr.mxu0 0.0
    %6736 = vmatpush1.xpose.msra.mxu0 0.0
    %6737 = vmatprep.subr.mxu0 0.0
    %6738 = vmatpush1.xpose.msra.mxu0 %v6705
    %6739 = vmatprep.subr.mxu0 0.0
    %6740 = vmatpush2.xpose.msra.mxu0 0.0
    %6741 = vmatprep.subr.mxu0 0.0
    %6742 = vmatpush2.xpose.msra.mxu0 0.0
    %6743 = vmatprep.subr.mxu0 0.0
    %6744 = vmatpush2.xpose.msra.mxu0 0.0
    %6745 = vmatprep.subr.mxu0 0.0
    %6746 = vmatpush2.xpose.msra.mxu0 0.0
    %6747 = vmatprep.subr.mxu0 0.0
    %6748 = vmatpush2.xpose.msra.mxu0 0.0
    %6749 = vmatprep.subr.mxu0 0.0
    %6750 = vmatpush2.xpose.msra.mxu0 0.0
    %6751 = vmatprep.subr.mxu0 0.0
    %6752 = vmatpush2.xpose.msra.mxu0 0.0
    %6753 = vmatprep.subr.mxu0 0.0
    %6754 = vmatpush2.xpose.msra.mxu0 0.0
    %6755 = vmatprep.subr.mxu0 0.0
    %6756 = vmatpush2.xpose.msra.mxu0 0.0
    %6757 = vmatprep.subr.mxu0 0.0
    %6758 = vmatpush2.xpose.msra.mxu0 0.0
    %6759 = vmatprep.subr.mxu0 0.0
    %6760 = vmatpush2.xpose.msra.mxu0 0.0
    %6761 = vmatprep.subr.mxu0 0.0
    %6762 = vmatpush2.xpose.msra.mxu0 0.0
    %6763 = vmatprep.subr.mxu0 0.0
    %6764 = vmatpush2.xpose.msra.mxu0 0.0
    %6765 = vmatprep.subr.mxu0 0.0
    %6766 = vmatpush2.xpose.msra.mxu0 0.0
    %6767 = vmatprep.subr.mxu0 0.0
    %6768 = vmatpush2.xpose.msra.mxu0 0.0
    %6769 = vmatprep.subr.mxu0 0.0
    %6770 = vmatpush2.xpose.msra.mxu0 0.0
    %6771 = vmatprep.mubr.f32.mxu0 0.0
    %6772 = vmatmul.mubr.f32.gmra.mxu0 %v6703
    %v6773 = vpop.f32.mrf.mxu0
    %v6774 = vadd.f32 0.0, %v6773
    %v6775 = vpop.f32.mrf.mxu0
    %6776 = vdwg.mxu0
    %v6777 = vmul.f32 %v6696, 0.35355338
    %v6778 = vmul.f32 %v6774, 0.35355338
    %v6779 = vsel %vm490, -1e+09, %v6777
    %v6780 = vsel %vm491, -1e+09, %v6778
    %v6781 = vsel %vm336, %v6779, -inf
    %6782 = vmax.xlane.f32.xlu0 %v6781
    %v6783 = vpop.xlane.xlu0 %6782
    %v6784 = vsel %vm336, %v6780, -inf
    %6785 = vmax.xlane.f32.xlu0 %v6784
    %v6786 = vpop.xlane.xlu0 %6785
    %v6787 = vsub.f32 %v6779, %v6783
    %v6788 = vsub.f32 %v6780, %v6786
    %v6789 = vmul.f32 %v6787, 1.442695
    %v6790 = vpow.pop %v6789
    %v6791 = vmul.f32 %v6788, 1.442695
    %v6792 = vpow.pop %v6791
    %v6793 = vsel %vm336, %v6790, 0.0
    %6794 = vadd.xlane.f32.xlu0 %v6793
    %v6795 = vpop.xlane.xlu0 %6794
    %v6796 = vsel %vm336, %v6792, 0.0
    %6797 = vadd.xlane.f32.xlu0 %v6796
    %v6798 = vpop.xlane.xlu0 %6797
    %v6799 = vrcp.pop %v6795
    %v6800 = vrcp.pop %v6798
    %v6801 = vmul.f32 %v6790, %v6799
    %v6802 = vmul.f32 %v6792, %v6800
    %6803 = vrot.lane.b32.xlu0 %v5615, 40
    %v6804 = vpop.permute.xlu0 %6803
    %v6807 = vsel %vm336, %v6801, 0
    %6809 = vmatprep.subr.mxu0 0.0
    %6810 = vmatpush1.msra.mxu0 0.0
    %6811 = vmatprep.subr.mxu0 0.0
    %6812 = vmatpush1.msra.mxu0 0.0
    %6813 = vmatprep.subr.mxu0 0.0
    %6814 = vmatpush1.msra.mxu0 0.0
    %6815 = vmatprep.subr.mxu0 0.0
    %6816 = vmatpush1.msra.mxu0 0.0
    %6817 = vmatprep.subr.mxu0 0.0
    %6818 = vmatpush1.msra.mxu0 0.0
    %6819 = vmatprep.subr.mxu0 0.0
    %6820 = vmatpush1.msra.mxu0 0.0
    %6821 = vmatprep.subr.mxu0 0.0
    %6822 = vmatpush1.msra.mxu0 0.0
    %6823 = vmatprep.subr.mxu0 0.0
    %6824 = vmatpush1.msra.mxu0 0.0
    %6825 = vmatprep.subr.mxu0 0.0
    %6826 = vmatpush1.msra.mxu0 0.0
    %6827 = vmatprep.subr.mxu0 0.0
    %6828 = vmatpush1.msra.mxu0 0.0
    %6829 = vmatprep.subr.mxu0 0.0
    %6830 = vmatpush1.msra.mxu0 0.0
    %6831 = vmatprep.subr.mxu0 0.0
    %6832 = vmatpush1.msra.mxu0 0.0
    %6833 = vmatprep.subr.mxu0 0.0
    %6834 = vmatpush1.msra.mxu0 0.0
    %6835 = vmatprep.subr.mxu0 0.0
    %6836 = vmatpush1.msra.mxu0 0.0
    %6837 = vmatprep.subr.mxu0 0.0
    %6838 = vmatpush1.msra.mxu0 0.0
    %6839 = vmatprep.subr.mxu0 0.0
    %6840 = vmatpush1.msra.mxu0 %v6804
    %6841 = vmatprep.subr.mxu0 0.0
    %6842 = vmatpush2.msra.mxu0 0.0
    %6843 = vmatprep.subr.mxu0 0.0
    %6844 = vmatpush2.msra.mxu0 0.0
    %6845 = vmatprep.subr.mxu0 0.0
    %6846 = vmatpush2.msra.mxu0 0.0
    %6847 = vmatprep.subr.mxu0 0.0
    %6848 = vmatpush2.msra.mxu0 0.0
    %6849 = vmatprep.subr.mxu0 0.0
    %6850 = vmatpush2.msra.mxu0 0.0
    %6851 = vmatprep.subr.mxu0 0.0
    %6852 = vmatpush2.msra.mxu0 0.0
    %6853 = vmatprep.subr.mxu0 0.0
    %6854 = vmatpush2.msra.mxu0 0.0
    %6855 = vmatprep.subr.mxu0 0.0
    %6856 = vmatpush2.msra.mxu0 0.0
    %6857 = vmatprep.subr.mxu0 0.0
    %6858 = vmatpush2.msra.mxu0 0.0
    %6859 = vmatprep.subr.mxu0 0.0
    %6860 = vmatpush2.msra.mxu0 0.0
    %6861 = vmatprep.subr.mxu0 0.0
    %6862 = vmatpush2.msra.mxu0 0.0
    %6863 = vmatprep.subr.mxu0 0.0
    %6864 = vmatpush2.msra.mxu0 0.0
    %6865 = vmatprep.subr.mxu0 0.0
    %6866 = vmatpush2.msra.mxu0 0.0
    %6867 = vmatprep.subr.mxu0 0.0
    %6868 = vmatpush2.msra.mxu0 0.0
    %6869 = vmatprep.subr.mxu0 0.0
    %6870 = vmatpush2.msra.mxu0 0.0
    %6871 = vmatprep.subr.mxu0 0.0
    %6872 = vmatpush2.msra.mxu0 0.0
    %6873 = vmatprep.mubr.f32.mxu0 0.0
    %6874 = vmatmul.mubr.f32.gmra.mxu0 %v6807
    %v6875 = vpop.f32.mrf.mxu0
    %v6876 = vadd.f32 0.0, %v6875
    %v6877 = vpop.f32.mrf.mxu0
    %6878 = vdwg.mxu0
    %6879 = vrot.lane.b32.xlu0 %v5618, 40
    %v6880 = vpop.permute.xlu0 %6879
    %v6883 = vsel %vm336, %v6802, 0
    %6885 = vmatprep.subr.mxu0 0.0
    %6886 = vmatpush1.msra.mxu0 0.0
    %6887 = vmatprep.subr.mxu0 0.0
    %6888 = vmatpush1.msra.mxu0 0.0
    %6889 = vmatprep.subr.mxu0 0.0
    %6890 = vmatpush1.msra.mxu0 0.0
    %6891 = vmatprep.subr.mxu0 0.0
    %6892 = vmatpush1.msra.mxu0 0.0
    %6893 = vmatprep.subr.mxu0 0.0
    %6894 = vmatpush1.msra.mxu0 0.0
    %6895 = vmatprep.subr.mxu0 0.0
    %6896 = vmatpush1.msra.mxu0 0.0
    %6897 = vmatprep.subr.mxu0 0.0
    %6898 = vmatpush1.msra.mxu0 0.0
    %6899 = vmatprep.subr.mxu0 0.0
    %6900 = vmatpush1.msra.mxu0 0.0
    %6901 = vmatprep.subr.mxu0 0.0
    %6902 = vmatpush1.msra.mxu0 0.0
    %6903 = vmatprep.subr.mxu0 0.0
    %6904 = vmatpush1.msra.mxu0 0.0
    %6905 = vmatprep.subr.mxu0 0.0
    %6906 = vmatpush1.msra.mxu0 0.0
    %6907 = vmatprep.subr.mxu0 0.0
    %6908 = vmatpush1.msra.mxu0 0.0
    %6909 = vmatprep.subr.mxu0 0.0
    %6910 = vmatpush1.msra.mxu0 0.0
    %6911 = vmatprep.subr.mxu0 0.0
    %6912 = vmatpush1.msra.mxu0 0.0
    %6913 = vmatprep.subr.mxu0 0.0
    %6914 = vmatpush1.msra.mxu0 0.0
    %6915 = vmatprep.subr.mxu0 0.0
    %6916 = vmatpush1.msra.mxu0 %v6880
    %6917 = vmatprep.subr.mxu0 0.0
    %6918 = vmatpush2.msra.mxu0 0.0
    %6919 = vmatprep.subr.mxu0 0.0
    %6920 = vmatpush2.msra.mxu0 0.0
    %6921 = vmatprep.subr.mxu0 0.0
    %6922 = vmatpush2.msra.mxu0 0.0
    %6923 = vmatprep.subr.mxu0 0.0
    %6924 = vmatpush2.msra.mxu0 0.0
    %6925 = vmatprep.subr.mxu0 0.0
    %6926 = vmatpush2.msra.mxu0 0.0
    %6927 = vmatprep.subr.mxu0 0.0
    %6928 = vmatpush2.msra.mxu0 0.0
    %6929 = vmatprep.subr.mxu0 0.0
    %6930 = vmatpush2.msra.mxu0 0.0
    %6931 = vmatprep.subr.mxu0 0.0
    %6932 = vmatpush2.msra.mxu0 0.0
    %6933 = vmatprep.subr.mxu0 0.0
    %6934 = vmatpush2.msra.mxu0 0.0
    %6935 = vmatprep.subr.mxu0 0.0
    %6936 = vmatpush2.msra.mxu0 0.0
    %6937 = vmatprep.subr.mxu0 0.0
    %6938 = vmatpush2.msra.mxu0 0.0
    %6939 = vmatprep.subr.mxu0 0.0
    %6940 = vmatpush2.msra.mxu0 0.0
    %6941 = vmatprep.subr.mxu0 0.0
    %6942 = vmatpush2.msra.mxu0 0.0
    %6943 = vmatprep.subr.mxu0 0.0
    %6944 = vmatpush2.msra.mxu0 0.0
    %6945 = vmatprep.subr.mxu0 0.0
    %6946 = vmatpush2.msra.mxu0 0.0
    %6947 = vmatprep.subr.mxu0 0.0
    %6948 = vmatpush2.msra.mxu0 0.0
    %6949 = vmatprep.mubr.f32.mxu0 0.0
    %6950 = vmatmul.mubr.f32.gmra.mxu0 %v6883
    %v6951 = vpop.f32.mrf.mxu0
    %v6952 = vadd.f32 0.0, %v6951
    %v6953 = vpop.f32.mrf.mxu0
    %6954 = vdwg.mxu0
    %6957 = vrot.lane.b32.xlu0 %v6208, 8
    %v6958 = vpop.permute.xlu0 %6957
    %6959 = vrot.lane.b32.xlu0 %v6284, 8
    %v6960 = vpop.permute.xlu0 %6959
    %6965 = vrot.lane.b32.xlu0 %v6542, 16
    %v6966 = vpop.permute.xlu0 %6965
    %6967 = vrot.lane.b32.xlu0 %v6618, 16
    %v6968 = vpop.permute.xlu0 %6967
    %6973 = vrot.lane.b32.xlu0 %v6876, 24
    %v6974 = vpop.permute.xlu0 %6973
    %6975 = vrot.lane.b32.xlu0 %v6952, 24
    %v6976 = vpop.permute.xlu0 %6975
    %v6979 = vsel %vm336, %v5874, %v6958
    %v6980 = vsel %vm336, %v5950, %v6960
    %v6981 = vsel %vm1696, %v6979, %v6966
    %v6982 = vsel %vm1696, %v6980, %v6968
    %v6983 = vsel %vm1699, %v6981, %v6974
    %v6984 = vsel %vm1699, %v6982, %v6976
    %s6985 = scalar_lea.vmem %s10, 16
    %v6986 = vld [vmem:[%s6985] sm:$0xf]
    %v6987 = vld [vmem:[%s6985 + $0x4] sm:$0xf]
    %v6988 = vld [vmem:[%s6985 + $0x8] sm:$0xf]
    %v6989 = vld [vmem:[%s6985 + $0xc] sm:$0xf]
    %s6990 = scalar_lea.vmem %s11, 1
    %v6991 = vld [vmem:[%s6990] sm:$0x1]
    %v6992 = vpack.c.bf16 %v6984, %v6983
    %v6994 = vlaneseq
    %v6995 = vshrl.u32 %v6994, 7
    %v6996 = vsub.s32 0, %v6995
    %v6997 = vrot.slane %v6991, %v6996
    %v7003 = vunpack.c.l.b16 %v6986
    %v7004 = vunpack.c.l.b16 %v6987
    %v7005 = vunpack.c.l.b16 %v6988
    %v7006 = vunpack.c.l.b16 %v6989
    %v7007 = vpack.c.b16 %v7004, %v7003
    %v7008 = vpack.c.b16 %v7006, %v7005
    %v7012 = vsel %vm207, %v6992, 0
    %7014 = vmatprep.subr.bf16.mxu0 0
    %7015 = vmatpush1.bf16.msra.mxu0 0
    %7016 = vmatprep.subr.bf16.mxu0 0
    %7017 = vmatpush1.bf16.msra.mxu0 0
    %7018 = vmatprep.subr.bf16.mxu0 0
    %7019 = vmatpush1.bf16.msra.mxu0 0
    %7020 = vmatprep.subr.bf16.mxu0 0
    %7021 = vmatpush1.bf16.msra.mxu0 0
    %7022 = vmatprep.subr.bf16.mxu0 0
    %7023 = vmatpush1.bf16.msra.mxu0 0
    %7024 = vmatprep.subr.bf16.mxu0 0
    %7025 = vmatpush1.bf16.msra.mxu0 0
    %7026 = vmatprep.subr.bf16.mxu0 0
    %7027 = vmatpush1.bf16.msra.mxu0 %v7008
    %7028 = vmatprep.subr.bf16.mxu0 0
    %7029 = vmatpush1.bf16.msra.mxu0 %v7007
    %7030 = vmatprep.subr.bf16.mxu0 0
    %7031 = vmatpush2.bf16.msra.mxu0 0
    %7032 = vmatprep.subr.bf16.mxu0 0
    %7033 = vmatpush2.bf16.msra.mxu0 0
    %7034 = vmatprep.subr.bf16.mxu0 0
    %7035 = vmatpush2.bf16.msra.mxu0 0
    %7036 = vmatprep.subr.bf16.mxu0 0
    %7037 = vmatpush2.bf16.msra.mxu0 0
    %7038 = vmatprep.subr.bf16.mxu0 0
    %7039 = vmatpush2.bf16.msra.mxu0 0
    %7040 = vmatprep.subr.bf16.mxu0 0
    %7041 = vmatpush2.bf16.msra.mxu0 0
    %7042 = vmatprep.subr.bf16.mxu0 0
    %7043 = vmatpush2.bf16.msra.mxu0 0
    %7044 = vmatprep.subr.bf16.mxu0 0
    %7045 = vmatpush2.bf16.msra.mxu0 0
    %7046 = vmatprep.mubr.bf16.mxu0 0
    %7047 = vmatmul.mubr.bf16.gmra.mxu0 %v7012
    %v7048 = vpop.f32.mrf.mxu0
    %v7049 = vadd.f32 %v6997, %v7048
    %v7050 = vpop.f32.mrf.mxu0
    %v7051 = vpop.f32.mrf.mxu0
    %v7052 = vadd.f32 %v6997, %v7051
    %v7053 = vpop.f32.mrf.mxu0
    %7054 = vdwg.mxu0
    %v7055 = vadd.f32 %v5489, %v7049
    %v7056 = vadd.f32 %v5490, %v7052
    %s7057 = scalar_lea.vmem %s12, 1
    %v7058 = vld [vmem:[%s7057] sm:$0x1]
    %s7059 = scalar_lea.vmem %s13, 1
    %v7060 = vld [vmem:[%s7059] sm:$0x1]
    %v7061 = vsel %vm207, %v7055, 0.0
    %7062 = vadd.xlane.f32.xlu0 %v7061
    %v7063 = vpop.xlane.xlu0 %7062
    %v7064 = vsel %vm207, %v7056, 0.0
    %7065 = vadd.xlane.f32.xlu0 %v7064
    %v7066 = vpop.xlane.xlu0 %7065
    %v7067 = vmul.f32 %v7063, %v214
    %v7068 = vmul.f32 %v7066, %v214
    %v7069 = vsub.f32 %v7055, %v7067
    %v7070 = vsub.f32 %v7056, %v7068
    %v7071 = vmul.f32 %v7069, %v7069
    %v7072 = vmul.f32 %v7070, %v7070
    %v7073 = vsel %vm207, %v7071, 0.0
    %7074 = vadd.xlane.f32.xlu0 %v7073
    %v7075 = vpop.xlane.xlu0 %7074
    %v7076 = vsel %vm207, %v7072, 0.0
    %7077 = vadd.xlane.f32.xlu0 %v7076
    %v7078 = vpop.xlane.xlu0 %7077
    %v7079 = vmul.f32 %v7075, 0.032258064
    %v7080 = vmul.f32 %v7078, 0.032258064
    %v7081 = vrsqrt.pop %v7079
    %v7082 = vmul.f32 %v7079, %v7081
    %vm7083 = vcmp.eq.f32.partialorder %v7079, inf
    %v7084 = vsel %vm7083, %v7079, %v7082
    %vm7085 = vcmp.eq.f32.partialorder %v7079, 0.0
    %v7086 = vand.u32 %v7079, 2147483648
    %v7087 = vsel %vm7085, %v7086, %v7084
    %v7088 = vrsqrt.pop %v7080
    %v7089 = vmul.f32 %v7080, %v7088
    %vm7090 = vcmp.eq.f32.partialorder %v7080, inf
    %v7091 = vsel %vm7090, %v7080, %v7089
    %vm7092 = vcmp.eq.f32.partialorder %v7080, 0.0
    %v7093 = vand.u32 %v7080, 2147483648
    %v7094 = vsel %vm7092, %v7093, %v7091
    %v7095 = vadd.f32 %v7087, 1e-06
    %v7096 = vadd.f32 %v7094, 1e-06
    %v7097 = vrcp.pop %v7095
    %v7098 = vrcp.pop %v7096
    %v7099 = vmul.f32 %v7069, %v7097
    %v7100 = vmul.f32 %v7070, %v7098
    %v7102 = vlaneseq
    %v7103 = vshrl.u32 %v7102, 7
    %v7104 = vsub.s32 0, %v7103
    %v7105 = vrot.slane %v7058, %v7104
    %v7107 = vmul.f32 %v7105, %v7099
    %v7108 = vmul.f32 %v7105, %v7100
    %v7110 = vlaneseq
    %v7111 = vshrl.u32 %v7110, 7
    %v7112 = vsub.s32 0, %v7111
    %v7113 = vrot.slane %v7060, %v7112
    %v7115 = vadd.f32 %v7107, %v7113
    %v7116 = vadd.f32 %v7108, %v7113
    %s7117 = scalar_lea.vmem %s14, 16
    %v7118 = vld [vmem:[%s7117] sm:$0xf]
    %v7119 = vld [vmem:[%s7117 + $0x4] sm:$0xf]
    %v7120 = vld [vmem:[%s7117 + $0x8] sm:$0xf]
    %v7121 = vld [vmem:[%s7117 + $0xc] sm:$0xf]
    %s7122 = scalar_lea.vmem %s15, 1
    %v7123 = vld [vmem:[%s7122] sm:$0x1]
    %v7124 = vpack.c.bf16 %v7116, %v7115
    %v7126 = vlaneseq
    %v7127 = vshrl.u32 %v7126, 7
    %v7128 = vsub.s32 0, %v7127
    %v7129 = vrot.slane %v7123, %v7128
    %v7135 = vunpack.c.l.b16 %v7118
    %v7136 = vunpack.c.l.b16 %v7119
    %v7137 = vunpack.c.l.b16 %v7120
    %v7138 = vunpack.c.l.b16 %v7121
    %v7139 = vpack.c.b16 %v7136, %v7135
    %v7140 = vpack.c.b16 %v7138, %v7137
    %v7144 = vsel %vm207, %v7124, 0
    %7146 = vmatprep.subr.bf16.mxu0 0
    %7147 = vmatpush1.bf16.msra.mxu0 0
    %7148 = vmatprep.subr.bf16.mxu0 0
    %7149 = vmatpush1.bf16.msra.mxu0 0
    %7150 = vmatprep.subr.bf16.mxu0 0
    %7151 = vmatpush1.bf16.msra.mxu0 0
    %7152 = vmatprep.subr.bf16.mxu0 0
    %7153 = vmatpush1.bf16.msra.mxu0 0
    %7154 = vmatprep.subr.bf16.mxu0 0
    %7155 = vmatpush1.bf16.msra.mxu0 0
    %7156 = vmatprep.subr.bf16.mxu0 0
    %7157 = vmatpush1.bf16.msra.mxu0 0
    %7158 = vmatprep.subr.bf16.mxu0 0
    %7159 = vmatpush1.bf16.msra.mxu0 %v7140
    %7160 = vmatprep.subr.bf16.mxu0 0
    %7161 = vmatpush1.bf16.msra.mxu0 %v7139
    %7162 = vmatprep.subr.bf16.mxu0 0
    %7163 = vmatpush2.bf16.msra.mxu0 0
    %7164 = vmatprep.subr.bf16.mxu0 0
    %7165 = vmatpush2.bf16.msra.mxu0 0
    %7166 = vmatprep.subr.bf16.mxu0 0
    %7167 = vmatpush2.bf16.msra.mxu0 0
    %7168 = vmatprep.subr.bf16.mxu0 0
    %7169 = vmatpush2.bf16.msra.mxu0 0
    %7170 = vmatprep.subr.bf16.mxu0 0
    %7171 = vmatpush2.bf16.msra.mxu0 0
    %7172 = vmatprep.subr.bf16.mxu0 0
    %7173 = vmatpush2.bf16.msra.mxu0 0
    %7174 = vmatprep.subr.bf16.mxu0 0
    %7175 = vmatpush2.bf16.msra.mxu0 0
    %7176 = vmatprep.subr.bf16.mxu0 0
    %7177 = vmatpush2.bf16.msra.mxu0 0
    %7178 = vmatprep.mubr.bf16.mxu0 0
    %7179 = vmatmul.mubr.bf16.gmra.mxu0 %v7144
    %v7180 = vpop.f32.mrf.mxu0
    %v7181 = vadd.f32 %v7129, %v7180
    %v7182 = vpop.f32.mrf.mxu0
    %v7183 = vpop.f32.mrf.mxu0
    %v7184 = vadd.f32 %v7129, %v7183
    %v7185 = vpop.f32.mrf.mxu0
    %7186 = vdwg.mxu0
    %s7187 = scalar_lea.vmem %s16, 16
    %v7188 = vld [vmem:[%s7187] sm:$0xf]
    %v7189 = vld [vmem:[%s7187 + $0x4] sm:$0xf]
    %v7190 = vld [vmem:[%s7187 + $0x8] sm:$0xf]
    %v7191 = vld [vmem:[%s7187 + $0xc] sm:$0xf]
    %s7192 = scalar_lea.vmem %s17, 1
    %v7193 = vld [vmem:[%s7192] sm:$0x1]
    %v7195 = vlaneseq
    %v7196 = vshrl.u32 %v7195, 7
    %v7197 = vsub.s32 0, %v7196
    %v7198 = vrot.slane %v7193, %v7197
    %v7204 = vunpack.c.l.b16 %v7188
    %v7205 = vunpack.c.l.b16 %v7189
    %v7206 = vunpack.c.l.b16 %v7190
    %v7207 = vunpack.c.l.b16 %v7191
    %v7208 = vpack.c.b16 %v7205, %v7204
    %v7209 = vpack.c.b16 %v7207, %v7206
    %7212 = vmatprep.subr.bf16.mxu0 0
    %7213 = vmatpush1.bf16.msra.mxu0 0
    %7214 = vmatprep.subr.bf16.mxu0 0
    %7215 = vmatpush1.bf16.msra.mxu0 0
    %7216 = vmatprep.subr.bf16.mxu0 0
    %7217 = vmatpush1.bf16.msra.mxu0 0
    %7218 = vmatprep.subr.bf16.mxu0 0
    %7219 = vmatpush1.bf16.msra.mxu0 0
    %7220 = vmatprep.subr.bf16.mxu0 0
    %7221 = vmatpush1.bf16.msra.mxu0 0
    %7222 = vmatprep.subr.bf16.mxu0 0
    %7223 = vmatpush1.bf16.msra.mxu0 0
    %7224 = vmatprep.subr.bf16.mxu0 0
    %7225 = vmatpush1.bf16.msra.mxu0 %v7209
    %7226 = vmatprep.subr.bf16.mxu0 0
    %7227 = vmatpush1.bf16.msra.mxu0 %v7208
    %7228 = vmatprep.subr.bf16.mxu0 0
    %7229 = vmatpush2.bf16.msra.mxu0 0
    %7230 = vmatprep.subr.bf16.mxu0 0
    %7231 = vmatpush2.bf16.msra.mxu0 0
    %7232 = vmatprep.subr.bf16.mxu0 0
    %7233 = vmatpush2.bf16.msra.mxu0 0
    %7234 = vmatprep.subr.bf16.mxu0 0
    %7235 = vmatpush2.bf16.msra.mxu0 0
    %7236 = vmatprep.subr.bf16.mxu0 0
    %7237 = vmatpush2.bf16.msra.mxu0 0
    %7238 = vmatprep.subr.bf16.mxu0 0
    %7239 = vmatpush2.bf16.msra.mxu0 0
    %7240 = vmatprep.subr.bf16.mxu0 0
    %7241 = vmatpush2.bf16.msra.mxu0 0
    %7242 = vmatprep.subr.bf16.mxu0 0
    %7243 = vmatpush2.bf16.msra.mxu0 0
    %7244 = vmatprep.mubr.bf16.mxu0 0
    %7245 = vmatmul.mubr.bf16.gmra.mxu0 %v1923
    %v7246 = vpop.f32.mrf.mxu0
    %v7247 = vadd.f32 %v7198, %v7246
    %v7248 = vpop.f32.mrf.mxu0
    %v7249 = vpop.f32.mrf.mxu0
    %v7250 = vadd.f32 %v7198, %v7249
    %v7251 = vpop.f32.mrf.mxu0
    %7252 = vdwg.mxu0
    %v7254 = vsel %vm336, %v7181, 0
    %v7257 = vsel %vm336, %v7247, 0
    %7259 = vmatprep.subr.mxu0 0.0
    %7260 = vmatpush1.xpose.msra.mxu0 0.0
    %7261 = vmatprep.subr.mxu0 0.0
    %7262 = vmatpush1.xpose.msra.mxu0 0.0
    %7263 = vmatprep.subr.mxu0 0.0
    %7264 = vmatpush1.xpose.msra.mxu0 0.0
    %7265 = vmatprep.subr.mxu0 0.0
    %7266 = vmatpush1.xpose.msra.mxu0 0.0
    %7267 = vmatprep.subr.mxu0 0.0
    %7268 = vmatpush1.xpose.msra.mxu0 0.0
    %7269 = vmatprep.subr.mxu0 0.0
    %7270 = vmatpush1.xpose.msra.mxu0 0.0
    %7271 = vmatprep.subr.mxu0 0.0
    %7272 = vmatpush1.xpose.msra.mxu0 0.0
    %7273 = vmatprep.subr.mxu0 0.0
    %7274 = vmatpush1.xpose.msra.mxu0 0.0
    %7275 = vmatprep.subr.mxu0 0.0
    %7276 = vmatpush1.xpose.msra.mxu0 0.0
    %7277 = vmatprep.subr.mxu0 0.0
    %7278 = vmatpush1.xpose.msra.mxu0 0.0
    %7279 = vmatprep.subr.mxu0 0.0
    %7280 = vmatpush1.xpose.msra.mxu0 0.0
    %7281 = vmatprep.subr.mxu0 0.0
    %7282 = vmatpush1.xpose.msra.mxu0 0.0
    %7283 = vmatprep.subr.mxu0 0.0
    %7284 = vmatpush1.xpose.msra.mxu0 0.0
    %7285 = vmatprep.subr.mxu0 0.0
    %7286 = vmatpush1.xpose.msra.mxu0 0.0
    %7287 = vmatprep.subr.mxu0 0.0
    %7288 = vmatpush1.xpose.msra.mxu0 0.0
    %7289 = vmatprep.subr.mxu0 0.0
    %7290 = vmatpush1.xpose.msra.mxu0 %v7257
    %7291 = vmatprep.subr.mxu0 0.0
    %7292 = vmatpush2.xpose.msra.mxu0 0.0
    %7293 = vmatprep.subr.mxu0 0.0
    %7294 = vmatpush2.xpose.msra.mxu0 0.0
    %7295 = vmatprep.subr.mxu0 0.0
    %7296 = vmatpush2.xpose.msra.mxu0 0.0
    %7297 = vmatprep.subr.mxu0 0.0
    %7298 = vmatpush2.xpose.msra.mxu0 0.0
    %7299 = vmatprep.subr.mxu0 0.0
    %7300 = vmatpush2.xpose.msra.mxu0 0.0
    %7301 = vmatprep.subr.mxu0 0.0
    %7302 = vmatpush2.xpose.msra.mxu0 0.0
    %7303 = vmatprep.subr.mxu0 0.0
    %7304 = vmatpush2.xpose.msra.mxu0 0.0
    %7305 = vmatprep.subr.mxu0 0.0
    %7306 = vmatpush2.xpose.msra.mxu0 0.0
    %7307 = vmatprep.subr.mxu0 0.0
    %7308 = vmatpush2.xpose.msra.mxu0 0.0
    %7309 = vmatprep.subr.mxu0 0.0
    %7310 = vmatpush2.xpose.msra.mxu0 0.0
    %7311 = vmatprep.subr.mxu0 0.0
    %7312 = vmatpush2.xpose.msra.mxu0 0.0
    %7313 = vmatprep.subr.mxu0 0.0
    %7314 = vmatpush2.xpose.msra.mxu0 0.0
    %7315 = vmatprep.subr.mxu0 0.0
    %7316 = vmatpush2.xpose.msra.mxu0 0.0
    %7317 = vmatprep.subr.mxu0 0.0
    %7318 = vmatpush2.xpose.msra.mxu0 0.0
    %7319 = vmatprep.subr.mxu0 0.0
    %7320 = vmatpush2.xpose.msra.mxu0 0.0
    %7321 = vmatprep.subr.mxu0 0.0
    %7322 = vmatpush2.xpose.msra.mxu0 0.0
    %7323 = vmatprep.mubr.f32.mxu0 0.0
    %7324 = vmatmul.mubr.f32.gmra.mxu0 %v7254
    %v7325 = vpop.f32.mrf.mxu0
    %v7326 = vadd.f32 0.0, %v7325
    %v7327 = vpop.f32.mrf.mxu0
    %7328 = vdwg.mxu0
    %v7330 = vsel %vm336, %v7184, 0
    %v7333 = vsel %vm336, %v7250, 0
    %7335 = vmatprep.subr.mxu0 0.0
    %7336 = vmatpush1.xpose.msra.mxu0 0.0
    %7337 = vmatprep.subr.mxu0 0.0
    %7338 = vmatpush1.xpose.msra.mxu0 0.0
    %7339 = vmatprep.subr.mxu0 0.0
    %7340 = vmatpush1.xpose.msra.mxu0 0.0
    %7341 = vmatprep.subr.mxu0 0.0
    %7342 = vmatpush1.xpose.msra.mxu0 0.0
    %7343 = vmatprep.subr.mxu0 0.0
    %7344 = vmatpush1.xpose.msra.mxu0 0.0
    %7345 = vmatprep.subr.mxu0 0.0
    %7346 = vmatpush1.xpose.msra.mxu0 0.0
    %7347 = vmatprep.subr.mxu0 0.0
    %7348 = vmatpush1.xpose.msra.mxu0 0.0
    %7349 = vmatprep.subr.mxu0 0.0
    %7350 = vmatpush1.xpose.msra.mxu0 0.0
    %7351 = vmatprep.subr.mxu0 0.0
    %7352 = vmatpush1.xpose.msra.mxu0 0.0
    %7353 = vmatprep.subr.mxu0 0.0
    %7354 = vmatpush1.xpose.msra.mxu0 0.0
    %7355 = vmatprep.subr.mxu0 0.0
    %7356 = vmatpush1.xpose.msra.mxu0 0.0
    %7357 = vmatprep.subr.mxu0 0.0
    %7358 = vmatpush1.xpose.msra.mxu0 0.0
    %7359 = vmatprep.subr.mxu0 0.0
    %7360 = vmatpush1.xpose.msra.mxu0 0.0
    %7361 = vmatprep.subr.mxu0 0.0
    %7362 = vmatpush1.xpose.msra.mxu0 0.0
    %7363 = vmatprep.subr.mxu0 0.0
    %7364 = vmatpush1.xpose.msra.mxu0 0.0
    %7365 = vmatprep.subr.mxu0 0.0
    %7366 = vmatpush1.xpose.msra.mxu0 %v7333
    %7367 = vmatprep.subr.mxu0 0.0
    %7368 = vmatpush2.xpose.msra.mxu0 0.0
    %7369 = vmatprep.subr.mxu0 0.0
    %7370 = vmatpush2.xpose.msra.mxu0 0.0
    %7371 = vmatprep.subr.mxu0 0.0
    %7372 = vmatpush2.xpose.msra.mxu0 0.0
    %7373 = vmatprep.subr.mxu0 0.0
    %7374 = vmatpush2.xpose.msra.mxu0 0.0
    %7375 = vmatprep.subr.mxu0 0.0
    %7376 = vmatpush2.xpose.msra.mxu0 0.0
    %7377 = vmatprep.subr.mxu0 0.0
    %7378 = vmatpush2.xpose.msra.mxu0 0.0
    %7379 = vmatprep.subr.mxu0 0.0
    %7380 = vmatpush2.xpose.msra.mxu0 0.0
    %7381 = vmatprep.subr.mxu0 0.0
    %7382 = vmatpush2.xpose.msra.mxu0 0.0
    %7383 = vmatprep.subr.mxu0 0.0
    %7384 = vmatpush2.xpose.msra.mxu0 0.0
    %7385 = vmatprep.subr.mxu0 0.0
    %7386 = vmatpush2.xpose.msra.mxu0 0.0
    %7387 = vmatprep.subr.mxu0 0.0
    %7388 = vmatpush2.xpose.msra.mxu0 0.0
    %7389 = vmatprep.subr.mxu0 0.0
    %7390 = vmatpush2.xpose.msra.mxu0 0.0
    %7391 = vmatprep.subr.mxu0 0.0
    %7392 = vmatpush2.xpose.msra.mxu0 0.0
    %7393 = vmatprep.subr.mxu0 0.0
    %7394 = vmatpush2.xpose.msra.mxu0 0.0
    %7395 = vmatprep.subr.mxu0 0.0
    %7396 = vmatpush2.xpose.msra.mxu0 0.0
    %7397 = vmatprep.subr.mxu0 0.0
    %7398 = vmatpush2.xpose.msra.mxu0 0.0
    %7399 = vmatprep.mubr.f32.mxu0 0.0
    %7400 = vmatmul.mubr.f32.gmra.mxu0 %v7330
    %v7401 = vpop.f32.mrf.mxu0
    %v7402 = vadd.f32 0.0, %v7401
    %v7403 = vpop.f32.mrf.mxu0
    %7404 = vdwg.mxu0
    %v7405 = vmul.f32 %v7326, 0.35355338
    %v7406 = vmul.f32 %v7402, 0.35355338
    %v7407 = vsel %vm2120, -1e+09, %v7405
    %v7408 = vsel %vm2121, -1e+09, %v7406
    %v7409 = vsel %vm336, %v7407, -inf
    %7410 = vmax.xlane.f32.xlu0 %v7409
    %v7411 = vpop.xlane.xlu0 %7410
    %v7412 = vsel %vm336, %v7408, -inf
    %7413 = vmax.xlane.f32.xlu0 %v7412
    %v7414 = vpop.xlane.xlu0 %7413
    %v7415 = vsub.f32 %v7407, %v7411
    %v7416 = vsub.f32 %v7408, %v7414
    %v7417 = vmul.f32 %v7415, 1.442695
    %v7418 = vpow.pop %v7417
    %v7419 = vmul.f32 %v7416, 1.442695
    %v7420 = vpow.pop %v7419
    %v7421 = vsel %vm336, %v7418, 0.0
    %7422 = vadd.xlane.f32.xlu0 %v7421
    %v7423 = vpop.xlane.xlu0 %7422
    %v7424 = vsel %vm336, %v7420, 0.0
    %7425 = vadd.xlane.f32.xlu0 %v7424
    %v7426 = vpop.xlane.xlu0 %7425
    %v7427 = vrcp.pop %v7423
    %v7428 = vrcp.pop %v7426
    %v7429 = vmul.f32 %v7418, %v7427
    %v7430 = vmul.f32 %v7420, %v7428
    %7431 = vrot.lane.b32.xlu0 %v7247, 96
    %v7432 = vpop.permute.xlu0 %7431
    %v7435 = vsel %vm336, %v7429, 0
    %7437 = vmatprep.subr.mxu0 0.0
    %7438 = vmatpush1.msra.mxu0 0.0
    %7439 = vmatprep.subr.mxu0 0.0
    %7440 = vmatpush1.msra.mxu0 0.0
    %7441 = vmatprep.subr.mxu0 0.0
    %7442 = vmatpush1.msra.mxu0 0.0
    %7443 = vmatprep.subr.mxu0 0.0
    %7444 = vmatpush1.msra.mxu0 0.0
    %7445 = vmatprep.subr.mxu0 0.0
    %7446 = vmatpush1.msra.mxu0 0.0
    %7447 = vmatprep.subr.mxu0 0.0
    %7448 = vmatpush1.msra.mxu0 0.0
    %7449 = vmatprep.subr.mxu0 0.0
    %7450 = vmatpush1.msra.mxu0 0.0
    %7451 = vmatprep.subr.mxu0 0.0
    %7452 = vmatpush1.msra.mxu0 0.0
    %7453 = vmatprep.subr.mxu0 0.0
    %7454 = vmatpush1.msra.mxu0 0.0
    %7455 = vmatprep.subr.mxu0 0.0
    %7456 = vmatpush1.msra.mxu0 0.0
    %7457 = vmatprep.subr.mxu0 0.0
    %7458 = vmatpush1.msra.mxu0 0.0
    %7459 = vmatprep.subr.mxu0 0.0
    %7460 = vmatpush1.msra.mxu0 0.0
    %7461 = vmatprep.subr.mxu0 0.0
    %7462 = vmatpush1.msra.mxu0 0.0
    %7463 = vmatprep.subr.mxu0 0.0
    %7464 = vmatpush1.msra.mxu0 0.0
    %7465 = vmatprep.subr.mxu0 0.0
    %7466 = vmatpush1.msra.mxu0 0.0
    %7467 = vmatprep.subr.mxu0 0.0
    %7468 = vmatpush1.msra.mxu0 %v7432
    %7469 = vmatprep.subr.mxu0 0.0
    %7470 = vmatpush2.msra.mxu0 0.0
    %7471 = vmatprep.subr.mxu0 0.0
    %7472 = vmatpush2.msra.mxu0 0.0
    %7473 = vmatprep.subr.mxu0 0.0
    %7474 = vmatpush2.msra.mxu0 0.0
    %7475 = vmatprep.subr.mxu0 0.0
    %7476 = vmatpush2.msra.mxu0 0.0
    %7477 = vmatprep.subr.mxu0 0.0
    %7478 = vmatpush2.msra.mxu0 0.0
    %7479 = vmatprep.subr.mxu0 0.0
    %7480 = vmatpush2.msra.mxu0 0.0
    %7481 = vmatprep.subr.mxu0 0.0
    %7482 = vmatpush2.msra.mxu0 0.0
    %7483 = vmatprep.subr.mxu0 0.0
    %7484 = vmatpush2.msra.mxu0 0.0
    %7485 = vmatprep.subr.mxu0 0.0
    %7486 = vmatpush2.msra.mxu0 0.0
    %7487 = vmatprep.subr.mxu0 0.0
    %7488 = vmatpush2.msra.mxu0 0.0
    %7489 = vmatprep.subr.mxu0 0.0
    %7490 = vmatpush2.msra.mxu0 0.0
    %7491 = vmatprep.subr.mxu0 0.0
    %7492 = vmatpush2.msra.mxu0 0.0
    %7493 = vmatprep.subr.mxu0 0.0
    %7494 = vmatpush2.msra.mxu0 0.0
    %7495 = vmatprep.subr.mxu0 0.0
    %7496 = vmatpush2.msra.mxu0 0.0
    %7497 = vmatprep.subr.mxu0 0.0
    %7498 = vmatpush2.msra.mxu0 0.0
    %7499 = vmatprep.subr.mxu0 0.0
    %7500 = vmatpush2.msra.mxu0 0.0
    %7501 = vmatprep.mubr.f32.mxu0 0.0
    %7502 = vmatmul.mubr.f32.gmra.mxu0 %v7435
    %v7503 = vpop.f32.mrf.mxu0
    %v7504 = vadd.f32 0.0, %v7503
    %v7505 = vpop.f32.mrf.mxu0
    %7506 = vdwg.mxu0
    %7507 = vrot.lane.b32.xlu0 %v7250, 96
    %v7508 = vpop.permute.xlu0 %7507
    %v7511 = vsel %vm336, %v7430, 0
    %7513 = vmatprep.subr.mxu0 0.0
    %7514 = vmatpush1.msra.mxu0 0.0
    %7515 = vmatprep.subr.mxu0 0.0
    %7516 = vmatpush1.msra.mxu0 0.0
    %7517 = vmatprep.subr.mxu0 0.0
    %7518 = vmatpush1.msra.mxu0 0.0
    %7519 = vmatprep.subr.mxu0 0.0
    %7520 = vmatpush1.msra.mxu0 0.0
    %7521 = vmatprep.subr.mxu0 0.0
    %7522 = vmatpush1.msra.mxu0 0.0
    %7523 = vmatprep.subr.mxu0 0.0
    %7524 = vmatpush1.msra.mxu0 0.0
    %7525 = vmatprep.subr.mxu0 0.0
    %7526 = vmatpush1.msra.mxu0 0.0
    %7527 = vmatprep.subr.mxu0 0.0
    %7528 = vmatpush1.msra.mxu0 0.0
    %7529 = vmatprep.subr.mxu0 0.0
    %7530 = vmatpush1.msra.mxu0 0.0
    %7531 = vmatprep.subr.mxu0 0.0
    %7532 = vmatpush1.msra.mxu0 0.0
    %7533 = vmatprep.subr.mxu0 0.0
    %7534 = vmatpush1.msra.mxu0 0.0
    %7535 = vmatprep.subr.mxu0 0.0
    %7536 = vmatpush1.msra.mxu0 0.0
    %7537 = vmatprep.subr.mxu0 0.0
    %7538 = vmatpush1.msra.mxu0 0.0
    %7539 = vmatprep.subr.mxu0 0.0
    %7540 = vmatpush1.msra.mxu0 0.0
    %7541 = vmatprep.subr.mxu0 0.0
    %7542 = vmatpush1.msra.mxu0 0.0
    %7543 = vmatprep.subr.mxu0 0.0
    %7544 = vmatpush1.msra.mxu0 %v7508
    %7545 = vmatprep.subr.mxu0 0.0
    %7546 = vmatpush2.msra.mxu0 0.0
    %7547 = vmatprep.subr.mxu0 0.0
    %7548 = vmatpush2.msra.mxu0 0.0
    %7549 = vmatprep.subr.mxu0 0.0
    %7550 = vmatpush2.msra.mxu0 0.0
    %7551 = vmatprep.subr.mxu0 0.0
    %7552 = vmatpush2.msra.mxu0 0.0
    %7553 = vmatprep.subr.mxu0 0.0
    %7554 = vmatpush2.msra.mxu0 0.0
    %7555 = vmatprep.subr.mxu0 0.0
    %7556 = vmatpush2.msra.mxu0 0.0
    %7557 = vmatprep.subr.mxu0 0.0
    %7558 = vmatpush2.msra.mxu0 0.0
    %7559 = vmatprep.subr.mxu0 0.0
    %7560 = vmatpush2.msra.mxu0 0.0
    %7561 = vmatprep.subr.mxu0 0.0
    %7562 = vmatpush2.msra.mxu0 0.0
    %7563 = vmatprep.subr.mxu0 0.0
    %7564 = vmatpush2.msra.mxu0 0.0
    %7565 = vmatprep.subr.mxu0 0.0
    %7566 = vmatpush2.msra.mxu0 0.0
    %7567 = vmatprep.subr.mxu0 0.0
    %7568 = vmatpush2.msra.mxu0 0.0
    %7569 = vmatprep.subr.mxu0 0.0
    %7570 = vmatpush2.msra.mxu0 0.0
    %7571 = vmatprep.subr.mxu0 0.0
    %7572 = vmatpush2.msra.mxu0 0.0
    %7573 = vmatprep.subr.mxu0 0.0
    %7574 = vmatpush2.msra.mxu0 0.0
    %7575 = vmatprep.subr.mxu0 0.0
    %7576 = vmatpush2.msra.mxu0 0.0
    %7577 = vmatprep.mubr.f32.mxu0 0.0
    %7578 = vmatmul.mubr.f32.gmra.mxu0 %v7511
    %v7579 = vpop.f32.mrf.mxu0
    %v7580 = vadd.f32 0.0, %v7579
    %v7581 = vpop.f32.mrf.mxu0
    %7582 = vdwg.mxu0
    %7583 = vrot.lane.b32.xlu0 %v7181, 120
    %v7584 = vpop.permute.xlu0 %7583
    %7585 = vrot.lane.b32.xlu0 %v7247, 120
    %v7586 = vpop.permute.xlu0 %7585
    %v7587 = vsel %vm336, %v7584, 0
    %v7589 = vsel %vm336, %v7586, 0
    %7591 = vmatprep.subr.mxu0 0.0
    %7592 = vmatpush1.xpose.msra.mxu0 0.0
    %7593 = vmatprep.subr.mxu0 0.0
    %7594 = vmatpush1.xpose.msra.mxu0 0.0
    %7595 = vmatprep.subr.mxu0 0.0
    %7596 = vmatpush1.xpose.msra.mxu0 0.0
    %7597 = vmatprep.subr.mxu0 0.0
    %7598 = vmatpush1.xpose.msra.mxu0 0.0
    %7599 = vmatprep.subr.mxu0 0.0
    %7600 = vmatpush1.xpose.msra.mxu0 0.0
    %7601 = vmatprep.subr.mxu0 0.0
    %7602 = vmatpush1.xpose.msra.mxu0 0.0
    %7603 = vmatprep.subr.mxu0 0.0
    %7604 = vmatpush1.xpose.msra.mxu0 0.0
    %7605 = vmatprep.subr.mxu0 0.0
    %7606 = vmatpush1.xpose.msra.mxu0 0.0
    %7607 = vmatprep.subr.mxu0 0.0
    %7608 = vmatpush1.xpose.msra.mxu0 0.0
    %7609 = vmatprep.subr.mxu0 0.0
    %7610 = vmatpush1.xpose.msra.mxu0 0.0
    %7611 = vmatprep.subr.mxu0 0.0
    %7612 = vmatpush1.xpose.msra.mxu0 0.0
    %7613 = vmatprep.subr.mxu0 0.0
    %7614 = vmatpush1.xpose.msra.mxu0 0.0
    %7615 = vmatprep.subr.mxu0 0.0
    %7616 = vmatpush1.xpose.msra.mxu0 0.0
    %7617 = vmatprep.subr.mxu0 0.0
    %7618 = vmatpush1.xpose.msra.mxu0 0.0
    %7619 = vmatprep.subr.mxu0 0.0
    %7620 = vmatpush1.xpose.msra.mxu0 0.0
    %7621 = vmatprep.subr.mxu0 0.0
    %7622 = vmatpush1.xpose.msra.mxu0 %v7589
    %7623 = vmatprep.subr.mxu0 0.0
    %7624 = vmatpush2.xpose.msra.mxu0 0.0
    %7625 = vmatprep.subr.mxu0 0.0
    %7626 = vmatpush2.xpose.msra.mxu0 0.0
    %7627 = vmatprep.subr.mxu0 0.0
    %7628 = vmatpush2.xpose.msra.mxu0 0.0
    %7629 = vmatprep.subr.mxu0 0.0
    %7630 = vmatpush2.xpose.msra.mxu0 0.0
    %7631 = vmatprep.subr.mxu0 0.0
    %7632 = vmatpush2.xpose.msra.mxu0 0.0
    %7633 = vmatprep.subr.mxu0 0.0
    %7634 = vmatpush2.xpose.msra.mxu0 0.0
    %7635 = vmatprep.subr.mxu0 0.0
    %7636 = vmatpush2.xpose.msra.mxu0 0.0
    %7637 = vmatprep.subr.mxu0 0.0
    %7638 = vmatpush2.xpose.msra.mxu0 0.0
    %7639 = vmatprep.subr.mxu0 0.0
    %7640 = vmatpush2.xpose.msra.mxu0 0.0
    %7641 = vmatprep.subr.mxu0 0.0
    %7642 = vmatpush2.xpose.msra.mxu0 0.0
    %7643 = vmatprep.subr.mxu0 0.0
    %7644 = vmatpush2.xpose.msra.mxu0 0.0
    %7645 = vmatprep.subr.mxu0 0.0
    %7646 = vmatpush2.xpose.msra.mxu0 0.0
    %7647 = vmatprep.subr.mxu0 0.0
    %7648 = vmatpush2.xpose.msra.mxu0 0.0
    %7649 = vmatprep.subr.mxu0 0.0
    %7650 = vmatpush2.xpose.msra.mxu0 0.0
    %7651 = vmatprep.subr.mxu0 0.0
    %7652 = vmatpush2.xpose.msra.mxu0 0.0
    %7653 = vmatprep.subr.mxu0 0.0
    %7654 = vmatpush2.xpose.msra.mxu0 0.0
    %7655 = vmatprep.mubr.f32.mxu0 0.0
    %7656 = vmatmul.mubr.f32.gmra.mxu0 %v7587
    %v7657 = vpop.f32.mrf.mxu0
    %v7658 = vadd.f32 0.0, %v7657
    %v7659 = vpop.f32.mrf.mxu0
    %7660 = vdwg.mxu0
    %7661 = vrot.lane.b32.xlu0 %v7184, 120
    %v7662 = vpop.permute.xlu0 %7661
    %7663 = vrot.lane.b32.xlu0 %v7250, 120
    %v7664 = vpop.permute.xlu0 %7663
    %v7665 = vsel %vm336, %v7662, 0
    %v7667 = vsel %vm336, %v7664, 0
    %7669 = vmatprep.subr.mxu0 0.0
    %7670 = vmatpush1.xpose.msra.mxu0 0.0
    %7671 = vmatprep.subr.mxu0 0.0
    %7672 = vmatpush1.xpose.msra.mxu0 0.0
    %7673 = vmatprep.subr.mxu0 0.0
    %7674 = vmatpush1.xpose.msra.mxu0 0.0
    %7675 = vmatprep.subr.mxu0 0.0
    %7676 = vmatpush1.xpose.msra.mxu0 0.0
    %7677 = vmatprep.subr.mxu0 0.0
    %7678 = vmatpush1.xpose.msra.mxu0 0.0
    %7679 = vmatprep.subr.mxu0 0.0
    %7680 = vmatpush1.xpose.msra.mxu0 0.0
    %7681 = vmatprep.subr.mxu0 0.0
    %7682 = vmatpush1.xpose.msra.mxu0 0.0
    %7683 = vmatprep.subr.mxu0 0.0
    %7684 = vmatpush1.xpose.msra.mxu0 0.0
    %7685 = vmatprep.subr.mxu0 0.0
    %7686 = vmatpush1.xpose.msra.mxu0 0.0
    %7687 = vmatprep.subr.mxu0 0.0
    %7688 = vmatpush1.xpose.msra.mxu0 0.0
    %7689 = vmatprep.subr.mxu0 0.0
    %7690 = vmatpush1.xpose.msra.mxu0 0.0
    %7691 = vmatprep.subr.mxu0 0.0
    %7692 = vmatpush1.xpose.msra.mxu0 0.0
    %7693 = vmatprep.subr.mxu0 0.0
    %7694 = vmatpush1.xpose.msra.mxu0 0.0
    %7695 = vmatprep.subr.mxu0 0.0
    %7696 = vmatpush1.xpose.msra.mxu0 0.0
    %7697 = vmatprep.subr.mxu0 0.0
    %7698 = vmatpush1.xpose.msra.mxu0 0.0
    %7699 = vmatprep.subr.mxu0 0.0
    %7700 = vmatpush1.xpose.msra.mxu0 %v7667
    %7701 = vmatprep.subr.mxu0 0.0
    %7702 = vmatpush2.xpose.msra.mxu0 0.0
    %7703 = vmatprep.subr.mxu0 0.0
    %7704 = vmatpush2.xpose.msra.mxu0 0.0
    %7705 = vmatprep.subr.mxu0 0.0
    %7706 = vmatpush2.xpose.msra.mxu0 0.0
    %7707 = vmatprep.subr.mxu0 0.0
    %7708 = vmatpush2.xpose.msra.mxu0 0.0
    %7709 = vmatprep.subr.mxu0 0.0
    %7710 = vmatpush2.xpose.msra.mxu0 0.0
    %7711 = vmatprep.subr.mxu0 0.0
    %7712 = vmatpush2.xpose.msra.mxu0 0.0
    %7713 = vmatprep.subr.mxu0 0.0
    %7714 = vmatpush2.xpose.msra.mxu0 0.0
    %7715 = vmatprep.subr.mxu0 0.0
    %7716 = vmatpush2.xpose.msra.mxu0 0.0
    %7717 = vmatprep.subr.mxu0 0.0
    %7718 = vmatpush2.xpose.msra.mxu0 0.0
    %7719 = vmatprep.subr.mxu0 0.0
    %7720 = vmatpush2.xpose.msra.mxu0 0.0
    %7721 = vmatprep.subr.mxu0 0.0
    %7722 = vmatpush2.xpose.msra.mxu0 0.0
    %7723 = vmatprep.subr.mxu0 0.0
    %7724 = vmatpush2.xpose.msra.mxu0 0.0
    %7725 = vmatprep.subr.mxu0 0.0
    %7726 = vmatpush2.xpose.msra.mxu0 0.0
    %7727 = vmatprep.subr.mxu0 0.0
    %7728 = vmatpush2.xpose.msra.mxu0 0.0
    %7729 = vmatprep.subr.mxu0 0.0
    %7730 = vmatpush2.xpose.msra.mxu0 0.0
    %7731 = vmatprep.subr.mxu0 0.0
    %7732 = vmatpush2.xpose.msra.mxu0 0.0
    %7733 = vmatprep.mubr.f32.mxu0 0.0
    %7734 = vmatmul.mubr.f32.gmra.mxu0 %v7665
    %v7735 = vpop.f32.mrf.mxu0
    %v7736 = vadd.f32 0.0, %v7735
    %v7737 = vpop.f32.mrf.mxu0
    %7738 = vdwg.mxu0
    %v7739 = vmul.f32 %v7658, 0.35355338
    %v7740 = vmul.f32 %v7736, 0.35355338
    %v7741 = vsel %vm2120, -1e+09, %v7739
    %v7742 = vsel %vm2121, -1e+09, %v7740
    %v7743 = vsel %vm336, %v7741, -inf
    %7744 = vmax.xlane.f32.xlu0 %v7743
    %v7745 = vpop.xlane.xlu0 %7744
    %v7746 = vsel %vm336, %v7742, -inf
    %7747 = vmax.xlane.f32.xlu0 %v7746
    %v7748 = vpop.xlane.xlu0 %7747
    %v7749 = vsub.f32 %v7741, %v7745
    %v7750 = vsub.f32 %v7742, %v7748
    %v7751 = vmul.f32 %v7749, 1.442695
    %v7752 = vpow.pop %v7751
    %v7753 = vmul.f32 %v7750, 1.442695
    %v7754 = vpow.pop %v7753
    %v7755 = vsel %vm336, %v7752, 0.0
    %7756 = vadd.xlane.f32.xlu0 %v7755
    %v7757 = vpop.xlane.xlu0 %7756
    %v7758 = vsel %vm336, %v7754, 0.0
    %7759 = vadd.xlane.f32.xlu0 %v7758
    %v7760 = vpop.xlane.xlu0 %7759
    %v7761 = vrcp.pop %v7757
    %v7762 = vrcp.pop %v7760
    %v7763 = vmul.f32 %v7752, %v7761
    %v7764 = vmul.f32 %v7754, %v7762
    %7765 = vrot.lane.b32.xlu0 %v7247, 88
    %v7766 = vpop.permute.xlu0 %7765
    %v7769 = vsel %vm336, %v7763, 0
    %7771 = vmatprep.subr.mxu0 0.0
    %7772 = vmatpush1.msra.mxu0 0.0
    %7773 = vmatprep.subr.mxu0 0.0
    %7774 = vmatpush1.msra.mxu0 0.0
    %7775 = vmatprep.subr.mxu0 0.0
    %7776 = vmatpush1.msra.mxu0 0.0
    %7777 = vmatprep.subr.mxu0 0.0
    %7778 = vmatpush1.msra.mxu0 0.0
    %7779 = vmatprep.subr.mxu0 0.0
    %7780 = vmatpush1.msra.mxu0 0.0
    %7781 = vmatprep.subr.mxu0 0.0
    %7782 = vmatpush1.msra.mxu0 0.0
    %7783 = vmatprep.subr.mxu0 0.0
    %7784 = vmatpush1.msra.mxu0 0.0
    %7785 = vmatprep.subr.mxu0 0.0
    %7786 = vmatpush1.msra.mxu0 0.0
    %7787 = vmatprep.subr.mxu0 0.0
    %7788 = vmatpush1.msra.mxu0 0.0
    %7789 = vmatprep.subr.mxu0 0.0
    %7790 = vmatpush1.msra.mxu0 0.0
    %7791 = vmatprep.subr.mxu0 0.0
    %7792 = vmatpush1.msra.mxu0 0.0
    %7793 = vmatprep.subr.mxu0 0.0
    %7794 = vmatpush1.msra.mxu0 0.0
    %7795 = vmatprep.subr.mxu0 0.0
    %7796 = vmatpush1.msra.mxu0 0.0
    %7797 = vmatprep.subr.mxu0 0.0
    %7798 = vmatpush1.msra.mxu0 0.0
    %7799 = vmatprep.subr.mxu0 0.0
    %7800 = vmatpush1.msra.mxu0 0.0
    %7801 = vmatprep.subr.mxu0 0.0
    %7802 = vmatpush1.msra.mxu0 %v7766
    %7803 = vmatprep.subr.mxu0 0.0
    %7804 = vmatpush2.msra.mxu0 0.0
    %7805 = vmatprep.subr.mxu0 0.0
    %7806 = vmatpush2.msra.mxu0 0.0
    %7807 = vmatprep.subr.mxu0 0.0
    %7808 = vmatpush2.msra.mxu0 0.0
    %7809 = vmatprep.subr.mxu0 0.0
    %7810 = vmatpush2.msra.mxu0 0.0
    %7811 = vmatprep.subr.mxu0 0.0
    %7812 = vmatpush2.msra.mxu0 0.0
    %7813 = vmatprep.subr.mxu0 0.0
    %7814 = vmatpush2.msra.mxu0 0.0
    %7815 = vmatprep.subr.mxu0 0.0
    %7816 = vmatpush2.msra.mxu0 0.0
    %7817 = vmatprep.subr.mxu0 0.0
    %7818 = vmatpush2.msra.mxu0 0.0
    %7819 = vmatprep.subr.mxu0 0.0
    %7820 = vmatpush2.msra.mxu0 0.0
    %7821 = vmatprep.subr.mxu0 0.0
    %7822 = vmatpush2.msra.mxu0 0.0
    %7823 = vmatprep.subr.mxu0 0.0
    %7824 = vmatpush2.msra.mxu0 0.0
    %7825 = vmatprep.subr.mxu0 0.0
    %7826 = vmatpush2.msra.mxu0 0.0
    %7827 = vmatprep.subr.mxu0 0.0
    %7828 = vmatpush2.msra.mxu0 0.0
    %7829 = vmatprep.subr.mxu0 0.0
    %7830 = vmatpush2.msra.mxu0 0.0
    %7831 = vmatprep.subr.mxu0 0.0
    %7832 = vmatpush2.msra.mxu0 0.0
    %7833 = vmatprep.subr.mxu0 0.0
    %7834 = vmatpush2.msra.mxu0 0.0
    %7835 = vmatprep.mubr.f32.mxu0 0.0
    %7836 = vmatmul.mubr.f32.gmra.mxu0 %v7769
    %v7837 = vpop.f32.mrf.mxu0
    %v7838 = vadd.f32 0.0, %v7837
    %v7839 = vpop.f32.mrf.mxu0
    %7840 = vdwg.mxu0
    %7841 = vrot.lane.b32.xlu0 %v7250, 88
    %v7842 = vpop.permute.xlu0 %7841
    %v7845 = vsel %vm336, %v7764, 0
    %7847 = vmatprep.subr.mxu0 0.0
    %7848 = vmatpush1.msra.mxu0 0.0
    %7849 = vmatprep.subr.mxu0 0.0
    %7850 = vmatpush1.msra.mxu0 0.0
    %7851 = vmatprep.subr.mxu0 0.0
    %7852 = vmatpush1.msra.mxu0 0.0
    %7853 = vmatprep.subr.mxu0 0.0
    %7854 = vmatpush1.msra.mxu0 0.0
    %7855 = vmatprep.subr.mxu0 0.0
    %7856 = vmatpush1.msra.mxu0 0.0
    %7857 = vmatprep.subr.mxu0 0.0
    %7858 = vmatpush1.msra.mxu0 0.0
    %7859 = vmatprep.subr.mxu0 0.0
    %7860 = vmatpush1.msra.mxu0 0.0
    %7861 = vmatprep.subr.mxu0 0.0
    %7862 = vmatpush1.msra.mxu0 0.0
    %7863 = vmatprep.subr.mxu0 0.0
    %7864 = vmatpush1.msra.mxu0 0.0
    %7865 = vmatprep.subr.mxu0 0.0
    %7866 = vmatpush1.msra.mxu0 0.0
    %7867 = vmatprep.subr.mxu0 0.0
    %7868 = vmatpush1.msra.mxu0 0.0
    %7869 = vmatprep.subr.mxu0 0.0
    %7870 = vmatpush1.msra.mxu0 0.0
    %7871 = vmatprep.subr.mxu0 0.0
    %7872 = vmatpush1.msra.mxu0 0.0
    %7873 = vmatprep.subr.mxu0 0.0
    %7874 = vmatpush1.msra.mxu0 0.0
    %7875 = vmatprep.subr.mxu0 0.0
    %7876 = vmatpush1.msra.mxu0 0.0
    %7877 = vmatprep.subr.mxu0 0.0
    %7878 = vmatpush1.msra.mxu0 %v7842
    %7879 = vmatprep.subr.mxu0 0.0
    %7880 = vmatpush2.msra.mxu0 0.0
    %7881 = vmatprep.subr.mxu0 0.0
    %7882 = vmatpush2.msra.mxu0 0.0
    %7883 = vmatprep.subr.mxu0 0.0
    %7884 = vmatpush2.msra.mxu0 0.0
    %7885 = vmatprep.subr.mxu0 0.0
    %7886 = vmatpush2.msra.mxu0 0.0
    %7887 = vmatprep.subr.mxu0 0.0
    %7888 = vmatpush2.msra.mxu0 0.0
    %7889 = vmatprep.subr.mxu0 0.0
    %7890 = vmatpush2.msra.mxu0 0.0
    %7891 = vmatprep.subr.mxu0 0.0
    %7892 = vmatpush2.msra.mxu0 0.0
    %7893 = vmatprep.subr.mxu0 0.0
    %7894 = vmatpush2.msra.mxu0 0.0
    %7895 = vmatprep.subr.mxu0 0.0
    %7896 = vmatpush2.msra.mxu0 0.0
    %7897 = vmatprep.subr.mxu0 0.0
    %7898 = vmatpush2.msra.mxu0 0.0
    %7899 = vmatprep.subr.mxu0 0.0
    %7900 = vmatpush2.msra.mxu0 0.0
    %7901 = vmatprep.subr.mxu0 0.0
    %7902 = vmatpush2.msra.mxu0 0.0
    %7903 = vmatprep.subr.mxu0 0.0
    %7904 = vmatpush2.msra.mxu0 0.0
    %7905 = vmatprep.subr.mxu0 0.0
    %7906 = vmatpush2.msra.mxu0 0.0
    %7907 = vmatprep.subr.mxu0 0.0
    %7908 = vmatpush2.msra.mxu0 0.0
    %7909 = vmatprep.subr.mxu0 0.0
    %7910 = vmatpush2.msra.mxu0 0.0
    %7911 = vmatprep.mubr.f32.mxu0 0.0
    %7912 = vmatmul.mubr.f32.gmra.mxu0 %v7845
    %v7913 = vpop.f32.mrf.mxu0
    %v7914 = vadd.f32 0.0, %v7913
    %v7915 = vpop.f32.mrf.mxu0
    %7916 = vdwg.mxu0
    %7917 = vrot.lane.b32.xlu0 %v7181, 112
    %v7918 = vpop.permute.xlu0 %7917
    %7919 = vrot.lane.b32.xlu0 %v7247, 112
    %v7920 = vpop.permute.xlu0 %7919
    %v7921 = vsel %vm336, %v7918, 0
    %v7923 = vsel %vm336, %v7920, 0
    %7925 = vmatprep.subr.mxu0 0.0
    %7926 = vmatpush1.xpose.msra.mxu0 0.0
    %7927 = vmatprep.subr.mxu0 0.0
    %7928 = vmatpush1.xpose.msra.mxu0 0.0
    %7929 = vmatprep.subr.mxu0 0.0
    %7930 = vmatpush1.xpose.msra.mxu0 0.0
    %7931 = vmatprep.subr.mxu0 0.0
    %7932 = vmatpush1.xpose.msra.mxu0 0.0
    %7933 = vmatprep.subr.mxu0 0.0
    %7934 = vmatpush1.xpose.msra.mxu0 0.0
    %7935 = vmatprep.subr.mxu0 0.0
    %7936 = vmatpush1.xpose.msra.mxu0 0.0
    %7937 = vmatprep.subr.mxu0 0.0
    %7938 = vmatpush1.xpose.msra.mxu0 0.0
    %7939 = vmatprep.subr.mxu0 0.0
    %7940 = vmatpush1.xpose.msra.mxu0 0.0
    %7941 = vmatprep.subr.mxu0 0.0
    %7942 = vmatpush1.xpose.msra.mxu0 0.0
    %7943 = vmatprep.subr.mxu0 0.0
    %7944 = vmatpush1.xpose.msra.mxu0 0.0
    %7945 = vmatprep.subr.mxu0 0.0
    %7946 = vmatpush1.xpose.msra.mxu0 0.0
    %7947 = vmatprep.subr.mxu0 0.0
    %7948 = vmatpush1.xpose.msra.mxu0 0.0
    %7949 = vmatprep.subr.mxu0 0.0
    %7950 = vmatpush1.xpose.msra.mxu0 0.0
    %7951 = vmatprep.subr.mxu0 0.0
    %7952 = vmatpush1.xpose.msra.mxu0 0.0
    %7953 = vmatprep.subr.mxu0 0.0
    %7954 = vmatpush1.xpose.msra.mxu0 0.0
    %7955 = vmatprep.subr.mxu0 0.0
    %7956 = vmatpush1.xpose.msra.mxu0 %v7923
    %7957 = vmatprep.subr.mxu0 0.0
    %7958 = vmatpush2.xpose.msra.mxu0 0.0
    %7959 = vmatprep.subr.mxu0 0.0
    %7960 = vmatpush2.xpose.msra.mxu0 0.0
    %7961 = vmatprep.subr.mxu0 0.0
    %7962 = vmatpush2.xpose.msra.mxu0 0.0
    %7963 = vmatprep.subr.mxu0 0.0
    %7964 = vmatpush2.xpose.msra.mxu0 0.0
    %7965 = vmatprep.subr.mxu0 0.0
    %7966 = vmatpush2.xpose.msra.mxu0 0.0
    %7967 = vmatprep.subr.mxu0 0.0
    %7968 = vmatpush2.xpose.msra.mxu0 0.0
    %7969 = vmatprep.subr.mxu0 0.0
    %7970 = vmatpush2.xpose.msra.mxu0 0.0
    %7971 = vmatprep.subr.mxu0 0.0
    %7972 = vmatpush2.xpose.msra.mxu0 0.0
    %7973 = vmatprep.subr.mxu0 0.0
    %7974 = vmatpush2.xpose.msra.mxu0 0.0
    %7975 = vmatprep.subr.mxu0 0.0
    %7976 = vmatpush2.xpose.msra.mxu0 0.0
    %7977 = vmatprep.subr.mxu0 0.0
    %7978 = vmatpush2.xpose.msra.mxu0 0.0
    %7979 = vmatprep.subr.mxu0 0.0
    %7980 = vmatpush2.xpose.msra.mxu0 0.0
    %7981 = vmatprep.subr.mxu0 0.0
    %7982 = vmatpush2.xpose.msra.mxu0 0.0
    %7983 = vmatprep.subr.mxu0 0.0
    %7984 = vmatpush2.xpose.msra.mxu0 0.0
    %7985 = vmatprep.subr.mxu0 0.0
    %7986 = vmatpush2.xpose.msra.mxu0 0.0
    %7987 = vmatprep.subr.mxu0 0.0
    %7988 = vmatpush2.xpose.msra.mxu0 0.0
    %7989 = vmatprep.mubr.f32.mxu0 0.0
    %7990 = vmatmul.mubr.f32.gmra.mxu0 %v7921
    %v7991 = vpop.f32.mrf.mxu0
    %v7992 = vadd.f32 0.0, %v7991
    %v7993 = vpop.f32.mrf.mxu0
    %7994 = vdwg.mxu0
    %7995 = vrot.lane.b32.xlu0 %v7184, 112
    %v7996 = vpop.permute.xlu0 %7995
    %7997 = vrot.lane.b32.xlu0 %v7250, 112
    %v7998 = vpop.permute.xlu0 %7997
    %v7999 = vsel %vm336, %v7996, 0
    %v8001 = vsel %vm336, %v7998, 0
    %8003 = vmatprep.subr.mxu0 0.0
    %8004 = vmatpush1.xpose.msra.mxu0 0.0
    %8005 = vmatprep.subr.mxu0 0.0
    %8006 = vmatpush1.xpose.msra.mxu0 0.0
    %8007 = vmatprep.subr.mxu0 0.0
    %8008 = vmatpush1.xpose.msra.mxu0 0.0
    %8009 = vmatprep.subr.mxu0 0.0
    %8010 = vmatpush1.xpose.msra.mxu0 0.0
    %8011 = vmatprep.subr.mxu0 0.0
    %8012 = vmatpush1.xpose.msra.mxu0 0.0
    %8013 = vmatprep.subr.mxu0 0.0
    %8014 = vmatpush1.xpose.msra.mxu0 0.0
    %8015 = vmatprep.subr.mxu0 0.0
    %8016 = vmatpush1.xpose.msra.mxu0 0.0
    %8017 = vmatprep.subr.mxu0 0.0
    %8018 = vmatpush1.xpose.msra.mxu0 0.0
    %8019 = vmatprep.subr.mxu0 0.0
    %8020 = vmatpush1.xpose.msra.mxu0 0.0
    %8021 = vmatprep.subr.mxu0 0.0
    %8022 = vmatpush1.xpose.msra.mxu0 0.0
    %8023 = vmatprep.subr.mxu0 0.0
    %8024 = vmatpush1.xpose.msra.mxu0 0.0
    %8025 = vmatprep.subr.mxu0 0.0
    %8026 = vmatpush1.xpose.msra.mxu0 0.0
    %8027 = vmatprep.subr.mxu0 0.0
    %8028 = vmatpush1.xpose.msra.mxu0 0.0
    %8029 = vmatprep.subr.mxu0 0.0
    %8030 = vmatpush1.xpose.msra.mxu0 0.0
    %8031 = vmatprep.subr.mxu0 0.0
    %8032 = vmatpush1.xpose.msra.mxu0 0.0
    %8033 = vmatprep.subr.mxu0 0.0
    %8034 = vmatpush1.xpose.msra.mxu0 %v8001
    %8035 = vmatprep.subr.mxu0 0.0
    %8036 = vmatpush2.xpose.msra.mxu0 0.0
    %8037 = vmatprep.subr.mxu0 0.0
    %8038 = vmatpush2.xpose.msra.mxu0 0.0
    %8039 = vmatprep.subr.mxu0 0.0
    %8040 = vmatpush2.xpose.msra.mxu0 0.0
    %8041 = vmatprep.subr.mxu0 0.0
    %8042 = vmatpush2.xpose.msra.mxu0 0.0
    %8043 = vmatprep.subr.mxu0 0.0
    %8044 = vmatpush2.xpose.msra.mxu0 0.0
    %8045 = vmatprep.subr.mxu0 0.0
    %8046 = vmatpush2.xpose.msra.mxu0 0.0
    %8047 = vmatprep.subr.mxu0 0.0
    %8048 = vmatpush2.xpose.msra.mxu0 0.0
    %8049 = vmatprep.subr.mxu0 0.0
    %8050 = vmatpush2.xpose.msra.mxu0 0.0
    %8051 = vmatprep.subr.mxu0 0.0
    %8052 = vmatpush2.xpose.msra.mxu0 0.0
    %8053 = vmatprep.subr.mxu0 0.0
    %8054 = vmatpush2.xpose.msra.mxu0 0.0
    %8055 = vmatprep.subr.mxu0 0.0
    %8056 = vmatpush2.xpose.msra.mxu0 0.0
    %8057 = vmatprep.subr.mxu0 0.0
    %8058 = vmatpush2.xpose.msra.mxu0 0.0
    %8059 = vmatprep.subr.mxu0 0.0
    %8060 = vmatpush2.xpose.msra.mxu0 0.0
    %8061 = vmatprep.subr.mxu0 0.0
    %8062 = vmatpush2.xpose.msra.mxu0 0.0
    %8063 = vmatprep.subr.mxu0 0.0
    %8064 = vmatpush2.xpose.msra.mxu0 0.0
    %8065 = vmatprep.subr.mxu0 0.0
    %8066 = vmatpush2.xpose.msra.mxu0 0.0
    %8067 = vmatprep.mubr.f32.mxu0 0.0
    %8068 = vmatmul.mubr.f32.gmra.mxu0 %v7999
    %v8069 = vpop.f32.mrf.mxu0
    %v8070 = vadd.f32 0.0, %v8069
    %v8071 = vpop.f32.mrf.mxu0
    %8072 = vdwg.mxu0
    %v8073 = vmul.f32 %v7992, 0.35355338
    %v8074 = vmul.f32 %v8070, 0.35355338
    %v8075 = vsel %vm2120, -1e+09, %v8073
    %v8076 = vsel %vm2121, -1e+09, %v8074
    %v8077 = vsel %vm336, %v8075, -inf
    %8078 = vmax.xlane.f32.xlu0 %v8077
    %v8079 = vpop.xlane.xlu0 %8078
    %v8080 = vsel %vm336, %v8076, -inf
    %8081 = vmax.xlane.f32.xlu0 %v8080
    %v8082 = vpop.xlane.xlu0 %8081
    %v8083 = vsub.f32 %v8075, %v8079
    %v8084 = vsub.f32 %v8076, %v8082
    %v8085 = vmul.f32 %v8083, 1.442695
    %v8086 = vpow.pop %v8085
    %v8087 = vmul.f32 %v8084, 1.442695
    %v8088 = vpow.pop %v8087
    %v8089 = vsel %vm336, %v8086, 0.0
    %8090 = vadd.xlane.f32.xlu0 %v8089
    %v8091 = vpop.xlane.xlu0 %8090
    %v8092 = vsel %vm336, %v8088, 0.0
    %8093 = vadd.xlane.f32.xlu0 %v8092
    %v8094 = vpop.xlane.xlu0 %8093
    %v8095 = vrcp.pop %v8091
    %v8096 = vrcp.pop %v8094
    %v8097 = vmul.f32 %v8086, %v8095
    %v8098 = vmul.f32 %v8088, %v8096
    %8099 = vrot.lane.b32.xlu0 %v7247, 80
    %v8100 = vpop.permute.xlu0 %8099
    %v8103 = vsel %vm336, %v8097, 0
    %8105 = vmatprep.subr.mxu0 0.0
    %8106 = vmatpush1.msra.mxu0 0.0
    %8107 = vmatprep.subr.mxu0 0.0
    %8108 = vmatpush1.msra.mxu0 0.0
    %8109 = vmatprep.subr.mxu0 0.0
    %8110 = vmatpush1.msra.mxu0 0.0
    %8111 = vmatprep.subr.mxu0 0.0
    %8112 = vmatpush1.msra.mxu0 0.0
    %8113 = vmatprep.subr.mxu0 0.0
    %8114 = vmatpush1.msra.mxu0 0.0
    %8115 = vmatprep.subr.mxu0 0.0
    %8116 = vmatpush1.msra.mxu0 0.0
    %8117 = vmatprep.subr.mxu0 0.0
    %8118 = vmatpush1.msra.mxu0 0.0
    %8119 = vmatprep.subr.mxu0 0.0
    %8120 = vmatpush1.msra.mxu0 0.0
    %8121 = vmatprep.subr.mxu0 0.0
    %8122 = vmatpush1.msra.mxu0 0.0
    %8123 = vmatprep.subr.mxu0 0.0
    %8124 = vmatpush1.msra.mxu0 0.0
    %8125 = vmatprep.subr.mxu0 0.0
    %8126 = vmatpush1.msra.mxu0 0.0
    %8127 = vmatprep.subr.mxu0 0.0
    %8128 = vmatpush1.msra.mxu0 0.0
    %8129 = vmatprep.subr.mxu0 0.0
    %8130 = vmatpush1.msra.mxu0 0.0
    %8131 = vmatprep.subr.mxu0 0.0
    %8132 = vmatpush1.msra.mxu0 0.0
    %8133 = vmatprep.subr.mxu0 0.0
    %8134 = vmatpush1.msra.mxu0 0.0
    %8135 = vmatprep.subr.mxu0 0.0
    %8136 = vmatpush1.msra.mxu0 %v8100
    %8137 = vmatprep.subr.mxu0 0.0
    %8138 = vmatpush2.msra.mxu0 0.0
    %8139 = vmatprep.subr.mxu0 0.0
    %8140 = vmatpush2.msra.mxu0 0.0
    %8141 = vmatprep.subr.mxu0 0.0
    %8142 = vmatpush2.msra.mxu0 0.0
    %8143 = vmatprep.subr.mxu0 0.0
    %8144 = vmatpush2.msra.mxu0 0.0
    %8145 = vmatprep.subr.mxu0 0.0
    %8146 = vmatpush2.msra.mxu0 0.0
    %8147 = vmatprep.subr.mxu0 0.0
    %8148 = vmatpush2.msra.mxu0 0.0
    %8149 = vmatprep.subr.mxu0 0.0
    %8150 = vmatpush2.msra.mxu0 0.0
    %8151 = vmatprep.subr.mxu0 0.0
    %8152 = vmatpush2.msra.mxu0 0.0
    %8153 = vmatprep.subr.mxu0 0.0
    %8154 = vmatpush2.msra.mxu0 0.0
    %8155 = vmatprep.subr.mxu0 0.0
    %8156 = vmatpush2.msra.mxu0 0.0
    %8157 = vmatprep.subr.mxu0 0.0
    %8158 = vmatpush2.msra.mxu0 0.0
    %8159 = vmatprep.subr.mxu0 0.0
    %8160 = vmatpush2.msra.mxu0 0.0
    %8161 = vmatprep.subr.mxu0 0.0
    %8162 = vmatpush2.msra.mxu0 0.0
    %8163 = vmatprep.subr.mxu0 0.0
    %8164 = vmatpush2.msra.mxu0 0.0
    %8165 = vmatprep.subr.mxu0 0.0
    %8166 = vmatpush2.msra.mxu0 0.0
    %8167 = vmatprep.subr.mxu0 0.0
    %8168 = vmatpush2.msra.mxu0 0.0
    %8169 = vmatprep.mubr.f32.mxu0 0.0
    %8170 = vmatmul.mubr.f32.gmra.mxu0 %v8103
    %v8171 = vpop.f32.mrf.mxu0
    %v8172 = vadd.f32 0.0, %v8171
    %v8173 = vpop.f32.mrf.mxu0
    %8174 = vdwg.mxu0
    %8175 = vrot.lane.b32.xlu0 %v7250, 80
    %v8176 = vpop.permute.xlu0 %8175
    %v8179 = vsel %vm336, %v8098, 0
    %8181 = vmatprep.subr.mxu0 0.0
    %8182 = vmatpush1.msra.mxu0 0.0
    %8183 = vmatprep.subr.mxu0 0.0
    %8184 = vmatpush1.msra.mxu0 0.0
    %8185 = vmatprep.subr.mxu0 0.0
    %8186 = vmatpush1.msra.mxu0 0.0
    %8187 = vmatprep.subr.mxu0 0.0
    %8188 = vmatpush1.msra.mxu0 0.0
    %8189 = vmatprep.subr.mxu0 0.0
    %8190 = vmatpush1.msra.mxu0 0.0
    %8191 = vmatprep.subr.mxu0 0.0
    %8192 = vmatpush1.msra.mxu0 0.0
    %8193 = vmatprep.subr.mxu0 0.0
    %8194 = vmatpush1.msra.mxu0 0.0
    %8195 = vmatprep.subr.mxu0 0.0
    %8196 = vmatpush1.msra.mxu0 0.0
    %8197 = vmatprep.subr.mxu0 0.0
    %8198 = vmatpush1.msra.mxu0 0.0
    %8199 = vmatprep.subr.mxu0 0.0
    %8200 = vmatpush1.msra.mxu0 0.0
    %8201 = vmatprep.subr.mxu0 0.0
    %8202 = vmatpush1.msra.mxu0 0.0
    %8203 = vmatprep.subr.mxu0 0.0
    %8204 = vmatpush1.msra.mxu0 0.0
    %8205 = vmatprep.subr.mxu0 0.0
    %8206 = vmatpush1.msra.mxu0 0.0
    %8207 = vmatprep.subr.mxu0 0.0
    %8208 = vmatpush1.msra.mxu0 0.0
    %8209 = vmatprep.subr.mxu0 0.0
    %8210 = vmatpush1.msra.mxu0 0.0
    %8211 = vmatprep.subr.mxu0 0.0
    %8212 = vmatpush1.msra.mxu0 %v8176
    %8213 = vmatprep.subr.mxu0 0.0
    %8214 = vmatpush2.msra.mxu0 0.0
    %8215 = vmatprep.subr.mxu0 0.0
    %8216 = vmatpush2.msra.mxu0 0.0
    %8217 = vmatprep.subr.mxu0 0.0
    %8218 = vmatpush2.msra.mxu0 0.0
    %8219 = vmatprep.subr.mxu0 0.0
    %8220 = vmatpush2.msra.mxu0 0.0
    %8221 = vmatprep.subr.mxu0 0.0
    %8222 = vmatpush2.msra.mxu0 0.0
    %8223 = vmatprep.subr.mxu0 0.0
    %8224 = vmatpush2.msra.mxu0 0.0
    %8225 = vmatprep.subr.mxu0 0.0
    %8226 = vmatpush2.msra.mxu0 0.0
    %8227 = vmatprep.subr.mxu0 0.0
    %8228 = vmatpush2.msra.mxu0 0.0
    %8229 = vmatprep.subr.mxu0 0.0
    %8230 = vmatpush2.msra.mxu0 0.0
    %8231 = vmatprep.subr.mxu0 0.0
    %8232 = vmatpush2.msra.mxu0 0.0
    %8233 = vmatprep.subr.mxu0 0.0
    %8234 = vmatpush2.msra.mxu0 0.0
    %8235 = vmatprep.subr.mxu0 0.0
    %8236 = vmatpush2.msra.mxu0 0.0
    %8237 = vmatprep.subr.mxu0 0.0
    %8238 = vmatpush2.msra.mxu0 0.0
    %8239 = vmatprep.subr.mxu0 0.0
    %8240 = vmatpush2.msra.mxu0 0.0
    %8241 = vmatprep.subr.mxu0 0.0
    %8242 = vmatpush2.msra.mxu0 0.0
    %8243 = vmatprep.subr.mxu0 0.0
    %8244 = vmatpush2.msra.mxu0 0.0
    %8245 = vmatprep.mubr.f32.mxu0 0.0
    %8246 = vmatmul.mubr.f32.gmra.mxu0 %v8179
    %v8247 = vpop.f32.mrf.mxu0
    %v8248 = vadd.f32 0.0, %v8247
    %v8249 = vpop.f32.mrf.mxu0
    %8250 = vdwg.mxu0
    %8251 = vrot.lane.b32.xlu0 %v7181, 104
    %v8252 = vpop.permute.xlu0 %8251
    %8253 = vrot.lane.b32.xlu0 %v7247, 104
    %v8254 = vpop.permute.xlu0 %8253
    %v8255 = vsel %vm336, %v8252, 0
    %v8257 = vsel %vm336, %v8254, 0
    %8259 = vmatprep.subr.mxu0 0.0
    %8260 = vmatpush1.xpose.msra.mxu0 0.0
    %8261 = vmatprep.subr.mxu0 0.0
    %8262 = vmatpush1.xpose.msra.mxu0 0.0
    %8263 = vmatprep.subr.mxu0 0.0
    %8264 = vmatpush1.xpose.msra.mxu0 0.0
    %8265 = vmatprep.subr.mxu0 0.0
    %8266 = vmatpush1.xpose.msra.mxu0 0.0
    %8267 = vmatprep.subr.mxu0 0.0
    %8268 = vmatpush1.xpose.msra.mxu0 0.0
    %8269 = vmatprep.subr.mxu0 0.0
    %8270 = vmatpush1.xpose.msra.mxu0 0.0
    %8271 = vmatprep.subr.mxu0 0.0
    %8272 = vmatpush1.xpose.msra.mxu0 0.0
    %8273 = vmatprep.subr.mxu0 0.0
    %8274 = vmatpush1.xpose.msra.mxu0 0.0
    %8275 = vmatprep.subr.mxu0 0.0
    %8276 = vmatpush1.xpose.msra.mxu0 0.0
    %8277 = vmatprep.subr.mxu0 0.0
    %8278 = vmatpush1.xpose.msra.mxu0 0.0
    %8279 = vmatprep.subr.mxu0 0.0
    %8280 = vmatpush1.xpose.msra.mxu0 0.0
    %8281 = vmatprep.subr.mxu0 0.0
    %8282 = vmatpush1.xpose.msra.mxu0 0.0
    %8283 = vmatprep.subr.mxu0 0.0
    %8284 = vmatpush1.xpose.msra.mxu0 0.0
    %8285 = vmatprep.subr.mxu0 0.0
    %8286 = vmatpush1.xpose.msra.mxu0 0.0
    %8287 = vmatprep.subr.mxu0 0.0
    %8288 = vmatpush1.xpose.msra.mxu0 0.0
    %8289 = vmatprep.subr.mxu0 0.0
    %8290 = vmatpush1.xpose.msra.mxu0 %v8257
    %8291 = vmatprep.subr.mxu0 0.0
    %8292 = vmatpush2.xpose.msra.mxu0 0.0
    %8293 = vmatprep.subr.mxu0 0.0
    %8294 = vmatpush2.xpose.msra.mxu0 0.0
    %8295 = vmatprep.subr.mxu0 0.0
    %8296 = vmatpush2.xpose.msra.mxu0 0.0
    %8297 = vmatprep.subr.mxu0 0.0
    %8298 = vmatpush2.xpose.msra.mxu0 0.0
    %8299 = vmatprep.subr.mxu0 0.0
    %8300 = vmatpush2.xpose.msra.mxu0 0.0
    %8301 = vmatprep.subr.mxu0 0.0
    %8302 = vmatpush2.xpose.msra.mxu0 0.0
    %8303 = vmatprep.subr.mxu0 0.0
    %8304 = vmatpush2.xpose.msra.mxu0 0.0
    %8305 = vmatprep.subr.mxu0 0.0
    %8306 = vmatpush2.xpose.msra.mxu0 0.0
    %8307 = vmatprep.subr.mxu0 0.0
    %8308 = vmatpush2.xpose.msra.mxu0 0.0
    %8309 = vmatprep.subr.mxu0 0.0
    %8310 = vmatpush2.xpose.msra.mxu0 0.0
    %8311 = vmatprep.subr.mxu0 0.0
    %8312 = vmatpush2.xpose.msra.mxu0 0.0
    %8313 = vmatprep.subr.mxu0 0.0
    %8314 = vmatpush2.xpose.msra.mxu0 0.0
    %8315 = vmatprep.subr.mxu0 0.0
    %8316 = vmatpush2.xpose.msra.mxu0 0.0
    %8317 = vmatprep.subr.mxu0 0.0
    %8318 = vmatpush2.xpose.msra.mxu0 0.0
    %8319 = vmatprep.subr.mxu0 0.0
    %8320 = vmatpush2.xpose.msra.mxu0 0.0
    %8321 = vmatprep.subr.mxu0 0.0
    %8322 = vmatpush2.xpose.msra.mxu0 0.0
    %8323 = vmatprep.mubr.f32.mxu0 0.0
    %8324 = vmatmul.mubr.f32.gmra.mxu0 %v8255
    %v8325 = vpop.f32.mrf.mxu0
    %v8326 = vadd.f32 0.0, %v8325
    %v8327 = vpop.f32.mrf.mxu0
    %8328 = vdwg.mxu0
    %8329 = vrot.lane.b32.xlu0 %v7184, 104
    %v8330 = vpop.permute.xlu0 %8329
    %8331 = vrot.lane.b32.xlu0 %v7250, 104
    %v8332 = vpop.permute.xlu0 %8331
    %v8333 = vsel %vm336, %v8330, 0
    %v8335 = vsel %vm336, %v8332, 0
    %8337 = vmatprep.subr.mxu0 0.0
    %8338 = vmatpush1.xpose.msra.mxu0 0.0
    %8339 = vmatprep.subr.mxu0 0.0
    %8340 = vmatpush1.xpose.msra.mxu0 0.0
    %8341 = vmatprep.subr.mxu0 0.0
    %8342 = vmatpush1.xpose.msra.mxu0 0.0
    %8343 = vmatprep.subr.mxu0 0.0
    %8344 = vmatpush1.xpose.msra.mxu0 0.0
    %8345 = vmatprep.subr.mxu0 0.0
    %8346 = vmatpush1.xpose.msra.mxu0 0.0
    %8347 = vmatprep.subr.mxu0 0.0
    %8348 = vmatpush1.xpose.msra.mxu0 0.0
    %8349 = vmatprep.subr.mxu0 0.0
    %8350 = vmatpush1.xpose.msra.mxu0 0.0
    %8351 = vmatprep.subr.mxu0 0.0
    %8352 = vmatpush1.xpose.msra.mxu0 0.0
    %8353 = vmatprep.subr.mxu0 0.0
    %8354 = vmatpush1.xpose.msra.mxu0 0.0
    %8355 = vmatprep.subr.mxu0 0.0
    %8356 = vmatpush1.xpose.msra.mxu0 0.0
    %8357 = vmatprep.subr.mxu0 0.0
    %8358 = vmatpush1.xpose.msra.mxu0 0.0
    %8359 = vmatprep.subr.mxu0 0.0
    %8360 = vmatpush1.xpose.msra.mxu0 0.0
    %8361 = vmatprep.subr.mxu0 0.0
    %8362 = vmatpush1.xpose.msra.mxu0 0.0
    %8363 = vmatprep.subr.mxu0 0.0
    %8364 = vmatpush1.xpose.msra.mxu0 0.0
    %8365 = vmatprep.subr.mxu0 0.0
    %8366 = vmatpush1.xpose.msra.mxu0 0.0
    %8367 = vmatprep.subr.mxu0 0.0
    %8368 = vmatpush1.xpose.msra.mxu0 %v8335
    %8369 = vmatprep.subr.mxu0 0.0
    %8370 = vmatpush2.xpose.msra.mxu0 0.0
    %8371 = vmatprep.subr.mxu0 0.0
    %8372 = vmatpush2.xpose.msra.mxu0 0.0
    %8373 = vmatprep.subr.mxu0 0.0
    %8374 = vmatpush2.xpose.msra.mxu0 0.0
    %8375 = vmatprep.subr.mxu0 0.0
    %8376 = vmatpush2.xpose.msra.mxu0 0.0
    %8377 = vmatprep.subr.mxu0 0.0
    %8378 = vmatpush2.xpose.msra.mxu0 0.0
    %8379 = vmatprep.subr.mxu0 0.0
    %8380 = vmatpush2.xpose.msra.mxu0 0.0
    %8381 = vmatprep.subr.mxu0 0.0
    %8382 = vmatpush2.xpose.msra.mxu0 0.0
    %8383 = vmatprep.subr.mxu0 0.0
    %8384 = vmatpush2.xpose.msra.mxu0 0.0
    %8385 = vmatprep.subr.mxu0 0.0
    %8386 = vmatpush2.xpose.msra.mxu0 0.0
    %8387 = vmatprep.subr.mxu0 0.0
    %8388 = vmatpush2.xpose.msra.mxu0 0.0
    %8389 = vmatprep.subr.mxu0 0.0
    %8390 = vmatpush2.xpose.msra.mxu0 0.0
    %8391 = vmatprep.subr.mxu0 0.0
    %8392 = vmatpush2.xpose.msra.mxu0 0.0
    %8393 = vmatprep.subr.mxu0 0.0
    %8394 = vmatpush2.xpose.msra.mxu0 0.0
    %8395 = vmatprep.subr.mxu0 0.0
    %8396 = vmatpush2.xpose.msra.mxu0 0.0
    %8397 = vmatprep.subr.mxu0 0.0
    %8398 = vmatpush2.xpose.msra.mxu0 0.0
    %8399 = vmatprep.subr.mxu0 0.0
    %8400 = vmatpush2.xpose.msra.mxu0 0.0
    %8401 = vmatprep.mubr.f32.mxu0 0.0
    %8402 = vmatmul.mubr.f32.gmra.mxu0 %v8333
    %v8403 = vpop.f32.mrf.mxu0
    %v8404 = vadd.f32 0.0, %v8403
    %v8405 = vpop.f32.mrf.mxu0
    %8406 = vdwg.mxu0
    %v8407 = vmul.f32 %v8326, 0.35355338
    %v8408 = vmul.f32 %v8404, 0.35355338
    %v8409 = vsel %vm2120, -1e+09, %v8407
    %v8410 = vsel %vm2121, -1e+09, %v8408
    %v8411 = vsel %vm336, %v8409, -inf
    %8412 = vmax.xlane.f32.xlu0 %v8411
    %v8413 = vpop.xlane.xlu0 %8412
    %v8414 = vsel %vm336, %v8410, -inf
    %8415 = vmax.xlane.f32.xlu0 %v8414
    %v8416 = vpop.xlane.xlu0 %8415
    %v8417 = vsub.f32 %v8409, %v8413
    %v8418 = vsub.f32 %v8410, %v8416
    %v8419 = vmul.f32 %v8417, 1.442695
    %v8420 = vpow.pop %v8419
    %v8421 = vmul.f32 %v8418, 1.442695
    %v8422 = vpow.pop %v8421
    %v8423 = vsel %vm336, %v8420, 0.0
    %8424 = vadd.xlane.f32.xlu0 %v8423
    %v8425 = vpop.xlane.xlu0 %8424
    %v8426 = vsel %vm336, %v8422, 0.0
    %8427 = vadd.xlane.f32.xlu0 %v8426
    %v8428 = vpop.xlane.xlu0 %8427
    %v8429 = vrcp.pop %v8425
    %v8430 = vrcp.pop %v8428
    %v8431 = vmul.f32 %v8420, %v8429
    %v8432 = vmul.f32 %v8422, %v8430
    %8433 = vrot.lane.b32.xlu0 %v7247, 72
    %v8434 = vpop.permute.xlu0 %8433
    %v8437 = vsel %vm336, %v8431, 0
    %8439 = vmatprep.subr.mxu0 0.0
    %8440 = vmatpush1.msra.mxu0 0.0
    %8441 = vmatprep.subr.mxu0 0.0
    %8442 = vmatpush1.msra.mxu0 0.0
    %8443 = vmatprep.subr.mxu0 0.0
    %8444 = vmatpush1.msra.mxu0 0.0
    %8445 = vmatprep.subr.mxu0 0.0
    %8446 = vmatpush1.msra.mxu0 0.0
    %8447 = vmatprep.subr.mxu0 0.0
    %8448 = vmatpush1.msra.mxu0 0.0
    %8449 = vmatprep.subr.mxu0 0.0
    %8450 = vmatpush1.msra.mxu0 0.0
    %8451 = vmatprep.subr.mxu0 0.0
    %8452 = vmatpush1.msra.mxu0 0.0
    %8453 = vmatprep.subr.mxu0 0.0
    %8454 = vmatpush1.msra.mxu0 0.0
    %8455 = vmatprep.subr.mxu0 0.0
    %8456 = vmatpush1.msra.mxu0 0.0
    %8457 = vmatprep.subr.mxu0 0.0
    %8458 = vmatpush1.msra.mxu0 0.0
    %8459 = vmatprep.subr.mxu0 0.0
    %8460 = vmatpush1.msra.mxu0 0.0
    %8461 = vmatprep.subr.mxu0 0.0
    %8462 = vmatpush1.msra.mxu0 0.0
    %8463 = vmatprep.subr.mxu0 0.0
    %8464 = vmatpush1.msra.mxu0 0.0
    %8465 = vmatprep.subr.mxu0 0.0
    %8466 = vmatpush1.msra.mxu0 0.0
    %8467 = vmatprep.subr.mxu0 0.0
    %8468 = vmatpush1.msra.mxu0 0.0
    %8469 = vmatprep.subr.mxu0 0.0
    %8470 = vmatpush1.msra.mxu0 %v8434
    %8471 = vmatprep.subr.mxu0 0.0
    %8472 = vmatpush2.msra.mxu0 0.0
    %8473 = vmatprep.subr.mxu0 0.0
    %8474 = vmatpush2.msra.mxu0 0.0
    %8475 = vmatprep.subr.mxu0 0.0
    %8476 = vmatpush2.msra.mxu0 0.0
    %8477 = vmatprep.subr.mxu0 0.0
    %8478 = vmatpush2.msra.mxu0 0.0
    %8479 = vmatprep.subr.mxu0 0.0
    %8480 = vmatpush2.msra.mxu0 0.0
    %8481 = vmatprep.subr.mxu0 0.0
    %8482 = vmatpush2.msra.mxu0 0.0
    %8483 = vmatprep.subr.mxu0 0.0
    %8484 = vmatpush2.msra.mxu0 0.0
    %8485 = vmatprep.subr.mxu0 0.0
    %8486 = vmatpush2.msra.mxu0 0.0
    %8487 = vmatprep.subr.mxu0 0.0
    %8488 = vmatpush2.msra.mxu0 0.0
    %8489 = vmatprep.subr.mxu0 0.0
    %8490 = vmatpush2.msra.mxu0 0.0
    %8491 = vmatprep.subr.mxu0 0.0
    %8492 = vmatpush2.msra.mxu0 0.0
    %8493 = vmatprep.subr.mxu0 0.0
    %8494 = vmatpush2.msra.mxu0 0.0
    %8495 = vmatprep.subr.mxu0 0.0
    %8496 = vmatpush2.msra.mxu0 0.0
    %8497 = vmatprep.subr.mxu0 0.0
    %8498 = vmatpush2.msra.mxu0 0.0
    %8499 = vmatprep.subr.mxu0 0.0
    %8500 = vmatpush2.msra.mxu0 0.0
    %8501 = vmatprep.subr.mxu0 0.0
    %8502 = vmatpush2.msra.mxu0 0.0
    %8503 = vmatprep.mubr.f32.mxu0 0.0
    %8504 = vmatmul.mubr.f32.gmra.mxu0 %v8437
    %v8505 = vpop.f32.mrf.mxu0
    %v8506 = vadd.f32 0.0, %v8505
    %v8507 = vpop.f32.mrf.mxu0
    %8508 = vdwg.mxu0
    %8509 = vrot.lane.b32.xlu0 %v7250, 72
    %v8510 = vpop.permute.xlu0 %8509
    %v8513 = vsel %vm336, %v8432, 0
    %8515 = vmatprep.subr.mxu0 0.0
    %8516 = vmatpush1.msra.mxu0 0.0
    %8517 = vmatprep.subr.mxu0 0.0
    %8518 = vmatpush1.msra.mxu0 0.0
    %8519 = vmatprep.subr.mxu0 0.0
    %8520 = vmatpush1.msra.mxu0 0.0
    %8521 = vmatprep.subr.mxu0 0.0
    %8522 = vmatpush1.msra.mxu0 0.0
    %8523 = vmatprep.subr.mxu0 0.0
    %8524 = vmatpush1.msra.mxu0 0.0
    %8525 = vmatprep.subr.mxu0 0.0
    %8526 = vmatpush1.msra.mxu0 0.0
    %8527 = vmatprep.subr.mxu0 0.0
    %8528 = vmatpush1.msra.mxu0 0.0
    %8529 = vmatprep.subr.mxu0 0.0
    %8530 = vmatpush1.msra.mxu0 0.0
    %8531 = vmatprep.subr.mxu0 0.0
    %8532 = vmatpush1.msra.mxu0 0.0
    %8533 = vmatprep.subr.mxu0 0.0
    %8534 = vmatpush1.msra.mxu0 0.0
    %8535 = vmatprep.subr.mxu0 0.0
    %8536 = vmatpush1.msra.mxu0 0.0
    %8537 = vmatprep.subr.mxu0 0.0
    %8538 = vmatpush1.msra.mxu0 0.0
    %8539 = vmatprep.subr.mxu0 0.0
    %8540 = vmatpush1.msra.mxu0 0.0
    %8541 = vmatprep.subr.mxu0 0.0
    %8542 = vmatpush1.msra.mxu0 0.0
    %8543 = vmatprep.subr.mxu0 0.0
    %8544 = vmatpush1.msra.mxu0 0.0
    %8545 = vmatprep.subr.mxu0 0.0
    %8546 = vmatpush1.msra.mxu0 %v8510
    %8547 = vmatprep.subr.mxu0 0.0
    %8548 = vmatpush2.msra.mxu0 0.0
    %8549 = vmatprep.subr.mxu0 0.0
    %8550 = vmatpush2.msra.mxu0 0.0
    %8551 = vmatprep.subr.mxu0 0.0
    %8552 = vmatpush2.msra.mxu0 0.0
    %8553 = vmatprep.subr.mxu0 0.0
    %8554 = vmatpush2.msra.mxu0 0.0
    %8555 = vmatprep.subr.mxu0 0.0
    %8556 = vmatpush2.msra.mxu0 0.0
    %8557 = vmatprep.subr.mxu0 0.0
    %8558 = vmatpush2.msra.mxu0 0.0
    %8559 = vmatprep.subr.mxu0 0.0
    %8560 = vmatpush2.msra.mxu0 0.0
    %8561 = vmatprep.subr.mxu0 0.0
    %8562 = vmatpush2.msra.mxu0 0.0
    %8563 = vmatprep.subr.mxu0 0.0
    %8564 = vmatpush2.msra.mxu0 0.0
    %8565 = vmatprep.subr.mxu0 0.0
    %8566 = vmatpush2.msra.mxu0 0.0
    %8567 = vmatprep.subr.mxu0 0.0
    %8568 = vmatpush2.msra.mxu0 0.0
    %8569 = vmatprep.subr.mxu0 0.0
    %8570 = vmatpush2.msra.mxu0 0.0
    %8571 = vmatprep.subr.mxu0 0.0
    %8572 = vmatpush2.msra.mxu0 0.0
    %8573 = vmatprep.subr.mxu0 0.0
    %8574 = vmatpush2.msra.mxu0 0.0
    %8575 = vmatprep.subr.mxu0 0.0
    %8576 = vmatpush2.msra.mxu0 0.0
    %8577 = vmatprep.subr.mxu0 0.0
    %8578 = vmatpush2.msra.mxu0 0.0
    %8579 = vmatprep.mubr.f32.mxu0 0.0
    %8580 = vmatmul.mubr.f32.gmra.mxu0 %v8513
    %v8581 = vpop.f32.mrf.mxu0
    %v8582 = vadd.f32 0.0, %v8581
    %v8583 = vpop.f32.mrf.mxu0
    %8584 = vdwg.mxu0
    %8587 = vrot.lane.b32.xlu0 %v7838, 8
    %v8588 = vpop.permute.xlu0 %8587
    %8589 = vrot.lane.b32.xlu0 %v7914, 8
    %v8590 = vpop.permute.xlu0 %8589
    %8595 = vrot.lane.b32.xlu0 %v8172, 16
    %v8596 = vpop.permute.xlu0 %8595
    %8597 = vrot.lane.b32.xlu0 %v8248, 16
    %v8598 = vpop.permute.xlu0 %8597
    %8603 = vrot.lane.b32.xlu0 %v8506, 24
    %v8604 = vpop.permute.xlu0 %8603
    %8605 = vrot.lane.b32.xlu0 %v8582, 24
    %v8606 = vpop.permute.xlu0 %8605
    %v8609 = vsel %vm336, %v7504, %v8588
    %v8610 = vsel %vm336, %v7580, %v8590
    %v8611 = vsel %vm1696, %v8609, %v8596
    %v8612 = vsel %vm1696, %v8610, %v8598
    %v8613 = vsel %vm1699, %v8611, %v8604
    %v8614 = vsel %vm1699, %v8612, %v8606
    %s8615 = scalar_lea.vmem %s18, 16
    %v8616 = vld [vmem:[%s8615] sm:$0xf]
    %v8617 = vld [vmem:[%s8615 + $0x4] sm:$0xf]
    %v8618 = vld [vmem:[%s8615 + $0x8] sm:$0xf]
    %v8619 = vld [vmem:[%s8615 + $0xc] sm:$0xf]
    %s8620 = scalar_lea.vmem %s19, 1
    %v8621 = vld [vmem:[%s8620] sm:$0x1]
    %v8622 = vpack.c.bf16 %v8614, %v8613
    %v8624 = vlaneseq
    %v8625 = vshrl.u32 %v8624, 7
    %v8626 = vsub.s32 0, %v8625
    %v8627 = vrot.slane %v8621, %v8626
    %v8633 = vunpack.c.l.b16 %v8616
    %v8634 = vunpack.c.l.b16 %v8617
    %v8635 = vunpack.c.l.b16 %v8618
    %v8636 = vunpack.c.l.b16 %v8619
    %v8637 = vpack.c.b16 %v8634, %v8633
    %v8638 = vpack.c.b16 %v8636, %v8635
    %v8642 = vsel %vm207, %v8622, 0
    %8644 = vmatprep.subr.bf16.mxu0 0
    %8645 = vmatpush1.bf16.msra.mxu0 0
    %8646 = vmatprep.subr.bf16.mxu0 0
    %8647 = vmatpush1.bf16.msra.mxu0 0
    %8648 = vmatprep.subr.bf16.mxu0 0
    %8649 = vmatpush1.bf16.msra.mxu0 0
    %8650 = vmatprep.subr.bf16.mxu0 0
    %8651 = vmatpush1.bf16.msra.mxu0 0
    %8652 = vmatprep.subr.bf16.mxu0 0
    %8653 = vmatpush1.bf16.msra.mxu0 0
    %8654 = vmatprep.subr.bf16.mxu0 0
    %8655 = vmatpush1.bf16.msra.mxu0 0
    %8656 = vmatprep.subr.bf16.mxu0 0
    %8657 = vmatpush1.bf16.msra.mxu0 %v8638
    %8658 = vmatprep.subr.bf16.mxu0 0
    %8659 = vmatpush1.bf16.msra.mxu0 %v8637
    %8660 = vmatprep.subr.bf16.mxu0 0
    %8661 = vmatpush2.bf16.msra.mxu0 0
    %8662 = vmatprep.subr.bf16.mxu0 0
    %8663 = vmatpush2.bf16.msra.mxu0 0
    %8664 = vmatprep.subr.bf16.mxu0 0
    %8665 = vmatpush2.bf16.msra.mxu0 0
    %8666 = vmatprep.subr.bf16.mxu0 0
    %8667 = vmatpush2.bf16.msra.mxu0 0
    %8668 = vmatprep.subr.bf16.mxu0 0
    %8669 = vmatpush2.bf16.msra.mxu0 0
    %8670 = vmatprep.subr.bf16.mxu0 0
    %8671 = vmatpush2.bf16.msra.mxu0 0
    %8672 = vmatprep.subr.bf16.mxu0 0
    %8673 = vmatpush2.bf16.msra.mxu0 0
    %8674 = vmatprep.subr.bf16.mxu0 0
    %8675 = vmatpush2.bf16.msra.mxu0 0
    %8676 = vmatprep.mubr.bf16.mxu0 0
    %8677 = vmatmul.mubr.bf16.gmra.mxu0 %v8642
    %v8678 = vpop.f32.mrf.mxu0
    %v8679 = vadd.f32 %v8627, %v8678
    %v8680 = vpop.f32.mrf.mxu0
    %v8681 = vpop.f32.mrf.mxu0
    %v8682 = vadd.f32 %v8627, %v8681
    %v8683 = vpop.f32.mrf.mxu0
    %8684 = vdwg.mxu0
    %v8685 = vadd.f32 %v7055, %v8679
    %v8686 = vadd.f32 %v7056, %v8682
    %s8687 = scalar_lea.vmem %s20, 1
    %v8688 = vld [vmem:[%s8687] sm:$0x1]
    %s8689 = scalar_lea.vmem %s21, 1
    %v8690 = vld [vmem:[%s8689] sm:$0x1]
    %v8691 = vsel %vm207, %v8685, 0.0
    %8692 = vadd.xlane.f32.xlu0 %v8691
    %v8693 = vpop.xlane.xlu0 %8692
    %v8694 = vsel %vm207, %v8686, 0.0
    %8695 = vadd.xlane.f32.xlu0 %v8694
    %v8696 = vpop.xlane.xlu0 %8695
    %v8697 = vmul.f32 %v8693, %v214
    %v8698 = vmul.f32 %v8696, %v214
    %v8699 = vsub.f32 %v8685, %v8697
    %v8700 = vsub.f32 %v8686, %v8698
    %v8701 = vmul.f32 %v8699, %v8699
    %v8702 = vmul.f32 %v8700, %v8700
    %v8703 = vsel %vm207, %v8701, 0.0
    %8704 = vadd.xlane.f32.xlu0 %v8703
    %v8705 = vpop.xlane.xlu0 %8704
    %v8706 = vsel %vm207, %v8702, 0.0
    %8707 = vadd.xlane.f32.xlu0 %v8706
    %v8708 = vpop.xlane.xlu0 %8707
    %v8709 = vmul.f32 %v8705, 0.032258064
    %v8710 = vmul.f32 %v8708, 0.032258064
    %v8711 = vrsqrt.pop %v8709
    %v8712 = vmul.f32 %v8709, %v8711
    %vm8713 = vcmp.eq.f32.partialorder %v8709, inf
    %v8714 = vsel %vm8713, %v8709, %v8712
    %vm8715 = vcmp.eq.f32.partialorder %v8709, 0.0
    %v8716 = vand.u32 %v8709, 2147483648
    %v8717 = vsel %vm8715, %v8716, %v8714
    %v8718 = vrsqrt.pop %v8710
    %v8719 = vmul.f32 %v8710, %v8718
    %vm8720 = vcmp.eq.f32.partialorder %v8710, inf
    %v8721 = vsel %vm8720, %v8710, %v8719
    %vm8722 = vcmp.eq.f32.partialorder %v8710, 0.0
    %v8723 = vand.u32 %v8710, 2147483648
    %v8724 = vsel %vm8722, %v8723, %v8721
    %v8725 = vadd.f32 %v8717, 1e-06
    %v8726 = vadd.f32 %v8724, 1e-06
    %v8727 = vrcp.pop %v8725
    %v8728 = vrcp.pop %v8726
    %v8729 = vmul.f32 %v8699, %v8727
    %v8730 = vmul.f32 %v8700, %v8728
    %v8732 = vlaneseq
    %v8733 = vshrl.u32 %v8732, 7
    %v8734 = vsub.s32 0, %v8733
    %v8735 = vrot.slane %v8688, %v8734
    %v8737 = vmul.f32 %v8735, %v8729
    %v8738 = vmul.f32 %v8735, %v8730
    %v8740 = vlaneseq
    %v8741 = vshrl.u32 %v8740, 7
    %v8742 = vsub.s32 0, %v8741
    %v8743 = vrot.slane %v8690, %v8742
    %v8745 = vadd.f32 %v8737, %v8743
    %v8746 = vadd.f32 %v8738, %v8743
    %s8747 = scalar_lea.vmem %s22, 256
    %v8748 = vld [vmem:[%s8747] sm:$0xff]
    %v8749 = vld [vmem:[%s8747 + $0x8] sm:$0xff]
    %v8750 = vld [vmem:[%s8747 + $0x10] sm:$0xff]
    %v8751 = vld [vmem:[%s8747 + $0x18] sm:$0xff]
    %v8752 = vld [vmem:[%s8747 + $0x20] sm:$0xff]
    %v8753 = vld [vmem:[%s8747 + $0x28] sm:$0xff]
    %v8754 = vld [vmem:[%s8747 + $0x30] sm:$0xff]
    %v8755 = vld [vmem:[%s8747 + $0x38] sm:$0xff]
    %v8756 = vld [vmem:[%s8747 + $0x40] sm:$0xff]
    %v8757 = vld [vmem:[%s8747 + $0x48] sm:$0xff]
    %v8758 = vld [vmem:[%s8747 + $0x50] sm:$0xff]
    %v8759 = vld [vmem:[%s8747 + $0x58] sm:$0xff]
    %v8760 = vld [vmem:[%s8747 + $0x60] sm:$0xff]
    %v8761 = vld [vmem:[%s8747 + $0x68] sm:$0xff]
    %v8762 = vld [vmem:[%s8747 + $0x70] sm:$0xff]
    %v8763 = vld [vmem:[%s8747 + $0x78] sm:$0xff]
    %v8764 = vld [vmem:[%s8747 + $0x80] sm:$0xff]
    %v8765 = vld [vmem:[%s8747 + $0x88] sm:$0xff]
    %v8766 = vld [vmem:[%s8747 + $0x90] sm:$0xff]
    %v8767 = vld [vmem:[%s8747 + $0x98] sm:$0xff]
    %v8768 = vld [vmem:[%s8747 + $0xa0] sm:$0xff]
    %v8769 = vld [vmem:[%s8747 + $0xa8] sm:$0xff]
    %v8770 = vld [vmem:[%s8747 + $0xb0] sm:$0xff]
    %v8771 = vld [vmem:[%s8747 + $0xb8] sm:$0xff]
    %v8772 = vld [vmem:[%s8747 + $0xc0] sm:$0xff]
    %v8773 = vld [vmem:[%s8747 + $0xc8] sm:$0xff]
    %v8774 = vld [vmem:[%s8747 + $0xd0] sm:$0xff]
    %v8775 = vld [vmem:[%s8747 + $0xd8] sm:$0xff]
    %v8776 = vld [vmem:[%s8747 + $0xe0] sm:$0xff]
    %v8777 = vld [vmem:[%s8747 + $0xe8] sm:$0xff]
    %v8778 = vld [vmem:[%s8747 + $0xf0] sm:$0xff]
    %v8779 = vld [vmem:[%s8747 + $0xf8] sm:$0xff]
    %s8780 = scalar_lea.vmem %s23, 16
    %v8781 = vld [vmem:[%s8780] sm:$0xff]
    %v8782 = vld [vmem:[%s8780 + $0x8] sm:$0xff]
    %v8783 = vpack.c.bf16 %v8746, %v8745
    %v8786 = vlaneseq
    %v8787 = vshrl.u32 %v8786, 7
    %v8788 = vsub.s32 0, %v8787
    %v8789 = vrot.slane %v8781, %v8788
    %v8790 = vlaneseq
    %v8791 = vshrl.u32 %v8790, 7
    %v8792 = vsub.s32 1, %v8791
    %v8793 = vrot.slane %v8781, %v8792
    %v8794 = vlaneseq
    %v8795 = vshrl.u32 %v8794, 7
    %v8796 = vsub.s32 2, %v8795
    %v8797 = vrot.slane %v8781, %v8796
    %v8798 = vlaneseq
    %v8799 = vshrl.u32 %v8798, 7
    %v8800 = vsub.s32 3, %v8799
    %v8801 = vrot.slane %v8781, %v8800
    %v8802 = vlaneseq
    %v8803 = vshrl.u32 %v8802, 7
    %v8804 = vsub.s32 4, %v8803
    %v8805 = vrot.slane %v8781, %v8804
    %v8806 = vlaneseq
    %v8807 = vshrl.u32 %v8806, 7
    %v8808 = vsub.s32 5, %v8807
    %v8809 = vrot.slane %v8781, %v8808
    %v8810 = vlaneseq
    %v8811 = vshrl.u32 %v8810, 7
    %v8812 = vsub.s32 6, %v8811
    %v8813 = vrot.slane %v8781, %v8812
    %v8814 = vlaneseq
    %v8815 = vshrl.u32 %v8814, 7
    %v8816 = vsub.s32 7, %v8815
    %v8817 = vrot.slane %v8781, %v8816
    %v8818 = vlaneseq
    %v8819 = vshrl.u32 %v8818, 7
    %v8820 = vsub.s32 0, %v8819
    %v8821 = vrot.slane %v8782, %v8820
    %v8822 = vlaneseq
    %v8823 = vshrl.u32 %v8822, 7
    %v8824 = vsub.s32 1, %v8823
    %v8825 = vrot.slane %v8782, %v8824
    %v8826 = vlaneseq
    %v8827 = vshrl.u32 %v8826, 7
    %v8828 = vsub.s32 2, %v8827
    %v8829 = vrot.slane %v8782, %v8828
    %v8830 = vlaneseq
    %v8831 = vshrl.u32 %v8830, 7
    %v8832 = vsub.s32 3, %v8831
    %v8833 = vrot.slane %v8782, %v8832
    %v8834 = vlaneseq
    %v8835 = vshrl.u32 %v8834, 7
    %v8836 = vsub.s32 4, %v8835
    %v8837 = vrot.slane %v8782, %v8836
    %v8838 = vlaneseq
    %v8839 = vshrl.u32 %v8838, 7
    %v8840 = vsub.s32 5, %v8839
    %v8841 = vrot.slane %v8782, %v8840
    %v8842 = vlaneseq
    %v8843 = vshrl.u32 %v8842, 7
    %v8844 = vsub.s32 6, %v8843
    %v8845 = vrot.slane %v8782, %v8844
    %v8846 = vlaneseq
    %v8847 = vshrl.u32 %v8846, 7
    %v8848 = vsub.s32 7, %v8847
    %v8849 = vrot.slane %v8782, %v8848
    %v8898 = vunpack.c.l.b16 %v8748
    %v8899 = vunpack.c.h.b16 %v8748
    %v8900 = vunpack.c.l.b16 %v8749
    %v8901 = vunpack.c.h.b16 %v8749
    %v8902 = vunpack.c.l.b16 %v8750
    %v8903 = vunpack.c.h.b16 %v8750
    %v8904 = vunpack.c.l.b16 %v8751
    %v8905 = vunpack.c.h.b16 %v8751
    %v8906 = vunpack.c.l.b16 %v8752
    %v8907 = vunpack.c.h.b16 %v8752
    %v8908 = vunpack.c.l.b16 %v8753
    %v8909 = vunpack.c.h.b16 %v8753
    %v8910 = vunpack.c.l.b16 %v8754
    %v8911 = vunpack.c.h.b16 %v8754
    %v8912 = vunpack.c.l.b16 %v8755
    %v8913 = vunpack.c.h.b16 %v8755
    %v8914 = vunpack.c.l.b16 %v8756
    %v8915 = vunpack.c.h.b16 %v8756
    %v8916 = vunpack.c.l.b16 %v8757
    %v8917 = vunpack.c.h.b16 %v8757
    %v8918 = vunpack.c.l.b16 %v8758
    %v8919 = vunpack.c.h.b16 %v8758
    %v8920 = vunpack.c.l.b16 %v8759
    %v8921 = vunpack.c.h.b16 %v8759
    %v8922 = vunpack.c.l.b16 %v8760
    %v8923 = vunpack.c.h.b16 %v8760
    %v8924 = vunpack.c.l.b16 %v8761
    %v8925 = vunpack.c.h.b16 %v8761
    %v8926 = vunpack.c.l.b16 %v8762
    %v8927 = vunpack.c.h.b16 %v8762
    %v8928 = vunpack.c.l.b16 %v8763
    %v8929 = vunpack.c.h.b16 %v8763
    %v8930 = vunpack.c.l.b16 %v8764
    %v8931 = vunpack.c.h.b16 %v8764
    %v8932 = vunpack.c.l.b16 %v8765
    %v8933 = vunpack.c.h.b16 %v8765
    %v8934 = vunpack.c.l.b16 %v8766
    %v8935 = vunpack.c.h.b16 %v8766
    %v8936 = vunpack.c.l.b16 %v8767
    %v8937 = vunpack.c.h.b16 %v8767
    %v8938 = vunpack.c.l.b16 %v8768
    %v8939 = vunpack.c.h.b16 %v8768
    %v8940 = vunpack.c.l.b16 %v8769
    %v8941 = vunpack.c.h.b16 %v8769
    %v8942 = vunpack.c.l.b16 %v8770
    %v8943 = vunpack.c.h.b16 %v8770
    %v8944 = vunpack.c.l.b16 %v8771
    %v8945 = vunpack.c.h.b16 %v8771
    %v8946 = vunpack.c.l.b16 %v8772
    %v8947 = vunpack.c.h.b16 %v8772
    %v8948 = vunpack.c.l.b16 %v8773
    %v8949 = vunpack.c.h.b16 %v8773
    %v8950 = vunpack.c.l.b16 %v8774
    %v8951 = vunpack.c.h.b16 %v8774
    %v8952 = vunpack.c.l.b16 %v8775
    %v8953 = vunpack.c.h.b16 %v8775
    %v8954 = vunpack.c.l.b16 %v8776
    %v8955 = vunpack.c.h.b16 %v8776
    %v8956 = vunpack.c.l.b16 %v8777
    %v8957 = vunpack.c.h.b16 %v8777
    %v8958 = vunpack.c.l.b16 %v8778
    %v8959 = vunpack.c.h.b16 %v8778
    %v8960 = vunpack.c.l.b16 %v8779
    %v8961 = vunpack.c.h.b16 %v8779
    %v8962 = vpack.c.b16 %v8914, %v8898
    %v8963 = vpack.c.b16 %v8915, %v8899
    %v8964 = vpack.c.b16 %v8916, %v8900
    %v8965 = vpack.c.b16 %v8917, %v8901
    %v8966 = vpack.c.b16 %v8918, %v8902
    %v8967 = vpack.c.b16 %v8919, %v8903
    %v8968 = vpack.c.b16 %v8920, %v8904
    %v8969 = vpack.c.b16 %v8921, %v8905
    %v8970 = vpack.c.b16 %v8922, %v8906
    %v8971 = vpack.c.b16 %v8923, %v8907
    %v8972 = vpack.c.b16 %v8924, %v8908
    %v8973 = vpack.c.b16 %v8925, %v8909
    %v8974 = vpack.c.b16 %v8926, %v8910
    %v8975 = vpack.c.b16 %v8927, %v8911
    %v8976 = vpack.c.b16 %v8928, %v8912
    %v8977 = vpack.c.b16 %v8929, %v8913
    %v8978 = vpack.c.b16 %v8946, %v8930
    %v8979 = vpack.c.b16 %v8947, %v8931
    %v8980 = vpack.c.b16 %v8948, %v8932
    %v8981 = vpack.c.b16 %v8949, %v8933
    %v8982 = vpack.c.b16 %v8950, %v8934
    %v8983 = vpack.c.b16 %v8951, %v8935
    %v8984 = vpack.c.b16 %v8952, %v8936
    %v8985 = vpack.c.b16 %v8953, %v8937
    %v8986 = vpack.c.b16 %v8954, %v8938
    %v8987 = vpack.c.b16 %v8955, %v8939
    %v8988 = vpack.c.b16 %v8956, %v8940
    %v8989 = vpack.c.b16 %v8957, %v8941
    %v8990 = vpack.c.b16 %v8958, %v8942
    %v8991 = vpack.c.b16 %v8959, %v8943
    %v8992 = vpack.c.b16 %v8960, %v8944
    %v8993 = vpack.c.b16 %v8961, %v8945
    %v9027 = vsel %vm207, %v8783, 0
    %9029 = vmatprep.subr.bf16.mxu0 0
    %9030 = vmatpush1.bf16.msra.mxu0 0
    %9031 = vmatprep.subr.bf16.mxu0 0
    %9032 = vmatpush1.bf16.msra.mxu0 0
    %9033 = vmatprep.subr.bf16.mxu0 0
    %9034 = vmatpush1.bf16.msra.mxu0 0
    %9035 = vmatprep.subr.bf16.mxu0 0
    %9036 = vmatpush1.bf16.msra.mxu0 0
    %9037 = vmatprep.subr.bf16.mxu0 0
    %9038 = vmatpush1.bf16.msra.mxu0 0
    %9039 = vmatprep.subr.bf16.mxu0 0
    %9040 = vmatpush1.bf16.msra.mxu0 0
    %9041 = vmatprep.subr.bf16.mxu0 %v8979
    %9042 = vmatpush1.bf16.msra.mxu0 %v8978
    %9043 = vmatprep.subr.bf16.mxu0 %v8963
    %9044 = vmatpush1.bf16.msra.mxu0 %v8962
    %9045 = vmatprep.subr.bf16.mxu0 0
    %9046 = vmatpush2.bf16.msra.mxu0 0
    %9047 = vmatprep.subr.bf16.mxu0 0
    %9048 = vmatpush2.bf16.msra.mxu0 0
    %9049 = vmatprep.subr.bf16.mxu0 0
    %9050 = vmatpush2.bf16.msra.mxu0 0
    %9051 = vmatprep.subr.bf16.mxu0 0
    %9052 = vmatpush2.bf16.msra.mxu0 0
    %9053 = vmatprep.subr.bf16.mxu0 0
    %9054 = vmatpush2.bf16.msra.mxu0 0
    %9055 = vmatprep.subr.bf16.mxu0 0
    %9056 = vmatpush2.bf16.msra.mxu0 0
    %9057 = vmatprep.subr.bf16.mxu0 0
    %9058 = vmatpush2.bf16.msra.mxu0 0
    %9059 = vmatprep.subr.bf16.mxu0 0
    %9060 = vmatpush2.bf16.msra.mxu0 0
    %9061 = vmatprep.mubr.bf16.mxu0 0
    %9062 = vmatmul.mubr.bf16.gmra.mxu0 %v9027
    %v9063 = vpop.f32.mrf.mxu0
    %v9064 = vadd.f32 %v8789, %v9063
    %v9065 = vpop.f32.mrf.mxu0
    %v9066 = vadd.f32 %v8793, %v9065
    %v9067 = vpop.f32.mrf.mxu0
    %v9068 = vadd.f32 %v8789, %v9067
    %v9069 = vpop.f32.mrf.mxu0
    %v9070 = vadd.f32 %v8793, %v9069
    %9071 = vdwg.mxu0
    %9072 = vmatprep.subr.bf16.mxu0 0
    %9073 = vmatpush1.bf16.msra.mxu0 0
    %9074 = vmatprep.subr.bf16.mxu0 0
    %9075 = vmatpush1.bf16.msra.mxu0 0
    %9076 = vmatprep.subr.bf16.mxu0 0
    %9077 = vmatpush1.bf16.msra.mxu0 0
    %9078 = vmatprep.subr.bf16.mxu0 0
    %9079 = vmatpush1.bf16.msra.mxu0 0
    %9080 = vmatprep.subr.bf16.mxu0 0
    %9081 = vmatpush1.bf16.msra.mxu0 0
    %9082 = vmatprep.subr.bf16.mxu0 0
    %9083 = vmatpush1.bf16.msra.mxu0 0
    %9084 = vmatprep.subr.bf16.mxu0 %v8981
    %9085 = vmatpush1.bf16.msra.mxu0 %v8980
    %9086 = vmatprep.subr.bf16.mxu0 %v8965
    %9087 = vmatpush1.bf16.msra.mxu0 %v8964
    %9088 = vmatprep.subr.bf16.mxu0 0
    %9089 = vmatpush2.bf16.msra.mxu0 0
    %9090 = vmatprep.subr.bf16.mxu0 0
    %9091 = vmatpush2.bf16.msra.mxu0 0
    %9092 = vmatprep.subr.bf16.mxu0 0
    %9093 = vmatpush2.bf16.msra.mxu0 0
    %9094 = vmatprep.subr.bf16.mxu0 0
    %9095 = vmatpush2.bf16.msra.mxu0 0
    %9096 = vmatprep.subr.bf16.mxu0 0
    %9097 = vmatpush2.bf16.msra.mxu0 0
    %9098 = vmatprep.subr.bf16.mxu0 0
    %9099 = vmatpush2.bf16.msra.mxu0 0
    %9100 = vmatprep.subr.bf16.mxu0 0
    %9101 = vmatpush2.bf16.msra.mxu0 0
    %9102 = vmatprep.subr.bf16.mxu0 0
    %9103 = vmatpush2.bf16.msra.mxu0 0
    %9104 = vmatprep.mubr.bf16.mxu0 0
    %9105 = vmatmul.mubr.bf16.gmra.mxu0 %v9027
    %v9106 = vpop.f32.mrf.mxu0
    %v9107 = vadd.f32 %v8797, %v9106
    %v9108 = vpop.f32.mrf.mxu0
    %v9109 = vadd.f32 %v8801, %v9108
    %v9110 = vpop.f32.mrf.mxu0
    %v9111 = vadd.f32 %v8797, %v9110
    %v9112 = vpop.f32.mrf.mxu0
    %v9113 = vadd.f32 %v8801, %v9112
    %9114 = vdwg.mxu0
    %9115 = vmatprep.subr.bf16.mxu0 0
    %9116 = vmatpush1.bf16.msra.mxu0 0
    %9117 = vmatprep.subr.bf16.mxu0 0
    %9118 = vmatpush1.bf16.msra.mxu0 0
    %9119 = vmatprep.subr.bf16.mxu0 0
    %9120 = vmatpush1.bf16.msra.mxu0 0
    %9121 = vmatprep.subr.bf16.mxu0 0
    %9122 = vmatpush1.bf16.msra.mxu0 0
    %9123 = vmatprep.subr.bf16.mxu0 0
    %9124 = vmatpush1.bf16.msra.mxu0 0
    %9125 = vmatprep.subr.bf16.mxu0 0
    %9126 = vmatpush1.bf16.msra.mxu0 0
    %9127 = vmatprep.subr.bf16.mxu0 %v8983
    %9128 = vmatpush1.bf16.msra.mxu0 %v8982
    %9129 = vmatprep.subr.bf16.mxu0 %v8967
    %9130 = vmatpush1.bf16.msra.mxu0 %v8966
    %9131 = vmatprep.subr.bf16.mxu0 0
    %9132 = vmatpush2.bf16.msra.mxu0 0
    %9133 = vmatprep.subr.bf16.mxu0 0
    %9134 = vmatpush2.bf16.msra.mxu0 0
    %9135 = vmatprep.subr.bf16.mxu0 0
    %9136 = vmatpush2.bf16.msra.mxu0 0
    %9137 = vmatprep.subr.bf16.mxu0 0
    %9138 = vmatpush2.bf16.msra.mxu0 0
    %9139 = vmatprep.subr.bf16.mxu0 0
    %9140 = vmatpush2.bf16.msra.mxu0 0
    %9141 = vmatprep.subr.bf16.mxu0 0
    %9142 = vmatpush2.bf16.msra.mxu0 0
    %9143 = vmatprep.subr.bf16.mxu0 0
    %9144 = vmatpush2.bf16.msra.mxu0 0
    %9145 = vmatprep.subr.bf16.mxu0 0
    %9146 = vmatpush2.bf16.msra.mxu0 0
    %9147 = vmatprep.mubr.bf16.mxu0 0
    %9148 = vmatmul.mubr.bf16.gmra.mxu0 %v9027
    %v9149 = vpop.f32.mrf.mxu0
    %v9150 = vadd.f32 %v8805, %v9149
    %v9151 = vpop.f32.mrf.mxu0
    %v9152 = vadd.f32 %v8809, %v9151
    %v9153 = vpop.f32.mrf.mxu0
    %v9154 = vadd.f32 %v8805, %v9153
    %v9155 = vpop.f32.mrf.mxu0
    %v9156 = vadd.f32 %v8809, %v9155
    %9157 = vdwg.mxu0
    %9158 = vmatprep.subr.bf16.mxu0 0
    %9159 = vmatpush1.bf16.msra.mxu0 0
    %9160 = vmatprep.subr.bf16.mxu0 0
    %9161 = vmatpush1.bf16.msra.mxu0 0
    %9162 = vmatprep.subr.bf16.mxu0 0
    %9163 = vmatpush1.bf16.msra.mxu0 0
    %9164 = vmatprep.subr.bf16.mxu0 0
    %9165 = vmatpush1.bf16.msra.mxu0 0
    %9166 = vmatprep.subr.bf16.mxu0 0
    %9167 = vmatpush1.bf16.msra.mxu0 0
    %9168 = vmatprep.subr.bf16.mxu0 0
    %9169 = vmatpush1.bf16.msra.mxu0 0
    %9170 = vmatprep.subr.bf16.mxu0 %v8985
    %9171 = vmatpush1.bf16.msra.mxu0 %v8984
    %9172 = vmatprep.subr.bf16.mxu0 %v8969
    %9173 = vmatpush1.bf16.msra.mxu0 %v8968
    %9174 = vmatprep.subr.bf16.mxu0 0
    %9175 = vmatpush2.bf16.msra.mxu0 0
    %9176 = vmatprep.subr.bf16.mxu0 0
    %9177 = vmatpush2.bf16.msra.mxu0 0
    %9178 = vmatprep.subr.bf16.mxu0 0
    %9179 = vmatpush2.bf16.msra.mxu0 0
    %9180 = vmatprep.subr.bf16.mxu0 0
    %9181 = vmatpush2.bf16.msra.mxu0 0
    %9182 = vmatprep.subr.bf16.mxu0 0
    %9183 = vmatpush2.bf16.msra.mxu0 0
    %9184 = vmatprep.subr.bf16.mxu0 0
    %9185 = vmatpush2.bf16.msra.mxu0 0
    %9186 = vmatprep.subr.bf16.mxu0 0
    %9187 = vmatpush2.bf16.msra.mxu0 0
    %9188 = vmatprep.subr.bf16.mxu0 0
    %9189 = vmatpush2.bf16.msra.mxu0 0
    %9190 = vmatprep.mubr.bf16.mxu0 0
    %9191 = vmatmul.mubr.bf16.gmra.mxu0 %v9027
    %v9192 = vpop.f32.mrf.mxu0
    %v9193 = vadd.f32 %v8813, %v9192
    %v9194 = vpop.f32.mrf.mxu0
    %v9195 = vadd.f32 %v8817, %v9194
    %v9196 = vpop.f32.mrf.mxu0
    %v9197 = vadd.f32 %v8813, %v9196
    %v9198 = vpop.f32.mrf.mxu0
    %v9199 = vadd.f32 %v8817, %v9198
    %9200 = vdwg.mxu0
    %9201 = vmatprep.subr.bf16.mxu0 0
    %9202 = vmatpush1.bf16.msra.mxu0 0
    %9203 = vmatprep.subr.bf16.mxu0 0
    %9204 = vmatpush1.bf16.msra.mxu0 0
    %9205 = vmatprep.subr.bf16.mxu0 0
    %9206 = vmatpush1.bf16.msra.mxu0 0
    %9207 = vmatprep.subr.bf16.mxu0 0
    %9208 = vmatpush1.bf16.msra.mxu0 0
    %9209 = vmatprep.subr.bf16.mxu0 0
    %9210 = vmatpush1.bf16.msra.mxu0 0
    %9211 = vmatprep.subr.bf16.mxu0 0
    %9212 = vmatpush1.bf16.msra.mxu0 0
    %9213 = vmatprep.subr.bf16.mxu0 %v8987
    %9214 = vmatpush1.bf16.msra.mxu0 %v8986
    %9215 = vmatprep.subr.bf16.mxu0 %v8971
    %9216 = vmatpush1.bf16.msra.mxu0 %v8970
    %9217 = vmatprep.subr.bf16.mxu0 0
    %9218 = vmatpush2.bf16.msra.mxu0 0
    %9219 = vmatprep.subr.bf16.mxu0 0
    %9220 = vmatpush2.bf16.msra.mxu0 0
    %9221 = vmatprep.subr.bf16.mxu0 0
    %9222 = vmatpush2.bf16.msra.mxu0 0
    %9223 = vmatprep.subr.bf16.mxu0 0
    %9224 = vmatpush2.bf16.msra.mxu0 0
    %9225 = vmatprep.subr.bf16.mxu0 0
    %9226 = vmatpush2.bf16.msra.mxu0 0
    %9227 = vmatprep.subr.bf16.mxu0 0
    %9228 = vmatpush2.bf16.msra.mxu0 0
    %9229 = vmatprep.subr.bf16.mxu0 0
    %9230 = vmatpush2.bf16.msra.mxu0 0
    %9231 = vmatprep.subr.bf16.mxu0 0
    %9232 = vmatpush2.bf16.msra.mxu0 0
    %9233 = vmatprep.mubr.bf16.mxu0 0
    %9234 = vmatmul.mubr.bf16.gmra.mxu0 %v9027
    %v9235 = vpop.f32.mrf.mxu0
    %v9236 = vadd.f32 %v8821, %v9235
    %v9237 = vpop.f32.mrf.mxu0
    %v9238 = vadd.f32 %v8825, %v9237
    %v9239 = vpop.f32.mrf.mxu0
    %v9240 = vadd.f32 %v8821, %v9239
    %v9241 = vpop.f32.mrf.mxu0
    %v9242 = vadd.f32 %v8825, %v9241
    %9243 = vdwg.mxu0
    %9244 = vmatprep.subr.bf16.mxu0 0
    %9245 = vmatpush1.bf16.msra.mxu0 0
    %9246 = vmatprep.subr.bf16.mxu0 0
    %9247 = vmatpush1.bf16.msra.mxu0 0
    %9248 = vmatprep.subr.bf16.mxu0 0
    %9249 = vmatpush1.bf16.msra.mxu0 0
    %9250 = vmatprep.subr.bf16.mxu0 0
    %9251 = vmatpush1.bf16.msra.mxu0 0
    %9252 = vmatprep.subr.bf16.mxu0 0
    %9253 = vmatpush1.bf16.msra.mxu0 0
    %9254 = vmatprep.subr.bf16.mxu0 0
    %9255 = vmatpush1.bf16.msra.mxu0 0
    %9256 = vmatprep.subr.bf16.mxu0 %v8989
    %9257 = vmatpush1.bf16.msra.mxu0 %v8988
    %9258 = vmatprep.subr.bf16.mxu0 %v8973
    %9259 = vmatpush1.bf16.msra.mxu0 %v8972
    %9260 = vmatprep.subr.bf16.mxu0 0
    %9261 = vmatpush2.bf16.msra.mxu0 0
    %9262 = vmatprep.subr.bf16.mxu0 0
    %9263 = vmatpush2.bf16.msra.mxu0 0
    %9264 = vmatprep.subr.bf16.mxu0 0
    %9265 = vmatpush2.bf16.msra.mxu0 0
    %9266 = vmatprep.subr.bf16.mxu0 0
    %9267 = vmatpush2.bf16.msra.mxu0 0
    %9268 = vmatprep.subr.bf16.mxu0 0
    %9269 = vmatpush2.bf16.msra.mxu0 0
    %9270 = vmatprep.subr.bf16.mxu0 0
    %9271 = vmatpush2.bf16.msra.mxu0 0
    %9272 = vmatprep.subr.bf16.mxu0 0
    %9273 = vmatpush2.bf16.msra.mxu0 0
    %9274 = vmatprep.subr.bf16.mxu0 0
    %9275 = vmatpush2.bf16.msra.mxu0 0
    %9276 = vmatprep.mubr.bf16.mxu0 0
    %9277 = vmatmul.mubr.bf16.gmra.mxu0 %v9027
    %v9278 = vpop.f32.mrf.mxu0
    %v9279 = vadd.f32 %v8829, %v9278
    %v9280 = vpop.f32.mrf.mxu0
    %v9281 = vadd.f32 %v8833, %v9280
    %v9282 = vpop.f32.mrf.mxu0
    %v9283 = vadd.f32 %v8829, %v9282
    %v9284 = vpop.f32.mrf.mxu0
    %v9285 = vadd.f32 %v8833, %v9284
    %9286 = vdwg.mxu0
    %9287 = vmatprep.subr.bf16.mxu0 0
    %9288 = vmatpush1.bf16.msra.mxu0 0
    %9289 = vmatprep.subr.bf16.mxu0 0
    %9290 = vmatpush1.bf16.msra.mxu0 0
    %9291 = vmatprep.subr.bf16.mxu0 0
    %9292 = vmatpush1.bf16.msra.mxu0 0
    %9293 = vmatprep.subr.bf16.mxu0 0
    %9294 = vmatpush1.bf16.msra.mxu0 0
    %9295 = vmatprep.subr.bf16.mxu0 0
    %9296 = vmatpush1.bf16.msra.mxu0 0
    %9297 = vmatprep.subr.bf16.mxu0 0
    %9298 = vmatpush1.bf16.msra.mxu0 0
    %9299 = vmatprep.subr.bf16.mxu0 %v8991
    %9300 = vmatpush1.bf16.msra.mxu0 %v8990
    %9301 = vmatprep.subr.bf16.mxu0 %v8975
    %9302 = vmatpush1.bf16.msra.mxu0 %v8974
    %9303 = vmatprep.subr.bf16.mxu0 0
    %9304 = vmatpush2.bf16.msra.mxu0 0
    %9305 = vmatprep.subr.bf16.mxu0 0
    %9306 = vmatpush2.bf16.msra.mxu0 0
    %9307 = vmatprep.subr.bf16.mxu0 0
    %9308 = vmatpush2.bf16.msra.mxu0 0
    %9309 = vmatprep.subr.bf16.mxu0 0
    %9310 = vmatpush2.bf16.msra.mxu0 0
    %9311 = vmatprep.subr.bf16.mxu0 0
    %9312 = vmatpush2.bf16.msra.mxu0 0
    %9313 = vmatprep.subr.bf16.mxu0 0
    %9314 = vmatpush2.bf16.msra.mxu0 0
    %9315 = vmatprep.subr.bf16.mxu0 0
    %9316 = vmatpush2.bf16.msra.mxu0 0
    %9317 = vmatprep.subr.bf16.mxu0 0
    %9318 = vmatpush2.bf16.msra.mxu0 0
    %9319 = vmatprep.mubr.bf16.mxu0 0
    %9320 = vmatmul.mubr.bf16.gmra.mxu0 %v9027
    %v9321 = vpop.f32.mrf.mxu0
    %v9322 = vadd.f32 %v8837, %v9321
    %v9323 = vpop.f32.mrf.mxu0
    %v9324 = vadd.f32 %v8841, %v9323
    %v9325 = vpop.f32.mrf.mxu0
    %v9326 = vadd.f32 %v8837, %v9325
    %v9327 = vpop.f32.mrf.mxu0
    %v9328 = vadd.f32 %v8841, %v9327
    %9329 = vdwg.mxu0
    %9330 = vmatprep.subr.bf16.mxu0 0
    %9331 = vmatpush1.bf16.msra.mxu0 0
    %9332 = vmatprep.subr.bf16.mxu0 0
    %9333 = vmatpush1.bf16.msra.mxu0 0
    %9334 = vmatprep.subr.bf16.mxu0 0
    %9335 = vmatpush1.bf16.msra.mxu0 0
    %9336 = vmatprep.subr.bf16.mxu0 0
    %9337 = vmatpush1.bf16.msra.mxu0 0
    %9338 = vmatprep.subr.bf16.mxu0 0
    %9339 = vmatpush1.bf16.msra.mxu0 0
    %9340 = vmatprep.subr.bf16.mxu0 0
    %9341 = vmatpush1.bf16.msra.mxu0 0
    %9342 = vmatprep.subr.bf16.mxu0 %v8993
    %9343 = vmatpush1.bf16.msra.mxu0 %v8992
    %9344 = vmatprep.subr.bf16.mxu0 %v8977
    %9345 = vmatpush1.bf16.msra.mxu0 %v8976
    %9346 = vmatprep.subr.bf16.mxu0 0
    %9347 = vmatpush2.bf16.msra.mxu0 0
    %9348 = vmatprep.subr.bf16.mxu0 0
    %9349 = vmatpush2.bf16.msra.mxu0 0
    %9350 = vmatprep.subr.bf16.mxu0 0
    %9351 = vmatpush2.bf16.msra.mxu0 0
    %9352 = vmatprep.subr.bf16.mxu0 0
    %9353 = vmatpush2.bf16.msra.mxu0 0
    %9354 = vmatprep.subr.bf16.mxu0 0
    %9355 = vmatpush2.bf16.msra.mxu0 0
    %9356 = vmatprep.subr.bf16.mxu0 0
    %9357 = vmatpush2.bf16.msra.mxu0 0
    %9358 = vmatprep.subr.bf16.mxu0 0
    %9359 = vmatpush2.bf16.msra.mxu0 0
    %9360 = vmatprep.subr.bf16.mxu0 0
    %9361 = vmatpush2.bf16.msra.mxu0 0
    %9362 = vmatprep.mubr.bf16.mxu0 0
    %9363 = vmatmul.mubr.bf16.gmra.mxu0 %v9027
    %v9364 = vpop.f32.mrf.mxu0
    %v9365 = vadd.f32 %v8845, %v9364
    %v9366 = vpop.f32.mrf.mxu0
    %v9367 = vadd.f32 %v8849, %v9366
    %v9368 = vpop.f32.mrf.mxu0
    %v9369 = vadd.f32 %v8845, %v9368
    %v9370 = vpop.f32.mrf.mxu0
    %v9371 = vadd.f32 %v8849, %v9370
    %9372 = vdwg.mxu0
    %v9373 = vmax.f32 %v9064, 0.0
    %v9374 = vmax.f32 %v9066, 0.0
    %v9375 = vmax.f32 %v9107, 0.0
    %v9376 = vmax.f32 %v9109, 0.0
    %v9377 = vmax.f32 %v9150, 0.0
    %v9378 = vmax.f32 %v9152, 0.0
    %v9379 = vmax.f32 %v9193, 0.0
    %v9380 = vmax.f32 %v9195, 0.0
    %v9381 = vmax.f32 %v9236, 0.0
    %v9382 = vmax.f32 %v9238, 0.0
    %v9383 = vmax.f32 %v9279, 0.0
    %v9384 = vmax.f32 %v9281, 0.0
    %v9385 = vmax.f32 %v9322, 0.0
    %v9386 = vmax.f32 %v9324, 0.0
    %v9387 = vmax.f32 %v9365, 0.0
    %v9388 = vmax.f32 %v9367, 0.0
    %v9389 = vmax.f32 %v9068, 0.0
    %v9390 = vmax.f32 %v9070, 0.0
    %v9391 = vmax.f32 %v9111, 0.0
    %v9392 = vmax.f32 %v9113, 0.0
    %v9393 = vmax.f32 %v9154, 0.0
    %v9394 = vmax.f32 %v9156, 0.0
    %v9395 = vmax.f32 %v9197, 0.0
    %v9396 = vmax.f32 %v9199, 0.0
    %v9397 = vmax.f32 %v9240, 0.0
    %v9398 = vmax.f32 %v9242, 0.0
    %v9399 = vmax.f32 %v9283, 0.0
    %v9400 = vmax.f32 %v9285, 0.0
    %v9401 = vmax.f32 %v9326, 0.0
    %v9402 = vmax.f32 %v9328, 0.0
    %v9403 = vmax.f32 %v9369, 0.0
    %v9404 = vmax.f32 %v9371, 0.0
    %s9405 = scalar_lea.vmem %s24, 1024
    %v9406 = vld [vmem:[%s9405] sm:$0xf]
    %v9407 = vld [vmem:[%s9405 + $0x4] sm:$0xf]
    %v9408 = vld [vmem:[%s9405 + $0x8] sm:$0xf]
    %v9409 = vld [vmem:[%s9405 + $0xc] sm:$0xf]
    %v9410 = vld [vmem:[%s9405 + $0x10] sm:$0xf]
    %v9411 = vld [vmem:[%s9405 + $0x14] sm:$0xf]
    %v9412 = vld [vmem:[%s9405 + $0x18] sm:$0xf]
    %v9413 = vld [vmem:[%s9405 + $0x1c] sm:$0xf]
    %v9414 = vld [vmem:[%s9405 + $0x20] sm:$0xf]
    %v9415 = vld [vmem:[%s9405 + $0x24] sm:$0xf]
    %v9416 = vld [vmem:[%s9405 + $0x28] sm:$0xf]
    %v9417 = vld [vmem:[%s9405 + $0x2c] sm:$0xf]
    %v9418 = vld [vmem:[%s9405 + $0x30] sm:$0xf]
    %v9419 = vld [vmem:[%s9405 + $0x34] sm:$0xf]
    %v9420 = vld [vmem:[%s9405 + $0x38] sm:$0xf]
    %v9421 = vld [vmem:[%s9405 + $0x3c] sm:$0xf]
    %v9422 = vld [vmem:[%s9405 + $0x40] sm:$0xf]
    %v9423 = vld [vmem:[%s9405 + $0x44] sm:$0xf]
    %v9424 = vld [vmem:[%s9405 + $0x48] sm:$0xf]
    %v9425 = vld [vmem:[%s9405 + $0x4c] sm:$0xf]
    %v9426 = vld [vmem:[%s9405 + $0x50] sm:$0xf]
    %v9427 = vld [vmem:[%s9405 + $0x54] sm:$0xf]
    %v9428 = vld [vmem:[%s9405 + $0x58] sm:$0xf]
    %v9429 = vld [vmem:[%s9405 + $0x5c] sm:$0xf]
    %v9430 = vld [vmem:[%s9405 + $0x60] sm:$0xf]
    %v9431 = vld [vmem:[%s9405 + $0x64] sm:$0xf]
    %v9432 = vld [vmem:[%s9405 + $0x68] sm:$0xf]
    %v9433 = vld [vmem:[%s9405 + $0x6c] sm:$0xf]
    %v9434 = vld [vmem:[%s9405 + $0x70] sm:$0xf]
    %v9435 = vld [vmem:[%s9405 + $0x74] sm:$0xf]
    %v9436 = vld [vmem:[%s9405 + $0x78] sm:$0xf]
    %v9437 = vld [vmem:[%s9405 + $0x7c] sm:$0xf]
    %v9438 = vld [vmem:[%s9405 + $0x80] sm:$0xf]
    %v9439 = vld [vmem:[%s9405 + $0x84] sm:$0xf]
    %v9440 = vld [vmem:[%s9405 + $0x88] sm:$0xf]
    %v9441 = vld [vmem:[%s9405 + $0x8c] sm:$0xf]
    %v9442 = vld [vmem:[%s9405 + $0x90] sm:$0xf]
    %v9443 = vld [vmem:[%s9405 + $0x94] sm:$0xf]
    %v9444 = vld [vmem:[%s9405 + $0x98] sm:$0xf]
    %v9445 = vld [vmem:[%s9405 + $0x9c] sm:$0xf]
    %v9446 = vld [vmem:[%s9405 + $0xa0] sm:$0xf]
    %v9447 = vld [vmem:[%s9405 + $0xa4] sm:$0xf]
    %v9448 = vld [vmem:[%s9405 + $0xa8] sm:$0xf]
    %v9449 = vld [vmem:[%s9405 + $0xac] sm:$0xf]
    %v9450 = vld [vmem:[%s9405 + $0xb0] sm:$0xf]
    %v9451 = vld [vmem:[%s9405 + $0xb4] sm:$0xf]
    %v9452 = vld [vmem:[%s9405 + $0xb8] sm:$0xf]
    %v9453 = vld [vmem:[%s9405 + $0xbc] sm:$0xf]
    %v9454 = vld [vmem:[%s9405 + $0xc0] sm:$0xf]
    %v9455 = vld [vmem:[%s9405 + $0xc4] sm:$0xf]
    %v9456 = vld [vmem:[%s9405 + $0xc8] sm:$0xf]
    %v9457 = vld [vmem:[%s9405 + $0xcc] sm:$0xf]
    %v9458 = vld [vmem:[%s9405 + $0xd0] sm:$0xf]
    %v9459 = vld [vmem:[%s9405 + $0xd4] sm:$0xf]
    %v9460 = vld [vmem:[%s9405 + $0xd8] sm:$0xf]
    %v9461 = vld [vmem:[%s9405 + $0xdc] sm:$0xf]
    %v9462 = vld [vmem:[%s9405 + $0xe0] sm:$0xf]
    %v9463 = vld [vmem:[%s9405 + $0xe4] sm:$0xf]
    %v9464 = vld [vmem:[%s9405 + $0xe8] sm:$0xf]
    %v9465 = vld [vmem:[%s9405 + $0xec] sm:$0xf]
    %v9466 = vld [vmem:[%s9405 + $0xf0] sm:$0xf]
    %v9467 = vld [vmem:[%s9405 + $0xf4] sm:$0xf]
    %v9468 = vld [vmem:[%s9405 + $0xf8] sm:$0xf]
    %v9469 = vld [vmem:[%s9405 + $0xfc] sm:$0xf]
    %v9470 = vld [vmem:[%s9405 + $0x100] sm:$0xf]
    %v9471 = vld [vmem:[%s9405 + $0x104] sm:$0xf]
    %v9472 = vld [vmem:[%s9405 + $0x108] sm:$0xf]
    %v9473 = vld [vmem:[%s9405 + $0x10c] sm:$0xf]
    %v9474 = vld [vmem:[%s9405 + $0x110] sm:$0xf]
    %v9475 = vld [vmem:[%s9405 + $0x114] sm:$0xf]
    %v9476 = vld [vmem:[%s9405 + $0x118] sm:$0xf]
    %v9477 = vld [vmem:[%s9405 + $0x11c] sm:$0xf]
    %v9478 = vld [vmem:[%s9405 + $0x120] sm:$0xf]
    %v9479 = vld [vmem:[%s9405 + $0x124] sm:$0xf]
    %v9480 = vld [vmem:[%s9405 + $0x128] sm:$0xf]
    %v9481 = vld [vmem:[%s9405 + $0x12c] sm:$0xf]
    %v9482 = vld [vmem:[%s9405 + $0x130] sm:$0xf]
    %v9483 = vld [vmem:[%s9405 + $0x134] sm:$0xf]
    %v9484 = vld [vmem:[%s9405 + $0x138] sm:$0xf]
    %v9485 = vld [vmem:[%s9405 + $0x13c] sm:$0xf]
    %v9486 = vld [vmem:[%s9405 + $0x140] sm:$0xf]
    %v9487 = vld [vmem:[%s9405 + $0x144] sm:$0xf]
    %v9488 = vld [vmem:[%s9405 + $0x148] sm:$0xf]
    %v9489 = vld [vmem:[%s9405 + $0x14c] sm:$0xf]
    %v9490 = vld [vmem:[%s9405 + $0x150] sm:$0xf]
    %v9491 = vld [vmem:[%s9405 + $0x154] sm:$0xf]
    %v9492 = vld [vmem:[%s9405 + $0x158] sm:$0xf]
    %v9493 = vld [vmem:[%s9405 + $0x15c] sm:$0xf]
    %v9494 = vld [vmem:[%s9405 + $0x160] sm:$0xf]
    %v9495 = vld [vmem:[%s9405 + $0x164] sm:$0xf]
    %v9496 = vld [vmem:[%s9405 + $0x168] sm:$0xf]
    %v9497 = vld [vmem:[%s9405 + $0x16c] sm:$0xf]
    %v9498 = vld [vmem:[%s9405 + $0x170] sm:$0xf]
    %v9499 = vld [vmem:[%s9405 + $0x174] sm:$0xf]
    %v9500 = vld [vmem:[%s9405 + $0x178] sm:$0xf]
    %v9501 = vld [vmem:[%s9405 + $0x17c] sm:$0xf]
    %v9502 = vld [vmem:[%s9405 + $0x180] sm:$0xf]
    %v9503 = vld [vmem:[%s9405 + $0x184] sm:$0xf]
    %v9504 = vld [vmem:[%s9405 + $0x188] sm:$0xf]
    %v9505 = vld [vmem:[%s9405 + $0x18c] sm:$0xf]
    %v9506 = vld [vmem:[%s9405 + $0x190] sm:$0xf]
    %v9507 = vld [vmem:[%s9405 + $0x194] sm:$0xf]
    %v9508 = vld [vmem:[%s9405 + $0x198] sm:$0xf]
    %v9509 = vld [vmem:[%s9405 + $0x19c] sm:$0xf]
    %v9510 = vld [vmem:[%s9405 + $0x1a0] sm:$0xf]
    %v9511 = vld [vmem:[%s9405 + $0x1a4] sm:$0xf]
    %v9512 = vld [vmem:[%s9405 + $0x1a8] sm:$0xf]
    %v9513 = vld [vmem:[%s9405 + $0x1ac] sm:$0xf]
    %v9514 = vld [vmem:[%s9405 + $0x1b0] sm:$0xf]
    %v9515 = vld [vmem:[%s9405 + $0x1b4] sm:$0xf]
    %v9516 = vld [vmem:[%s9405 + $0x1b8] sm:$0xf]
    %v9517 = vld [vmem:[%s9405 + $0x1bc] sm:$0xf]
    %v9518 = vld [vmem:[%s9405 + $0x1c0] sm:$0xf]
    %v9519 = vld [vmem:[%s9405 + $0x1c4] sm:$0xf]
    %v9520 = vld [vmem:[%s9405 + $0x1c8] sm:$0xf]
    %v9521 = vld [vmem:[%s9405 + $0x1cc] sm:$0xf]
    %v9522 = vld [vmem:[%s9405 + $0x1d0] sm:$0xf]
    %v9523 = vld [vmem:[%s9405 + $0x1d4] sm:$0xf]
    %v9524 = vld [vmem:[%s9405 + $0x1d8] sm:$0xf]
    %v9525 = vld [vmem:[%s9405 + $0x1dc] sm:$0xf]
    %v9526 = vld [vmem:[%s9405 + $0x1e0] sm:$0xf]
    %v9527 = vld [vmem:[%s9405 + $0x1e4] sm:$0xf]
    %v9528 = vld [vmem:[%s9405 + $0x1e8] sm:$0xf]
    %v9529 = vld [vmem:[%s9405 + $0x1ec] sm:$0xf]
    %v9530 = vld [vmem:[%s9405 + $0x1f0] sm:$0xf]
    %v9531 = vld [vmem:[%s9405 + $0x1f4] sm:$0xf]
    %v9532 = vld [vmem:[%s9405 + $0x1f8] sm:$0xf]
    %v9533 = vld [vmem:[%s9405 + $0x1fc] sm:$0xf]
    %v9534 = vld [vmem:[%s9405 + $0x200] sm:$0xf]
    %v9535 = vld [vmem:[%s9405 + $0x204] sm:$0xf]
    %v9536 = vld [vmem:[%s9405 + $0x208] sm:$0xf]
    %v9537 = vld [vmem:[%s9405 + $0x20c] sm:$0xf]
    %v9538 = vld [vmem:[%s9405 + $0x210] sm:$0xf]
    %v9539 = vld [vmem:[%s9405 + $0x214] sm:$0xf]
    %v9540 = vld [vmem:[%s9405 + $0x218] sm:$0xf]
    %v9541 = vld [vmem:[%s9405 + $0x21c] sm:$0xf]
    %v9542 = vld [vmem:[%s9405 + $0x220] sm:$0xf]
    %v9543 = vld [vmem:[%s9405 + $0x224] sm:$0xf]
    %v9544 = vld [vmem:[%s9405 + $0x228] sm:$0xf]
    %v9545 = vld [vmem:[%s9405 + $0x22c] sm:$0xf]
    %v9546 = vld [vmem:[%s9405 + $0x230] sm:$0xf]
    %v9547 = vld [vmem:[%s9405 + $0x234] sm:$0xf]
    %v9548 = vld [vmem:[%s9405 + $0x238] sm:$0xf]
    %v9549 = vld [vmem:[%s9405 + $0x23c] sm:$0xf]
    %v9550 = vld [vmem:[%s9405 + $0x240] sm:$0xf]
    %v9551 = vld [vmem:[%s9405 + $0x244] sm:$0xf]
    %v9552 = vld [vmem:[%s9405 + $0x248] sm:$0xf]
    %v9553 = vld [vmem:[%s9405 + $0x24c] sm:$0xf]
    %v9554 = vld [vmem:[%s9405 + $0x250] sm:$0xf]
    %v9555 = vld [vmem:[%s9405 + $0x254] sm:$0xf]
    %v9556 = vld [vmem:[%s9405 + $0x258] sm:$0xf]
    %v9557 = vld [vmem:[%s9405 + $0x25c] sm:$0xf]
    %v9558 = vld [vmem:[%s9405 + $0x260] sm:$0xf]
    %v9559 = vld [vmem:[%s9405 + $0x264] sm:$0xf]
    %v9560 = vld [vmem:[%s9405 + $0x268] sm:$0xf]
    %v9561 = vld [vmem:[%s9405 + $0x26c] sm:$0xf]
    %v9562 = vld [vmem:[%s9405 + $0x270] sm:$0xf]
    %v9563 = vld [vmem:[%s9405 + $0x274] sm:$0xf]
    %v9564 = vld [vmem:[%s9405 + $0x278] sm:$0xf]
    %v9565 = vld [vmem:[%s9405 + $0x27c] sm:$0xf]
    %v9566 = vld [vmem:[%s9405 + $0x280] sm:$0xf]
    %v9567 = vld [vmem:[%s9405 + $0x284] sm:$0xf]
    %v9568 = vld [vmem:[%s9405 + $0x288] sm:$0xf]
    %v9569 = vld [vmem:[%s9405 + $0x28c] sm:$0xf]
    %v9570 = vld [vmem:[%s9405 + $0x290] sm:$0xf]
    %v9571 = vld [vmem:[%s9405 + $0x294] sm:$0xf]
    %v9572 = vld [vmem:[%s9405 + $0x298] sm:$0xf]
    %v9573 = vld [vmem:[%s9405 + $0x29c] sm:$0xf]
    %v9574 = vld [vmem:[%s9405 + $0x2a0] sm:$0xf]
    %v9575 = vld [vmem:[%s9405 + $0x2a4] sm:$0xf]
    %v9576 = vld [vmem:[%s9405 + $0x2a8] sm:$0xf]
    %v9577 = vld [vmem:[%s9405 + $0x2ac] sm:$0xf]
    %v9578 = vld [vmem:[%s9405 + $0x2b0] sm:$0xf]
    %v9579 = vld [vmem:[%s9405 + $0x2b4] sm:$0xf]
    %v9580 = vld [vmem:[%s9405 + $0x2b8] sm:$0xf]
    %v9581 = vld [vmem:[%s9405 + $0x2bc] sm:$0xf]
    %v9582 = vld [vmem:[%s9405 + $0x2c0] sm:$0xf]
    %v9583 = vld [vmem:[%s9405 + $0x2c4] sm:$0xf]
    %v9584 = vld [vmem:[%s9405 + $0x2c8] sm:$0xf]
    %v9585 = vld [vmem:[%s9405 + $0x2cc] sm:$0xf]
    %v9586 = vld [vmem:[%s9405 + $0x2d0] sm:$0xf]
    %v9587 = vld [vmem:[%s9405 + $0x2d4] sm:$0xf]
    %v9588 = vld [vmem:[%s9405 + $0x2d8] sm:$0xf]
    %v9589 = vld [vmem:[%s9405 + $0x2dc] sm:$0xf]
    %v9590 = vld [vmem:[%s9405 + $0x2e0] sm:$0xf]
    %v9591 = vld [vmem:[%s9405 + $0x2e4] sm:$0xf]
    %v9592 = vld [vmem:[%s9405 + $0x2e8] sm:$0xf]
    %v9593 = vld [vmem:[%s9405 + $0x2ec] sm:$0xf]
    %v9594 = vld [vmem:[%s9405 + $0x2f0] sm:$0xf]
    %v9595 = vld [vmem:[%s9405 + $0x2f4] sm:$0xf]
    %v9596 = vld [vmem:[%s9405 + $0x2f8] sm:$0xf]
    %v9597 = vld [vmem:[%s9405 + $0x2fc] sm:$0xf]
    %v9598 = vld [vmem:[%s9405 + $0x300] sm:$0xf]
    %v9599 = vld [vmem:[%s9405 + $0x304] sm:$0xf]
    %v9600 = vld [vmem:[%s9405 + $0x308] sm:$0xf]
    %v9601 = vld [vmem:[%s9405 + $0x30c] sm:$0xf]
    %v9602 = vld [vmem:[%s9405 + $0x310] sm:$0xf]
    %v9603 = vld [vmem:[%s9405 + $0x314] sm:$0xf]
    %v9604 = vld [vmem:[%s9405 + $0x318] sm:$0xf]
    %v9605 = vld [vmem:[%s9405 + $0x31c] sm:$0xf]
    %v9606 = vld [vmem:[%s9405 + $0x320] sm:$0xf]
    %v9607 = vld [vmem:[%s9405 + $0x324] sm:$0xf]
    %v9608 = vld [vmem:[%s9405 + $0x328] sm:$0xf]
    %v9609 = vld [vmem:[%s9405 + $0x32c] sm:$0xf]
    %v9610 = vld [vmem:[%s9405 + $0x330] sm:$0xf]
    %v9611 = vld [vmem:[%s9405 + $0x334] sm:$0xf]
    %v9612 = vld [vmem:[%s9405 + $0x338] sm:$0xf]
    %v9613 = vld [vmem:[%s9405 + $0x33c] sm:$0xf]
    %v9614 = vld [vmem:[%s9405 + $0x340] sm:$0xf]
    %v9615 = vld [vmem:[%s9405 + $0x344] sm:$0xf]
    %v9616 = vld [vmem:[%s9405 + $0x348] sm:$0xf]
    %v9617 = vld [vmem:[%s9405 + $0x34c] sm:$0xf]
    %v9618 = vld [vmem:[%s9405 + $0x350] sm:$0xf]
    %v9619 = vld [vmem:[%s9405 + $0x354] sm:$0xf]
    %v9620 = vld [vmem:[%s9405 + $0x358] sm:$0xf]
    %v9621 = vld [vmem:[%s9405 + $0x35c] sm:$0xf]
    %v9622 = vld [vmem:[%s9405 + $0x360] sm:$0xf]
    %v9623 = vld [vmem:[%s9405 + $0x364] sm:$0xf]
    %v9624 = vld [vmem:[%s9405 + $0x368] sm:$0xf]
    %v9625 = vld [vmem:[%s9405 + $0x36c] sm:$0xf]
    %v9626 = vld [vmem:[%s9405 + $0x370] sm:$0xf]
    %v9627 = vld [vmem:[%s9405 + $0x374] sm:$0xf]
    %v9628 = vld [vmem:[%s9405 + $0x378] sm:$0xf]
    %v9629 = vld [vmem:[%s9405 + $0x37c] sm:$0xf]
    %v9630 = vld [vmem:[%s9405 + $0x380] sm:$0xf]
    %v9631 = vld [vmem:[%s9405 + $0x384] sm:$0xf]
    %v9632 = vld [vmem:[%s9405 + $0x388] sm:$0xf]
    %v9633 = vld [vmem:[%s9405 + $0x38c] sm:$0xf]
    %v9634 = vld [vmem:[%s9405 + $0x390] sm:$0xf]
    %v9635 = vld [vmem:[%s9405 + $0x394] sm:$0xf]
    %v9636 = vld [vmem:[%s9405 + $0x398] sm:$0xf]
    %v9637 = vld [vmem:[%s9405 + $0x39c] sm:$0xf]
    %v9638 = vld [vmem:[%s9405 + $0x3a0] sm:$0xf]
    %v9639 = vld [vmem:[%s9405 + $0x3a4] sm:$0xf]
    %v9640 = vld [vmem:[%s9405 + $0x3a8] sm:$0xf]
    %v9641 = vld [vmem:[%s9405 + $0x3ac] sm:$0xf]
    %v9642 = vld [vmem:[%s9405 + $0x3b0] sm:$0xf]
    %v9643 = vld [vmem:[%s9405 + $0x3b4] sm:$0xf]
    %v9644 = vld [vmem:[%s9405 + $0x3b8] sm:$0xf]
    %v9645 = vld [vmem:[%s9405 + $0x3bc] sm:$0xf]
    %v9646 = vld [vmem:[%s9405 + $0x3c0] sm:$0xf]
    %v9647 = vld [vmem:[%s9405 + $0x3c4] sm:$0xf]
    %v9648 = vld [vmem:[%s9405 + $0x3c8] sm:$0xf]
    %v9649 = vld [vmem:[%s9405 + $0x3cc] sm:$0xf]
    %v9650 = vld [vmem:[%s9405 + $0x3d0] sm:$0xf]
    %v9651 = vld [vmem:[%s9405 + $0x3d4] sm:$0xf]
    %v9652 = vld [vmem:[%s9405 + $0x3d8] sm:$0xf]
    %v9653 = vld [vmem:[%s9405 + $0x3dc] sm:$0xf]
    %v9654 = vld [vmem:[%s9405 + $0x3e0] sm:$0xf]
    %v9655 = vld [vmem:[%s9405 + $0x3e4] sm:$0xf]
    %v9656 = vld [vmem:[%s9405 + $0x3e8] sm:$0xf]
    %v9657 = vld [vmem:[%s9405 + $0x3ec] sm:$0xf]
    %v9658 = vld [vmem:[%s9405 + $0x3f0] sm:$0xf]
    %v9659 = vld [vmem:[%s9405 + $0x3f4] sm:$0xf]
    %v9660 = vld [vmem:[%s9405 + $0x3f8] sm:$0xf]
    %v9661 = vld [vmem:[%s9405 + $0x3fc] sm:$0xf]
    %s9662 = scalar_lea.vmem %s25, 1
    %v9663 = vld [vmem:[%s9662] sm:$0x1]
    %v9664 = vpack.c.bf16 %v9389, %v9373
    %v9665 = vpack.c.bf16 %v9390, %v9374
    %v9666 = vpack.c.bf16 %v9391, %v9375
    %v9667 = vpack.c.bf16 %v9392, %v9376
    %v9668 = vpack.c.bf16 %v9393, %v9377
    %v9669 = vpack.c.bf16 %v9394, %v9378
    %v9670 = vpack.c.bf16 %v9395, %v9379
    %v9671 = vpack.c.bf16 %v9396, %v9380
    %v9672 = vpack.c.bf16 %v9397, %v9381
    %v9673 = vpack.c.bf16 %v9398, %v9382
    %v9674 = vpack.c.bf16 %v9399, %v9383
    %v9675 = vpack.c.bf16 %v9400, %v9384
    %v9676 = vpack.c.bf16 %v9401, %v9385
    %v9677 = vpack.c.bf16 %v9402, %v9386
    %v9678 = vpack.c.bf16 %v9403, %v9387
    %v9679 = vpack.c.bf16 %v9404, %v9388
    %v9681 = vlaneseq
    %v9682 = vshrl.u32 %v9681, 7
    %v9683 = vsub.s32 0, %v9682
    %v9684 = vrot.slane %v9663, %v9683
    %v9942 = vunpack.c.l.b16 %v9406
    %v9943 = vunpack.c.l.b16 %v9407
    %v9944 = vunpack.c.l.b16 %v9408
    %v9945 = vunpack.c.l.b16 %v9409
    %v9946 = vunpack.c.l.b16 %v9410
    %v9947 = vunpack.c.l.b16 %v9411
    %v9948 = vunpack.c.l.b16 %v9412
    %v9949 = vunpack.c.l.b16 %v9413
    %v9950 = vunpack.c.l.b16 %v9414
    %v9951 = vunpack.c.l.b16 %v9415
    %v9952 = vunpack.c.l.b16 %v9416
    %v9953 = vunpack.c.l.b16 %v9417
    %v9954 = vunpack.c.l.b16 %v9418
    %v9955 = vunpack.c.l.b16 %v9419
    %v9956 = vunpack.c.l.b16 %v9420
    %v9957 = vunpack.c.l.b16 %v9421
    %v9958 = vunpack.c.l.b16 %v9422
    %v9959 = vunpack.c.l.b16 %v9423
    %v9960 = vunpack.c.l.b16 %v9424
    %v9961 = vunpack.c.l.b16 %v9425
    %v9962 = vunpack.c.l.b16 %v9426
    %v9963 = vunpack.c.l.b16 %v9427
    %v9964 = vunpack.c.l.b16 %v9428
    %v9965 = vunpack.c.l.b16 %v9429
    %v9966 = vunpack.c.l.b16 %v9430
    %v9967 = vunpack.c.l.b16 %v9431
    %v9968 = vunpack.c.l.b16 %v9432
    %v9969 = vunpack.c.l.b16 %v9433
    %v9970 = vunpack.c.l.b16 %v9434
    %v9971 = vunpack.c.l.b16 %v9435
    %v9972 = vunpack.c.l.b16 %v9436
    %v9973 = vunpack.c.l.b16 %v9437
    %v9974 = vunpack.c.l.b16 %v9438
    %v9975 = vunpack.c.l.b16 %v9439
    %v9976 = vunpack.c.l.b16 %v9440
    %v9977 = vunpack.c.l.b16 %v9441
    %v9978 = vunpack.c.l.b16 %v9442
    %v9979 = vunpack.c.l.b16 %v9443
    %v9980 = vunpack.c.l.b16 %v9444
    %v9981 = vunpack.c.l.b16 %v9445
    %v9982 = vunpack.c.l.b16 %v9446
    %v9983 = vunpack.c.l.b16 %v9447
    %v9984 = vunpack.c.l.b16 %v9448
    %v9985 = vunpack.c.l.b16 %v9449
    %v9986 = vunpack.c.l.b16 %v9450
    %v9987 = vunpack.c.l.b16 %v9451
    %v9988 = vunpack.c.l.b16 %v9452
    %v9989 = vunpack.c.l.b16 %v9453
    %v9990 = vunpack.c.l.b16 %v9454
    %v9991 = vunpack.c.l.b16 %v9455
    %v9992 = vunpack.c.l.b16 %v9456
    %v9993 = vunpack.c.l.b16 %v9457
    %v9994 = vunpack.c.l.b16 %v9458
    %v9995 = vunpack.c.l.b16 %v9459
    %v9996 = vunpack.c.l.b16 %v9460
    %v9997 = vunpack.c.l.b16 %v9461
    %v9998 = vunpack.c.l.b16 %v9462
    %v9999 = vunpack.c.l.b16 %v9463
    %v10000 = vunpack.c.l.b16 %v9464
    %v10001 = vunpack.c.l.b16 %v9465
    %v10002 = vunpack.c.l.b16 %v9466
    %v10003 = vunpack.c.l.b16 %v9467
    %v10004 = vunpack.c.l.b16 %v9468
    %v10005 = vunpack.c.l.b16 %v9469
    %v10006 = vunpack.c.l.b16 %v9470
    %v10007 = vunpack.c.l.b16 %v9471
    %v10008 = vunpack.c.l.b16 %v9472
    %v10009 = vunpack.c.l.b16 %v9473
    %v10010 = vunpack.c.l.b16 %v9474
    %v10011 = vunpack.c.l.b16 %v9475
    %v10012 = vunpack.c.l.b16 %v9476
    %v10013 = vunpack.c.l.b16 %v9477
    %v10014 = vunpack.c.l.b16 %v9478
    %v10015 = vunpack.c.l.b16 %v9479
    %v10016 = vunpack.c.l.b16 %v9480
    %v10017 = vunpack.c.l.b16 %v9481
    %v10018 = vunpack.c.l.b16 %v9482
    %v10019 = vunpack.c.l.b16 %v9483
    %v10020 = vunpack.c.l.b16 %v9484
    %v10021 = vunpack.c.l.b16 %v9485
    %v10022 = vunpack.c.l.b16 %v9486
    %v10023 = vunpack.c.l.b16 %v9487
    %v10024 = vunpack.c.l.b16 %v9488
    %v10025 = vunpack.c.l.b16 %v9489
    %v10026 = vunpack.c.l.b16 %v9490
    %v10027 = vunpack.c.l.b16 %v9491
    %v10028 = vunpack.c.l.b16 %v9492
    %v10029 = vunpack.c.l.b16 %v9493
    %v10030 = vunpack.c.l.b16 %v9494
    %v10031 = vunpack.c.l.b16 %v9495
    %v10032 = vunpack.c.l.b16 %v9496
    %v10033 = vunpack.c.l.b16 %v9497
    %v10034 = vunpack.c.l.b16 %v9498
    %v10035 = vunpack.c.l.b16 %v9499
    %v10036 = vunpack.c.l.b16 %v9500
    %v10037 = vunpack.c.l.b16 %v9501
    %v10038 = vunpack.c.l.b16 %v9502
    %v10039 = vunpack.c.l.b16 %v9503
    %v10040 = vunpack.c.l.b16 %v9504
    %v10041 = vunpack.c.l.b16 %v9505
    %v10042 = vunpack.c.l.b16 %v9506
    %v10043 = vunpack.c.l.b16 %v9507
    %v10044 = vunpack.c.l.b16 %v9508
    %v10045 = vunpack.c.l.b16 %v9509
    %v10046 = vunpack.c.l.b16 %v9510
    %v10047 = vunpack.c.l.b16 %v9511
    %v10048 = vunpack.c.l.b16 %v9512
    %v10049 = vunpack.c.l.b16 %v9513
    %v10050 = vunpack.c.l.b16 %v9514
    %v10051 = vunpack.c.l.b16 %v9515
    %v10052 = vunpack.c.l.b16 %v9516
    %v10053 = vunpack.c.l.b16 %v9517
    %v10054 = vunpack.c.l.b16 %v9518
    %v10055 = vunpack.c.l.b16 %v9519
    %v10056 = vunpack.c.l.b16 %v9520
    %v10057 = vunpack.c.l.b16 %v9521
    %v10058 = vunpack.c.l.b16 %v9522
    %v10059 = vunpack.c.l.b16 %v9523
    %v10060 = vunpack.c.l.b16 %v9524
    %v10061 = vunpack.c.l.b16 %v9525
    %v10062 = vunpack.c.l.b16 %v9526
    %v10063 = vunpack.c.l.b16 %v9527
    %v10064 = vunpack.c.l.b16 %v9528
    %v10065 = vunpack.c.l.b16 %v9529
    %v10066 = vunpack.c.l.b16 %v9530
    %v10067 = vunpack.c.l.b16 %v9531
    %v10068 = vunpack.c.l.b16 %v9532
    %v10069 = vunpack.c.l.b16 %v9533
    %v10070 = vunpack.c.l.b16 %v9534
    %v10071 = vunpack.c.l.b16 %v9535
    %v10072 = vunpack.c.l.b16 %v9536
    %v10073 = vunpack.c.l.b16 %v9537
    %v10074 = vunpack.c.l.b16 %v9538
    %v10075 = vunpack.c.l.b16 %v9539
    %v10076 = vunpack.c.l.b16 %v9540
    %v10077 = vunpack.c.l.b16 %v9541
    %v10078 = vunpack.c.l.b16 %v9542
    %v10079 = vunpack.c.l.b16 %v9543
    %v10080 = vunpack.c.l.b16 %v9544
    %v10081 = vunpack.c.l.b16 %v9545
    %v10082 = vunpack.c.l.b16 %v9546
    %v10083 = vunpack.c.l.b16 %v9547
    %v10084 = vunpack.c.l.b16 %v9548
    %v10085 = vunpack.c.l.b16 %v9549
    %v10086 = vunpack.c.l.b16 %v9550
    %v10087 = vunpack.c.l.b16 %v9551
    %v10088 = vunpack.c.l.b16 %v9552
    %v10089 = vunpack.c.l.b16 %v9553
    %v10090 = vunpack.c.l.b16 %v9554
    %v10091 = vunpack.c.l.b16 %v9555
    %v10092 = vunpack.c.l.b16 %v9556
    %v10093 = vunpack.c.l.b16 %v9557
    %v10094 = vunpack.c.l.b16 %v9558
    %v10095 = vunpack.c.l.b16 %v9559
    %v10096 = vunpack.c.l.b16 %v9560
    %v10097 = vunpack.c.l.b16 %v9561
    %v10098 = vunpack.c.l.b16 %v9562
    %v10099 = vunpack.c.l.b16 %v9563
    %v10100 = vunpack.c.l.b16 %v9564
    %v10101 = vunpack.c.l.b16 %v9565
    %v10102 = vunpack.c.l.b16 %v9566
    %v10103 = vunpack.c.l.b16 %v9567
    %v10104 = vunpack.c.l.b16 %v9568
    %v10105 = vunpack.c.l.b16 %v9569
    %v10106 = vunpack.c.l.b16 %v9570
    %v10107 = vunpack.c.l.b16 %v9571
    %v10108 = vunpack.c.l.b16 %v9572
    %v10109 = vunpack.c.l.b16 %v9573
    %v10110 = vunpack.c.l.b16 %v9574
    %v10111 = vunpack.c.l.b16 %v9575
    %v10112 = vunpack.c.l.b16 %v9576
    %v10113 = vunpack.c.l.b16 %v9577
    %v10114 = vunpack.c.l.b16 %v9578
    %v10115 = vunpack.c.l.b16 %v9579
    %v10116 = vunpack.c.l.b16 %v9580
    %v10117 = vunpack.c.l.b16 %v9581
    %v10118 = vunpack.c.l.b16 %v9582
    %v10119 = vunpack.c.l.b16 %v9583
    %v10120 = vunpack.c.l.b16 %v9584
    %v10121 = vunpack.c.l.b16 %v9585
    %v10122 = vunpack.c.l.b16 %v9586
    %v10123 = vunpack.c.l.b16 %v9587
    %v10124 = vunpack.c.l.b16 %v9588
    %v10125 = vunpack.c.l.b16 %v9589
    %v10126 = vunpack.c.l.b16 %v9590
    %v10127 = vunpack.c.l.b16 %v9591
    %v10128 = vunpack.c.l.b16 %v9592
    %v10129 = vunpack.c.l.b16 %v9593
    %v10130 = vunpack.c.l.b16 %v9594
    %v10131 = vunpack.c.l.b16 %v9595
    %v10132 = vunpack.c.l.b16 %v9596
    %v10133 = vunpack.c.l.b16 %v9597
    %v10134 = vunpack.c.l.b16 %v9598
    %v10135 = vunpack.c.l.b16 %v9599
    %v10136 = vunpack.c.l.b16 %v9600
    %v10137 = vunpack.c.l.b16 %v9601
    %v10138 = vunpack.c.l.b16 %v9602
    %v10139 = vunpack.c.l.b16 %v9603
    %v10140 = vunpack.c.l.b16 %v9604
    %v10141 = vunpack.c.l.b16 %v9605
    %v10142 = vunpack.c.l.b16 %v9606
    %v10143 = vunpack.c.l.b16 %v9607
    %v10144 = vunpack.c.l.b16 %v9608
    %v10145 = vunpack.c.l.b16 %v9609
    %v10146 = vunpack.c.l.b16 %v9610
    %v10147 = vunpack.c.l.b16 %v9611
    %v10148 = vunpack.c.l.b16 %v9612
    %v10149 = vunpack.c.l.b16 %v9613
    %v10150 = vunpack.c.l.b16 %v9614
    %v10151 = vunpack.c.l.b16 %v9615
    %v10152 = vunpack.c.l.b16 %v9616
    %v10153 = vunpack.c.l.b16 %v9617
    %v10154 = vunpack.c.l.b16 %v9618
    %v10155 = vunpack.c.l.b16 %v9619
    %v10156 = vunpack.c.l.b16 %v9620
    %v10157 = vunpack.c.l.b16 %v9621
    %v10158 = vunpack.c.l.b16 %v9622
    %v10159 = vunpack.c.l.b16 %v9623
    %v10160 = vunpack.c.l.b16 %v9624
    %v10161 = vunpack.c.l.b16 %v9625
    %v10162 = vunpack.c.l.b16 %v9626
    %v10163 = vunpack.c.l.b16 %v9627
    %v10164 = vunpack.c.l.b16 %v9628
    %v10165 = vunpack.c.l.b16 %v9629
    %v10166 = vunpack.c.l.b16 %v9630
    %v10167 = vunpack.c.l.b16 %v9631
    %v10168 = vunpack.c.l.b16 %v9632
    %v10169 = vunpack.c.l.b16 %v9633
    %v10170 = vunpack.c.l.b16 %v9634
    %v10171 = vunpack.c.l.b16 %v9635
    %v10172 = vunpack.c.l.b16 %v9636
    %v10173 = vunpack.c.l.b16 %v9637
    %v10174 = vunpack.c.l.b16 %v9638
    %v10175 = vunpack.c.l.b16 %v9639
    %v10176 = vunpack.c.l.b16 %v9640
    %v10177 = vunpack.c.l.b16 %v9641
    %v10178 = vunpack.c.l.b16 %v9642
    %v10179 = vunpack.c.l.b16 %v9643
    %v10180 = vunpack.c.l.b16 %v9644
    %v10181 = vunpack.c.l.b16 %v9645
    %v10182 = vunpack.c.l.b16 %v9646
    %v10183 = vunpack.c.l.b16 %v9647
    %v10184 = vunpack.c.l.b16 %v9648
    %v10185 = vunpack.c.l.b16 %v9649
    %v10186 = vunpack.c.l.b16 %v9650
    %v10187 = vunpack.c.l.b16 %v9651
    %v10188 = vunpack.c.l.b16 %v9652
    %v10189 = vunpack.c.l.b16 %v9653
    %v10190 = vunpack.c.l.b16 %v9654
    %v10191 = vunpack.c.l.b16 %v9655
    %v10192 = vunpack.c.l.b16 %v9656
    %v10193 = vunpack.c.l.b16 %v9657
    %v10194 = vunpack.c.l.b16 %v9658
    %v10195 = vunpack.c.l.b16 %v9659
    %v10196 = vunpack.c.l.b16 %v9660
    %v10197 = vunpack.c.l.b16 %v9661
    %v10198 = vpack.c.b16 %v9943, %v9942
    %v10199 = vpack.c.b16 %v9945, %v9944
    %v10200 = vpack.c.b16 %v9947, %v9946
    %v10201 = vpack.c.b16 %v9949, %v9948
    %v10202 = vpack.c.b16 %v9951, %v9950
    %v10203 = vpack.c.b16 %v9953, %v9952
    %v10204 = vpack.c.b16 %v9955, %v9954
    %v10205 = vpack.c.b16 %v9957, %v9956
    %v10206 = vpack.c.b16 %v9959, %v9958
    %v10207 = vpack.c.b16 %v9961, %v9960
    %v10208 = vpack.c.b16 %v9963, %v9962
    %v10209 = vpack.c.b16 %v9965, %v9964
    %v10210 = vpack.c.b16 %v9967, %v9966
    %v10211 = vpack.c.b16 %v9969, %v9968
    %v10212 = vpack.c.b16 %v9971, %v9970
    %v10213 = vpack.c.b16 %v9973, %v9972
    %v10214 = vpack.c.b16 %v9975, %v9974
    %v10215 = vpack.c.b16 %v9977, %v9976
    %v10216 = vpack.c.b16 %v9979, %v9978
    %v10217 = vpack.c.b16 %v9981, %v9980
    %v10218 = vpack.c.b16 %v9983, %v9982
    %v10219 = vpack.c.b16 %v9985, %v9984
    %v10220 = vpack.c.b16 %v9987, %v9986
    %v10221 = vpack.c.b16 %v9989, %v9988
    %v10222 = vpack.c.b16 %v9991, %v9990
    %v10223 = vpack.c.b16 %v9993, %v9992
    %v10224 = vpack.c.b16 %v9995, %v9994
    %v10225 = vpack.c.b16 %v9997, %v9996
    %v10226 = vpack.c.b16 %v9999, %v9998
    %v10227 = vpack.c.b16 %v10001, %v10000
    %v10228 = vpack.c.b16 %v10003, %v10002
    %v10229 = vpack.c.b16 %v10005, %v10004
    %v10230 = vpack.c.b16 %v10007, %v10006
    %v10231 = vpack.c.b16 %v10009, %v10008
    %v10232 = vpack.c.b16 %v10011, %v10010
    %v10233 = vpack.c.b16 %v10013, %v10012
    %v10234 = vpack.c.b16 %v10015, %v10014
    %v10235 = vpack.c.b16 %v10017, %v10016
    %v10236 = vpack.c.b16 %v10019, %v10018
    %v10237 = vpack.c.b16 %v10021, %v10020
    %v10238 = vpack.c.b16 %v10023, %v10022
    %v10239 = vpack.c.b16 %v10025, %v10024
    %v10240 = vpack.c.b16 %v10027, %v10026
    %v10241 = vpack.c.b16 %v10029, %v10028
    %v10242 = vpack.c.b16 %v10031, %v10030
    %v10243 = vpack.c.b16 %v10033, %v10032
    %v10244 = vpack.c.b16 %v10035, %v10034
    %v10245 = vpack.c.b16 %v10037, %v10036
    %v10246 = vpack.c.b16 %v10039, %v10038
    %v10247 = vpack.c.b16 %v10041, %v10040
    %v10248 = vpack.c.b16 %v10043, %v10042
    %v10249 = vpack.c.b16 %v10045, %v10044
    %v10250 = vpack.c.b16 %v10047, %v10046
    %v10251 = vpack.c.b16 %v10049, %v10048
    %v10252 = vpack.c.b16 %v10051, %v10050
    %v10253 = vpack.c.b16 %v10053, %v10052
    %v10254 = vpack.c.b16 %v10055, %v10054
    %v10255 = vpack.c.b16 %v10057, %v10056
    %v10256 = vpack.c.b16 %v10059, %v10058
    %v10257 = vpack.c.b16 %v10061, %v10060
    %v10258 = vpack.c.b16 %v10063, %v10062
    %v10259 = vpack.c.b16 %v10065, %v10064
    %v10260 = vpack.c.b16 %v10067, %v10066
    %v10261 = vpack.c.b16 %v10069, %v10068
    %v10262 = vpack.c.b16 %v10071, %v10070
    %v10263 = vpack.c.b16 %v10073, %v10072
    %v10264 = vpack.c.b16 %v10075, %v10074
    %v10265 = vpack.c.b16 %v10077, %v10076
    %v10266 = vpack.c.b16 %v10079, %v10078
    %v10267 = vpack.c.b16 %v10081, %v10080
    %v10268 = vpack.c.b16 %v10083, %v10082
    %v10269 = vpack.c.b16 %v10085, %v10084
    %v10270 = vpack.c.b16 %v10087, %v10086
    %v10271 = vpack.c.b16 %v10089, %v10088
    %v10272 = vpack.c.b16 %v10091, %v10090
    %v10273 = vpack.c.b16 %v10093, %v10092
    %v10274 = vpack.c.b16 %v10095, %v10094
    %v10275 = vpack.c.b16 %v10097, %v10096
    %v10276 = vpack.c.b16 %v10099, %v10098
    %v10277 = vpack.c.b16 %v10101, %v10100
    %v10278 = vpack.c.b16 %v10103, %v10102
    %v10279 = vpack.c.b16 %v10105, %v10104
    %v10280 = vpack.c.b16 %v10107, %v10106
    %v10281 = vpack.c.b16 %v10109, %v10108
    %v10282 = vpack.c.b16 %v10111, %v10110
    %v10283 = vpack.c.b16 %v10113, %v10112
    %v10284 = vpack.c.b16 %v10115, %v10114
    %v10285 = vpack.c.b16 %v10117, %v10116
    %v10286 = vpack.c.b16 %v10119, %v10118
    %v10287 = vpack.c.b16 %v10121, %v10120
    %v10288 = vpack.c.b16 %v10123, %v10122
    %v10289 = vpack.c.b16 %v10125, %v10124
    %v10290 = vpack.c.b16 %v10127, %v10126
    %v10291 = vpack.c.b16 %v10129, %v10128
    %v10292 = vpack.c.b16 %v10131, %v10130
    %v10293 = vpack.c.b16 %v10133, %v10132
    %v10294 = vpack.c.b16 %v10135, %v10134
    %v10295 = vpack.c.b16 %v10137, %v10136
    %v10296 = vpack.c.b16 %v10139, %v10138
    %v10297 = vpack.c.b16 %v10141, %v10140
    %v10298 = vpack.c.b16 %v10143, %v10142
    %v10299 = vpack.c.b16 %v10145, %v10144
    %v10300 = vpack.c.b16 %v10147, %v10146
    %v10301 = vpack.c.b16 %v10149, %v10148
    %v10302 = vpack.c.b16 %v10151, %v10150
    %v10303 = vpack.c.b16 %v10153, %v10152
    %v10304 = vpack.c.b16 %v10155, %v10154
    %v10305 = vpack.c.b16 %v10157, %v10156
    %v10306 = vpack.c.b16 %v10159, %v10158
    %v10307 = vpack.c.b16 %v10161, %v10160
    %v10308 = vpack.c.b16 %v10163, %v10162
    %v10309 = vpack.c.b16 %v10165, %v10164
    %v10310 = vpack.c.b16 %v10167, %v10166
    %v10311 = vpack.c.b16 %v10169, %v10168
    %v10312 = vpack.c.b16 %v10171, %v10170
    %v10313 = vpack.c.b16 %v10173, %v10172
    %v10314 = vpack.c.b16 %v10175, %v10174
    %v10315 = vpack.c.b16 %v10177, %v10176
    %v10316 = vpack.c.b16 %v10179, %v10178
    %v10317 = vpack.c.b16 %v10181, %v10180
    %v10318 = vpack.c.b16 %v10183, %v10182
    %v10319 = vpack.c.b16 %v10185, %v10184
    %v10320 = vpack.c.b16 %v10187, %v10186
    %v10321 = vpack.c.b16 %v10189, %v10188
    %v10322 = vpack.c.b16 %v10191, %v10190
    %v10323 = vpack.c.b16 %v10193, %v10192
    %v10324 = vpack.c.b16 %v10195, %v10194
    %v10325 = vpack.c.b16 %v10197, %v10196
    %10454 = vmatprep.subr.bf16.mxu0 0
    %10455 = vmatpush1.bf16.msra.mxu0 %v10205
    %10456 = vmatprep.subr.bf16.mxu0 0
    %10457 = vmatpush1.bf16.msra.mxu0 %v10204
    %10458 = vmatprep.subr.bf16.mxu0 0
    %10459 = vmatpush1.bf16.msra.mxu0 %v10203
    %10460 = vmatprep.subr.bf16.mxu0 0
    %10461 = vmatpush1.bf16.msra.mxu0 %v10202
    %10462 = vmatprep.subr.bf16.mxu0 0
    %10463 = vmatpush1.bf16.msra.mxu0 %v10201
    %10464 = vmatprep.subr.bf16.mxu0 0
    %10465 = vmatpush1.bf16.msra.mxu0 %v10200
    %10466 = vmatprep.subr.bf16.mxu0 0
    %10467 = vmatpush1.bf16.msra.mxu0 %v10199
    %10468 = vmatprep.subr.bf16.mxu0 0
    %10469 = vmatpush1.bf16.msra.mxu0 %v10198
    %10470 = vmatprep.subr.bf16.mxu0 0
    %10471 = vmatpush2.bf16.msra.mxu0 %v10213
    %10472 = vmatprep.subr.bf16.mxu0 0
    %10473 = vmatpush2.bf16.msra.mxu0 %v10212
    %10474 = vmatprep.subr.bf16.mxu0 0
    %10475 = vmatpush2.bf16.msra.mxu0 %v10211
    %10476 = vmatprep.subr.bf16.mxu0 0
    %10477 = vmatpush2.bf16.msra.mxu0 %v10210
    %10478 = vmatprep.subr.bf16.mxu0 0
    %10479 = vmatpush2.bf16.msra.mxu0 %v10209
    %10480 = vmatprep.subr.bf16.mxu0 0
    %10481 = vmatpush2.bf16.msra.mxu0 %v10208
    %10482 = vmatprep.subr.bf16.mxu0 0
    %10483 = vmatpush2.bf16.msra.mxu0 %v10207
    %10484 = vmatprep.subr.bf16.mxu0 0
    %10485 = vmatpush2.bf16.msra.mxu0 %v10206
    %10486 = vmatprep.mubr.bf16.mxu0 %v9665
    %10487 = vmatmul.mubr.bf16.gmra.mxu0 %v9664
    %v10488 = vpop.f32.mrf.mxu0
    %v10489 = vadd.f32 %v9684, %v10488
    %v10490 = vpop.f32.mrf.mxu0
    %v10491 = vpop.f32.mrf.mxu0
    %v10492 = vadd.f32 %v9684, %v10491
    %v10493 = vpop.f32.mrf.mxu0
    %10494 = vdwg.mxu0
    %10495 = vmatprep.subr.bf16.mxu0 0
    %10496 = vmatpush1.bf16.msra.mxu0 %v10221
    %10497 = vmatprep.subr.bf16.mxu0 0
    %10498 = vmatpush1.bf16.msra.mxu0 %v10220
    %10499 = vmatprep.subr.bf16.mxu0 0
    %10500 = vmatpush1.bf16.msra.mxu0 %v10219
    %10501 = vmatprep.subr.bf16.mxu0 0
    %10502 = vmatpush1.bf16.msra.mxu0 %v10218
    %10503 = vmatprep.subr.bf16.mxu0 0
    %10504 = vmatpush1.bf16.msra.mxu0 %v10217
    %10505 = vmatprep.subr.bf16.mxu0 0
    %10506 = vmatpush1.bf16.msra.mxu0 %v10216
    %10507 = vmatprep.subr.bf16.mxu0 0
    %10508 = vmatpush1.bf16.msra.mxu0 %v10215
    %10509 = vmatprep.subr.bf16.mxu0 0
    %10510 = vmatpush1.bf16.msra.mxu0 %v10214
    %10511 = vmatprep.subr.bf16.mxu0 0
    %10512 = vmatpush2.bf16.msra.mxu0 %v10229
    %10513 = vmatprep.subr.bf16.mxu0 0
    %10514 = vmatpush2.bf16.msra.mxu0 %v10228
    %10515 = vmatprep.subr.bf16.mxu0 0
    %10516 = vmatpush2.bf16.msra.mxu0 %v10227
    %10517 = vmatprep.subr.bf16.mxu0 0
    %10518 = vmatpush2.bf16.msra.mxu0 %v10226
    %10519 = vmatprep.subr.bf16.mxu0 0
    %10520 = vmatpush2.bf16.msra.mxu0 %v10225
    %10521 = vmatprep.subr.bf16.mxu0 0
    %10522 = vmatpush2.bf16.msra.mxu0 %v10224
    %10523 = vmatprep.subr.bf16.mxu0 0
    %10524 = vmatpush2.bf16.msra.mxu0 %v10223
    %10525 = vmatprep.subr.bf16.mxu0 0
    %10526 = vmatpush2.bf16.msra.mxu0 %v10222
    %10527 = vmatprep.mubr.bf16.mxu0 %v9667
    %10528 = vmatmul.mubr.bf16.gmra.mxu0 %v9666
    %v10529 = vpop.f32.mrf.mxu0
    %v10530 = vadd.f32 %v10489, %v10529
    %v10531 = vpop.f32.mrf.mxu0
    %v10532 = vpop.f32.mrf.mxu0
    %v10533 = vadd.f32 %v10492, %v10532
    %v10534 = vpop.f32.mrf.mxu0
    %10535 = vdwg.mxu0
    %10536 = vmatprep.subr.bf16.mxu0 0
    %10537 = vmatpush1.bf16.msra.mxu0 %v10237
    %10538 = vmatprep.subr.bf16.mxu0 0
    %10539 = vmatpush1.bf16.msra.mxu0 %v10236
    %10540 = vmatprep.subr.bf16.mxu0 0
    %10541 = vmatpush1.bf16.msra.mxu0 %v10235
    %10542 = vmatprep.subr.bf16.mxu0 0
    %10543 = vmatpush1.bf16.msra.mxu0 %v10234
    %10544 = vmatprep.subr.bf16.mxu0 0
    %10545 = vmatpush1.bf16.msra.mxu0 %v10233
    %10546 = vmatprep.subr.bf16.mxu0 0
    %10547 = vmatpush1.bf16.msra.mxu0 %v10232
    %10548 = vmatprep.subr.bf16.mxu0 0
    %10549 = vmatpush1.bf16.msra.mxu0 %v10231
    %10550 = vmatprep.subr.bf16.mxu0 0
    %10551 = vmatpush1.bf16.msra.mxu0 %v10230
    %10552 = vmatprep.subr.bf16.mxu0 0
    %10553 = vmatpush2.bf16.msra.mxu0 %v10245
    %10554 = vmatprep.subr.bf16.mxu0 0
    %10555 = vmatpush2.bf16.msra.mxu0 %v10244
    %10556 = vmatprep.subr.bf16.mxu0 0
    %10557 = vmatpush2.bf16.msra.mxu0 %v10243
    %10558 = vmatprep.subr.bf16.mxu0 0
    %10559 = vmatpush2.bf16.msra.mxu0 %v10242
    %10560 = vmatprep.subr.bf16.mxu0 0
    %10561 = vmatpush2.bf16.msra.mxu0 %v10241
    %10562 = vmatprep.subr.bf16.mxu0 0
    %10563 = vmatpush2.bf16.msra.mxu0 %v10240
    %10564 = vmatprep.subr.bf16.mxu0 0
    %10565 = vmatpush2.bf16.msra.mxu0 %v10239
    %10566 = vmatprep.subr.bf16.mxu0 0
    %10567 = vmatpush2.bf16.msra.mxu0 %v10238
    %10568 = vmatprep.mubr.bf16.mxu0 %v9669
    %10569 = vmatmul.mubr.bf16.gmra.mxu0 %v9668
    %v10570 = vpop.f32.mrf.mxu0
    %v10571 = vadd.f32 %v10530, %v10570
    %v10572 = vpop.f32.mrf.mxu0
    %v10573 = vpop.f32.mrf.mxu0
    %v10574 = vadd.f32 %v10533, %v10573
    %v10575 = vpop.f32.mrf.mxu0
    %10576 = vdwg.mxu0
    %10577 = vmatprep.subr.bf16.mxu0 0
    %10578 = vmatpush1.bf16.msra.mxu0 %v10253
    %10579 = vmatprep.subr.bf16.mxu0 0
    %10580 = vmatpush1.bf16.msra.mxu0 %v10252
    %10581 = vmatprep.subr.bf16.mxu0 0
    %10582 = vmatpush1.bf16.msra.mxu0 %v10251
    %10583 = vmatprep.subr.bf16.mxu0 0
    %10584 = vmatpush1.bf16.msra.mxu0 %v10250
    %10585 = vmatprep.subr.bf16.mxu0 0
    %10586 = vmatpush1.bf16.msra.mxu0 %v10249
    %10587 = vmatprep.subr.bf16.mxu0 0
    %10588 = vmatpush1.bf16.msra.mxu0 %v10248
    %10589 = vmatprep.subr.bf16.mxu0 0
    %10590 = vmatpush1.bf16.msra.mxu0 %v10247
    %10591 = vmatprep.subr.bf16.mxu0 0
    %10592 = vmatpush1.bf16.msra.mxu0 %v10246
    %10593 = vmatprep.subr.bf16.mxu0 0
    %10594 = vmatpush2.bf16.msra.mxu0 %v10261
    %10595 = vmatprep.subr.bf16.mxu0 0
    %10596 = vmatpush2.bf16.msra.mxu0 %v10260
    %10597 = vmatprep.subr.bf16.mxu0 0
    %10598 = vmatpush2.bf16.msra.mxu0 %v10259
    %10599 = vmatprep.subr.bf16.mxu0 0
    %10600 = vmatpush2.bf16.msra.mxu0 %v10258
    %10601 = vmatprep.subr.bf16.mxu0 0
    %10602 = vmatpush2.bf16.msra.mxu0 %v10257
    %10603 = vmatprep.subr.bf16.mxu0 0
    %10604 = vmatpush2.bf16.msra.mxu0 %v10256
    %10605 = vmatprep.subr.bf16.mxu0 0
    %10606 = vmatpush2.bf16.msra.mxu0 %v10255
    %10607 = vmatprep.subr.bf16.mxu0 0
    %10608 = vmatpush2.bf16.msra.mxu0 %v10254
    %10609 = vmatprep.mubr.bf16.mxu0 %v9671
    %10610 = vmatmul.mubr.bf16.gmra.mxu0 %v9670
    %v10611 = vpop.f32.mrf.mxu0
    %v10612 = vadd.f32 %v10571, %v10611
    %v10613 = vpop.f32.mrf.mxu0
    %v10614 = vpop.f32.mrf.mxu0
    %v10615 = vadd.f32 %v10574, %v10614
    %v10616 = vpop.f32.mrf.mxu0
    %10617 = vdwg.mxu0
    %10618 = vmatprep.subr.bf16.mxu0 0
    %10619 = vmatpush1.bf16.msra.mxu0 %v10269
    %10620 = vmatprep.subr.bf16.mxu0 0
    %10621 = vmatpush1.bf16.msra.mxu0 %v10268
    %10622 = vmatprep.subr.bf16.mxu0 0
    %10623 = vmatpush1.bf16.msra.mxu0 %v10267
    %10624 = vmatprep.subr.bf16.mxu0 0
    %10625 = vmatpush1.bf16.msra.mxu0 %v10266
    %10626 = vmatprep.subr.bf16.mxu0 0
    %10627 = vmatpush1.bf16.msra.mxu0 %v10265
    %10628 = vmatprep.subr.bf16.mxu0 0
    %10629 = vmatpush1.bf16.msra.mxu0 %v10264
    %10630 = vmatprep.subr.bf16.mxu0 0
    %10631 = vmatpush1.bf16.msra.mxu0 %v10263
    %10632 = vmatprep.subr.bf16.mxu0 0
    %10633 = vmatpush1.bf16.msra.mxu0 %v10262
    %10634 = vmatprep.subr.bf16.mxu0 0
    %10635 = vmatpush2.bf16.msra.mxu0 %v10277
    %10636 = vmatprep.subr.bf16.mxu0 0
    %10637 = vmatpush2.bf16.msra.mxu0 %v10276
    %10638 = vmatprep.subr.bf16.mxu0 0
    %10639 = vmatpush2.bf16.msra.mxu0 %v10275
    %10640 = vmatprep.subr.bf16.mxu0 0
    %10641 = vmatpush2.bf16.msra.mxu0 %v10274
    %10642 = vmatprep.subr.bf16.mxu0 0
    %10643 = vmatpush2.bf16.msra.mxu0 %v10273
    %10644 = vmatprep.subr.bf16.mxu0 0
    %10645 = vmatpush2.bf16.msra.mxu0 %v10272
    %10646 = vmatprep.subr.bf16.mxu0 0
    %10647 = vmatpush2.bf16.msra.mxu0 %v10271
    %10648 = vmatprep.subr.bf16.mxu0 0
    %10649 = vmatpush2.bf16.msra.mxu0 %v10270
    %10650 = vmatprep.mubr.bf16.mxu0 %v9673
    %10651 = vmatmul.mubr.bf16.gmra.mxu0 %v9672
    %v10652 = vpop.f32.mrf.mxu0
    %v10653 = vadd.f32 %v10612, %v10652
    %v10654 = vpop.f32.mrf.mxu0
    %v10655 = vpop.f32.mrf.mxu0
    %v10656 = vadd.f32 %v10615, %v10655
    %v10657 = vpop.f32.mrf.mxu0
    %10658 = vdwg.mxu0
    %10659 = vmatprep.subr.bf16.mxu0 0
    %10660 = vmatpush1.bf16.msra.mxu0 %v10285
    %10661 = vmatprep.subr.bf16.mxu0 0
    %10662 = vmatpush1.bf16.msra.mxu0 %v10284
    %10663 = vmatprep.subr.bf16.mxu0 0
    %10664 = vmatpush1.bf16.msra.mxu0 %v10283
    %10665 = vmatprep.subr.bf16.mxu0 0
    %10666 = vmatpush1.bf16.msra.mxu0 %v10282
    %10667 = vmatprep.subr.bf16.mxu0 0
    %10668 = vmatpush1.bf16.msra.mxu0 %v10281
    %10669 = vmatprep.subr.bf16.mxu0 0
    %10670 = vmatpush1.bf16.msra.mxu0 %v10280
    %10671 = vmatprep.subr.bf16.mxu0 0
    %10672 = vmatpush1.bf16.msra.mxu0 %v10279
    %10673 = vmatprep.subr.bf16.mxu0 0
    %10674 = vmatpush1.bf16.msra.mxu0 %v10278
    %10675 = vmatprep.subr.bf16.mxu0 0
    %10676 = vmatpush2.bf16.msra.mxu0 %v10293
    %10677 = vmatprep.subr.bf16.mxu0 0
    %10678 = vmatpush2.bf16.msra.mxu0 %v10292
    %10679 = vmatprep.subr.bf16.mxu0 0
    %10680 = vmatpush2.bf16.msra.mxu0 %v10291
    %10681 = vmatprep.subr.bf16.mxu0 0
    %10682 = vmatpush2.bf16.msra.mxu0 %v10290
    %10683 = vmatprep.subr.bf16.mxu0 0
    %10684 = vmatpush2.bf16.msra.mxu0 %v10289
    %10685 = vmatprep.subr.bf16.mxu0 0
    %10686 = vmatpush2.bf16.msra.mxu0 %v10288
    %10687 = vmatprep.subr.bf16.mxu0 0
    %10688 = vmatpush2.bf16.msra.mxu0 %v10287
    %10689 = vmatprep.subr.bf16.mxu0 0
    %10690 = vmatpush2.bf16.msra.mxu0 %v10286
    %10691 = vmatprep.mubr.bf16.mxu0 %v9675
    %10692 = vmatmul.mubr.bf16.gmra.mxu0 %v9674
    %v10693 = vpop.f32.mrf.mxu0
    %v10694 = vadd.f32 %v10653, %v10693
    %v10695 = vpop.f32.mrf.mxu0
    %v10696 = vpop.f32.mrf.mxu0
    %v10697 = vadd.f32 %v10656, %v10696
    %v10698 = vpop.f32.mrf.mxu0
    %10699 = vdwg.mxu0
    %10700 = vmatprep.subr.bf16.mxu0 0
    %10701 = vmatpush1.bf16.msra.mxu0 %v10301
    %10702 = vmatprep.subr.bf16.mxu0 0
    %10703 = vmatpush1.bf16.msra.mxu0 %v10300
    %10704 = vmatprep.subr.bf16.mxu0 0
    %10705 = vmatpush1.bf16.msra.mxu0 %v10299
    %10706 = vmatprep.subr.bf16.mxu0 0
    %10707 = vmatpush1.bf16.msra.mxu0 %v10298
    %10708 = vmatprep.subr.bf16.mxu0 0
    %10709 = vmatpush1.bf16.msra.mxu0 %v10297
    %10710 = vmatprep.subr.bf16.mxu0 0
    %10711 = vmatpush1.bf16.msra.mxu0 %v10296
    %10712 = vmatprep.subr.bf16.mxu0 0
    %10713 = vmatpush1.bf16.msra.mxu0 %v10295
    %10714 = vmatprep.subr.bf16.mxu0 0
    %10715 = vmatpush1.bf16.msra.mxu0 %v10294
    %10716 = vmatprep.subr.bf16.mxu0 0
    %10717 = vmatpush2.bf16.msra.mxu0 %v10309
    %10718 = vmatprep.subr.bf16.mxu0 0
    %10719 = vmatpush2.bf16.msra.mxu0 %v10308
    %10720 = vmatprep.subr.bf16.mxu0 0
    %10721 = vmatpush2.bf16.msra.mxu0 %v10307
    %10722 = vmatprep.subr.bf16.mxu0 0
    %10723 = vmatpush2.bf16.msra.mxu0 %v10306
    %10724 = vmatprep.subr.bf16.mxu0 0
    %10725 = vmatpush2.bf16.msra.mxu0 %v10305
    %10726 = vmatprep.subr.bf16.mxu0 0
    %10727 = vmatpush2.bf16.msra.mxu0 %v10304
    %10728 = vmatprep.subr.bf16.mxu0 0
    %10729 = vmatpush2.bf16.msra.mxu0 %v10303
    %10730 = vmatprep.subr.bf16.mxu0 0
    %10731 = vmatpush2.bf16.msra.mxu0 %v10302
    %10732 = vmatprep.mubr.bf16.mxu0 %v9677
    %10733 = vmatmul.mubr.bf16.gmra.mxu0 %v9676
    %v10734 = vpop.f32.mrf.mxu0
    %v10735 = vadd.f32 %v10694, %v10734
    %v10736 = vpop.f32.mrf.mxu0
    %v10737 = vpop.f32.mrf.mxu0
    %v10738 = vadd.f32 %v10697, %v10737
    %v10739 = vpop.f32.mrf.mxu0
    %10740 = vdwg.mxu0
    %10741 = vmatprep.subr.bf16.mxu0 0
    %10742 = vmatpush1.bf16.msra.mxu0 %v10317
    %10743 = vmatprep.subr.bf16.mxu0 0
    %10744 = vmatpush1.bf16.msra.mxu0 %v10316
    %10745 = vmatprep.subr.bf16.mxu0 0
    %10746 = vmatpush1.bf16.msra.mxu0 %v10315
    %10747 = vmatprep.subr.bf16.mxu0 0
    %10748 = vmatpush1.bf16.msra.mxu0 %v10314
    %10749 = vmatprep.subr.bf16.mxu0 0
    %10750 = vmatpush1.bf16.msra.mxu0 %v10313
    %10751 = vmatprep.subr.bf16.mxu0 0
    %10752 = vmatpush1.bf16.msra.mxu0 %v10312
    %10753 = vmatprep.subr.bf16.mxu0 0
    %10754 = vmatpush1.bf16.msra.mxu0 %v10311
    %10755 = vmatprep.subr.bf16.mxu0 0
    %10756 = vmatpush1.bf16.msra.mxu0 %v10310
    %10757 = vmatprep.subr.bf16.mxu0 0
    %10758 = vmatpush2.bf16.msra.mxu0 %v10325
    %10759 = vmatprep.subr.bf16.mxu0 0
    %10760 = vmatpush2.bf16.msra.mxu0 %v10324
    %10761 = vmatprep.subr.bf16.mxu0 0
    %10762 = vmatpush2.bf16.msra.mxu0 %v10323
    %10763 = vmatprep.subr.bf16.mxu0 0
    %10764 = vmatpush2.bf16.msra.mxu0 %v10322
    %10765 = vmatprep.subr.bf16.mxu0 0
    %10766 = vmatpush2.bf16.msra.mxu0 %v10321
    %10767 = vmatprep.subr.bf16.mxu0 0
    %10768 = vmatpush2.bf16.msra.mxu0 %v10320
    %10769 = vmatprep.subr.bf16.mxu0 0
    %10770 = vmatpush2.bf16.msra.mxu0 %v10319
    %10771 = vmatprep.subr.bf16.mxu0 0
    %10772 = vmatpush2.bf16.msra.mxu0 %v10318
    %10773 = vmatprep.mubr.bf16.mxu0 %v9679
    %10774 = vmatmul.mubr.bf16.gmra.mxu0 %v9678
    %v10775 = vpop.f32.mrf.mxu0
    %v10776 = vadd.f32 %v10735, %v10775
    %v10777 = vpop.f32.mrf.mxu0
    %v10778 = vpop.f32.mrf.mxu0
    %v10779 = vadd.f32 %v10738, %v10778
    %v10780 = vpop.f32.mrf.mxu0
    %10781 = vdwg.mxu0
    %v10782 = vadd.f32 %v8685, %v10776
    %v10783 = vadd.f32 %v8686, %v10779
    %v10784 = vld [vmem:[%s26] sm:$0x1]
    %v10785 = vld [vmem:[%s27] sm:$0x1]
    %v10786 = vsel %vm207, %v10782, 0.0
    %10787 = vadd.xlane.f32.xlu0 %v10786
    %v10788 = vpop.xlane.xlu0 %10787
    %v10789 = vsel %vm207, %v10783, 0.0
    %10790 = vadd.xlane.f32.xlu0 %v10789
    %v10791 = vpop.xlane.xlu0 %10790
    %v10792 = vmul.f32 %v10788, %v214
    %v10793 = vmul.f32 %v10791, %v214
    %v10794 = vsub.f32 %v10782, %v10792
    %v10795 = vsub.f32 %v10783, %v10793
    %v10796 = vmul.f32 %v10794, %v10794
    %v10797 = vmul.f32 %v10795, %v10795
    %v10798 = vsel %vm207, %v10796, 0.0
    %10799 = vadd.xlane.f32.xlu0 %v10798
    %v10800 = vpop.xlane.xlu0 %10799
    %v10801 = vsel %vm207, %v10797, 0.0
    %10802 = vadd.xlane.f32.xlu0 %v10801
    %v10803 = vpop.xlane.xlu0 %10802
    %v10804 = vmul.f32 %v10800, 0.032258064
    %v10805 = vmul.f32 %v10803, 0.032258064
    %v10806 = vrsqrt.pop %v10804
    %v10807 = vmul.f32 %v10804, %v10806
    %vm10808 = vcmp.eq.f32.partialorder %v10804, inf
    %v10809 = vsel %vm10808, %v10804, %v10807
    %vm10810 = vcmp.eq.f32.partialorder %v10804, 0.0
    %v10811 = vand.u32 %v10804, 2147483648
    %v10812 = vsel %vm10810, %v10811, %v10809
    %v10813 = vrsqrt.pop %v10805
    %v10814 = vmul.f32 %v10805, %v10813
    %vm10815 = vcmp.eq.f32.partialorder %v10805, inf
    %v10816 = vsel %vm10815, %v10805, %v10814
    %vm10817 = vcmp.eq.f32.partialorder %v10805, 0.0
    %v10818 = vand.u32 %v10805, 2147483648
    %v10819 = vsel %vm10817, %v10818, %v10816
    %v10820 = vadd.f32 %v10812, 1e-06
    %v10821 = vadd.f32 %v10819, 1e-06
    %v10822 = vrcp.pop %v10820
    %v10823 = vrcp.pop %v10821
    %v10824 = vmul.f32 %v10794, %v10822
    %v10825 = vmul.f32 %v10795, %v10823
    %v10827 = vlaneseq
    %v10828 = vshrl.u32 %v10827, 7
    %v10829 = vsub.s32 0, %v10828
    %v10830 = vrot.slane %v10784, %v10829
    %v10832 = vmul.f32 %v10830, %v10824
    %v10833 = vmul.f32 %v10830, %v10825
    %v10835 = vlaneseq
    %v10836 = vshrl.u32 %v10835, 7
    %v10837 = vsub.s32 0, %v10836
    %v10838 = vrot.slane %v10785, %v10837
    %v10840 = vadd.f32 %v10832, %v10838
    %v10841 = vadd.f32 %v10833, %v10838
    %10842 = vst.msk [vmem:[#allocation2] sm:$0xff] %vm207, %v10840
    %10843 = vst.msk [vmem:[#allocation2 + $0x8] sm:$0xff] %vm207, %v10841
    // Predicated region
    $region114: #{decoder_forward.1} parent=1 // pred_check
      _
    $region115: #{decoder_forward.1} parent=1 // pred_check_branch
      %10845 = sbr.rel (0) target = $region117
    $region116: #{decoder_forward.1} parent=1 // pred_region
      %s10847 = ssub.s32 256, 256
      %10848 = vsyncadd [#allocation3], %s10847
      %s10849 = sshll.u32 [#allocation2], 4
      %s10850 = int_to_ptr.vmem [resolvable:$true] %s10849
      %10855 = dma.vmem_to_hbm [thread:$0]  %s10850, 256, %s28, [#allocation3], 128, 128, 8
    $region117: #{decoder_forward.1} parent=1 // pred_fallthru
      _
    // Predicated region
    $region118: #{decoder_forward.1} parent=1 // pred_check
      _
    $region119: #{decoder_forward.1} parent=1 // pred_check_branch
      %10857 = sbr.rel (0) target = $region121
    $region120: #{decoder_forward.1} parent=1 // pred_region
      %10858 = dma.done [#allocation3], 256
    $region121: #{decoder_forward.1} parent=1 // pred_fallthru
      _
    %10859 = vsyncpa [#allocation3], 1

</llo_original>
